<compile_context>
chip_gen: v7x
topology: tpu7x:2x2x1
jax: 0.10.0
libtpu: 0.0.40
codegen_flags: <defaults>
</compile_context>

<pallas_src>
import functools

import jax
import jax.numpy as jnp
from jax import lax
from jax.experimental import pallas as pl
from jax.experimental.pallas import tpu as pltpu

EPS = 1e-5
LANE = 128


# ----------------------------- Pallas kernel ------------------------------- #

def _resblock_kernel(x_ref, w1_ref, w2_ref, s1_ref, t1_ref, s2_ref, t2_ref,
                     msk_ref, o_ref, hp_ref, *, wp, rows):
    """Fully fused ResBlock for one image.

    x_ref  : (R, Cip)    zero-padded (spatial + channel) input, flattened so
                         conv tap (dy,dx) is the contiguous row slice
                         [dy*wp+dx : dy*wp+dx+rows).
    w*_ref : (9, Cin, Cout) per-tap matmul weights (channel-padded, zero-filled).
    s*/t*  : (1, Cout)   folded conv-bias + eval-BatchNorm scale / shift.
    msk_ref: (rows, 1)   1.0 on valid output rows, 0.0 on wrap-around junk rows.
    o_ref  : (rows, Cop) flat output (valid cols/channels sliced in the wrapper).
    hp_ref : (R, Chp)    VMEM scratch: spatially padded conv1 activation.
    """
    offs = [(t // 3) * wp + (t % 3) for t in range(9)]

    def conv3x3(src_ref, w_ref):
        acc = jnp.dot(src_ref[pl.ds(offs[0], rows), :], w_ref[0],
                      preferred_element_type=jnp.float32)
        for t in range(1, 9):
            acc = acc + jnp.dot(src_ref[pl.ds(offs[t], rows), :], w_ref[t],
                                preferred_element_type=jnp.float32)
        return acc

    # conv1 -> folded bias+BN -> ReLU.  Wrap-around junk rows are zeroed so
    # they land as zeros in the padded border of the scratch.
    h = conv3x3(x_ref, w1_ref)
    h = jnp.maximum(h * s1_ref[...] + t1_ref[...], 0.0) * msk_ref[...]

    # Scatter the activation into the interior of the zeroed, spatially padded
    # scratch (border rows/cols stay zero for conv2's SAME padding).
    hp_ref[...] = jnp.zeros_like(hp_ref)
    hp_ref[pl.ds(wp + 1, rows), :] = h

    # conv2 -> folded bias+BN -> + residual (= centre tap of the padded input).
    y = conv3x3(hp_ref, w2_ref)
    y = y * s2_ref[...] + t2_ref[...] + x_ref[pl.ds(wp + 1, rows), :]
    o_ref[...] = y.astype(o_ref.dtype)


# ------------------------------- JAX glue ---------------------------------- #

def _round_up(x, m):
    return (x + m - 1) // m * m


def _w_to_taps(w_oihw, cin_pad, cout_pad):
    """PyTorch (O, I, 3, 3) -> (9, cin_pad, cout_pad) per-tap matmul weights."""
    o, i, _, _ = w_oihw.shape
    taps = jnp.transpose(w_oihw, (2, 3, 1, 0)).reshape(9, i, o)
    return jnp.pad(taps, ((0, 0), (0, cin_pad - i),
                          (0, cout_pad - o))).astype(jnp.float32)


def _fold_bn(b, g, beta, mu, var, c_pad):
    """Fold conv bias + eval-mode BatchNorm into per-channel scale / shift."""
    s = g * lax.rsqrt(var + EPS)
    t = beta + (b - mu) * s
    c = s.shape[0]
    s = jnp.pad(s, (0, c_pad - c)).reshape(1, c_pad).astype(jnp.float32)
    t = jnp.pad(t, (0, c_pad - c)).reshape(1, c_pad).astype(jnp.float32)
    return s, t


def res_block_forward(x_nchw, p):
    """ResBlock forward. Input/output: NCHW float32 (PyTorch convention)."""
    N, Ci, H, W = x_nchw.shape
    nh = p["w1"].shape[0]
    ni = Ci

    wp = W + 2                      # padded row width = row stride of flat layout
    rows = H * wp                   # rows of the flat output grid per image
    R = (H + 3) * wp                # rows of the flat padded input per image
    chp = _round_up(nh, LANE)       # conv1 output channels, lane-padded
    cop = _round_up(ni, LANE)       # conv2 output / residual channels, lane-padded

    # NHWC, channel-pad to 128 lanes, spatial zero-pad (top 1, bottom 2, l/r 1),
    # then flatten per image so every 3x3 tap is a contiguous row slice.
    x = jnp.transpose(x_nchw, (0, 2, 3, 1))
    xp = jnp.pad(x, ((0, 0), (1, 2), (1, 1), (0, cop - ni)))
    xflat = xp.reshape(N, R, cop).astype(jnp.float32)

    w1 = _w_to_taps(p["w1"], cop, chp)
    w2 = _w_to_taps(p["w2"], chp, cop)
    s1, t1 = _fold_bn(p["b1"], p["g1"], p["beta1"], p["mu1"], p["var1"], chp)
    s2, t2 = _fold_bn(p["b2"], p["g2"], p["beta2"], p["mu2"], p["var2"], cop)

    # 1.0 where the flat row corresponds to a real pixel, 0.0 on wrap rows.
    mask = ((jnp.arange(rows) % wp) < W).astype(jnp.float32).reshape(rows, 1)

    kern = functools.partial(_resblock_kernel, wp=wp, rows=rows)
    out = pl.pallas_call(
        kern,
        out_shape=jax.ShapeDtypeStruct((N, rows, cop), jnp.float32),
        grid_spec=pltpu.PrefetchScalarGridSpec(
            num_scalar_prefetch=0,
            grid=(N,),                                   # one image per step
            in_specs=[
                pl.BlockSpec((None, R, cop), lambda n: (n, 0, 0)),   # x (flat)
                pl.BlockSpec((9, cop, chp), lambda n: (0, 0, 0)),    # w1 taps
                pl.BlockSpec((9, chp, cop), lambda n: (0, 0, 0)),    # w2 taps
                pl.BlockSpec((1, chp), lambda n: (0, 0)),            # scale1
                pl.BlockSpec((1, chp), lambda n: (0, 0)),            # shift1
                pl.BlockSpec((1, cop), lambda n: (0, 0)),            # scale2
                pl.BlockSpec((1, cop), lambda n: (0, 0)),            # shift2
                pl.BlockSpec((rows, 1), lambda n: (0, 0)),           # row mask
            ],
            out_specs=pl.BlockSpec((None, rows, cop), lambda n: (n, 0, 0)),
            scratch_shapes=[pltpu.VMEM((R, chp), jnp.float32)],
        ),
        compiler_params=pltpu.CompilerParams(
            dimension_semantics=("parallel",),           # megacore split on v7x
        ),
    )(xflat, w1, w2, s1, t1, s2, t2, mask)

    # Drop wrap-around columns and channel padding, back to NCHW.
    y = out.reshape(N, H, wp, cop)[:, :, :W, :ni]
    return jnp.transpose(y, (0, 3, 1, 2))


# ------------------------ pure-JAX reference (check) ------------------------ #

def _ref_forward(x_nchw, p):
    def conv(x, w, b):
        y = lax.conv_general_dilated(
            x, w, window_strides=(1, 1), padding="SAME",
            dimension_numbers=("NCHW", "OIHW", "NCHW"))
        return y + b[None, :, None, None]

    def bn(x, g, bt, mu, var):
        inv = lax.rsqrt(var + EPS)
        return ((x - mu[None, :, None, None]) * (inv * g)[None, :, None, None]
                + bt[None, :, None, None])

    h = conv(x_nchw, p["w1"], p["b1"])
    h = jnp.maximum(bn(h, p["g1"], p["beta1"], p["mu1"], p["var1"]), 0.0)
    y = conv(h, p["w2"], p["b2"])
    y = bn(y, p["g2"], p["beta2"], p["mu2"], p["var2"])
    return y + x_nchw


# ---------------------------------- main ------------------------------------ #

def _init_params(key, ni, nh):
    ks = jax.random.split(key, 8)
    f32 = jnp.float32
    return {
        "w1": 0.1 * jax.random.normal(ks[0], (nh, ni, 3, 3), f32),
        "b1": 0.05 * jax.random.normal(ks[1], (nh,), f32),
        "g1": 1.0 + 0.1 * jax.random.normal(ks[2], (nh,), f32),
        "beta1": 0.05 * jax.random.normal(ks[3], (nh,), f32),
        "mu1": 0.1 * jax.random.normal(ks[4], (nh,), f32),
        "var1": 0.5 + jax.random.uniform(ks[5], (nh,), f32),
        "w2": 0.1 * jax.random.normal(ks[6], (ni, nh, 3, 3), f32),
        "b2": 0.05 * jax.random.normal(ks[7], (ni,), f32),
        "g2": 1.0 + 0.1 * jax.random.normal(ks[2], (ni,), f32),
        "beta2": 0.05 * jax.random.normal(ks[3], (ni,), f32),
        "mu2": 0.1 * jax.random.normal(ks[4], (ni,), f32),
        "var2": 0.5 + jax.random.uniform(ks[5], (ni,), f32),
    }


if __name__ == "__main__":
    key = jax.random.PRNGKey(0)
    k_x, k_p = jax.random.split(key)

    ni, nh = 4, 8                     # ResBlock(ni=4, nh=8)
    x = jax.random.normal(k_x, (2, ni, 16, 16), jnp.float32)   # NCHW
    params = _init_params(k_p, ni, nh)

    fwd = jax.jit(res_block_forward)
    out = jax.block_until_ready(fwd(x, params))
    ref = jax.block_until_ready(_ref_forward(x, params))

    assert out.shape == x.shape and out.dtype == x.dtype
    max_err = float(jnp.max(jnp.abs(out - ref)))
    assert jnp.allclose(out, ref, atol=1e-3, rtol=1e-3), max_err

    print("KERNEL_OK")
</pallas_src>

<mosaic_0001>
module attributes {stable_mosaic.version = 11 : i64} {
  func.func @_resblock_kernel(%arg0: i32, %arg1: memref<1x342x128xf32, #tpu.memory_space<vmem>>, %arg2: memref<9x128x128xf32, #tpu.memory_space<vmem>>, %arg3: memref<9x128x128xf32, #tpu.memory_space<vmem>>, %arg4: memref<1x128xf32, #tpu.memory_space<vmem>>, %arg5: memref<1x128xf32, #tpu.memory_space<vmem>>, %arg6: memref<1x128xf32, #tpu.memory_space<vmem>>, %arg7: memref<1x128xf32, #tpu.memory_space<vmem>>, %arg8: memref<288x1xf32, #tpu.memory_space<vmem>>, %arg9: memref<1x288x128xf32, #tpu.memory_space<vmem>>, %arg10: memref<342x128xf32, #tpu.memory_space<vmem>>) attributes {dimension_semantics = [#tpu.dimension_semantics<parallel>], iteration_bounds = array<i64: 2>, scalar_prefetch = 0 : i64, scratch_operands = 1 : i64, tpu.core_type = #tpu.core_type<tc>, window_params = [{transform_indices = @transform_0, window_bounds = array<i64: 1, 342, 128>}, {pipeline_mode = #tpu.pipeline_mode<synchronous>, transform_indices = @transform_1, window_bounds = array<i64: 9, 128, 128>}, {pipeline_mode = #tpu.pipeline_mode<synchronous>, transform_indices = @transform_2, window_bounds = array<i64: 9, 128, 128>}, {pipeline_mode = #tpu.pipeline_mode<synchronous>, transform_indices = @transform_3, window_bounds = array<i64: 1, 128>}, {pipeline_mode = #tpu.pipeline_mode<synchronous>, transform_indices = @transform_4, window_bounds = array<i64: 1, 128>}, {pipeline_mode = #tpu.pipeline_mode<synchronous>, transform_indices = @transform_5, window_bounds = array<i64: 1, 128>}, {pipeline_mode = #tpu.pipeline_mode<synchronous>, transform_indices = @transform_6, window_bounds = array<i64: 1, 128>}, {pipeline_mode = #tpu.pipeline_mode<synchronous>, transform_indices = @transform_7, window_bounds = array<i64: 288, 1>}, {transform_indices = @transform_8, window_bounds = array<i64: 1, 288, 128>}]} {
    %c0 = arith.constant 0 : index
    %c0_0 = arith.constant 0 : index
    %c0_1 = arith.constant 0 : index
    %0 = vector.load %arg1[%c0, %c0_0, %c0_1] : memref<1x342x128xf32, #tpu.memory_space<vmem>>, vector<1x288x128xf32>
    %1 = vector.shape_cast %0 : vector<1x288x128xf32> to vector<288x128xf32>
    %c0_2 = arith.constant 0 : index
    %c0_3 = arith.constant 0 : index
    %c0_4 = arith.constant 0 : index
    %2 = vector.load %arg2[%c0_2, %c0_3, %c0_4] : memref<9x128x128xf32, #tpu.memory_space<vmem>>, vector<1x128x128xf32>
    %3 = vector.shape_cast %2 : vector<1x128x128xf32> to vector<128x128xf32>
    %cst = arith.constant dense<0.000000e+00> : vector<288x128xf32>
    %4 = tpu.matmul %1, %3, %cst {dimension_numbers = #tpu.dot_dimension_numbers<[1], [0], [0], [1], [0, 0, 1, 1], [], []>} : vector<288x128xf32>, vector<128x128xf32>, vector<288x128xf32> -> vector<288x128xf32>
    %c0_5 = arith.constant 0 : index
    %c1 = arith.constant 1 : index
    %c0_6 = arith.constant 0 : index
    %5 = vector.load %arg1[%c0_5, %c1, %c0_6] : memref<1x342x128xf32, #tpu.memory_space<vmem>>, vector<1x288x128xf32>
    %6 = vector.shape_cast %5 : vector<1x288x128xf32> to vector<288x128xf32>
    %c1_7 = arith.constant 1 : index
    %c0_8 = arith.constant 0 : index
    %c0_9 = arith.constant 0 : index
    %7 = vector.load %arg2[%c1_7, %c0_8, %c0_9] : memref<9x128x128xf32, #tpu.memory_space<vmem>>, vector<1x128x128xf32>
    %8 = vector.shape_cast %7 : vector<1x128x128xf32> to vector<128x128xf32>
    %cst_10 = arith.constant dense<0.000000e+00> : vector<288x128xf32>
    %9 = tpu.matmul %6, %8, %cst_10 {dimension_numbers = #tpu.dot_dimension_numbers<[1], [0], [0], [1], [0, 0, 1, 1], [], []>} : vector<288x128xf32>, vector<128x128xf32>, vector<288x128xf32> -> vector<288x128xf32>
    %10 = arith.addf %4, %9 : vector<288x128xf32>
    %c0_11 = arith.constant 0 : index
    %c2 = arith.constant 2 : index
    %c0_12 = arith.constant 0 : index
    %11 = vector.load %arg1[%c0_11, %c2, %c0_12] : memref<1x342x128xf32, #tpu.memory_space<vmem>>, vector<1x288x128xf32>
    %12 = vector.shape_cast %11 : vector<1x288x128xf32> to vector<288x128xf32>
    %c2_13 = arith.constant 2 : index
    %c0_14 = arith.constant 0 : index
    %c0_15 = arith.constant 0 : index
    %13 = vector.load %arg2[%c2_13, %c0_14, %c0_15] : memref<9x128x128xf32, #tpu.memory_space<vmem>>, vector<1x128x128xf32>
    %14 = vector.shape_cast %13 : vector<1x128x128xf32> to vector<128x128xf32>
    %cst_16 = arith.constant dense<0.000000e+00> : vector<288x128xf32>
    %15 = tpu.matmul %12, %14, %cst_16 {dimension_numbers = #tpu.dot_dimension_numbers<[1], [0], [0], [1], [0, 0, 1, 1], [], []>} : vector<288x128xf32>, vector<128x128xf32>, vector<288x128xf32> -> vector<288x128xf32>
    %16 = arith.addf %10, %15 : vector<288x128xf32>
    %c0_17 = arith.constant 0 : index
    %c18 = arith.constant 18 : index
    %c0_18 = arith.constant 0 : index
    %17 = vector.load %arg1[%c0_17, %c18, %c0_18] : memref<1x342x128xf32, #tpu.memory_space<vmem>>, vector<1x288x128xf32>
    %18 = vector.shape_cast %17 : vector<1x288x128xf32> to vector<288x128xf32>
    %c3 = arith.constant 3 : index
    %c0_19 = arith.constant 0 : index
    %c0_20 = arith.constant 0 : index
    %19 = vector.load %arg2[%c3, %c0_19, %c0_20] : memref<9x128x128xf32, #tpu.memory_space<vmem>>, vector<1x128x128xf32>
    %20 = vector.shape_cast %19 : vector<1x128x128xf32> to vector<128x128xf32>
    %cst_21 = arith.constant dense<0.000000e+00> : vector<288x128xf32>
    %21 = tpu.matmul %18, %20, %cst_21 {dimension_numbers = #tpu.dot_dimension_numbers<[1], [0], [0], [1], [0, 0, 1, 1], [], []>} : vector<288x128xf32>, vector<128x128xf32>, vector<288x128xf32> -> vector<288x128xf32>
    %22 = arith.addf %16, %21 : vector<288x128xf32>
    %c0_22 = arith.constant 0 : index
    %c19 = arith.constant 19 : index
    %c0_23 = arith.constant 0 : index
    %23 = vector.load %arg1[%c0_22, %c19, %c0_23] : memref<1x342x128xf32, #tpu.memory_space<vmem>>, vector<1x288x128xf32>
    %24 = vector.shape_cast %23 : vector<1x288x128xf32> to vector<288x128xf32>
    %c4 = arith.constant 4 : index
    %c0_24 = arith.constant 0 : index
    %c0_25 = arith.constant 0 : index
    %25 = vector.load %arg2[%c4, %c0_24, %c0_25] : memref<9x128x128xf32, #tpu.memory_space<vmem>>, vector<1x128x128xf32>
    %26 = vector.shape_cast %25 : vector<1x128x128xf32> to vector<128x128xf32>
    %cst_26 = arith.constant dense<0.000000e+00> : vector<288x128xf32>
    %27 = tpu.matmul %24, %26, %cst_26 {dimension_numbers = #tpu.dot_dimension_numbers<[1], [0], [0], [1], [0, 0, 1, 1], [], []>} : vector<288x128xf32>, vector<128x128xf32>, vector<288x128xf32> -> vector<288x128xf32>
    %28 = arith.addf %22, %27 : vector<288x128xf32>
    %c0_27 = arith.constant 0 : index
    %c20 = arith.constant 20 : index
    %c0_28 = arith.constant 0 : index
    %29 = vector.load %arg1[%c0_27, %c20, %c0_28] : memref<1x342x128xf32, #tpu.memory_space<vmem>>, vector<1x288x128xf32>
    %30 = vector.shape_cast %29 : vector<1x288x128xf32> to vector<288x128xf32>
    %c5 = arith.constant 5 : index
    %c0_29 = arith.constant 0 : index
    %c0_30 = arith.constant 0 : index
    %31 = vector.load %arg2[%c5, %c0_29, %c0_30] : memref<9x128x128xf32, #tpu.memory_space<vmem>>, vector<1x128x128xf32>
    %32 = vector.shape_cast %31 : vector<1x128x128xf32> to vector<128x128xf32>
    %cst_31 = arith.constant dense<0.000000e+00> : vector<288x128xf32>
    %33 = tpu.matmul %30, %32, %cst_31 {dimension_numbers = #tpu.dot_dimension_numbers<[1], [0], [0], [1], [0, 0, 1, 1], [], []>} : vector<288x128xf32>, vector<128x128xf32>, vector<288x128xf32> -> vector<288x128xf32>
    %34 = arith.addf %28, %33 : vector<288x128xf32>
    %c0_32 = arith.constant 0 : index
    %c36 = arith.constant 36 : index
    %c0_33 = arith.constant 0 : index
    %35 = vector.load %arg1[%c0_32, %c36, %c0_33] : memref<1x342x128xf32, #tpu.memory_space<vmem>>, vector<1x288x128xf32>
    %36 = vector.shape_cast %35 : vector<1x288x128xf32> to vector<288x128xf32>
    %c6 = arith.constant 6 : index
    %c0_34 = arith.constant 0 : index
    %c0_35 = arith.constant 0 : index
    %37 = vector.load %arg2[%c6, %c0_34, %c0_35] : memref<9x128x128xf32, #tpu.memory_space<vmem>>, vector<1x128x128xf32>
    %38 = vector.shape_cast %37 : vector<1x128x128xf32> to vector<128x128xf32>
    %cst_36 = arith.constant dense<0.000000e+00> : vector<288x128xf32>
    %39 = tpu.matmul %36, %38, %cst_36 {dimension_numbers = #tpu.dot_dimension_numbers<[1], [0], [0], [1], [0, 0, 1, 1], [], []>} : vector<288x128xf32>, vector<128x128xf32>, vector<288x128xf32> -> vector<288x128xf32>
    %40 = arith.addf %34, %39 : vector<288x128xf32>
    %c0_37 = arith.constant 0 : index
    %c37 = arith.constant 37 : index
    %c0_38 = arith.constant 0 : index
    %41 = vector.load %arg1[%c0_37, %c37, %c0_38] : memref<1x342x128xf32, #tpu.memory_space<vmem>>, vector<1x288x128xf32>
    %42 = vector.shape_cast %41 : vector<1x288x128xf32> to vector<288x128xf32>
    %c7 = arith.constant 7 : index
    %c0_39 = arith.constant 0 : index
    %c0_40 = arith.constant 0 : index
    %43 = vector.load %arg2[%c7, %c0_39, %c0_40] : memref<9x128x128xf32, #tpu.memory_space<vmem>>, vector<1x128x128xf32>
    %44 = vector.shape_cast %43 : vector<1x128x128xf32> to vector<128x128xf32>
    %cst_41 = arith.constant dense<0.000000e+00> : vector<288x128xf32>
    %45 = tpu.matmul %42, %44, %cst_41 {dimension_numbers = #tpu.dot_dimension_numbers<[1], [0], [0], [1], [0, 0, 1, 1], [], []>} : vector<288x128xf32>, vector<128x128xf32>, vector<288x128xf32> -> vector<288x128xf32>
    %46 = arith.addf %40, %45 : vector<288x128xf32>
    %c0_42 = arith.constant 0 : index
    %c38 = arith.constant 38 : index
    %c0_43 = arith.constant 0 : index
    %47 = vector.load %arg1[%c0_42, %c38, %c0_43] : memref<1x342x128xf32, #tpu.memory_space<vmem>>, vector<1x288x128xf32>
    %48 = vector.shape_cast %47 : vector<1x288x128xf32> to vector<288x128xf32>
    %c8 = arith.constant 8 : index
    %c0_44 = arith.constant 0 : index
    %c0_45 = arith.constant 0 : index
    %49 = vector.load %arg2[%c8, %c0_44, %c0_45] : memref<9x128x128xf32, #tpu.memory_space<vmem>>, vector<1x128x128xf32>
    %50 = vector.shape_cast %49 : vector<1x128x128xf32> to vector<128x128xf32>
    %cst_46 = arith.constant dense<0.000000e+00> : vector<288x128xf32>
    %51 = tpu.matmul %48, %50, %cst_46 {dimension_numbers = #tpu.dot_dimension_numbers<[1], [0], [0], [1], [0, 0, 1, 1], [], []>} : vector<288x128xf32>, vector<128x128xf32>, vector<288x128xf32> -> vector<288x128xf32>
    %52 = arith.addf %46, %51 : vector<288x128xf32>
    %c0_47 = arith.constant 0 : index
    %c0_48 = arith.constant 0 : index
    %53 = vector.load %arg4[%c0_47, %c0_48] : memref<1x128xf32, #tpu.memory_space<vmem>>, vector<1x128xf32>
    %54 = vector.broadcast %53 : vector<1x128xf32> to vector<288x128xf32>
    %55 = arith.mulf %52, %54 : vector<288x128xf32>
    %c0_49 = arith.constant 0 : index
    %c0_50 = arith.constant 0 : index
    %56 = vector.load %arg5[%c0_49, %c0_50] : memref<1x128xf32, #tpu.memory_space<vmem>>, vector<1x128xf32>
    %57 = vector.broadcast %56 : vector<1x128xf32> to vector<288x128xf32>
    %58 = arith.addf %55, %57 : vector<288x128xf32>
    %cst_51 = arith.constant 0.000000e+00 : f32
    %59 = vector.broadcast %cst_51 : f32 to vector<288x128xf32>
    %60 = arith.maximumf %58, %59 : vector<288x128xf32>
    %c0_52 = arith.constant 0 : index
    %c0_53 = arith.constant 0 : index
    %61 = vector.load %arg8[%c0_52, %c0_53] : memref<288x1xf32, #tpu.memory_space<vmem>>, vector<288x1xf32>
    %62 = vector.broadcast %61 : vector<288x1xf32> to vector<288x128xf32>
    %63 = arith.mulf %60, %62 : vector<288x128xf32>
    %cst_54 = arith.constant 0.000000e+00 : f32
    %64 = vector.broadcast %cst_54 : f32 to vector<342x128xf32>
    %c0_55 = arith.constant 0 : index
    %c0_56 = arith.constant 0 : index
    %65 = vector.load %arg10[%c0_55, %c0_56] : memref<342x128xf32, #tpu.memory_space<vmem>>, vector<342x128xf32>
    tpu.vector_store %arg10[%c0_55, %c0_56], %64 {strides = array<i32>} : memref<342x128xf32, #tpu.memory_space<vmem>>, vector<342x128xf32>,
    %c19_57 = arith.constant 19 : index
    %c0_58 = arith.constant 0 : index
    %66 = vector.load %arg10[%c19_57, %c0_58] : memref<342x128xf32, #tpu.memory_space<vmem>>, vector<288x128xf32>
    tpu.vector_store %arg10[%c19_57, %c0_58], %63 {strides = array<i32>} : memref<342x128xf32, #tpu.memory_space<vmem>>, vector<288x128xf32>,
    %c0_59 = arith.constant 0 : index
    %c0_60 = arith.constant 0 : index
    %67 = vector.load %arg10[%c0_59, %c0_60] : memref<342x128xf32, #tpu.memory_space<vmem>>, vector<288x128xf32>
    %c0_61 = arith.constant 0 : index
    %c0_62 = arith.constant 0 : index
    %c0_63 = arith.constant 0 : index
    %68 = vector.load %arg3[%c0_61, %c0_62, %c0_63] : memref<9x128x128xf32, #tpu.memory_space<vmem>>, vector<1x128x128xf32>
    %69 = vector.shape_cast %68 : vector<1x128x128xf32> to vector<128x128xf32>
    %cst_64 = arith.constant dense<0.000000e+00> : vector<288x128xf32>
    %70 = tpu.matmul %67, %69, %cst_64 {dimension_numbers = #tpu.dot_dimension_numbers<[1], [0], [0], [1], [0, 0, 1, 1], [], []>} : vector<288x128xf32>, vector<128x128xf32>, vector<288x128xf32> -> vector<288x128xf32>
    %c1_65 = arith.constant 1 : index
    %c0_66 = arith.constant 0 : index
    %71 = vector.load %arg10[%c1_65, %c0_66] : memref<342x128xf32, #tpu.memory_space<vmem>>, vector<288x128xf32>
    %c1_67 = arith.constant 1 : index
    %c0_68 = arith.constant 0 : index
    %c0_69 = arith.constant 0 : index
    %72 = vector.load %arg3[%c1_67, %c0_68, %c0_69] : memref<9x128x128xf32, #tpu.memory_space<vmem>>, vector<1x128x128xf32>
    %73 = vector.shape_cast %72 : vector<1x128x128xf32> to vector<128x128xf32>
    %cst_70 = arith.constant dense<0.000000e+00> : vector<288x128xf32>
    %74 = tpu.matmul %71, %73, %cst_70 {dimension_numbers = #tpu.dot_dimension_numbers<[1], [0], [0], [1], [0, 0, 1, 1], [], []>} : vector<288x128xf32>, vector<128x128xf32>, vector<288x128xf32> -> vector<288x128xf32>
    %75 = arith.addf %70, %74 : vector<288x128xf32>
    %c2_71 = arith.constant 2 : index
    %c0_72 = arith.constant 0 : index
    %76 = vector.load %arg10[%c2_71, %c0_72] : memref<342x128xf32, #tpu.memory_space<vmem>>, vector<288x128xf32>
    %c2_73 = arith.constant 2 : index
    %c0_74 = arith.constant 0 : index
    %c0_75 = arith.constant 0 : index
    %77 = vector.load %arg3[%c2_73, %c0_74, %c0_75] : memref<9x128x128xf32, #tpu.memory_space<vmem>>, vector<1x128x128xf32>
    %78 = vector.shape_cast %77 : vector<1x128x128xf32> to vector<128x128xf32>
    %cst_76 = arith.constant dense<0.000000e+00> : vector<288x128xf32>
    %79 = tpu.matmul %76, %78, %cst_76 {dimension_numbers = #tpu.dot_dimension_numbers<[1], [0], [0], [1], [0, 0, 1, 1], [], []>} : vector<288x128xf32>, vector<128x128xf32>, vector<288x128xf32> -> vector<288x128xf32>
    %80 = arith.addf %75, %79 : vector<288x128xf32>
    %c18_77 = arith.constant 18 : index
    %c0_78 = arith.constant 0 : index
    %81 = vector.load %arg10[%c18_77, %c0_78] : memref<342x128xf32, #tpu.memory_space<vmem>>, vector<288x128xf32>
    %c3_79 = arith.constant 3 : index
    %c0_80 = arith.constant 0 : index
    %c0_81 = arith.constant 0 : index
    %82 = vector.load %arg3[%c3_79, %c0_80, %c0_81] : memref<9x128x128xf32, #tpu.memory_space<vmem>>, vector<1x128x128xf32>
    %83 = vector.shape_cast %82 : vector<1x128x128xf32> to vector<128x128xf32>
    %cst_82 = arith.constant dense<0.000000e+00> : vector<288x128xf32>
    %84 = tpu.matmul %81, %83, %cst_82 {dimension_numbers = #tpu.dot_dimension_numbers<[1], [0], [0], [1], [0, 0, 1, 1], [], []>} : vector<288x128xf32>, vector<128x128xf32>, vector<288x128xf32> -> vector<288x128xf32>
    %85 = arith.addf %80, %84 : vector<288x128xf32>
    %c19_83 = arith.constant 19 : index
    %c0_84 = arith.constant 0 : index
    %86 = vector.load %arg10[%c19_83, %c0_84] : memref<342x128xf32, #tpu.memory_space<vmem>>, vector<288x128xf32>
    %c4_85 = arith.constant 4 : index
    %c0_86 = arith.constant 0 : index
    %c0_87 = arith.constant 0 : index
    %87 = vector.load %arg3[%c4_85, %c0_86, %c0_87] : memref<9x128x128xf32, #tpu.memory_space<vmem>>, vector<1x128x128xf32>
    %88 = vector.shape_cast %87 : vector<1x128x128xf32> to vector<128x128xf32>
    %cst_88 = arith.constant dense<0.000000e+00> : vector<288x128xf32>
    %89 = tpu.matmul %86, %88, %cst_88 {dimension_numbers = #tpu.dot_dimension_numbers<[1], [0], [0], [1], [0, 0, 1, 1], [], []>} : vector<288x128xf32>, vector<128x128xf32>, vector<288x128xf32> -> vector<288x128xf32>
    %90 = arith.addf %85, %89 : vector<288x128xf32>
    %c20_89 = arith.constant 20 : index
    %c0_90 = arith.constant 0 : index
    %91 = vector.load %arg10[%c20_89, %c0_90] : memref<342x128xf32, #tpu.memory_space<vmem>>, vector<288x128xf32>
    %c5_91 = arith.constant 5 : index
    %c0_92 = arith.constant 0 : index
    %c0_93 = arith.constant 0 : index
    %92 = vector.load %arg3[%c5_91, %c0_92, %c0_93] : memref<9x128x128xf32, #tpu.memory_space<vmem>>, vector<1x128x128xf32>
    %93 = vector.shape_cast %92 : vector<1x128x128xf32> to vector<128x128xf32>
    %cst_94 = arith.constant dense<0.000000e+00> : vector<288x128xf32>
    %94 = tpu.matmul %91, %93, %cst_94 {dimension_numbers = #tpu.dot_dimension_numbers<[1], [0], [0], [1], [0, 0, 1, 1], [], []>} : vector<288x128xf32>, vector<128x128xf32>, vector<288x128xf32> -> vector<288x128xf32>
    %95 = arith.addf %90, %94 : vector<288x128xf32>
    %c36_95 = arith.constant 36 : index
    %c0_96 = arith.constant 0 : index
    %96 = vector.load %arg10[%c36_95, %c0_96] : memref<342x128xf32, #tpu.memory_space<vmem>>, vector<288x128xf32>
    %c6_97 = arith.constant 6 : index
    %c0_98 = arith.constant 0 : index
    %c0_99 = arith.constant 0 : index
    %97 = vector.load %arg3[%c6_97, %c0_98, %c0_99] : memref<9x128x128xf32, #tpu.memory_space<vmem>>, vector<1x128x128xf32>
    %98 = vector.shape_cast %97 : vector<1x128x128xf32> to vector<128x128xf32>
    %cst_100 = arith.constant dense<0.000000e+00> : vector<288x128xf32>
    %99 = tpu.matmul %96, %98, %cst_100 {dimension_numbers = #tpu.dot_dimension_numbers<[1], [0], [0], [1], [0, 0, 1, 1], [], []>} : vector<288x128xf32>, vector<128x128xf32>, vector<288x128xf32> -> vector<288x128xf32>
    %100 = arith.addf %95, %99 : vector<288x128xf32>
    %c37_101 = arith.constant 37 : index
    %c0_102 = arith.constant 0 : index
    %101 = vector.load %arg10[%c37_101, %c0_102] : memref<342x128xf32, #tpu.memory_space<vmem>>, vector<288x128xf32>
    %c7_103 = arith.constant 7 : index
    %c0_104 = arith.constant 0 : index
    %c0_105 = arith.constant 0 : index
    %102 = vector.load %arg3[%c7_103, %c0_104, %c0_105] : memref<9x128x128xf32, #tpu.memory_space<vmem>>, vector<1x128x128xf32>
    %103 = vector.shape_cast %102 : vector<1x128x128xf32> to vector<128x128xf32>
    %cst_106 = arith.constant dense<0.000000e+00> : vector<288x128xf32>
    %104 = tpu.matmul %101, %103, %cst_106 {dimension_numbers = #tpu.dot_dimension_numbers<[1], [0], [0], [1], [0, 0, 1, 1], [], []>} : vector<288x128xf32>, vector<128x128xf32>, vector<288x128xf32> -> vector<288x128xf32>
    %105 = arith.addf %100, %104 : vector<288x128xf32>
    %c38_107 = arith.constant 38 : index
    %c0_108 = arith.constant 0 : index
    %106 = vector.load %arg10[%c38_107, %c0_108] : memref<342x128xf32, #tpu.memory_space<vmem>>, vector<288x128xf32>
    %c8_109 = arith.constant 8 : index
    %c0_110 = arith.constant 0 : index
    %c0_111 = arith.constant 0 : index
    %107 = vector.load %arg3[%c8_109, %c0_110, %c0_111] : memref<9x128x128xf32, #tpu.memory_space<vmem>>, vector<1x128x128xf32>
    %108 = vector.shape_cast %107 : vector<1x128x128xf32> to vector<128x128xf32>
    %cst_112 = arith.constant dense<0.000000e+00> : vector<288x128xf32>
    %109 = tpu.matmul %106, %108, %cst_112 {dimension_numbers = #tpu.dot_dimension_numbers<[1], [0], [0], [1], [0, 0, 1, 1], [], []>} : vector<288x128xf32>, vector<128x128xf32>, vector<288x128xf32> -> vector<288x128xf32>
    %110 = arith.addf %105, %109 : vector<288x128xf32>
    %c0_113 = arith.constant 0 : index
    %c0_114 = arith.constant 0 : index
    %111 = vector.load %arg6[%c0_113, %c0_114] : memref<1x128xf32, #tpu.memory_space<vmem>>, vector<1x128xf32>
    %112 = vector.broadcast %111 : vector<1x128xf32> to vector<288x128xf32>
    %113 = arith.mulf %110, %112 : vector<288x128xf32>
    %c0_115 = arith.constant 0 : index
    %c0_116 = arith.constant 0 : index
    %114 = vector.load %arg7[%c0_115, %c0_116] : memref<1x128xf32, #tpu.memory_space<vmem>>, vector<1x128xf32>
    %115 = vector.broadcast %114 : vector<1x128xf32> to vector<288x128xf32>
    %116 = arith.addf %113, %115 : vector<288x128xf32>
    %c0_117 = arith.constant 0 : index
    %c19_118 = arith.constant 19 : index
    %c0_119 = arith.constant 0 : index
    %117 = vector.load %arg1[%c0_117, %c19_118, %c0_119] : memref<1x342x128xf32, #tpu.memory_space<vmem>>, vector<1x288x128xf32>
    %118 = vector.shape_cast %117 : vector<1x288x128xf32> to vector<288x128xf32>
    %119 = arith.addf %116, %118 : vector<288x128xf32>
    %c0_120 = arith.constant 0 : index
    %c0_121 = arith.constant 0 : index
    %c0_122 = arith.constant 0 : index
    %120 = vector.load %arg9[%c0_120, %c0_121, %c0_122] : memref<1x288x128xf32, #tpu.memory_space<vmem>>, vector<1x288x128xf32>
    %121 = vector.shape_cast %120 : vector<1x288x128xf32> to vector<288x128xf32>
    %122 = vector.shape_cast %119 : vector<288x128xf32> to vector<1x288x128xf32>
    tpu.vector_store %arg9[%c0_120, %c0_121, %c0_122], %122 {strides = array<i32>} : memref<1x288x128xf32, #tpu.memory_space<vmem>>, vector<1x288x128xf32>,
    return
  }
  func.func @transform_0(%arg0: i32) -> (i32, i32, i32) {
    %c0_i32 = arith.constant 0 : i32
    %c0_i32_0 = arith.constant 0 : i32
    %c0_i32_1 = arith.constant 0 : i32
    return %arg0, %c0_i32, %c0_i32_0 : i32, i32, i32
  }
  func.func @transform_1(%arg0: i32) -> (i32, i32, i32) {
    %c0_i32 = arith.constant 0 : i32
    %c0_i32_0 = arith.constant 0 : i32
    %c0_i32_1 = arith.constant 0 : i32
    %c0_i32_2 = arith.constant 0 : i32
    return %c0_i32, %c0_i32_0, %c0_i32_1 : i32, i32, i32
  }
  func.func @transform_2(%arg0: i32) -> (i32, i32, i32) {
    %c0_i32 = arith.constant 0 : i32
    %c0_i32_0 = arith.constant 0 : i32
    %c0_i32_1 = arith.constant 0 : i32
    %c0_i32_2 = arith.constant 0 : i32
    return %c0_i32, %c0_i32_0, %c0_i32_1 : i32, i32, i32
  }
  func.func @transform_3(%arg0: i32) -> (i32, i32) {
    %c0_i32 = arith.constant 0 : i32
    %c0_i32_0 = arith.constant 0 : i32
    %c0_i32_1 = arith.constant 0 : i32
    return %c0_i32, %c0_i32_0 : i32, i32
  }
  func.func @transform_4(%arg0: i32) -> (i32, i32) {
    %c0_i32 = arith.constant 0 : i32
    %c0_i32_0 = arith.constant 0 : i32
    %c0_i32_1 = arith.constant 0 : i32
    return %c0_i32, %c0_i32_0 : i32, i32
  }
  func.func @transform_5(%arg0: i32) -> (i32, i32) {
    %c0_i32 = arith.constant 0 : i32
    %c0_i32_0 = arith.constant 0 : i32
    %c0_i32_1 = arith.constant 0 : i32
    return %c0_i32, %c0_i32_0 : i32, i32
  }
  func.func @transform_6(%arg0: i32) -> (i32, i32) {
    %c0_i32 = arith.constant 0 : i32
    %c0_i32_0 = arith.constant 0 : i32
    %c0_i32_1 = arith.constant 0 : i32
    return %c0_i32, %c0_i32_0 : i32, i32
  }
  func.func @transform_7(%arg0: i32) -> (i32, i32) {
    %c0_i32 = arith.constant 0 : i32
    %c0_i32_0 = arith.constant 0 : i32
    %c0_i32_1 = arith.constant 0 : i32
    return %c0_i32, %c0_i32_0 : i32, i32
  }
  func.func @transform_8(%arg0: i32) -> (i32, i32, i32) {
    %c0_i32 = arith.constant 0 : i32
    %c0_i32_0 = arith.constant 0 : i32
    %c0_i32_1 = arith.constant 0 : i32
    return %arg0, %c0_i32, %c0_i32_0 : i32, i32, i32
  }
}

</mosaic_0001>

<llo_original>
// kernel: res_block_forward.1
$region0: #{res_block_forward.1}
  #allocation0 [shape = 'u32[]', space=smem, size = 0x4, offset = 0x4, fixed_abs, tag = 'smem constant byte address 0x4 - core index']
  #allocation1 [shape = 'u32[144,128]{1,0:T(1,128)}', space=vmem, size = 0x12000, scoped, tag = 'internal scratch']
  #allocation2 [shape = 'f32[342,128]{1,0:T(8,128)}', space=vmem, size = 0x2b000, scoped, tag = 'scratch operand']
  %s0 = inlined_call_operand.vmem [shape: f32[2,342,128], index: 0, kind: input, shape index: {}]
  %s1 = inlined_call_operand.vmem [shape: f32[9,128,128], index: 1, kind: input, shape index: {}]
  %s2 = inlined_call_operand.vmem [shape: f32[9,128,128], index: 2, kind: input, shape index: {}]
  %s3 = inlined_call_operand.vmem [shape: f32[1,128], index: 3, kind: input, shape index: {}]
  %s4 = inlined_call_operand.vmem [shape: f32[1,128], index: 4, kind: input, shape index: {}]
  %s5 = inlined_call_operand.vmem [shape: f32[1,128], index: 5, kind: input, shape index: {}]
  %s6 = inlined_call_operand.vmem [shape: f32[1,128], index: 6, kind: input, shape index: {}]
  %s7 = inlined_call_operand.vmem [shape: f32[288,1], index: 7, kind: input, shape index: {}]
  %s8 = inlined_call_operand.vmem [shape: f32[2,288,128], index: 8, kind: output, shape index: {}]
  %s9 = sld [smem:[#allocation0]]
  $region65: #{res_block_forward.1} parent=0
    _
  %s11 = ssub.s32 1, %s9
  %s12 = scalar_select 0, %s11, %s9
  loop: start=0, step=1, limit=4
  $region2: #{res_block_forward.1} parent=0 // loop_pre_header
    _
  $region3: #{res_block_forward.1} parent=0 // loop_header
    %s14 = sphi 0, %s18
    %p15 = scmp.ge.s32.totalorder %s14, 4
    %s24 = sphi 0, %s26
    %s27 = sphi 0, %s24
    %s28 = sphi 0, %s27
    %s44 = sphi 0, %s28
    %s48 = sphi 0, %s48
    %s50 = sphi 0, %s48
    %s51 = sphi 0, %s50
    %s65 = sphi 0, %s51
    %s69 = sphi 0, %s69
    %s71 = sphi 0, %s69
    %s72 = sphi 0, %s71
    %s86 = sphi 0, %s72
    %s90 = sphi 0, %s90
    %s92 = sphi 0, %s90
    %s93 = sphi 0, %s92
    %s107 = sphi 0, %s93
    %s111 = sphi 0, %s111
    %s113 = sphi 0, %s111
    %s114 = sphi 0, %s113
    %s128 = sphi 0, %s114
    %s132 = sphi 0, %s132
    %s134 = sphi 0, %s132
    %s135 = sphi 0, %s134
    %s149 = sphi 0, %s135
    %s153 = sphi 0, %s153
    %s155 = sphi 0, %s153
    %s156 = sphi 0, %s155
    %s170 = sphi 0, %s156
    %s174 = sphi 0, %s174
    %s176 = sphi 0, %s174
    %s177 = sphi 0, %s176
    %s191 = sphi 0, %s177
    %s197 = sphi 0, %s199
    %s200 = sphi 0, %s197
    %s201 = sphi 0, %s200
    %s217 = sphi 0, %s201
  $region4: #{res_block_forward.1} parent=0 // loop_header_branch
    %17 = sbr.rel (%p15) target = $region8
  $region5: #{res_block_forward.1} parent=0 // loop_body
    %s19 = ssub.s32 %s14, 1
    %s20 = ssub.s32 %s14, 2
    %s21 = sadd.s32 %s14, 1
    %s22 = ssub.s32 %s14, %s21
    %p23 = scmp.eq.s32.totalorder %s22, 0
    %s25 = sadd.s32 %s24, 1
    %s26 = scalar_select %p23, %s24, %s25
    %p29 = pneg %p23
    %p30 = scmp.eq.s32.totalorder %s14, 1
    %p31 = por %p29, %p30
    %p32 = scmp.ne.s32.totalorder %s24, %s27
    %p33 = scmp.eq.s32.totalorder %s14, 0
    %p34 = por %p32, %p33
    %p35 = scmp.ne.s32.totalorder %s24, %s27
    %p36 = scmp.eq.s32.totalorder %s19, 1
    %p37 = por %p35, %p36
    %p38 = scmp.ne.s32.totalorder %s27, %s28
    %p39 = scmp.eq.s32.totalorder %s19, 0
    %p40 = por %p38, %p39
    %p41 = scmp.ne.s32.totalorder %s27, %s28
    %p42 = scmp.eq.s32.totalorder %s20, 1
    %p43 = por %p41, %p42
    %p45 = scmp.ne.s32.totalorder %s28, %s44
    %p46 = scmp.eq.s32.totalorder %s20, 0
    %p47 = por %p45, %p46
    %s49 = sadd.s32 %s48, 1
    %p52 = scmp.eq.s32.totalorder %s14, 1
    %p53 = scmp.ne.s32.totalorder %s48, %s50
    %p54 = scmp.eq.s32.totalorder %s14, 0
    %p55 = por %p53, %p54
    %p56 = scmp.ne.s32.totalorder %s48, %s50
    %p57 = scmp.eq.s32.totalorder %s19, 1
    %p58 = por %p56, %p57
    %p59 = scmp.ne.s32.totalorder %s50, %s51
    %p60 = scmp.eq.s32.totalorder %s19, 0
    %p61 = por %p59, %p60
    %p62 = scmp.ne.s32.totalorder %s50, %s51
    %p63 = scmp.eq.s32.totalorder %s20, 1
    %p64 = por %p62, %p63
    %p66 = scmp.ne.s32.totalorder %s51, %s65
    %p67 = scmp.eq.s32.totalorder %s20, 0
    %p68 = por %p66, %p67
    %s70 = sadd.s32 %s69, 1
    %p73 = scmp.eq.s32.totalorder %s14, 1
    %p74 = scmp.ne.s32.totalorder %s69, %s71
    %p75 = scmp.eq.s32.totalorder %s14, 0
    %p76 = por %p74, %p75
    %p77 = scmp.ne.s32.totalorder %s69, %s71
    %p78 = scmp.eq.s32.totalorder %s19, 1
    %p79 = por %p77, %p78
    %p80 = scmp.ne.s32.totalorder %s71, %s72
    %p81 = scmp.eq.s32.totalorder %s19, 0
    %p82 = por %p80, %p81
    %p83 = scmp.ne.s32.totalorder %s71, %s72
    %p84 = scmp.eq.s32.totalorder %s20, 1
    %p85 = por %p83, %p84
    %p87 = scmp.ne.s32.totalorder %s72, %s86
    %p88 = scmp.eq.s32.totalorder %s20, 0
    %p89 = por %p87, %p88
    %s91 = sadd.s32 %s90, 1
    %p94 = scmp.eq.s32.totalorder %s14, 1
    %p95 = scmp.ne.s32.totalorder %s90, %s92
    %p96 = scmp.eq.s32.totalorder %s14, 0
    %p97 = por %p95, %p96
    %p98 = scmp.ne.s32.totalorder %s90, %s92
    %p99 = scmp.eq.s32.totalorder %s19, 1
    %p100 = por %p98, %p99
    %p101 = scmp.ne.s32.totalorder %s92, %s93
    %p102 = scmp.eq.s32.totalorder %s19, 0
    %p103 = por %p101, %p102
    %p104 = scmp.ne.s32.totalorder %s92, %s93
    %p105 = scmp.eq.s32.totalorder %s20, 1
    %p106 = por %p104, %p105
    %p108 = scmp.ne.s32.totalorder %s93, %s107
    %p109 = scmp.eq.s32.totalorder %s20, 0
    %p110 = por %p108, %p109
    %s112 = sadd.s32 %s111, 1
    %p115 = scmp.eq.s32.totalorder %s14, 1
    %p116 = scmp.ne.s32.totalorder %s111, %s113
    %p117 = scmp.eq.s32.totalorder %s14, 0
    %p118 = por %p116, %p117
    %p119 = scmp.ne.s32.totalorder %s111, %s113
    %p120 = scmp.eq.s32.totalorder %s19, 1
    %p121 = por %p119, %p120
    %p122 = scmp.ne.s32.totalorder %s113, %s114
    %p123 = scmp.eq.s32.totalorder %s19, 0
    %p124 = por %p122, %p123
    %p125 = scmp.ne.s32.totalorder %s113, %s114
    %p126 = scmp.eq.s32.totalorder %s20, 1
    %p127 = por %p125, %p126
    %p129 = scmp.ne.s32.totalorder %s114, %s128
    %p130 = scmp.eq.s32.totalorder %s20, 0
    %p131 = por %p129, %p130
    %s133 = sadd.s32 %s132, 1
    %p136 = scmp.eq.s32.totalorder %s14, 1
    %p137 = scmp.ne.s32.totalorder %s132, %s134
    %p138 = scmp.eq.s32.totalorder %s14, 0
    %p139 = por %p137, %p138
    %p140 = scmp.ne.s32.totalorder %s132, %s134
    %p141 = scmp.eq.s32.totalorder %s19, 1
    %p142 = por %p140, %p141
    %p143 = scmp.ne.s32.totalorder %s134, %s135
    %p144 = scmp.eq.s32.totalorder %s19, 0
    %p145 = por %p143, %p144
    %p146 = scmp.ne.s32.totalorder %s134, %s135
    %p147 = scmp.eq.s32.totalorder %s20, 1
    %p148 = por %p146, %p147
    %p150 = scmp.ne.s32.totalorder %s135, %s149
    %p151 = scmp.eq.s32.totalorder %s20, 0
    %p152 = por %p150, %p151
    %s154 = sadd.s32 %s153, 1
    %p157 = scmp.eq.s32.totalorder %s14, 1
    %p158 = scmp.ne.s32.totalorder %s153, %s155
    %p159 = scmp.eq.s32.totalorder %s14, 0
    %p160 = por %p158, %p159
    %p161 = scmp.ne.s32.totalorder %s153, %s155
    %p162 = scmp.eq.s32.totalorder %s19, 1
    %p163 = por %p161, %p162
    %p164 = scmp.ne.s32.totalorder %s155, %s156
    %p165 = scmp.eq.s32.totalorder %s19, 0
    %p166 = por %p164, %p165
    %p167 = scmp.ne.s32.totalorder %s155, %s156
    %p168 = scmp.eq.s32.totalorder %s20, 1
    %p169 = por %p167, %p168
    %p171 = scmp.ne.s32.totalorder %s156, %s170
    %p172 = scmp.eq.s32.totalorder %s20, 0
    %p173 = por %p171, %p172
    %s175 = sadd.s32 %s174, 1
    %p178 = scmp.eq.s32.totalorder %s14, 1
    %p179 = scmp.ne.s32.totalorder %s174, %s176
    %p180 = scmp.eq.s32.totalorder %s14, 0
    %p181 = por %p179, %p180
    %p182 = scmp.ne.s32.totalorder %s174, %s176
    %p183 = scmp.eq.s32.totalorder %s19, 1
    %p184 = por %p182, %p183
    %p185 = scmp.ne.s32.totalorder %s176, %s177
    %p186 = scmp.eq.s32.totalorder %s19, 0
    %p187 = por %p185, %p186
    %p188 = scmp.ne.s32.totalorder %s176, %s177
    %p189 = scmp.eq.s32.totalorder %s20, 1
    %p190 = por %p188, %p189
    %p192 = scmp.ne.s32.totalorder %s177, %s191
    %p193 = scmp.eq.s32.totalorder %s20, 0
    %p194 = por %p192, %p193
    %s195 = ssub.s32 %s14, %s21
    %p196 = scmp.eq.s32.totalorder %s195, 0
    %s198 = sadd.s32 %s197, 1
    %s199 = scalar_select %p196, %s197, %s198
    %p202 = pneg %p196
    %p203 = scmp.eq.s32.totalorder %s14, 1
    %p204 = por %p202, %p203
    %p205 = scmp.ne.s32.totalorder %s197, %s200
    %p206 = scmp.eq.s32.totalorder %s14, 0
    %p207 = por %p205, %p206
    %p208 = scmp.ne.s32.totalorder %s197, %s200
    %p209 = scmp.eq.s32.totalorder %s19, 1
    %p210 = por %p208, %p209
    %p211 = scmp.ne.s32.totalorder %s200, %s201
    %p212 = scmp.eq.s32.totalorder %s19, 0
    %p213 = por %p211, %p212
    %p214 = scmp.ne.s32.totalorder %s200, %s201
    %p215 = scmp.eq.s32.totalorder %s20, 1
    %p216 = por %p214, %p215
    %p218 = scmp.ne.s32.totalorder %s201, %s217
    %p219 = scmp.eq.s32.totalorder %s20, 0
    %p220 = por %p218, %p219
    %p221 = scmp.le.s32.totalorder 1, %s14
    %p222 = scmp.lt.s32.totalorder %s14, 3
    %p223 = pnand %p221, %p222
    %p224 = pneg %p223
    // Predicated region
    $region9: #{res_block_forward.1} parent=5 // pred_check
      _
    $region10: #{res_block_forward.1} parent=5 // pred_check_branch
      %226 = sbr.rel (%p223) target = $region12
    $region11: #{res_block_forward.1} parent=5 // pred_region
      %s227 = ssub.s32 %s14, 1
      // Predicated region
      $region13: #{res_block_forward.1} parent=11 // pred_check
        %p228 = pneg %p61
      $region14: #{res_block_forward.1} parent=11 // pred_check_branch
        %230 = sbr.rel (%p228) target = $region16
      $region15: #{res_block_forward.1} parent=11 // pred_region
        _
      $region16: #{res_block_forward.1} parent=11 // pred_fallthru
        _
      // Predicated region
      $region17: #{res_block_forward.1} parent=11 // pred_check
        %p231 = pneg %p82
      $region18: #{res_block_forward.1} parent=11 // pred_check_branch
        %233 = sbr.rel (%p231) target = $region20
      $region19: #{res_block_forward.1} parent=11 // pred_region
        _
      $region20: #{res_block_forward.1} parent=11 // pred_fallthru
        _
      // Predicated region
      $region21: #{res_block_forward.1} parent=11 // pred_check
        %p234 = pneg %p103
      $region22: #{res_block_forward.1} parent=11 // pred_check_branch
        %236 = sbr.rel (%p234) target = $region24
      $region23: #{res_block_forward.1} parent=11 // pred_region
        _
      $region24: #{res_block_forward.1} parent=11 // pred_fallthru
        _
      // Predicated region
      $region25: #{res_block_forward.1} parent=11 // pred_check
        %p237 = pneg %p124
      $region26: #{res_block_forward.1} parent=11 // pred_check_branch
        %239 = sbr.rel (%p237) target = $region28
      $region27: #{res_block_forward.1} parent=11 // pred_region
        _
      $region28: #{res_block_forward.1} parent=11 // pred_fallthru
        _
      // Predicated region
      $region29: #{res_block_forward.1} parent=11 // pred_check
        %p240 = pneg %p145
      $region30: #{res_block_forward.1} parent=11 // pred_check_branch
        %242 = sbr.rel (%p240) target = $region32
      $region31: #{res_block_forward.1} parent=11 // pred_region
        _
      $region32: #{res_block_forward.1} parent=11 // pred_fallthru
        _
      // Predicated region
      $region33: #{res_block_forward.1} parent=11 // pred_check
        %p243 = pneg %p166
      $region34: #{res_block_forward.1} parent=11 // pred_check_branch
        %245 = sbr.rel (%p243) target = $region36
      $region35: #{res_block_forward.1} parent=11 // pred_region
        _
      $region36: #{res_block_forward.1} parent=11 // pred_fallthru
        _
      // Predicated region
      $region37: #{res_block_forward.1} parent=11 // pred_check
        %p246 = pneg %p187
      $region38: #{res_block_forward.1} parent=11 // pred_check_branch
        %248 = sbr.rel (%p246) target = $region40
      $region39: #{res_block_forward.1} parent=11 // pred_region
        _
      $region40: #{res_block_forward.1} parent=11 // pred_fallthru
        _
    $region12: #{res_block_forward.1} parent=5 // pred_fallthru
      _
    %p249 = scmp.lt.s32.totalorder %s14, 2
    // Predicated region
    $region41: #{res_block_forward.1} parent=5 // pred_check
      %p250 = pneg %p249
    $region42: #{res_block_forward.1} parent=5 // pred_check_branch
      %252 = sbr.rel (%p250) target = $region44
    $region43: #{res_block_forward.1} parent=5 // pred_region
      // Predicated region
      $region45: #{res_block_forward.1} parent=43 // pred_check
        %p253 = pneg %p34
      $region46: #{res_block_forward.1} parent=43 // pred_check_branch
        %255 = sbr.rel (%p253) target = $region48
      $region47: #{res_block_forward.1} parent=43 // pred_region
        %p256 = scmp.lt.s32.totalorder %s14, 1
        %s257 = scalar_select %p256, %s14, 1
        %s258 = smul.addr %s257, 43
        %s259 = smul.addr %s258, 8
        %s260 = scalar_lea.vmem %s0, %s259
      $region48: #{res_block_forward.1} parent=43 // pred_fallthru
        _
    $region44: #{res_block_forward.1} parent=5 // pred_fallthru
      _
    %p261 = scmp.le.s32.totalorder 1, %s14
    %p262 = scmp.lt.s32.totalorder %s14, 3
    %p263 = pnand %p261, %p262
    %p264 = pneg %p263
    // Predicated region
    $region49: #{res_block_forward.1} parent=5 // pred_check
      _
    $region50: #{res_block_forward.1} parent=5 // pred_check_branch
      %266 = sbr.rel (%p263) target = $region52
    $region51: #{res_block_forward.1} parent=5 // pred_region
      %s267 = ssub.s32 %s14, 1
      %p268 = scmp.lt.s32.totalorder %s19, 1
      %s269 = scalar_select %p268, %s19, 1
      %s270 = smul.addr %s269, 43
      %s271 = smul.addr %s270, 8
      %s272 = scalar_lea.vmem %s0, %s271
      %p273 = pneg %p40
      %p274 = pneg %p37
      %p275 = pneg %p61
      %p276 = pneg %p58
      %p277 = pneg %p82
      %p278 = pneg %p79
      %p279 = pneg %p103
      %p280 = pneg %p100
      %p281 = pneg %p124
      %p282 = pneg %p121
      %p283 = pneg %p145
      %p284 = pneg %p142
      %p285 = pneg %p166
      %p286 = pneg %p163
      %p287 = pneg %p187
      %p288 = pneg %p184
      %p289 = pneg %p213
      %p290 = pneg %p210
      %p291 = scmp.lt.s32.totalorder %s19, 1
      %s292 = scalar_select %p291, %s19, 1
      %s293 = smul.addr %s292, 36
      %s294 = smul.addr %s293, 8
      %s295 = scalar_lea.vmem %s8, %s294
      %p296 = scmp.lt.s32.totalorder %s19, 1
      %s297 = scalar_select %p296, %s19, 1
      %s298 = smul.addr %s297, 43
      %s299 = smul.addr %s298, 8
      %s300 = scalar_lea.vmem %s0, %s299
      %p301 = scmp.lt.s32.totalorder %s19, 1
      %s302 = scalar_select %p301, %s19, 1
      %s303 = smul.addr %s302, 36
      %s304 = smul.addr %s303, 8
      %s305 = scalar_lea.vmem %s8, %s304
      %v306 = vld [vmem:[%s300] sm:$0xff]
      %v307 = vld [vmem:[%s300 + $0x8] sm:$0xff]
      %v308 = vld [vmem:[%s300 + $0x10] sm:$0xff]
      %v309 = vld [vmem:[%s300 + $0x18] sm:$0xff]
      %v310 = vld [vmem:[%s300 + $0x20] sm:$0xff]
      %v311 = vld [vmem:[%s300 + $0x28] sm:$0xff]
      %v312 = vld [vmem:[%s300 + $0x30] sm:$0xff]
      %v313 = vld [vmem:[%s300 + $0x38] sm:$0xff]
      %v314 = vld [vmem:[%s300 + $0x40] sm:$0xff]
      %v315 = vld [vmem:[%s300 + $0x48] sm:$0xff]
      %v316 = vld [vmem:[%s300 + $0x50] sm:$0xff]
      %v317 = vld [vmem:[%s300 + $0x58] sm:$0xff]
      %v318 = vld [vmem:[%s300 + $0x60] sm:$0xff]
      %v319 = vld [vmem:[%s300 + $0x68] sm:$0xff]
      %v320 = vld [vmem:[%s300 + $0x70] sm:$0xff]
      %v321 = vld [vmem:[%s300 + $0x78] sm:$0xff]
      %v322 = vld [vmem:[%s300 + $0x80] sm:$0xff]
      %v323 = vld [vmem:[%s300 + $0x88] sm:$0xff]
      %v324 = vld [vmem:[%s300 + $0x90] sm:$0xff]
      %v325 = vld [vmem:[%s300 + $0x98] sm:$0xff]
      %v326 = vld [vmem:[%s300 + $0xa0] sm:$0xff]
      %v327 = vld [vmem:[%s300 + $0xa8] sm:$0xff]
      %v328 = vld [vmem:[%s300 + $0xb0] sm:$0xff]
      %v329 = vld [vmem:[%s300 + $0xb8] sm:$0xff]
      %v330 = vld [vmem:[%s300 + $0xc0] sm:$0xff]
      %v331 = vld [vmem:[%s300 + $0xc8] sm:$0xff]
      %v332 = vld [vmem:[%s300 + $0xd0] sm:$0xff]
      %v333 = vld [vmem:[%s300 + $0xd8] sm:$0xff]
      %v334 = vld [vmem:[%s300 + $0xe0] sm:$0xff]
      %v335 = vld [vmem:[%s300 + $0xe8] sm:$0xff]
      %v336 = vld [vmem:[%s300 + $0xf0] sm:$0xff]
      %v337 = vld [vmem:[%s300 + $0xf8] sm:$0xff]
      %v338 = vld [vmem:[%s300 + $0x100] sm:$0xff]
      %v339 = vld [vmem:[%s300 + $0x108] sm:$0xff]
      %v340 = vld [vmem:[%s300 + $0x110] sm:$0xff]
      %v341 = vld [vmem:[%s300 + $0x118] sm:$0xff]
      %v342 = vld [vmem:[%s1] sm:$0xff]
      %v343 = vld [vmem:[%s1 + $0x8] sm:$0xff]
      %v344 = vld [vmem:[%s1 + $0x10] sm:$0xff]
      %v345 = vld [vmem:[%s1 + $0x18] sm:$0xff]
      %v346 = vld [vmem:[%s1 + $0x20] sm:$0xff]
      %v347 = vld [vmem:[%s1 + $0x28] sm:$0xff]
      %v348 = vld [vmem:[%s1 + $0x30] sm:$0xff]
      %v349 = vld [vmem:[%s1 + $0x38] sm:$0xff]
      %v350 = vld [vmem:[%s1 + $0x40] sm:$0xff]
      %v351 = vld [vmem:[%s1 + $0x48] sm:$0xff]
      %v352 = vld [vmem:[%s1 + $0x50] sm:$0xff]
      %v353 = vld [vmem:[%s1 + $0x58] sm:$0xff]
      %v354 = vld [vmem:[%s1 + $0x60] sm:$0xff]
      %v355 = vld [vmem:[%s1 + $0x68] sm:$0xff]
      %v356 = vld [vmem:[%s1 + $0x70] sm:$0xff]
      %v357 = vld [vmem:[%s1 + $0x78] sm:$0xff]
      %v358 = vld [vmem:[%s300 + $0x1] sm:$0xff]
      %v359 = vld [vmem:[%s300 + $0x9] sm:$0xff]
      %v360 = vld [vmem:[%s300 + $0x11] sm:$0xff]
      %v361 = vld [vmem:[%s300 + $0x19] sm:$0xff]
      %v362 = vld [vmem:[%s300 + $0x21] sm:$0xff]
      %v363 = vld [vmem:[%s300 + $0x29] sm:$0xff]
      %v364 = vld [vmem:[%s300 + $0x31] sm:$0xff]
      %v365 = vld [vmem:[%s300 + $0x39] sm:$0xff]
      %v366 = vld [vmem:[%s300 + $0x41] sm:$0xff]
      %v367 = vld [vmem:[%s300 + $0x49] sm:$0xff]
      %v368 = vld [vmem:[%s300 + $0x51] sm:$0xff]
      %v369 = vld [vmem:[%s300 + $0x59] sm:$0xff]
      %v370 = vld [vmem:[%s300 + $0x61] sm:$0xff]
      %v371 = vld [vmem:[%s300 + $0x69] sm:$0xff]
      %v372 = vld [vmem:[%s300 + $0x71] sm:$0xff]
      %v373 = vld [vmem:[%s300 + $0x79] sm:$0xff]
      %v374 = vld [vmem:[%s300 + $0x81] sm:$0xff]
      %v375 = vld [vmem:[%s300 + $0x89] sm:$0xff]
      %v376 = vld [vmem:[%s300 + $0x91] sm:$0xff]
      %v377 = vld [vmem:[%s300 + $0x99] sm:$0xff]
      %v378 = vld [vmem:[%s300 + $0xa1] sm:$0xff]
      %v379 = vld [vmem:[%s300 + $0xa9] sm:$0xff]
      %v380 = vld [vmem:[%s300 + $0xb1] sm:$0xff]
      %v381 = vld [vmem:[%s300 + $0xb9] sm:$0xff]
      %v382 = vld [vmem:[%s300 + $0xc1] sm:$0xff]
      %v383 = vld [vmem:[%s300 + $0xc9] sm:$0xff]
      %v384 = vld [vmem:[%s300 + $0xd1] sm:$0xff]
      %v385 = vld [vmem:[%s300 + $0xd9] sm:$0xff]
      %v386 = vld [vmem:[%s300 + $0xe1] sm:$0xff]
      %v387 = vld [vmem:[%s300 + $0xe9] sm:$0xff]
      %v388 = vld [vmem:[%s300 + $0xf1] sm:$0xff]
      %v389 = vld [vmem:[%s300 + $0xf9] sm:$0xff]
      %v390 = vld [vmem:[%s300 + $0x101] sm:$0xff]
      %v391 = vld [vmem:[%s300 + $0x109] sm:$0xff]
      %v392 = vld [vmem:[%s300 + $0x111] sm:$0xff]
      %v393 = vld [vmem:[%s300 + $0x119] sm:$0xff]
      %s394 = scalar_lea.vmem %s1, 128
      %v395 = vld [vmem:[%s394] sm:$0xff]
      %v396 = vld [vmem:[%s394 + $0x8] sm:$0xff]
      %v397 = vld [vmem:[%s394 + $0x10] sm:$0xff]
      %v398 = vld [vmem:[%s394 + $0x18] sm:$0xff]
      %v399 = vld [vmem:[%s394 + $0x20] sm:$0xff]
      %v400 = vld [vmem:[%s394 + $0x28] sm:$0xff]
      %v401 = vld [vmem:[%s394 + $0x30] sm:$0xff]
      %v402 = vld [vmem:[%s394 + $0x38] sm:$0xff]
      %v403 = vld [vmem:[%s394 + $0x40] sm:$0xff]
      %v404 = vld [vmem:[%s394 + $0x48] sm:$0xff]
      %v405 = vld [vmem:[%s394 + $0x50] sm:$0xff]
      %v406 = vld [vmem:[%s394 + $0x58] sm:$0xff]
      %v407 = vld [vmem:[%s394 + $0x60] sm:$0xff]
      %v408 = vld [vmem:[%s394 + $0x68] sm:$0xff]
      %v409 = vld [vmem:[%s394 + $0x70] sm:$0xff]
      %v410 = vld [vmem:[%s394 + $0x78] sm:$0xff]
      %411 = vmatprep.subr.mxu0 0.0
      %412 = vmatpush1.msra.mxu0 %v395
      %413 = vmatprep.subr.mxu0 0.0
      %414 = vmatpush1.msra.mxu0 %v396
      %415 = vmatprep.subr.mxu0 0.0
      %416 = vmatpush1.msra.mxu0 %v397
      %417 = vmatprep.subr.mxu0 0.0
      %418 = vmatpush1.msra.mxu0 %v398
      %419 = vmatprep.subr.mxu0 0.0
      %420 = vmatpush1.msra.mxu0 %v399
      %421 = vmatprep.subr.mxu0 0.0
      %422 = vmatpush1.msra.mxu0 %v400
      %423 = vmatprep.subr.mxu0 0.0
      %424 = vmatpush1.msra.mxu0 %v401
      %425 = vmatprep.subr.mxu0 0.0
      %426 = vmatpush1.msra.mxu0 %v402
      %427 = vmatprep.subr.mxu0 0.0
      %428 = vmatpush1.msra.mxu0 %v403
      %429 = vmatprep.subr.mxu0 0.0
      %430 = vmatpush1.msra.mxu0 %v404
      %431 = vmatprep.subr.mxu0 0.0
      %432 = vmatpush1.msra.mxu0 %v405
      %433 = vmatprep.subr.mxu0 0.0
      %434 = vmatpush1.msra.mxu0 %v406
      %435 = vmatprep.subr.mxu0 0.0
      %436 = vmatpush1.msra.mxu0 %v407
      %437 = vmatprep.subr.mxu0 0.0
      %438 = vmatpush1.msra.mxu0 %v408
      %439 = vmatprep.subr.mxu0 0.0
      %440 = vmatpush1.msra.mxu0 %v409
      %441 = vmatprep.subr.mxu0 0.0
      %442 = vmatpush1.msra.mxu0 %v410
      %443 = vmatprep.subr.mxu0 0.0
      %444 = vmatpush1.msra.mxu0 0.0
      %445 = vmatprep.subr.mxu0 0.0
      %446 = vmatpush1.msra.mxu0 0.0
      %447 = vmatprep.subr.mxu0 0.0
      %448 = vmatpush1.msra.mxu0 0.0
      %449 = vmatprep.subr.mxu0 0.0
      %450 = vmatpush1.msra.mxu0 0.0
      %451 = vmatprep.subr.mxu0 0.0
      %452 = vmatpush1.msra.mxu0 0.0
      %453 = vmatprep.subr.mxu0 0.0
      %454 = vmatpush1.msra.mxu0 0.0
      %455 = vmatprep.subr.mxu0 0.0
      %456 = vmatpush1.msra.mxu0 0.0
      %457 = vmatprep.subr.mxu0 0.0
      %458 = vmatpush1.msra.mxu0 0.0
      %459 = vmatprep.subr.mxu0 0.0
      %460 = vmatpush1.msra.mxu0 0.0
      %461 = vmatprep.subr.mxu0 0.0
      %462 = vmatpush1.msra.mxu0 0.0
      %463 = vmatprep.subr.mxu0 0.0
      %464 = vmatpush1.msra.mxu0 0.0
      %465 = vmatprep.subr.mxu0 0.0
      %466 = vmatpush1.msra.mxu0 0.0
      %467 = vmatprep.subr.mxu0 0.0
      %468 = vmatpush1.msra.mxu0 0.0
      %469 = vmatprep.subr.mxu0 0.0
      %470 = vmatpush1.msra.mxu0 0.0
      %471 = vmatprep.subr.mxu0 0.0
      %472 = vmatpush1.msra.mxu0 0.0
      %473 = vmatprep.subr.mxu0 0.0
      %474 = vmatpush1.msra.mxu0 0.0
      %475 = vmatprep.mubr.f32.mxu0 0.0
      %476 = vmatmul.mubr.f32.gmra.mrb[0].mxu0 %v358
      %v477 = vpop.f32.mrb[0].mxu0
      %v478 = vadd.f32 0.0, %v477
      %v479 = vpop.f32.mrb[0].mxu0
      %480 = vmatprep.mubr.f32.mxu0 0.0
      %481 = vmatmul.mubr.f32.gmra.mrb[0].mxu0 %v359
      %v482 = vpop.f32.mrb[0].mxu0
      %v483 = vadd.f32 0.0, %v482
      %v484 = vpop.f32.mrb[0].mxu0
      %485 = vmatprep.mubr.f32.mxu0 0.0
      %486 = vmatmul.mubr.f32.gmra.mrb[0].mxu0 %v360
      %v487 = vpop.f32.mrb[0].mxu0
      %v488 = vadd.f32 0.0, %v487
      %v489 = vpop.f32.mrb[0].mxu0
      %490 = vmatprep.mubr.f32.mxu0 0.0
      %491 = vmatmul.mubr.f32.gmra.mrb[0].mxu0 %v361
      %v492 = vpop.f32.mrb[0].mxu0
      %v493 = vadd.f32 0.0, %v492
      %v494 = vpop.f32.mrb[0].mxu0
      %495 = vmatprep.mubr.f32.mxu0 0.0
      %496 = vmatmul.mubr.f32.gmra.mrb[0].mxu0 %v362
      %v497 = vpop.f32.mrb[0].mxu0
      %v498 = vadd.f32 0.0, %v497
      %v499 = vpop.f32.mrb[0].mxu0
      %500 = vmatprep.mubr.f32.mxu0 0.0
      %501 = vmatmul.mubr.f32.gmra.mrb[0].mxu0 %v363
      %v502 = vpop.f32.mrb[0].mxu0
      %v503 = vadd.f32 0.0, %v502
      %v504 = vpop.f32.mrb[0].mxu0
      %505 = vmatprep.mubr.f32.mxu0 0.0
      %506 = vmatmul.mubr.f32.gmra.mrb[0].mxu0 %v364
      %v507 = vpop.f32.mrb[0].mxu0
      %v508 = vadd.f32 0.0, %v507
      %v509 = vpop.f32.mrb[0].mxu0
      %510 = vmatprep.mubr.f32.mxu0 0.0
      %511 = vmatmul.mubr.f32.gmra.mrb[0].mxu0 %v365
      %v512 = vpop.f32.mrb[0].mxu0
      %v513 = vadd.f32 0.0, %v512
      %v514 = vpop.f32.mrb[0].mxu0
      %515 = vmatprep.mubr.f32.mxu0 0.0
      %516 = vmatmul.mubr.f32.gmra.mrb[0].mxu0 %v366
      %v517 = vpop.f32.mrb[0].mxu0
      %v518 = vadd.f32 0.0, %v517
      %v519 = vpop.f32.mrb[0].mxu0
      %520 = vmatprep.mubr.f32.mxu0 0.0
      %521 = vmatmul.mubr.f32.gmra.mrb[0].mxu0 %v367
      %v522 = vpop.f32.mrb[0].mxu0
      %v523 = vadd.f32 0.0, %v522
      %v524 = vpop.f32.mrb[0].mxu0
      %525 = vmatprep.mubr.f32.mxu0 0.0
      %526 = vmatmul.mubr.f32.gmra.mrb[0].mxu0 %v368
      %v527 = vpop.f32.mrb[0].mxu0
      %v528 = vadd.f32 0.0, %v527
      %v529 = vpop.f32.mrb[0].mxu0
      %530 = vmatprep.mubr.f32.mxu0 0.0
      %531 = vmatmul.mubr.f32.gmra.mrb[0].mxu0 %v369
      %v532 = vpop.f32.mrb[0].mxu0
      %v533 = vadd.f32 0.0, %v532
      %v534 = vpop.f32.mrb[0].mxu0
      %535 = vmatprep.mubr.f32.mxu0 0.0
      %536 = vmatmul.mubr.f32.gmra.mrb[0].mxu0 %v370
      %v537 = vpop.f32.mrb[0].mxu0
      %v538 = vadd.f32 0.0, %v537
      %v539 = vpop.f32.mrb[0].mxu0
      %540 = vmatprep.mubr.f32.mxu0 0.0
      %541 = vmatmul.mubr.f32.gmra.mrb[0].mxu0 %v371
      %v542 = vpop.f32.mrb[0].mxu0
      %v543 = vadd.f32 0.0, %v542
      %v544 = vpop.f32.mrb[0].mxu0
      %545 = vmatprep.mubr.f32.mxu0 0.0
      %546 = vmatmul.mubr.f32.gmra.mrb[0].mxu0 %v372
      %v547 = vpop.f32.mrb[0].mxu0
      %v548 = vadd.f32 0.0, %v547
      %v549 = vpop.f32.mrb[0].mxu0
      %550 = vmatprep.mubr.f32.mxu0 0.0
      %551 = vmatmul.mubr.f32.gmra.mrb[0].mxu0 %v373
      %v552 = vpop.f32.mrb[0].mxu0
      %v553 = vadd.f32 0.0, %v552
      %v554 = vpop.f32.mrb[0].mxu0
      %555 = vmatprep.mubr.f32.mxu0 0.0
      %556 = vmatmul.mubr.f32.gmra.mrb[0].mxu0 %v374
      %v557 = vpop.f32.mrb[0].mxu0
      %v558 = vadd.f32 0.0, %v557
      %v559 = vpop.f32.mrb[0].mxu0
      %560 = vmatprep.mubr.f32.mxu0 0.0
      %561 = vmatmul.mubr.f32.gmra.mrb[0].mxu0 %v375
      %v562 = vpop.f32.mrb[0].mxu0
      %v563 = vadd.f32 0.0, %v562
      %v564 = vpop.f32.mrb[0].mxu0
      %565 = vmatprep.mubr.f32.mxu0 0.0
      %566 = vmatmul.mubr.f32.gmra.mrb[0].mxu0 %v376
      %v567 = vpop.f32.mrb[0].mxu0
      %v568 = vadd.f32 0.0, %v567
      %v569 = vpop.f32.mrb[0].mxu0
      %570 = vmatprep.mubr.f32.mxu0 0.0
      %571 = vmatmul.mubr.f32.gmra.mrb[0].mxu0 %v377
      %v572 = vpop.f32.mrb[0].mxu0
      %v573 = vadd.f32 0.0, %v572
      %v574 = vpop.f32.mrb[0].mxu0
      %575 = vmatprep.mubr.f32.mxu0 0.0
      %576 = vmatmul.mubr.f32.gmra.mrb[0].mxu0 %v378
      %v577 = vpop.f32.mrb[0].mxu0
      %v578 = vadd.f32 0.0, %v577
      %v579 = vpop.f32.mrb[0].mxu0
      %580 = vmatprep.mubr.f32.mxu0 0.0
      %581 = vmatmul.mubr.f32.gmra.mrb[0].mxu0 %v379
      %v582 = vpop.f32.mrb[0].mxu0
      %v583 = vadd.f32 0.0, %v582
      %v584 = vpop.f32.mrb[0].mxu0
      %585 = vmatprep.mubr.f32.mxu0 0.0
      %586 = vmatmul.mubr.f32.gmra.mrb[0].mxu0 %v380
      %v587 = vpop.f32.mrb[0].mxu0
      %v588 = vadd.f32 0.0, %v587
      %v589 = vpop.f32.mrb[0].mxu0
      %590 = vmatprep.mubr.f32.mxu0 0.0
      %591 = vmatmul.mubr.f32.gmra.mrb[0].mxu0 %v381
      %v592 = vpop.f32.mrb[0].mxu0
      %v593 = vadd.f32 0.0, %v592
      %v594 = vpop.f32.mrb[0].mxu0
      %595 = vmatprep.mubr.f32.mxu0 0.0
      %596 = vmatmul.mubr.f32.gmra.mrb[0].mxu0 %v382
      %v597 = vpop.f32.mrb[0].mxu0
      %v598 = vadd.f32 0.0, %v597
      %v599 = vpop.f32.mrb[0].mxu0
      %600 = vmatprep.mubr.f32.mxu0 0.0
      %601 = vmatmul.mubr.f32.gmra.mrb[0].mxu0 %v383
      %v602 = vpop.f32.mrb[0].mxu0
      %v603 = vadd.f32 0.0, %v602
      %v604 = vpop.f32.mrb[0].mxu0
      %605 = vmatprep.mubr.f32.mxu0 0.0
      %606 = vmatmul.mubr.f32.gmra.mrb[0].mxu0 %v384
      %v607 = vpop.f32.mrb[0].mxu0
      %v608 = vadd.f32 0.0, %v607
      %v609 = vpop.f32.mrb[0].mxu0
      %610 = vmatprep.mubr.f32.mxu0 0.0
      %611 = vmatmul.mubr.f32.gmra.mrb[0].mxu0 %v385
      %v612 = vpop.f32.mrb[0].mxu0
      %v613 = vadd.f32 0.0, %v612
      %v614 = vpop.f32.mrb[0].mxu0
      %615 = vmatprep.mubr.f32.mxu0 0.0
      %616 = vmatmul.mubr.f32.gmra.mrb[0].mxu0 %v386
      %v617 = vpop.f32.mrb[0].mxu0
      %v618 = vadd.f32 0.0, %v617
      %v619 = vpop.f32.mrb[0].mxu0
      %620 = vmatprep.mubr.f32.mxu0 0.0
      %621 = vmatmul.mubr.f32.gmra.mrb[0].mxu0 %v387
      %v622 = vpop.f32.mrb[0].mxu0
      %v623 = vadd.f32 0.0, %v622
      %v624 = vpop.f32.mrb[0].mxu0
      %625 = vmatprep.mubr.f32.mxu0 0.0
      %626 = vmatmul.mubr.f32.gmra.mrb[0].mxu0 %v388
      %v627 = vpop.f32.mrb[0].mxu0
      %v628 = vadd.f32 0.0, %v627
      %v629 = vpop.f32.mrb[0].mxu0
      %630 = vmatprep.mubr.f32.mxu0 0.0
      %631 = vmatmul.mubr.f32.gmra.mrb[0].mxu0 %v389
      %v632 = vpop.f32.mrb[0].mxu0
      %v633 = vadd.f32 0.0, %v632
      %v634 = vpop.f32.mrb[0].mxu0
      %635 = vmatprep.mubr.f32.mxu0 0.0
      %636 = vmatmul.mubr.f32.gmra.mrb[0].mxu0 %v390
      %v637 = vpop.f32.mrb[0].mxu0
      %v638 = vadd.f32 0.0, %v637
      %v639 = vpop.f32.mrb[0].mxu0
      %640 = vmatprep.mubr.f32.mxu0 0.0
      %641 = vmatmul.mubr.f32.gmra.mrb[0].mxu0 %v391
      %v642 = vpop.f32.mrb[0].mxu0
      %v643 = vadd.f32 0.0, %v642
      %v644 = vpop.f32.mrb[0].mxu0
      %645 = vmatprep.mubr.f32.mxu0 0.0
      %646 = vmatmul.mubr.f32.gmra.mrb[0].mxu0 %v392
      %v647 = vpop.f32.mrb[0].mxu0
      %v648 = vadd.f32 0.0, %v647
      %v649 = vpop.f32.mrb[0].mxu0
      %650 = vmatprep.mubr.f32.mxu0 0.0
      %651 = vmatmul.mubr.f32.gmra.mrb[0].mxu0 %v393
      %v652 = vpop.f32.mrb[0].mxu0
      %v653 = vadd.f32 0.0, %v652
      %v654 = vpop.f32.mrb[0].mxu0
      %655 = vdwg.mxu0
      %656 = vmatprep.subr.mxu0 0.0
      %657 = vmatpush1.msra.mxu0 %v342
      %658 = vmatprep.subr.mxu0 0.0
      %659 = vmatpush1.msra.mxu0 %v343
      %660 = vmatprep.subr.mxu0 0.0
      %661 = vmatpush1.msra.mxu0 %v344
      %662 = vmatprep.subr.mxu0 0.0
      %663 = vmatpush1.msra.mxu0 %v345
      %664 = vmatprep.subr.mxu0 0.0
      %665 = vmatpush1.msra.mxu0 %v346
      %666 = vmatprep.subr.mxu0 0.0
      %667 = vmatpush1.msra.mxu0 %v347
      %668 = vmatprep.subr.mxu0 0.0
      %669 = vmatpush1.msra.mxu0 %v348
      %670 = vmatprep.subr.mxu0 0.0
      %671 = vmatpush1.msra.mxu0 %v349
      %672 = vmatprep.subr.mxu0 0.0
      %673 = vmatpush1.msra.mxu0 %v350
      %674 = vmatprep.subr.mxu0 0.0
      %675 = vmatpush1.msra.mxu0 %v351
      %676 = vmatprep.subr.mxu0 0.0
      %677 = vmatpush1.msra.mxu0 %v352
      %678 = vmatprep.subr.mxu0 0.0
      %679 = vmatpush1.msra.mxu0 %v353
      %680 = vmatprep.subr.mxu0 0.0
      %681 = vmatpush1.msra.mxu0 %v354
      %682 = vmatprep.subr.mxu0 0.0
      %683 = vmatpush1.msra.mxu0 %v355
      %684 = vmatprep.subr.mxu0 0.0
      %685 = vmatpush1.msra.mxu0 %v356
      %686 = vmatprep.subr.mxu0 0.0
      %687 = vmatpush1.msra.mxu0 %v357
      %688 = vmatprep.subr.mxu0 0.0
      %689 = vmatpush1.msra.mxu0 0.0
      %690 = vmatprep.subr.mxu0 0.0
      %691 = vmatpush1.msra.mxu0 0.0
      %692 = vmatprep.subr.mxu0 0.0
      %693 = vmatpush1.msra.mxu0 0.0
      %694 = vmatprep.subr.mxu0 0.0
      %695 = vmatpush1.msra.mxu0 0.0
      %696 = vmatprep.subr.mxu0 0.0
      %697 = vmatpush1.msra.mxu0 0.0
      %698 = vmatprep.subr.mxu0 0.0
      %699 = vmatpush1.msra.mxu0 0.0
      %700 = vmatprep.subr.mxu0 0.0
      %701 = vmatpush1.msra.mxu0 0.0
      %702 = vmatprep.subr.mxu0 0.0
      %703 = vmatpush1.msra.mxu0 0.0
      %704 = vmatprep.subr.mxu0 0.0
      %705 = vmatpush1.msra.mxu0 0.0
      %706 = vmatprep.subr.mxu0 0.0
      %707 = vmatpush1.msra.mxu0 0.0
      %708 = vmatprep.subr.mxu0 0.0
      %709 = vmatpush1.msra.mxu0 0.0
      %710 = vmatprep.subr.mxu0 0.0
      %711 = vmatpush1.msra.mxu0 0.0
      %712 = vmatprep.subr.mxu0 0.0
      %713 = vmatpush1.msra.mxu0 0.0
      %714 = vmatprep.subr.mxu0 0.0
      %715 = vmatpush1.msra.mxu0 0.0
      %716 = vmatprep.subr.mxu0 0.0
      %717 = vmatpush1.msra.mxu0 0.0
      %718 = vmatprep.subr.mxu0 0.0
      %719 = vmatpush1.msra.mxu0 0.0
      %720 = vmatprep.mubr.f32.mxu0 0.0
      %721 = vmatmul.mubr.f32.gmra.mrb[0].mxu0 %v306
      %v722 = vpop.f32.mrb[0].mxu0
      %v723 = vadd.f32 %v478, %v722
      %v724 = vpop.f32.mrb[0].mxu0
      %725 = vmatprep.mubr.f32.mxu0 0.0
      %726 = vmatmul.mubr.f32.gmra.mrb[0].mxu0 %v307
      %v727 = vpop.f32.mrb[0].mxu0
      %v728 = vadd.f32 %v483, %v727
      %v729 = vpop.f32.mrb[0].mxu0
      %730 = vmatprep.mubr.f32.mxu0 0.0
      %731 = vmatmul.mubr.f32.gmra.mrb[0].mxu0 %v308
      %v732 = vpop.f32.mrb[0].mxu0
      %v733 = vadd.f32 %v488, %v732
      %v734 = vpop.f32.mrb[0].mxu0
      %735 = vmatprep.mubr.f32.mxu0 0.0
      %736 = vmatmul.mubr.f32.gmra.mrb[0].mxu0 %v309
      %v737 = vpop.f32.mrb[0].mxu0
      %v738 = vadd.f32 %v493, %v737
      %v739 = vpop.f32.mrb[0].mxu0
      %740 = vmatprep.mubr.f32.mxu0 0.0
      %741 = vmatmul.mubr.f32.gmra.mrb[0].mxu0 %v310
      %v742 = vpop.f32.mrb[0].mxu0
      %v743 = vadd.f32 %v498, %v742
      %v744 = vpop.f32.mrb[0].mxu0
      %745 = vmatprep.mubr.f32.mxu0 0.0
      %746 = vmatmul.mubr.f32.gmra.mrb[0].mxu0 %v311
      %v747 = vpop.f32.mrb[0].mxu0
      %v748 = vadd.f32 %v503, %v747
      %v749 = vpop.f32.mrb[0].mxu0
      %750 = vmatprep.mubr.f32.mxu0 0.0
      %751 = vmatmul.mubr.f32.gmra.mrb[0].mxu0 %v312
      %v752 = vpop.f32.mrb[0].mxu0
      %v753 = vadd.f32 %v508, %v752
      %v754 = vpop.f32.mrb[0].mxu0
      %755 = vmatprep.mubr.f32.mxu0 0.0
      %756 = vmatmul.mubr.f32.gmra.mrb[0].mxu0 %v313
      %v757 = vpop.f32.mrb[0].mxu0
      %v758 = vadd.f32 %v513, %v757
      %v759 = vpop.f32.mrb[0].mxu0
      %760 = vmatprep.mubr.f32.mxu0 0.0
      %761 = vmatmul.mubr.f32.gmra.mrb[0].mxu0 %v314
      %v762 = vpop.f32.mrb[0].mxu0
      %v763 = vadd.f32 %v518, %v762
      %v764 = vpop.f32.mrb[0].mxu0
      %765 = vmatprep.mubr.f32.mxu0 0.0
      %766 = vmatmul.mubr.f32.gmra.mrb[0].mxu0 %v315
      %v767 = vpop.f32.mrb[0].mxu0
      %v768 = vadd.f32 %v523, %v767
      %v769 = vpop.f32.mrb[0].mxu0
      %770 = vmatprep.mubr.f32.mxu0 0.0
      %771 = vmatmul.mubr.f32.gmra.mrb[0].mxu0 %v316
      %v772 = vpop.f32.mrb[0].mxu0
      %v773 = vadd.f32 %v528, %v772
      %v774 = vpop.f32.mrb[0].mxu0
      %775 = vmatprep.mubr.f32.mxu0 0.0
      %776 = vmatmul.mubr.f32.gmra.mrb[0].mxu0 %v317
      %v777 = vpop.f32.mrb[0].mxu0
      %v778 = vadd.f32 %v533, %v777
      %v779 = vpop.f32.mrb[0].mxu0
      %780 = vmatprep.mubr.f32.mxu0 0.0
      %781 = vmatmul.mubr.f32.gmra.mrb[0].mxu0 %v318
      %v782 = vpop.f32.mrb[0].mxu0
      %v783 = vadd.f32 %v538, %v782
      %v784 = vpop.f32.mrb[0].mxu0
      %785 = vmatprep.mubr.f32.mxu0 0.0
      %786 = vmatmul.mubr.f32.gmra.mrb[0].mxu0 %v319
      %v787 = vpop.f32.mrb[0].mxu0
      %v788 = vadd.f32 %v543, %v787
      %v789 = vpop.f32.mrb[0].mxu0
      %790 = vmatprep.mubr.f32.mxu0 0.0
      %791 = vmatmul.mubr.f32.gmra.mrb[0].mxu0 %v320
      %v792 = vpop.f32.mrb[0].mxu0
      %v793 = vadd.f32 %v548, %v792
      %v794 = vpop.f32.mrb[0].mxu0
      %795 = vmatprep.mubr.f32.mxu0 0.0
      %796 = vmatmul.mubr.f32.gmra.mrb[0].mxu0 %v321
      %v797 = vpop.f32.mrb[0].mxu0
      %v798 = vadd.f32 %v553, %v797
      %v799 = vpop.f32.mrb[0].mxu0
      %800 = vmatprep.mubr.f32.mxu0 0.0
      %801 = vmatmul.mubr.f32.gmra.mrb[0].mxu0 %v322
      %v802 = vpop.f32.mrb[0].mxu0
      %v803 = vadd.f32 %v558, %v802
      %v804 = vpop.f32.mrb[0].mxu0
      %805 = vmatprep.mubr.f32.mxu0 0.0
      %806 = vmatmul.mubr.f32.gmra.mrb[0].mxu0 %v323
      %v807 = vpop.f32.mrb[0].mxu0
      %v808 = vadd.f32 %v563, %v807
      %v809 = vpop.f32.mrb[0].mxu0
      %810 = vmatprep.mubr.f32.mxu0 0.0
      %811 = vmatmul.mubr.f32.gmra.mrb[0].mxu0 %v324
      %v812 = vpop.f32.mrb[0].mxu0
      %v813 = vadd.f32 %v568, %v812
      %v814 = vpop.f32.mrb[0].mxu0
      %815 = vmatprep.mubr.f32.mxu0 0.0
      %816 = vmatmul.mubr.f32.gmra.mrb[0].mxu0 %v325
      %v817 = vpop.f32.mrb[0].mxu0
      %v818 = vadd.f32 %v573, %v817
      %v819 = vpop.f32.mrb[0].mxu0
      %820 = vmatprep.mubr.f32.mxu0 0.0
      %821 = vmatmul.mubr.f32.gmra.mrb[0].mxu0 %v326
      %v822 = vpop.f32.mrb[0].mxu0
      %v823 = vadd.f32 %v578, %v822
      %v824 = vpop.f32.mrb[0].mxu0
      %825 = vmatprep.mubr.f32.mxu0 0.0
      %826 = vmatmul.mubr.f32.gmra.mrb[0].mxu0 %v327
      %v827 = vpop.f32.mrb[0].mxu0
      %v828 = vadd.f32 %v583, %v827
      %v829 = vpop.f32.mrb[0].mxu0
      %830 = vmatprep.mubr.f32.mxu0 0.0
      %831 = vmatmul.mubr.f32.gmra.mrb[0].mxu0 %v328
      %v832 = vpop.f32.mrb[0].mxu0
      %v833 = vadd.f32 %v588, %v832
      %v834 = vpop.f32.mrb[0].mxu0
      %835 = vmatprep.mubr.f32.mxu0 0.0
      %836 = vmatmul.mubr.f32.gmra.mrb[0].mxu0 %v329
      %v837 = vpop.f32.mrb[0].mxu0
      %v838 = vadd.f32 %v593, %v837
      %v839 = vpop.f32.mrb[0].mxu0
      %840 = vmatprep.mubr.f32.mxu0 0.0
      %841 = vmatmul.mubr.f32.gmra.mrb[0].mxu0 %v330
      %v842 = vpop.f32.mrb[0].mxu0
      %v843 = vadd.f32 %v598, %v842
      %v844 = vpop.f32.mrb[0].mxu0
      %845 = vmatprep.mubr.f32.mxu0 0.0
      %846 = vmatmul.mubr.f32.gmra.mrb[0].mxu0 %v331
      %v847 = vpop.f32.mrb[0].mxu0
      %v848 = vadd.f32 %v603, %v847
      %v849 = vpop.f32.mrb[0].mxu0
      %850 = vmatprep.mubr.f32.mxu0 0.0
      %851 = vmatmul.mubr.f32.gmra.mrb[0].mxu0 %v332
      %v852 = vpop.f32.mrb[0].mxu0
      %v853 = vadd.f32 %v608, %v852
      %v854 = vpop.f32.mrb[0].mxu0
      %855 = vmatprep.mubr.f32.mxu0 0.0
      %856 = vmatmul.mubr.f32.gmra.mrb[0].mxu0 %v333
      %v857 = vpop.f32.mrb[0].mxu0
      %v858 = vadd.f32 %v613, %v857
      %v859 = vpop.f32.mrb[0].mxu0
      %860 = vmatprep.mubr.f32.mxu0 0.0
      %861 = vmatmul.mubr.f32.gmra.mrb[0].mxu0 %v334
      %v862 = vpop.f32.mrb[0].mxu0
      %v863 = vadd.f32 %v618, %v862
      %v864 = vpop.f32.mrb[0].mxu0
      %865 = vmatprep.mubr.f32.mxu0 0.0
      %866 = vmatmul.mubr.f32.gmra.mrb[0].mxu0 %v335
      %v867 = vpop.f32.mrb[0].mxu0
      %v868 = vadd.f32 %v623, %v867
      %v869 = vpop.f32.mrb[0].mxu0
      %870 = vmatprep.mubr.f32.mxu0 0.0
      %871 = vmatmul.mubr.f32.gmra.mrb[0].mxu0 %v336
      %v872 = vpop.f32.mrb[0].mxu0
      %v873 = vadd.f32 %v628, %v872
      %v874 = vpop.f32.mrb[0].mxu0
      %875 = vmatprep.mubr.f32.mxu0 0.0
      %876 = vmatmul.mubr.f32.gmra.mrb[0].mxu0 %v337
      %v877 = vpop.f32.mrb[0].mxu0
      %v878 = vadd.f32 %v633, %v877
      %v879 = vpop.f32.mrb[0].mxu0
      %880 = vmatprep.mubr.f32.mxu0 0.0
      %881 = vmatmul.mubr.f32.gmra.mrb[0].mxu0 %v338
      %v882 = vpop.f32.mrb[0].mxu0
      %v883 = vadd.f32 %v638, %v882
      %v884 = vpop.f32.mrb[0].mxu0
      %885 = vmatprep.mubr.f32.mxu0 0.0
      %886 = vmatmul.mubr.f32.gmra.mrb[0].mxu0 %v339
      %v887 = vpop.f32.mrb[0].mxu0
      %v888 = vadd.f32 %v643, %v887
      %v889 = vpop.f32.mrb[0].mxu0
      %890 = vmatprep.mubr.f32.mxu0 0.0
      %891 = vmatmul.mubr.f32.gmra.mrb[0].mxu0 %v340
      %v892 = vpop.f32.mrb[0].mxu0
      %v893 = vadd.f32 %v648, %v892
      %v894 = vpop.f32.mrb[0].mxu0
      %895 = vmatprep.mubr.f32.mxu0 0.0
      %896 = vmatmul.mubr.f32.gmra.mrb[0].mxu0 %v341
      %v897 = vpop.f32.mrb[0].mxu0
      %v898 = vadd.f32 %v653, %v897
      %v899 = vpop.f32.mrb[0].mxu0
      %900 = vdwg.mxu0
      %v901 = vld [vmem:[%s300 + $0x2] sm:$0xff]
      %v902 = vld [vmem:[%s300 + $0xa] sm:$0xff]
      %v903 = vld [vmem:[%s300 + $0x12] sm:$0xff]
      %v904 = vld [vmem:[%s300 + $0x1a] sm:$0xff]
      %v905 = vld [vmem:[%s300 + $0x22] sm:$0xff]
      %v906 = vld [vmem:[%s300 + $0x2a] sm:$0xff]
      %v907 = vld [vmem:[%s300 + $0x32] sm:$0xff]
      %v908 = vld [vmem:[%s300 + $0x3a] sm:$0xff]
      %v909 = vld [vmem:[%s300 + $0x42] sm:$0xff]
      %v910 = vld [vmem:[%s300 + $0x4a] sm:$0xff]
      %v911 = vld [vmem:[%s300 + $0x52] sm:$0xff]
      %v912 = vld [vmem:[%s300 + $0x5a] sm:$0xff]
      %v913 = vld [vmem:[%s300 + $0x62] sm:$0xff]
      %v914 = vld [vmem:[%s300 + $0x6a] sm:$0xff]
      %v915 = vld [vmem:[%s300 + $0x72] sm:$0xff]
      %v916 = vld [vmem:[%s300 + $0x7a] sm:$0xff]
      %v917 = vld [vmem:[%s300 + $0x82] sm:$0xff]
      %v918 = vld [vmem:[%s300 + $0x8a] sm:$0xff]
      %v919 = vld [vmem:[%s300 + $0x92] sm:$0xff]
      %v920 = vld [vmem:[%s300 + $0x9a] sm:$0xff]
      %v921 = vld [vmem:[%s300 + $0xa2] sm:$0xff]
      %v922 = vld [vmem:[%s300 + $0xaa] sm:$0xff]
      %v923 = vld [vmem:[%s300 + $0xb2] sm:$0xff]
      %v924 = vld [vmem:[%s300 + $0xba] sm:$0xff]
      %v925 = vld [vmem:[%s300 + $0xc2] sm:$0xff]
      %v926 = vld [vmem:[%s300 + $0xca] sm:$0xff]
      %v927 = vld [vmem:[%s300 + $0xd2] sm:$0xff]
      %v928 = vld [vmem:[%s300 + $0xda] sm:$0xff]
      %v929 = vld [vmem:[%s300 + $0xe2] sm:$0xff]
      %v930 = vld [vmem:[%s300 + $0xea] sm:$0xff]
      %v931 = vld [vmem:[%s300 + $0xf2] sm:$0xff]
      %v932 = vld [vmem:[%s300 + $0xfa] sm:$0xff]
      %v933 = vld [vmem:[%s300 + $0x102] sm:$0xff]
      %v934 = vld [vmem:[%s300 + $0x10a] sm:$0xff]
      %v935 = vld [vmem:[%s300 + $0x112] sm:$0xff]
      %v936 = vld [vmem:[%s300 + $0x11a] sm:$0xff]
      %s937 = scalar_lea.vmem %s1, 256
      %v938 = vld [vmem:[%s937] sm:$0xff]
      %v939 = vld [vmem:[%s937 + $0x8] sm:$0xff]
      %v940 = vld [vmem:[%s937 + $0x10] sm:$0xff]
      %v941 = vld [vmem:[%s937 + $0x18] sm:$0xff]
      %v942 = vld [vmem:[%s937 + $0x20] sm:$0xff]
      %v943 = vld [vmem:[%s937 + $0x28] sm:$0xff]
      %v944 = vld [vmem:[%s937 + $0x30] sm:$0xff]
      %v945 = vld [vmem:[%s937 + $0x38] sm:$0xff]
      %v946 = vld [vmem:[%s937 + $0x40] sm:$0xff]
      %v947 = vld [vmem:[%s937 + $0x48] sm:$0xff]
      %v948 = vld [vmem:[%s937 + $0x50] sm:$0xff]
      %v949 = vld [vmem:[%s937 + $0x58] sm:$0xff]
      %v950 = vld [vmem:[%s937 + $0x60] sm:$0xff]
      %v951 = vld [vmem:[%s937 + $0x68] sm:$0xff]
      %v952 = vld [vmem:[%s937 + $0x70] sm:$0xff]
      %v953 = vld [vmem:[%s937 + $0x78] sm:$0xff]
      %954 = vmatprep.subr.mxu0 0.0
      %955 = vmatpush1.msra.mxu0 %v938
      %956 = vmatprep.subr.mxu0 0.0
      %957 = vmatpush1.msra.mxu0 %v939
      %958 = vmatprep.subr.mxu0 0.0
      %959 = vmatpush1.msra.mxu0 %v940
      %960 = vmatprep.subr.mxu0 0.0
      %961 = vmatpush1.msra.mxu0 %v941
      %962 = vmatprep.subr.mxu0 0.0
      %963 = vmatpush1.msra.mxu0 %v942
      %964 = vmatprep.subr.mxu0 0.0
      %965 = vmatpush1.msra.mxu0 %v943
      %966 = vmatprep.subr.mxu0 0.0
      %967 = vmatpush1.msra.mxu0 %v944
      %968 = vmatprep.subr.mxu0 0.0
      %969 = vmatpush1.msra.mxu0 %v945
      %970 = vmatprep.subr.mxu0 0.0
      %971 = vmatpush1.msra.mxu0 %v946
      %972 = vmatprep.subr.mxu0 0.0
      %973 = vmatpush1.msra.mxu0 %v947
      %974 = vmatprep.subr.mxu0 0.0
      %975 = vmatpush1.msra.mxu0 %v948
      %976 = vmatprep.subr.mxu0 0.0
      %977 = vmatpush1.msra.mxu0 %v949
      %978 = vmatprep.subr.mxu0 0.0
      %979 = vmatpush1.msra.mxu0 %v950
      %980 = vmatprep.subr.mxu0 0.0
      %981 = vmatpush1.msra.mxu0 %v951
      %982 = vmatprep.subr.mxu0 0.0
      %983 = vmatpush1.msra.mxu0 %v952
      %984 = vmatprep.subr.mxu0 0.0
      %985 = vmatpush1.msra.mxu0 %v953
      %986 = vmatprep.subr.mxu0 0.0
      %987 = vmatpush1.msra.mxu0 0.0
      %988 = vmatprep.subr.mxu0 0.0
      %989 = vmatpush1.msra.mxu0 0.0
      %990 = vmatprep.subr.mxu0 0.0
      %991 = vmatpush1.msra.mxu0 0.0
      %992 = vmatprep.subr.mxu0 0.0
      %993 = vmatpush1.msra.mxu0 0.0
      %994 = vmatprep.subr.mxu0 0.0
      %995 = vmatpush1.msra.mxu0 0.0
      %996 = vmatprep.subr.mxu0 0.0
      %997 = vmatpush1.msra.mxu0 0.0
      %998 = vmatprep.subr.mxu0 0.0
      %999 = vmatpush1.msra.mxu0 0.0
      %1000 = vmatprep.subr.mxu0 0.0
      %1001 = vmatpush1.msra.mxu0 0.0
      %1002 = vmatprep.subr.mxu0 0.0
      %1003 = vmatpush1.msra.mxu0 0.0
      %1004 = vmatprep.subr.mxu0 0.0
      %1005 = vmatpush1.msra.mxu0 0.0
      %1006 = vmatprep.subr.mxu0 0.0
      %1007 = vmatpush1.msra.mxu0 0.0
      %1008 = vmatprep.subr.mxu0 0.0
      %1009 = vmatpush1.msra.mxu0 0.0
      %1010 = vmatprep.subr.mxu0 0.0
      %1011 = vmatpush1.msra.mxu0 0.0
      %1012 = vmatprep.subr.mxu0 0.0
      %1013 = vmatpush1.msra.mxu0 0.0
      %1014 = vmatprep.subr.mxu0 0.0
      %1015 = vmatpush1.msra.mxu0 0.0
      %1016 = vmatprep.subr.mxu0 0.0
      %1017 = vmatpush1.msra.mxu0 0.0
      %1018 = vmatprep.mubr.f32.mxu0 0.0
      %1019 = vmatmul.mubr.f32.gmra.mrb[0].mxu0 %v901
      %v1020 = vpop.f32.mrb[0].mxu0
      %v1021 = vadd.f32 0.0, %v1020
      %v1022 = vpop.f32.mrb[0].mxu0
      %1023 = vmatprep.mubr.f32.mxu0 0.0
      %1024 = vmatmul.mubr.f32.gmra.mrb[0].mxu0 %v902
      %v1025 = vpop.f32.mrb[0].mxu0
      %v1026 = vadd.f32 0.0, %v1025
      %v1027 = vpop.f32.mrb[0].mxu0
      %1028 = vmatprep.mubr.f32.mxu0 0.0
      %1029 = vmatmul.mubr.f32.gmra.mrb[0].mxu0 %v903
      %v1030 = vpop.f32.mrb[0].mxu0
      %v1031 = vadd.f32 0.0, %v1030
      %v1032 = vpop.f32.mrb[0].mxu0
      %1033 = vmatprep.mubr.f32.mxu0 0.0
      %1034 = vmatmul.mubr.f32.gmra.mrb[0].mxu0 %v904
      %v1035 = vpop.f32.mrb[0].mxu0
      %v1036 = vadd.f32 0.0, %v1035
      %v1037 = vpop.f32.mrb[0].mxu0
      %1038 = vmatprep.mubr.f32.mxu0 0.0
      %1039 = vmatmul.mubr.f32.gmra.mrb[0].mxu0 %v905
      %v1040 = vpop.f32.mrb[0].mxu0
      %v1041 = vadd.f32 0.0, %v1040
      %v1042 = vpop.f32.mrb[0].mxu0
      %1043 = vmatprep.mubr.f32.mxu0 0.0
      %1044 = vmatmul.mubr.f32.gmra.mrb[0].mxu0 %v906
      %v1045 = vpop.f32.mrb[0].mxu0
      %v1046 = vadd.f32 0.0, %v1045
      %v1047 = vpop.f32.mrb[0].mxu0
      %1048 = vmatprep.mubr.f32.mxu0 0.0
      %1049 = vmatmul.mubr.f32.gmra.mrb[0].mxu0 %v907
      %v1050 = vpop.f32.mrb[0].mxu0
      %v1051 = vadd.f32 0.0, %v1050
      %v1052 = vpop.f32.mrb[0].mxu0
      %1053 = vmatprep.mubr.f32.mxu0 0.0
      %1054 = vmatmul.mubr.f32.gmra.mrb[0].mxu0 %v908
      %v1055 = vpop.f32.mrb[0].mxu0
      %v1056 = vadd.f32 0.0, %v1055
      %v1057 = vpop.f32.mrb[0].mxu0
      %1058 = vmatprep.mubr.f32.mxu0 0.0
      %1059 = vmatmul.mubr.f32.gmra.mrb[0].mxu0 %v909
      %v1060 = vpop.f32.mrb[0].mxu0
      %v1061 = vadd.f32 0.0, %v1060
      %v1062 = vpop.f32.mrb[0].mxu0
      %1063 = vmatprep.mubr.f32.mxu0 0.0
      %1064 = vmatmul.mubr.f32.gmra.mrb[0].mxu0 %v910
      %v1065 = vpop.f32.mrb[0].mxu0
      %v1066 = vadd.f32 0.0, %v1065
      %v1067 = vpop.f32.mrb[0].mxu0
      %1068 = vmatprep.mubr.f32.mxu0 0.0
      %1069 = vmatmul.mubr.f32.gmra.mrb[0].mxu0 %v911
      %v1070 = vpop.f32.mrb[0].mxu0
      %v1071 = vadd.f32 0.0, %v1070
      %v1072 = vpop.f32.mrb[0].mxu0
      %1073 = vmatprep.mubr.f32.mxu0 0.0
      %1074 = vmatmul.mubr.f32.gmra.mrb[0].mxu0 %v912
      %v1075 = vpop.f32.mrb[0].mxu0
      %v1076 = vadd.f32 0.0, %v1075
      %v1077 = vpop.f32.mrb[0].mxu0
      %1078 = vmatprep.mubr.f32.mxu0 0.0
      %1079 = vmatmul.mubr.f32.gmra.mrb[0].mxu0 %v913
      %v1080 = vpop.f32.mrb[0].mxu0
      %v1081 = vadd.f32 0.0, %v1080
      %v1082 = vpop.f32.mrb[0].mxu0
      %1083 = vmatprep.mubr.f32.mxu0 0.0
      %1084 = vmatmul.mubr.f32.gmra.mrb[0].mxu0 %v914
      %v1085 = vpop.f32.mrb[0].mxu0
      %v1086 = vadd.f32 0.0, %v1085
      %v1087 = vpop.f32.mrb[0].mxu0
      %1088 = vmatprep.mubr.f32.mxu0 0.0
      %1089 = vmatmul.mubr.f32.gmra.mrb[0].mxu0 %v915
      %v1090 = vpop.f32.mrb[0].mxu0
      %v1091 = vadd.f32 0.0, %v1090
      %v1092 = vpop.f32.mrb[0].mxu0
      %1093 = vmatprep.mubr.f32.mxu0 0.0
      %1094 = vmatmul.mubr.f32.gmra.mrb[0].mxu0 %v916
      %v1095 = vpop.f32.mrb[0].mxu0
      %v1096 = vadd.f32 0.0, %v1095
      %v1097 = vpop.f32.mrb[0].mxu0
      %1098 = vmatprep.mubr.f32.mxu0 0.0
      %1099 = vmatmul.mubr.f32.gmra.mrb[0].mxu0 %v917
      %v1100 = vpop.f32.mrb[0].mxu0
      %v1101 = vadd.f32 0.0, %v1100
      %v1102 = vpop.f32.mrb[0].mxu0
      %1103 = vmatprep.mubr.f32.mxu0 0.0
      %1104 = vmatmul.mubr.f32.gmra.mrb[0].mxu0 %v918
      %v1105 = vpop.f32.mrb[0].mxu0
      %v1106 = vadd.f32 0.0, %v1105
      %v1107 = vpop.f32.mrb[0].mxu0
      %1108 = vmatprep.mubr.f32.mxu0 0.0
      %1109 = vmatmul.mubr.f32.gmra.mrb[0].mxu0 %v919
      %v1110 = vpop.f32.mrb[0].mxu0
      %v1111 = vadd.f32 0.0, %v1110
      %v1112 = vpop.f32.mrb[0].mxu0
      %1113 = vmatprep.mubr.f32.mxu0 0.0
      %1114 = vmatmul.mubr.f32.gmra.mrb[0].mxu0 %v920
      %v1115 = vpop.f32.mrb[0].mxu0
      %v1116 = vadd.f32 0.0, %v1115
      %v1117 = vpop.f32.mrb[0].mxu0
      %1118 = vmatprep.mubr.f32.mxu0 0.0
      %1119 = vmatmul.mubr.f32.gmra.mrb[0].mxu0 %v921
      %v1120 = vpop.f32.mrb[0].mxu0
      %v1121 = vadd.f32 0.0, %v1120
      %v1122 = vpop.f32.mrb[0].mxu0
      %1123 = vmatprep.mubr.f32.mxu0 0.0
      %1124 = vmatmul.mubr.f32.gmra.mrb[0].mxu0 %v922
      %v1125 = vpop.f32.mrb[0].mxu0
      %v1126 = vadd.f32 0.0, %v1125
      %v1127 = vpop.f32.mrb[0].mxu0
      %1128 = vmatprep.mubr.f32.mxu0 0.0
      %1129 = vmatmul.mubr.f32.gmra.mrb[0].mxu0 %v923
      %v1130 = vpop.f32.mrb[0].mxu0
      %v1131 = vadd.f32 0.0, %v1130
      %v1132 = vpop.f32.mrb[0].mxu0
      %1133 = vmatprep.mubr.f32.mxu0 0.0
      %1134 = vmatmul.mubr.f32.gmra.mrb[0].mxu0 %v924
      %v1135 = vpop.f32.mrb[0].mxu0
      %v1136 = vadd.f32 0.0, %v1135
      %v1137 = vpop.f32.mrb[0].mxu0
      %1138 = vmatprep.mubr.f32.mxu0 0.0
      %1139 = vmatmul.mubr.f32.gmra.mrb[0].mxu0 %v925
      %v1140 = vpop.f32.mrb[0].mxu0
      %v1141 = vadd.f32 0.0, %v1140
      %v1142 = vpop.f32.mrb[0].mxu0
      %1143 = vmatprep.mubr.f32.mxu0 0.0
      %1144 = vmatmul.mubr.f32.gmra.mrb[0].mxu0 %v926
      %v1145 = vpop.f32.mrb[0].mxu0
      %v1146 = vadd.f32 0.0, %v1145
      %v1147 = vpop.f32.mrb[0].mxu0
      %1148 = vmatprep.mubr.f32.mxu0 0.0
      %1149 = vmatmul.mubr.f32.gmra.mrb[0].mxu0 %v927
      %v1150 = vpop.f32.mrb[0].mxu0
      %v1151 = vadd.f32 0.0, %v1150
      %v1152 = vpop.f32.mrb[0].mxu0
      %1153 = vmatprep.mubr.f32.mxu0 0.0
      %1154 = vmatmul.mubr.f32.gmra.mrb[0].mxu0 %v928
      %v1155 = vpop.f32.mrb[0].mxu0
      %v1156 = vadd.f32 0.0, %v1155
      %v1157 = vpop.f32.mrb[0].mxu0
      %1158 = vmatprep.mubr.f32.mxu0 0.0
      %1159 = vmatmul.mubr.f32.gmra.mrb[0].mxu0 %v929
      %v1160 = vpop.f32.mrb[0].mxu0
      %v1161 = vadd.f32 0.0, %v1160
      %v1162 = vpop.f32.mrb[0].mxu0
      %1163 = vmatprep.mubr.f32.mxu0 0.0
      %1164 = vmatmul.mubr.f32.gmra.mrb[0].mxu0 %v930
      %v1165 = vpop.f32.mrb[0].mxu0
      %v1166 = vadd.f32 0.0, %v1165
      %v1167 = vpop.f32.mrb[0].mxu0
      %1168 = vmatprep.mubr.f32.mxu0 0.0
      %1169 = vmatmul.mubr.f32.gmra.mrb[0].mxu0 %v931
      %v1170 = vpop.f32.mrb[0].mxu0
      %v1171 = vadd.f32 0.0, %v1170
      %v1172 = vpop.f32.mrb[0].mxu0
      %1173 = vmatprep.mubr.f32.mxu0 0.0
      %1174 = vmatmul.mubr.f32.gmra.mrb[0].mxu0 %v932
      %v1175 = vpop.f32.mrb[0].mxu0
      %v1176 = vadd.f32 0.0, %v1175
      %v1177 = vpop.f32.mrb[0].mxu0
      %1178 = vmatprep.mubr.f32.mxu0 0.0
      %1179 = vmatmul.mubr.f32.gmra.mrb[0].mxu0 %v933
      %v1180 = vpop.f32.mrb[0].mxu0
      %v1181 = vadd.f32 0.0, %v1180
      %v1182 = vpop.f32.mrb[0].mxu0
      %1183 = vmatprep.mubr.f32.mxu0 0.0
      %1184 = vmatmul.mubr.f32.gmra.mrb[0].mxu0 %v934
      %v1185 = vpop.f32.mrb[0].mxu0
      %v1186 = vadd.f32 0.0, %v1185
      %v1187 = vpop.f32.mrb[0].mxu0
      %1188 = vmatprep.mubr.f32.mxu0 0.0
      %1189 = vmatmul.mubr.f32.gmra.mrb[0].mxu0 %v935
      %v1190 = vpop.f32.mrb[0].mxu0
      %v1191 = vadd.f32 0.0, %v1190
      %v1192 = vpop.f32.mrb[0].mxu0
      %1193 = vmatprep.mubr.f32.mxu0 0.0
      %1194 = vmatmul.mubr.f32.gmra.mrb[0].mxu0 %v936
      %v1195 = vpop.f32.mrb[0].mxu0
      %v1196 = vadd.f32 0.0, %v1195
      %v1197 = vpop.f32.mrb[0].mxu0
      %1198 = vdwg.mxu0
      %v1199 = vadd.f32 %v723, %v1021
      %v1200 = vadd.f32 %v728, %v1026
      %v1201 = vadd.f32 %v733, %v1031
      %v1202 = vadd.f32 %v738, %v1036
      %v1203 = vadd.f32 %v743, %v1041
      %v1204 = vadd.f32 %v748, %v1046
      %v1205 = vadd.f32 %v753, %v1051
      %v1206 = vadd.f32 %v758, %v1056
      %v1207 = vadd.f32 %v763, %v1061
      %v1208 = vadd.f32 %v768, %v1066
      %v1209 = vadd.f32 %v773, %v1071
      %v1210 = vadd.f32 %v778, %v1076
      %v1211 = vadd.f32 %v783, %v1081
      %v1212 = vadd.f32 %v788, %v1086
      %v1213 = vadd.f32 %v793, %v1091
      %v1214 = vadd.f32 %v798, %v1096
      %v1215 = vadd.f32 %v803, %v1101
      %v1216 = vadd.f32 %v808, %v1106
      %v1217 = vadd.f32 %v813, %v1111
      %v1218 = vadd.f32 %v818, %v1116
      %v1219 = vadd.f32 %v823, %v1121
      %v1220 = vadd.f32 %v828, %v1126
      %v1221 = vadd.f32 %v833, %v1131
      %v1222 = vadd.f32 %v838, %v1136
      %v1223 = vadd.f32 %v843, %v1141
      %v1224 = vadd.f32 %v848, %v1146
      %v1225 = vadd.f32 %v853, %v1151
      %v1226 = vadd.f32 %v858, %v1156
      %v1227 = vadd.f32 %v863, %v1161
      %v1228 = vadd.f32 %v868, %v1166
      %v1229 = vadd.f32 %v873, %v1171
      %v1230 = vadd.f32 %v878, %v1176
      %v1231 = vadd.f32 %v883, %v1181
      %v1232 = vadd.f32 %v888, %v1186
      %v1233 = vadd.f32 %v893, %v1191
      %v1234 = vadd.f32 %v898, %v1196
      %v1235 = vld [vmem:[%s300 + $0x12] sm:$0xff]
      %v1236 = vld [vmem:[%s300 + $0x1a] sm:$0xff]
      %v1237 = vld [vmem:[%s300 + $0x22] sm:$0xff]
      %v1238 = vld [vmem:[%s300 + $0x2a] sm:$0xff]
      %v1239 = vld [vmem:[%s300 + $0x32] sm:$0xff]
      %v1240 = vld [vmem:[%s300 + $0x3a] sm:$0xff]
      %v1241 = vld [vmem:[%s300 + $0x42] sm:$0xff]
      %v1242 = vld [vmem:[%s300 + $0x4a] sm:$0xff]
      %v1243 = vld [vmem:[%s300 + $0x52] sm:$0xff]
      %v1244 = vld [vmem:[%s300 + $0x5a] sm:$0xff]
      %v1245 = vld [vmem:[%s300 + $0x62] sm:$0xff]
      %v1246 = vld [vmem:[%s300 + $0x6a] sm:$0xff]
      %v1247 = vld [vmem:[%s300 + $0x72] sm:$0xff]
      %v1248 = vld [vmem:[%s300 + $0x7a] sm:$0xff]
      %v1249 = vld [vmem:[%s300 + $0x82] sm:$0xff]
      %v1250 = vld [vmem:[%s300 + $0x8a] sm:$0xff]
      %v1251 = vld [vmem:[%s300 + $0x92] sm:$0xff]
      %v1252 = vld [vmem:[%s300 + $0x9a] sm:$0xff]
      %v1253 = vld [vmem:[%s300 + $0xa2] sm:$0xff]
      %v1254 = vld [vmem:[%s300 + $0xaa] sm:$0xff]
      %v1255 = vld [vmem:[%s300 + $0xb2] sm:$0xff]
      %v1256 = vld [vmem:[%s300 + $0xba] sm:$0xff]
      %v1257 = vld [vmem:[%s300 + $0xc2] sm:$0xff]
      %v1258 = vld [vmem:[%s300 + $0xca] sm:$0xff]
      %v1259 = vld [vmem:[%s300 + $0xd2] sm:$0xff]
      %v1260 = vld [vmem:[%s300 + $0xda] sm:$0xff]
      %v1261 = vld [vmem:[%s300 + $0xe2] sm:$0xff]
      %v1262 = vld [vmem:[%s300 + $0xea] sm:$0xff]
      %v1263 = vld [vmem:[%s300 + $0xf2] sm:$0xff]
      %v1264 = vld [vmem:[%s300 + $0xfa] sm:$0xff]
      %v1265 = vld [vmem:[%s300 + $0x102] sm:$0xff]
      %v1266 = vld [vmem:[%s300 + $0x10a] sm:$0xff]
      %v1267 = vld [vmem:[%s300 + $0x112] sm:$0xff]
      %v1268 = vld [vmem:[%s300 + $0x11a] sm:$0xff]
      %v1269 = vld [vmem:[%s300 + $0x122] sm:$0xff]
      %v1270 = vld [vmem:[%s300 + $0x12a] sm:$0xff]
      %s1271 = scalar_lea.vmem %s1, 384
      %v1272 = vld [vmem:[%s1271] sm:$0xff]
      %v1273 = vld [vmem:[%s1271 + $0x8] sm:$0xff]
      %v1274 = vld [vmem:[%s1271 + $0x10] sm:$0xff]
      %v1275 = vld [vmem:[%s1271 + $0x18] sm:$0xff]
      %v1276 = vld [vmem:[%s1271 + $0x20] sm:$0xff]
      %v1277 = vld [vmem:[%s1271 + $0x28] sm:$0xff]
      %v1278 = vld [vmem:[%s1271 + $0x30] sm:$0xff]
      %v1279 = vld [vmem:[%s1271 + $0x38] sm:$0xff]
      %v1280 = vld [vmem:[%s1271 + $0x40] sm:$0xff]
      %v1281 = vld [vmem:[%s1271 + $0x48] sm:$0xff]
      %v1282 = vld [vmem:[%s1271 + $0x50] sm:$0xff]
      %v1283 = vld [vmem:[%s1271 + $0x58] sm:$0xff]
      %v1284 = vld [vmem:[%s1271 + $0x60] sm:$0xff]
      %v1285 = vld [vmem:[%s1271 + $0x68] sm:$0xff]
      %v1286 = vld [vmem:[%s1271 + $0x70] sm:$0xff]
      %v1287 = vld [vmem:[%s1271 + $0x78] sm:$0xff]
      %1288 = vmatprep.subr.mxu0 0.0
      %1289 = vmatpush1.msra.mxu0 %v1272
      %1290 = vmatprep.subr.mxu0 0.0
      %1291 = vmatpush1.msra.mxu0 %v1273
      %1292 = vmatprep.subr.mxu0 0.0
      %1293 = vmatpush1.msra.mxu0 %v1274
      %1294 = vmatprep.subr.mxu0 0.0
      %1295 = vmatpush1.msra.mxu0 %v1275
      %1296 = vmatprep.subr.mxu0 0.0
      %1297 = vmatpush1.msra.mxu0 %v1276
      %1298 = vmatprep.subr.mxu0 0.0
      %1299 = vmatpush1.msra.mxu0 %v1277
      %1300 = vmatprep.subr.mxu0 0.0
      %1301 = vmatpush1.msra.mxu0 %v1278
      %1302 = vmatprep.subr.mxu0 0.0
      %1303 = vmatpush1.msra.mxu0 %v1279
      %1304 = vmatprep.subr.mxu0 0.0
      %1305 = vmatpush1.msra.mxu0 %v1280
      %1306 = vmatprep.subr.mxu0 0.0
      %1307 = vmatpush1.msra.mxu0 %v1281
      %1308 = vmatprep.subr.mxu0 0.0
      %1309 = vmatpush1.msra.mxu0 %v1282
      %1310 = vmatprep.subr.mxu0 0.0
      %1311 = vmatpush1.msra.mxu0 %v1283
      %1312 = vmatprep.subr.mxu0 0.0
      %1313 = vmatpush1.msra.mxu0 %v1284
      %1314 = vmatprep.subr.mxu0 0.0
      %1315 = vmatpush1.msra.mxu0 %v1285
      %1316 = vmatprep.subr.mxu0 0.0
      %1317 = vmatpush1.msra.mxu0 %v1286
      %1318 = vmatprep.subr.mxu0 0.0
      %1319 = vmatpush1.msra.mxu0 %v1287
      %1320 = vmatprep.subr.mxu0 0.0
      %1321 = vmatpush1.msra.mxu0 0.0
      %1322 = vmatprep.subr.mxu0 0.0
      %1323 = vmatpush1.msra.mxu0 0.0
      %1324 = vmatprep.subr.mxu0 0.0
      %1325 = vmatpush1.msra.mxu0 0.0
      %1326 = vmatprep.subr.mxu0 0.0
      %1327 = vmatpush1.msra.mxu0 0.0
      %1328 = vmatprep.subr.mxu0 0.0
      %1329 = vmatpush1.msra.mxu0 0.0
      %1330 = vmatprep.subr.mxu0 0.0
      %1331 = vmatpush1.msra.mxu0 0.0
      %1332 = vmatprep.subr.mxu0 0.0
      %1333 = vmatpush1.msra.mxu0 0.0
      %1334 = vmatprep.subr.mxu0 0.0
      %1335 = vmatpush1.msra.mxu0 0.0
      %1336 = vmatprep.subr.mxu0 0.0
      %1337 = vmatpush1.msra.mxu0 0.0
      %1338 = vmatprep.subr.mxu0 0.0
      %1339 = vmatpush1.msra.mxu0 0.0
      %1340 = vmatprep.subr.mxu0 0.0
      %1341 = vmatpush1.msra.mxu0 0.0
      %1342 = vmatprep.subr.mxu0 0.0
      %1343 = vmatpush1.msra.mxu0 0.0
      %1344 = vmatprep.subr.mxu0 0.0
      %1345 = vmatpush1.msra.mxu0 0.0
      %1346 = vmatprep.subr.mxu0 0.0
      %1347 = vmatpush1.msra.mxu0 0.0
      %1348 = vmatprep.subr.mxu0 0.0
      %1349 = vmatpush1.msra.mxu0 0.0
      %1350 = vmatprep.subr.mxu0 0.0
      %1351 = vmatpush1.msra.mxu0 0.0
      %1352 = vmatprep.mubr.f32.mxu0 0.0
      %1353 = vmatmul.mubr.f32.gmra.mrb[0].mxu0 %v1235
      %v1354 = vpop.f32.mrb[0].mxu0
      %v1355 = vadd.f32 0.0, %v1354
      %v1356 = vpop.f32.mrb[0].mxu0
      %1357 = vmatprep.mubr.f32.mxu0 0.0
      %1358 = vmatmul.mubr.f32.gmra.mrb[0].mxu0 %v1236
      %v1359 = vpop.f32.mrb[0].mxu0
      %v1360 = vadd.f32 0.0, %v1359
      %v1361 = vpop.f32.mrb[0].mxu0
      %1362 = vmatprep.mubr.f32.mxu0 0.0
      %1363 = vmatmul.mubr.f32.gmra.mrb[0].mxu0 %v1237
      %v1364 = vpop.f32.mrb[0].mxu0
      %v1365 = vadd.f32 0.0, %v1364
      %v1366 = vpop.f32.mrb[0].mxu0
      %1367 = vmatprep.mubr.f32.mxu0 0.0
      %1368 = vmatmul.mubr.f32.gmra.mrb[0].mxu0 %v1238
      %v1369 = vpop.f32.mrb[0].mxu0
      %v1370 = vadd.f32 0.0, %v1369
      %v1371 = vpop.f32.mrb[0].mxu0
      %1372 = vmatprep.mubr.f32.mxu0 0.0
      %1373 = vmatmul.mubr.f32.gmra.mrb[0].mxu0 %v1239
      %v1374 = vpop.f32.mrb[0].mxu0
      %v1375 = vadd.f32 0.0, %v1374
      %v1376 = vpop.f32.mrb[0].mxu0
      %1377 = vmatprep.mubr.f32.mxu0 0.0
      %1378 = vmatmul.mubr.f32.gmra.mrb[0].mxu0 %v1240
      %v1379 = vpop.f32.mrb[0].mxu0
      %v1380 = vadd.f32 0.0, %v1379
      %v1381 = vpop.f32.mrb[0].mxu0
      %1382 = vmatprep.mubr.f32.mxu0 0.0
      %1383 = vmatmul.mubr.f32.gmra.mrb[0].mxu0 %v1241
      %v1384 = vpop.f32.mrb[0].mxu0
      %v1385 = vadd.f32 0.0, %v1384
      %v1386 = vpop.f32.mrb[0].mxu0
      %1387 = vmatprep.mubr.f32.mxu0 0.0
      %1388 = vmatmul.mubr.f32.gmra.mrb[0].mxu0 %v1242
      %v1389 = vpop.f32.mrb[0].mxu0
      %v1390 = vadd.f32 0.0, %v1389
      %v1391 = vpop.f32.mrb[0].mxu0
      %1392 = vmatprep.mubr.f32.mxu0 0.0
      %1393 = vmatmul.mubr.f32.gmra.mrb[0].mxu0 %v1243
      %v1394 = vpop.f32.mrb[0].mxu0
      %v1395 = vadd.f32 0.0, %v1394
      %v1396 = vpop.f32.mrb[0].mxu0
      %1397 = vmatprep.mubr.f32.mxu0 0.0
      %1398 = vmatmul.mubr.f32.gmra.mrb[0].mxu0 %v1244
      %v1399 = vpop.f32.mrb[0].mxu0
      %v1400 = vadd.f32 0.0, %v1399
      %v1401 = vpop.f32.mrb[0].mxu0
      %1402 = vmatprep.mubr.f32.mxu0 0.0
      %1403 = vmatmul.mubr.f32.gmra.mrb[0].mxu0 %v1245
      %v1404 = vpop.f32.mrb[0].mxu0
      %v1405 = vadd.f32 0.0, %v1404
      %v1406 = vpop.f32.mrb[0].mxu0
      %1407 = vmatprep.mubr.f32.mxu0 0.0
      %1408 = vmatmul.mubr.f32.gmra.mrb[0].mxu0 %v1246
      %v1409 = vpop.f32.mrb[0].mxu0
      %v1410 = vadd.f32 0.0, %v1409
      %v1411 = vpop.f32.mrb[0].mxu0
      %1412 = vmatprep.mubr.f32.mxu0 0.0
      %1413 = vmatmul.mubr.f32.gmra.mrb[0].mxu0 %v1247
      %v1414 = vpop.f32.mrb[0].mxu0
      %v1415 = vadd.f32 0.0, %v1414
      %v1416 = vpop.f32.mrb[0].mxu0
      %1417 = vmatprep.mubr.f32.mxu0 0.0
      %1418 = vmatmul.mubr.f32.gmra.mrb[0].mxu0 %v1248
      %v1419 = vpop.f32.mrb[0].mxu0
      %v1420 = vadd.f32 0.0, %v1419
      %v1421 = vpop.f32.mrb[0].mxu0
      %1422 = vmatprep.mubr.f32.mxu0 0.0
      %1423 = vmatmul.mubr.f32.gmra.mrb[0].mxu0 %v1249
      %v1424 = vpop.f32.mrb[0].mxu0
      %v1425 = vadd.f32 0.0, %v1424
      %v1426 = vpop.f32.mrb[0].mxu0
      %1427 = vmatprep.mubr.f32.mxu0 0.0
      %1428 = vmatmul.mubr.f32.gmra.mrb[0].mxu0 %v1250
      %v1429 = vpop.f32.mrb[0].mxu0
      %v1430 = vadd.f32 0.0, %v1429
      %v1431 = vpop.f32.mrb[0].mxu0
      %1432 = vmatprep.mubr.f32.mxu0 0.0
      %1433 = vmatmul.mubr.f32.gmra.mrb[0].mxu0 %v1251
      %v1434 = vpop.f32.mrb[0].mxu0
      %v1435 = vadd.f32 0.0, %v1434
      %v1436 = vpop.f32.mrb[0].mxu0
      %1437 = vmatprep.mubr.f32.mxu0 0.0
      %1438 = vmatmul.mubr.f32.gmra.mrb[0].mxu0 %v1252
      %v1439 = vpop.f32.mrb[0].mxu0
      %v1440 = vadd.f32 0.0, %v1439
      %v1441 = vpop.f32.mrb[0].mxu0
      %1442 = vmatprep.mubr.f32.mxu0 0.0
      %1443 = vmatmul.mubr.f32.gmra.mrb[0].mxu0 %v1253
      %v1444 = vpop.f32.mrb[0].mxu0
      %v1445 = vadd.f32 0.0, %v1444
      %v1446 = vpop.f32.mrb[0].mxu0
      %1447 = vmatprep.mubr.f32.mxu0 0.0
      %1448 = vmatmul.mubr.f32.gmra.mrb[0].mxu0 %v1254
      %v1449 = vpop.f32.mrb[0].mxu0
      %v1450 = vadd.f32 0.0, %v1449
      %v1451 = vpop.f32.mrb[0].mxu0
      %1452 = vmatprep.mubr.f32.mxu0 0.0
      %1453 = vmatmul.mubr.f32.gmra.mrb[0].mxu0 %v1255
      %v1454 = vpop.f32.mrb[0].mxu0
      %v1455 = vadd.f32 0.0, %v1454
      %v1456 = vpop.f32.mrb[0].mxu0
      %1457 = vmatprep.mubr.f32.mxu0 0.0
      %1458 = vmatmul.mubr.f32.gmra.mrb[0].mxu0 %v1256
      %v1459 = vpop.f32.mrb[0].mxu0
      %v1460 = vadd.f32 0.0, %v1459
      %v1461 = vpop.f32.mrb[0].mxu0
      %1462 = vmatprep.mubr.f32.mxu0 0.0
      %1463 = vmatmul.mubr.f32.gmra.mrb[0].mxu0 %v1257
      %v1464 = vpop.f32.mrb[0].mxu0
      %v1465 = vadd.f32 0.0, %v1464
      %v1466 = vpop.f32.mrb[0].mxu0
      %1467 = vmatprep.mubr.f32.mxu0 0.0
      %1468 = vmatmul.mubr.f32.gmra.mrb[0].mxu0 %v1258
      %v1469 = vpop.f32.mrb[0].mxu0
      %v1470 = vadd.f32 0.0, %v1469
      %v1471 = vpop.f32.mrb[0].mxu0
      %1472 = vmatprep.mubr.f32.mxu0 0.0
      %1473 = vmatmul.mubr.f32.gmra.mrb[0].mxu0 %v1259
      %v1474 = vpop.f32.mrb[0].mxu0
      %v1475 = vadd.f32 0.0, %v1474
      %v1476 = vpop.f32.mrb[0].mxu0
      %1477 = vmatprep.mubr.f32.mxu0 0.0
      %1478 = vmatmul.mubr.f32.gmra.mrb[0].mxu0 %v1260
      %v1479 = vpop.f32.mrb[0].mxu0
      %v1480 = vadd.f32 0.0, %v1479
      %v1481 = vpop.f32.mrb[0].mxu0
      %1482 = vmatprep.mubr.f32.mxu0 0.0
      %1483 = vmatmul.mubr.f32.gmra.mrb[0].mxu0 %v1261
      %v1484 = vpop.f32.mrb[0].mxu0
      %v1485 = vadd.f32 0.0, %v1484
      %v1486 = vpop.f32.mrb[0].mxu0
      %1487 = vmatprep.mubr.f32.mxu0 0.0
      %1488 = vmatmul.mubr.f32.gmra.mrb[0].mxu0 %v1262
      %v1489 = vpop.f32.mrb[0].mxu0
      %v1490 = vadd.f32 0.0, %v1489
      %v1491 = vpop.f32.mrb[0].mxu0
      %1492 = vmatprep.mubr.f32.mxu0 0.0
      %1493 = vmatmul.mubr.f32.gmra.mrb[0].mxu0 %v1263
      %v1494 = vpop.f32.mrb[0].mxu0
      %v1495 = vadd.f32 0.0, %v1494
      %v1496 = vpop.f32.mrb[0].mxu0
      %1497 = vmatprep.mubr.f32.mxu0 0.0
      %1498 = vmatmul.mubr.f32.gmra.mrb[0].mxu0 %v1264
      %v1499 = vpop.f32.mrb[0].mxu0
      %v1500 = vadd.f32 0.0, %v1499
      %v1501 = vpop.f32.mrb[0].mxu0
      %1502 = vmatprep.mubr.f32.mxu0 0.0
      %1503 = vmatmul.mubr.f32.gmra.mrb[0].mxu0 %v1265
      %v1504 = vpop.f32.mrb[0].mxu0
      %v1505 = vadd.f32 0.0, %v1504
      %v1506 = vpop.f32.mrb[0].mxu0
      %1507 = vmatprep.mubr.f32.mxu0 0.0
      %1508 = vmatmul.mubr.f32.gmra.mrb[0].mxu0 %v1266
      %v1509 = vpop.f32.mrb[0].mxu0
      %v1510 = vadd.f32 0.0, %v1509
      %v1511 = vpop.f32.mrb[0].mxu0
      %1512 = vmatprep.mubr.f32.mxu0 0.0
      %1513 = vmatmul.mubr.f32.gmra.mrb[0].mxu0 %v1267
      %v1514 = vpop.f32.mrb[0].mxu0
      %v1515 = vadd.f32 0.0, %v1514
      %v1516 = vpop.f32.mrb[0].mxu0
      %1517 = vmatprep.mubr.f32.mxu0 0.0
      %1518 = vmatmul.mubr.f32.gmra.mrb[0].mxu0 %v1268
      %v1519 = vpop.f32.mrb[0].mxu0
      %v1520 = vadd.f32 0.0, %v1519
      %v1521 = vpop.f32.mrb[0].mxu0
      %1522 = vmatprep.mubr.f32.mxu0 0.0
      %1523 = vmatmul.mubr.f32.gmra.mrb[0].mxu0 %v1269
      %v1524 = vpop.f32.mrb[0].mxu0
      %v1525 = vadd.f32 0.0, %v1524
      %v1526 = vpop.f32.mrb[0].mxu0
      %1527 = vmatprep.mubr.f32.mxu0 0.0
      %1528 = vmatmul.mubr.f32.gmra.mrb[0].mxu0 %v1270
      %v1529 = vpop.f32.mrb[0].mxu0
      %v1530 = vadd.f32 0.0, %v1529
      %v1531 = vpop.f32.mrb[0].mxu0
      %1532 = vdwg.mxu0
      %v1533 = vadd.f32 %v1199, %v1355
      %v1534 = vadd.f32 %v1200, %v1360
      %v1535 = vadd.f32 %v1201, %v1365
      %v1536 = vadd.f32 %v1202, %v1370
      %v1537 = vadd.f32 %v1203, %v1375
      %v1538 = vadd.f32 %v1204, %v1380
      %v1539 = vadd.f32 %v1205, %v1385
      %v1540 = vadd.f32 %v1206, %v1390
      %v1541 = vadd.f32 %v1207, %v1395
      %v1542 = vadd.f32 %v1208, %v1400
      %v1543 = vadd.f32 %v1209, %v1405
      %v1544 = vadd.f32 %v1210, %v1410
      %v1545 = vadd.f32 %v1211, %v1415
      %v1546 = vadd.f32 %v1212, %v1420
      %v1547 = vadd.f32 %v1213, %v1425
      %v1548 = vadd.f32 %v1214, %v1430
      %v1549 = vadd.f32 %v1215, %v1435
      %v1550 = vadd.f32 %v1216, %v1440
      %v1551 = vadd.f32 %v1217, %v1445
      %v1552 = vadd.f32 %v1218, %v1450
      %v1553 = vadd.f32 %v1219, %v1455
      %v1554 = vadd.f32 %v1220, %v1460
      %v1555 = vadd.f32 %v1221, %v1465
      %v1556 = vadd.f32 %v1222, %v1470
      %v1557 = vadd.f32 %v1223, %v1475
      %v1558 = vadd.f32 %v1224, %v1480
      %v1559 = vadd.f32 %v1225, %v1485
      %v1560 = vadd.f32 %v1226, %v1490
      %v1561 = vadd.f32 %v1227, %v1495
      %v1562 = vadd.f32 %v1228, %v1500
      %v1563 = vadd.f32 %v1229, %v1505
      %v1564 = vadd.f32 %v1230, %v1510
      %v1565 = vadd.f32 %v1231, %v1515
      %v1566 = vadd.f32 %v1232, %v1520
      %v1567 = vadd.f32 %v1233, %v1525
      %v1568 = vadd.f32 %v1234, %v1530
      %v1569 = vld [vmem:[%s300 + $0x13] sm:$0xff]
      %v1570 = vld [vmem:[%s300 + $0x1b] sm:$0xff]
      %v1571 = vld [vmem:[%s300 + $0x23] sm:$0xff]
      %v1572 = vld [vmem:[%s300 + $0x2b] sm:$0xff]
      %v1573 = vld [vmem:[%s300 + $0x33] sm:$0xff]
      %v1574 = vld [vmem:[%s300 + $0x3b] sm:$0xff]
      %v1575 = vld [vmem:[%s300 + $0x43] sm:$0xff]
      %v1576 = vld [vmem:[%s300 + $0x4b] sm:$0xff]
      %v1577 = vld [vmem:[%s300 + $0x53] sm:$0xff]
      %v1578 = vld [vmem:[%s300 + $0x5b] sm:$0xff]
      %v1579 = vld [vmem:[%s300 + $0x63] sm:$0xff]
      %v1580 = vld [vmem:[%s300 + $0x6b] sm:$0xff]
      %v1581 = vld [vmem:[%s300 + $0x73] sm:$0xff]
      %v1582 = vld [vmem:[%s300 + $0x7b] sm:$0xff]
      %v1583 = vld [vmem:[%s300 + $0x83] sm:$0xff]
      %v1584 = vld [vmem:[%s300 + $0x8b] sm:$0xff]
      %v1585 = vld [vmem:[%s300 + $0x93] sm:$0xff]
      %v1586 = vld [vmem:[%s300 + $0x9b] sm:$0xff]
      %v1587 = vld [vmem:[%s300 + $0xa3] sm:$0xff]
      %v1588 = vld [vmem:[%s300 + $0xab] sm:$0xff]
      %v1589 = vld [vmem:[%s300 + $0xb3] sm:$0xff]
      %v1590 = vld [vmem:[%s300 + $0xbb] sm:$0xff]
      %v1591 = vld [vmem:[%s300 + $0xc3] sm:$0xff]
      %v1592 = vld [vmem:[%s300 + $0xcb] sm:$0xff]
      %v1593 = vld [vmem:[%s300 + $0xd3] sm:$0xff]
      %v1594 = vld [vmem:[%s300 + $0xdb] sm:$0xff]
      %v1595 = vld [vmem:[%s300 + $0xe3] sm:$0xff]
      %v1596 = vld [vmem:[%s300 + $0xeb] sm:$0xff]
      %v1597 = vld [vmem:[%s300 + $0xf3] sm:$0xff]
      %v1598 = vld [vmem:[%s300 + $0xfb] sm:$0xff]
      %v1599 = vld [vmem:[%s300 + $0x103] sm:$0xff]
      %v1600 = vld [vmem:[%s300 + $0x10b] sm:$0xff]
      %v1601 = vld [vmem:[%s300 + $0x113] sm:$0xff]
      %v1602 = vld [vmem:[%s300 + $0x11b] sm:$0xff]
      %v1603 = vld [vmem:[%s300 + $0x123] sm:$0xff]
      %v1604 = vld [vmem:[%s300 + $0x12b] sm:$0xff]
      %s1605 = scalar_lea.vmem %s1, 512
      %v1606 = vld [vmem:[%s1605] sm:$0xff]
      %v1607 = vld [vmem:[%s1605 + $0x8] sm:$0xff]
      %v1608 = vld [vmem:[%s1605 + $0x10] sm:$0xff]
      %v1609 = vld [vmem:[%s1605 + $0x18] sm:$0xff]
      %v1610 = vld [vmem:[%s1605 + $0x20] sm:$0xff]
      %v1611 = vld [vmem:[%s1605 + $0x28] sm:$0xff]
      %v1612 = vld [vmem:[%s1605 + $0x30] sm:$0xff]
      %v1613 = vld [vmem:[%s1605 + $0x38] sm:$0xff]
      %v1614 = vld [vmem:[%s1605 + $0x40] sm:$0xff]
      %v1615 = vld [vmem:[%s1605 + $0x48] sm:$0xff]
      %v1616 = vld [vmem:[%s1605 + $0x50] sm:$0xff]
      %v1617 = vld [vmem:[%s1605 + $0x58] sm:$0xff]
      %v1618 = vld [vmem:[%s1605 + $0x60] sm:$0xff]
      %v1619 = vld [vmem:[%s1605 + $0x68] sm:$0xff]
      %v1620 = vld [vmem:[%s1605 + $0x70] sm:$0xff]
      %v1621 = vld [vmem:[%s1605 + $0x78] sm:$0xff]
      %1622 = vmatprep.subr.mxu0 0.0
      %1623 = vmatpush1.msra.mxu0 %v1606
      %1624 = vmatprep.subr.mxu0 0.0
      %1625 = vmatpush1.msra.mxu0 %v1607
      %1626 = vmatprep.subr.mxu0 0.0
      %1627 = vmatpush1.msra.mxu0 %v1608
      %1628 = vmatprep.subr.mxu0 0.0
      %1629 = vmatpush1.msra.mxu0 %v1609
      %1630 = vmatprep.subr.mxu0 0.0
      %1631 = vmatpush1.msra.mxu0 %v1610
      %1632 = vmatprep.subr.mxu0 0.0
      %1633 = vmatpush1.msra.mxu0 %v1611
      %1634 = vmatprep.subr.mxu0 0.0
      %1635 = vmatpush1.msra.mxu0 %v1612
      %1636 = vmatprep.subr.mxu0 0.0
      %1637 = vmatpush1.msra.mxu0 %v1613
      %1638 = vmatprep.subr.mxu0 0.0
      %1639 = vmatpush1.msra.mxu0 %v1614
      %1640 = vmatprep.subr.mxu0 0.0
      %1641 = vmatpush1.msra.mxu0 %v1615
      %1642 = vmatprep.subr.mxu0 0.0
      %1643 = vmatpush1.msra.mxu0 %v1616
      %1644 = vmatprep.subr.mxu0 0.0
      %1645 = vmatpush1.msra.mxu0 %v1617
      %1646 = vmatprep.subr.mxu0 0.0
      %1647 = vmatpush1.msra.mxu0 %v1618
      %1648 = vmatprep.subr.mxu0 0.0
      %1649 = vmatpush1.msra.mxu0 %v1619
      %1650 = vmatprep.subr.mxu0 0.0
      %1651 = vmatpush1.msra.mxu0 %v1620
      %1652 = vmatprep.subr.mxu0 0.0
      %1653 = vmatpush1.msra.mxu0 %v1621
      %1654 = vmatprep.subr.mxu0 0.0
      %1655 = vmatpush1.msra.mxu0 0.0
      %1656 = vmatprep.subr.mxu0 0.0
      %1657 = vmatpush1.msra.mxu0 0.0
      %1658 = vmatprep.subr.mxu0 0.0
      %1659 = vmatpush1.msra.mxu0 0.0
      %1660 = vmatprep.subr.mxu0 0.0
      %1661 = vmatpush1.msra.mxu0 0.0
      %1662 = vmatprep.subr.mxu0 0.0
      %1663 = vmatpush1.msra.mxu0 0.0
      %1664 = vmatprep.subr.mxu0 0.0
      %1665 = vmatpush1.msra.mxu0 0.0
      %1666 = vmatprep.subr.mxu0 0.0
      %1667 = vmatpush1.msra.mxu0 0.0
      %1668 = vmatprep.subr.mxu0 0.0
      %1669 = vmatpush1.msra.mxu0 0.0
      %1670 = vmatprep.subr.mxu0 0.0
      %1671 = vmatpush1.msra.mxu0 0.0
      %1672 = vmatprep.subr.mxu0 0.0
      %1673 = vmatpush1.msra.mxu0 0.0
      %1674 = vmatprep.subr.mxu0 0.0
      %1675 = vmatpush1.msra.mxu0 0.0
      %1676 = vmatprep.subr.mxu0 0.0
      %1677 = vmatpush1.msra.mxu0 0.0
      %1678 = vmatprep.subr.mxu0 0.0
      %1679 = vmatpush1.msra.mxu0 0.0
      %1680 = vmatprep.subr.mxu0 0.0
      %1681 = vmatpush1.msra.mxu0 0.0
      %1682 = vmatprep.subr.mxu0 0.0
      %1683 = vmatpush1.msra.mxu0 0.0
      %1684 = vmatprep.subr.mxu0 0.0
      %1685 = vmatpush1.msra.mxu0 0.0
      %1686 = vmatprep.mubr.f32.mxu0 0.0
      %1687 = vmatmul.mubr.f32.gmra.mrb[0].mxu0 %v1569
      %v1688 = vpop.f32.mrb[0].mxu0
      %v1689 = vadd.f32 0.0, %v1688
      %v1690 = vpop.f32.mrb[0].mxu0
      %1691 = vmatprep.mubr.f32.mxu0 0.0
      %1692 = vmatmul.mubr.f32.gmra.mrb[0].mxu0 %v1570
      %v1693 = vpop.f32.mrb[0].mxu0
      %v1694 = vadd.f32 0.0, %v1693
      %v1695 = vpop.f32.mrb[0].mxu0
      %1696 = vmatprep.mubr.f32.mxu0 0.0
      %1697 = vmatmul.mubr.f32.gmra.mrb[0].mxu0 %v1571
      %v1698 = vpop.f32.mrb[0].mxu0
      %v1699 = vadd.f32 0.0, %v1698
      %v1700 = vpop.f32.mrb[0].mxu0
      %1701 = vmatprep.mubr.f32.mxu0 0.0
      %1702 = vmatmul.mubr.f32.gmra.mrb[0].mxu0 %v1572
      %v1703 = vpop.f32.mrb[0].mxu0
      %v1704 = vadd.f32 0.0, %v1703
      %v1705 = vpop.f32.mrb[0].mxu0
      %1706 = vmatprep.mubr.f32.mxu0 0.0
      %1707 = vmatmul.mubr.f32.gmra.mrb[0].mxu0 %v1573
      %v1708 = vpop.f32.mrb[0].mxu0
      %v1709 = vadd.f32 0.0, %v1708
      %v1710 = vpop.f32.mrb[0].mxu0
      %1711 = vmatprep.mubr.f32.mxu0 0.0
      %1712 = vmatmul.mubr.f32.gmra.mrb[0].mxu0 %v1574
      %v1713 = vpop.f32.mrb[0].mxu0
      %v1714 = vadd.f32 0.0, %v1713
      %v1715 = vpop.f32.mrb[0].mxu0
      %1716 = vmatprep.mubr.f32.mxu0 0.0
      %1717 = vmatmul.mubr.f32.gmra.mrb[0].mxu0 %v1575
      %v1718 = vpop.f32.mrb[0].mxu0
      %v1719 = vadd.f32 0.0, %v1718
      %v1720 = vpop.f32.mrb[0].mxu0
      %1721 = vmatprep.mubr.f32.mxu0 0.0
      %1722 = vmatmul.mubr.f32.gmra.mrb[0].mxu0 %v1576
      %v1723 = vpop.f32.mrb[0].mxu0
      %v1724 = vadd.f32 0.0, %v1723
      %v1725 = vpop.f32.mrb[0].mxu0
      %1726 = vmatprep.mubr.f32.mxu0 0.0
      %1727 = vmatmul.mubr.f32.gmra.mrb[0].mxu0 %v1577
      %v1728 = vpop.f32.mrb[0].mxu0
      %v1729 = vadd.f32 0.0, %v1728
      %v1730 = vpop.f32.mrb[0].mxu0
      %1731 = vmatprep.mubr.f32.mxu0 0.0
      %1732 = vmatmul.mubr.f32.gmra.mrb[0].mxu0 %v1578
      %v1733 = vpop.f32.mrb[0].mxu0
      %v1734 = vadd.f32 0.0, %v1733
      %v1735 = vpop.f32.mrb[0].mxu0
      %1736 = vmatprep.mubr.f32.mxu0 0.0
      %1737 = vmatmul.mubr.f32.gmra.mrb[0].mxu0 %v1579
      %v1738 = vpop.f32.mrb[0].mxu0
      %v1739 = vadd.f32 0.0, %v1738
      %v1740 = vpop.f32.mrb[0].mxu0
      %1741 = vmatprep.mubr.f32.mxu0 0.0
      %1742 = vmatmul.mubr.f32.gmra.mrb[0].mxu0 %v1580
      %v1743 = vpop.f32.mrb[0].mxu0
      %v1744 = vadd.f32 0.0, %v1743
      %v1745 = vpop.f32.mrb[0].mxu0
      %1746 = vmatprep.mubr.f32.mxu0 0.0
      %1747 = vmatmul.mubr.f32.gmra.mrb[0].mxu0 %v1581
      %v1748 = vpop.f32.mrb[0].mxu0
      %v1749 = vadd.f32 0.0, %v1748
      %v1750 = vpop.f32.mrb[0].mxu0
      %1751 = vmatprep.mubr.f32.mxu0 0.0
      %1752 = vmatmul.mubr.f32.gmra.mrb[0].mxu0 %v1582
      %v1753 = vpop.f32.mrb[0].mxu0
      %v1754 = vadd.f32 0.0, %v1753
      %v1755 = vpop.f32.mrb[0].mxu0
      %1756 = vmatprep.mubr.f32.mxu0 0.0
      %1757 = vmatmul.mubr.f32.gmra.mrb[0].mxu0 %v1583
      %v1758 = vpop.f32.mrb[0].mxu0
      %v1759 = vadd.f32 0.0, %v1758
      %v1760 = vpop.f32.mrb[0].mxu0
      %1761 = vmatprep.mubr.f32.mxu0 0.0
      %1762 = vmatmul.mubr.f32.gmra.mrb[0].mxu0 %v1584
      %v1763 = vpop.f32.mrb[0].mxu0
      %v1764 = vadd.f32 0.0, %v1763
      %v1765 = vpop.f32.mrb[0].mxu0
      %1766 = vmatprep.mubr.f32.mxu0 0.0
      %1767 = vmatmul.mubr.f32.gmra.mrb[0].mxu0 %v1585
      %v1768 = vpop.f32.mrb[0].mxu0
      %v1769 = vadd.f32 0.0, %v1768
      %v1770 = vpop.f32.mrb[0].mxu0
      %1771 = vmatprep.mubr.f32.mxu0 0.0
      %1772 = vmatmul.mubr.f32.gmra.mrb[0].mxu0 %v1586
      %v1773 = vpop.f32.mrb[0].mxu0
      %v1774 = vadd.f32 0.0, %v1773
      %v1775 = vpop.f32.mrb[0].mxu0
      %1776 = vmatprep.mubr.f32.mxu0 0.0
      %1777 = vmatmul.mubr.f32.gmra.mrb[0].mxu0 %v1587
      %v1778 = vpop.f32.mrb[0].mxu0
      %v1779 = vadd.f32 0.0, %v1778
      %v1780 = vpop.f32.mrb[0].mxu0
      %1781 = vmatprep.mubr.f32.mxu0 0.0
      %1782 = vmatmul.mubr.f32.gmra.mrb[0].mxu0 %v1588
      %v1783 = vpop.f32.mrb[0].mxu0
      %v1784 = vadd.f32 0.0, %v1783
      %v1785 = vpop.f32.mrb[0].mxu0
      %1786 = vmatprep.mubr.f32.mxu0 0.0
      %1787 = vmatmul.mubr.f32.gmra.mrb[0].mxu0 %v1589
      %v1788 = vpop.f32.mrb[0].mxu0
      %v1789 = vadd.f32 0.0, %v1788
      %v1790 = vpop.f32.mrb[0].mxu0
      %1791 = vmatprep.mubr.f32.mxu0 0.0
      %1792 = vmatmul.mubr.f32.gmra.mrb[0].mxu0 %v1590
      %v1793 = vpop.f32.mrb[0].mxu0
      %v1794 = vadd.f32 0.0, %v1793
      %v1795 = vpop.f32.mrb[0].mxu0
      %1796 = vmatprep.mubr.f32.mxu0 0.0
      %1797 = vmatmul.mubr.f32.gmra.mrb[0].mxu0 %v1591
      %v1798 = vpop.f32.mrb[0].mxu0
      %v1799 = vadd.f32 0.0, %v1798
      %v1800 = vpop.f32.mrb[0].mxu0
      %1801 = vmatprep.mubr.f32.mxu0 0.0
      %1802 = vmatmul.mubr.f32.gmra.mrb[0].mxu0 %v1592
      %v1803 = vpop.f32.mrb[0].mxu0
      %v1804 = vadd.f32 0.0, %v1803
      %v1805 = vpop.f32.mrb[0].mxu0
      %1806 = vmatprep.mubr.f32.mxu0 0.0
      %1807 = vmatmul.mubr.f32.gmra.mrb[0].mxu0 %v1593
      %v1808 = vpop.f32.mrb[0].mxu0
      %v1809 = vadd.f32 0.0, %v1808
      %v1810 = vpop.f32.mrb[0].mxu0
      %1811 = vmatprep.mubr.f32.mxu0 0.0
      %1812 = vmatmul.mubr.f32.gmra.mrb[0].mxu0 %v1594
      %v1813 = vpop.f32.mrb[0].mxu0
      %v1814 = vadd.f32 0.0, %v1813
      %v1815 = vpop.f32.mrb[0].mxu0
      %1816 = vmatprep.mubr.f32.mxu0 0.0
      %1817 = vmatmul.mubr.f32.gmra.mrb[0].mxu0 %v1595
      %v1818 = vpop.f32.mrb[0].mxu0
      %v1819 = vadd.f32 0.0, %v1818
      %v1820 = vpop.f32.mrb[0].mxu0
      %1821 = vmatprep.mubr.f32.mxu0 0.0
      %1822 = vmatmul.mubr.f32.gmra.mrb[0].mxu0 %v1596
      %v1823 = vpop.f32.mrb[0].mxu0
      %v1824 = vadd.f32 0.0, %v1823
      %v1825 = vpop.f32.mrb[0].mxu0
      %1826 = vmatprep.mubr.f32.mxu0 0.0
      %1827 = vmatmul.mubr.f32.gmra.mrb[0].mxu0 %v1597
      %v1828 = vpop.f32.mrb[0].mxu0
      %v1829 = vadd.f32 0.0, %v1828
      %v1830 = vpop.f32.mrb[0].mxu0
      %1831 = vmatprep.mubr.f32.mxu0 0.0
      %1832 = vmatmul.mubr.f32.gmra.mrb[0].mxu0 %v1598
      %v1833 = vpop.f32.mrb[0].mxu0
      %v1834 = vadd.f32 0.0, %v1833
      %v1835 = vpop.f32.mrb[0].mxu0
      %1836 = vmatprep.mubr.f32.mxu0 0.0
      %1837 = vmatmul.mubr.f32.gmra.mrb[0].mxu0 %v1599
      %v1838 = vpop.f32.mrb[0].mxu0
      %v1839 = vadd.f32 0.0, %v1838
      %v1840 = vpop.f32.mrb[0].mxu0
      %1841 = vmatprep.mubr.f32.mxu0 0.0
      %1842 = vmatmul.mubr.f32.gmra.mrb[0].mxu0 %v1600
      %v1843 = vpop.f32.mrb[0].mxu0
      %v1844 = vadd.f32 0.0, %v1843
      %v1845 = vpop.f32.mrb[0].mxu0
      %1846 = vmatprep.mubr.f32.mxu0 0.0
      %1847 = vmatmul.mubr.f32.gmra.mrb[0].mxu0 %v1601
      %v1848 = vpop.f32.mrb[0].mxu0
      %v1849 = vadd.f32 0.0, %v1848
      %v1850 = vpop.f32.mrb[0].mxu0
      %1851 = vmatprep.mubr.f32.mxu0 0.0
      %1852 = vmatmul.mubr.f32.gmra.mrb[0].mxu0 %v1602
      %v1853 = vpop.f32.mrb[0].mxu0
      %v1854 = vadd.f32 0.0, %v1853
      %v1855 = vpop.f32.mrb[0].mxu0
      %1856 = vmatprep.mubr.f32.mxu0 0.0
      %1857 = vmatmul.mubr.f32.gmra.mrb[0].mxu0 %v1603
      %v1858 = vpop.f32.mrb[0].mxu0
      %v1859 = vadd.f32 0.0, %v1858
      %v1860 = vpop.f32.mrb[0].mxu0
      %1861 = vmatprep.mubr.f32.mxu0 0.0
      %1862 = vmatmul.mubr.f32.gmra.mrb[0].mxu0 %v1604
      %v1863 = vpop.f32.mrb[0].mxu0
      %v1864 = vadd.f32 0.0, %v1863
      %v1865 = vpop.f32.mrb[0].mxu0
      %1866 = vdwg.mxu0
      %v1867 = vadd.f32 %v1533, %v1689
      %v1868 = vadd.f32 %v1534, %v1694
      %v1869 = vadd.f32 %v1535, %v1699
      %v1870 = vadd.f32 %v1536, %v1704
      %v1871 = vadd.f32 %v1537, %v1709
      %v1872 = vadd.f32 %v1538, %v1714
      %v1873 = vadd.f32 %v1539, %v1719
      %v1874 = vadd.f32 %v1540, %v1724
      %v1875 = vadd.f32 %v1541, %v1729
      %v1876 = vadd.f32 %v1542, %v1734
      %v1877 = vadd.f32 %v1543, %v1739
      %v1878 = vadd.f32 %v1544, %v1744
      %v1879 = vadd.f32 %v1545, %v1749
      %v1880 = vadd.f32 %v1546, %v1754
      %v1881 = vadd.f32 %v1547, %v1759
      %v1882 = vadd.f32 %v1548, %v1764
      %v1883 = vadd.f32 %v1549, %v1769
      %v1884 = vadd.f32 %v1550, %v1774
      %v1885 = vadd.f32 %v1551, %v1779
      %v1886 = vadd.f32 %v1552, %v1784
      %v1887 = vadd.f32 %v1553, %v1789
      %v1888 = vadd.f32 %v1554, %v1794
      %v1889 = vadd.f32 %v1555, %v1799
      %v1890 = vadd.f32 %v1556, %v1804
      %v1891 = vadd.f32 %v1557, %v1809
      %v1892 = vadd.f32 %v1558, %v1814
      %v1893 = vadd.f32 %v1559, %v1819
      %v1894 = vadd.f32 %v1560, %v1824
      %v1895 = vadd.f32 %v1561, %v1829
      %v1896 = vadd.f32 %v1562, %v1834
      %v1897 = vadd.f32 %v1563, %v1839
      %v1898 = vadd.f32 %v1564, %v1844
      %v1899 = vadd.f32 %v1565, %v1849
      %v1900 = vadd.f32 %v1566, %v1854
      %v1901 = vadd.f32 %v1567, %v1859
      %v1902 = vadd.f32 %v1568, %v1864
      %v1903 = vld [vmem:[%s300 + $0x14] sm:$0xff]
      %v1904 = vld [vmem:[%s300 + $0x1c] sm:$0xff]
      %v1905 = vld [vmem:[%s300 + $0x24] sm:$0xff]
      %v1906 = vld [vmem:[%s300 + $0x2c] sm:$0xff]
      %v1907 = vld [vmem:[%s300 + $0x34] sm:$0xff]
      %v1908 = vld [vmem:[%s300 + $0x3c] sm:$0xff]
      %v1909 = vld [vmem:[%s300 + $0x44] sm:$0xff]
      %v1910 = vld [vmem:[%s300 + $0x4c] sm:$0xff]
      %v1911 = vld [vmem:[%s300 + $0x54] sm:$0xff]
      %v1912 = vld [vmem:[%s300 + $0x5c] sm:$0xff]
      %v1913 = vld [vmem:[%s300 + $0x64] sm:$0xff]
      %v1914 = vld [vmem:[%s300 + $0x6c] sm:$0xff]
      %v1915 = vld [vmem:[%s300 + $0x74] sm:$0xff]
      %v1916 = vld [vmem:[%s300 + $0x7c] sm:$0xff]
      %v1917 = vld [vmem:[%s300 + $0x84] sm:$0xff]
      %v1918 = vld [vmem:[%s300 + $0x8c] sm:$0xff]
      %v1919 = vld [vmem:[%s300 + $0x94] sm:$0xff]
      %v1920 = vld [vmem:[%s300 + $0x9c] sm:$0xff]
      %v1921 = vld [vmem:[%s300 + $0xa4] sm:$0xff]
      %v1922 = vld [vmem:[%s300 + $0xac] sm:$0xff]
      %v1923 = vld [vmem:[%s300 + $0xb4] sm:$0xff]
      %v1924 = vld [vmem:[%s300 + $0xbc] sm:$0xff]
      %v1925 = vld [vmem:[%s300 + $0xc4] sm:$0xff]
      %v1926 = vld [vmem:[%s300 + $0xcc] sm:$0xff]
      %v1927 = vld [vmem:[%s300 + $0xd4] sm:$0xff]
      %v1928 = vld [vmem:[%s300 + $0xdc] sm:$0xff]
      %v1929 = vld [vmem:[%s300 + $0xe4] sm:$0xff]
      %v1930 = vld [vmem:[%s300 + $0xec] sm:$0xff]
      %v1931 = vld [vmem:[%s300 + $0xf4] sm:$0xff]
      %v1932 = vld [vmem:[%s300 + $0xfc] sm:$0xff]
      %v1933 = vld [vmem:[%s300 + $0x104] sm:$0xff]
      %v1934 = vld [vmem:[%s300 + $0x10c] sm:$0xff]
      %v1935 = vld [vmem:[%s300 + $0x114] sm:$0xff]
      %v1936 = vld [vmem:[%s300 + $0x11c] sm:$0xff]
      %v1937 = vld [vmem:[%s300 + $0x124] sm:$0xff]
      %v1938 = vld [vmem:[%s300 + $0x12c] sm:$0xff]
      %s1939 = scalar_lea.vmem %s1, 640
      %v1940 = vld [vmem:[%s1939] sm:$0xff]
      %v1941 = vld [vmem:[%s1939 + $0x8] sm:$0xff]
      %v1942 = vld [vmem:[%s1939 + $0x10] sm:$0xff]
      %v1943 = vld [vmem:[%s1939 + $0x18] sm:$0xff]
      %v1944 = vld [vmem:[%s1939 + $0x20] sm:$0xff]
      %v1945 = vld [vmem:[%s1939 + $0x28] sm:$0xff]
      %v1946 = vld [vmem:[%s1939 + $0x30] sm:$0xff]
      %v1947 = vld [vmem:[%s1939 + $0x38] sm:$0xff]
      %v1948 = vld [vmem:[%s1939 + $0x40] sm:$0xff]
      %v1949 = vld [vmem:[%s1939 + $0x48] sm:$0xff]
      %v1950 = vld [vmem:[%s1939 + $0x50] sm:$0xff]
      %v1951 = vld [vmem:[%s1939 + $0x58] sm:$0xff]
      %v1952 = vld [vmem:[%s1939 + $0x60] sm:$0xff]
      %v1953 = vld [vmem:[%s1939 + $0x68] sm:$0xff]
      %v1954 = vld [vmem:[%s1939 + $0x70] sm:$0xff]
      %v1955 = vld [vmem:[%s1939 + $0x78] sm:$0xff]
      %1956 = vmatprep.subr.mxu0 0.0
      %1957 = vmatpush1.msra.mxu0 %v1940
      %1958 = vmatprep.subr.mxu0 0.0
      %1959 = vmatpush1.msra.mxu0 %v1941
      %1960 = vmatprep.subr.mxu0 0.0
      %1961 = vmatpush1.msra.mxu0 %v1942
      %1962 = vmatprep.subr.mxu0 0.0
      %1963 = vmatpush1.msra.mxu0 %v1943
      %1964 = vmatprep.subr.mxu0 0.0
      %1965 = vmatpush1.msra.mxu0 %v1944
      %1966 = vmatprep.subr.mxu0 0.0
      %1967 = vmatpush1.msra.mxu0 %v1945
      %1968 = vmatprep.subr.mxu0 0.0
      %1969 = vmatpush1.msra.mxu0 %v1946
      %1970 = vmatprep.subr.mxu0 0.0
      %1971 = vmatpush1.msra.mxu0 %v1947
      %1972 = vmatprep.subr.mxu0 0.0
      %1973 = vmatpush1.msra.mxu0 %v1948
      %1974 = vmatprep.subr.mxu0 0.0
      %1975 = vmatpush1.msra.mxu0 %v1949
      %1976 = vmatprep.subr.mxu0 0.0
      %1977 = vmatpush1.msra.mxu0 %v1950
      %1978 = vmatprep.subr.mxu0 0.0
      %1979 = vmatpush1.msra.mxu0 %v1951
      %1980 = vmatprep.subr.mxu0 0.0
      %1981 = vmatpush1.msra.mxu0 %v1952
      %1982 = vmatprep.subr.mxu0 0.0
      %1983 = vmatpush1.msra.mxu0 %v1953
      %1984 = vmatprep.subr.mxu0 0.0
      %1985 = vmatpush1.msra.mxu0 %v1954
      %1986 = vmatprep.subr.mxu0 0.0
      %1987 = vmatpush1.msra.mxu0 %v1955
      %1988 = vmatprep.subr.mxu0 0.0
      %1989 = vmatpush1.msra.mxu0 0.0
      %1990 = vmatprep.subr.mxu0 0.0
      %1991 = vmatpush1.msra.mxu0 0.0
      %1992 = vmatprep.subr.mxu0 0.0
      %1993 = vmatpush1.msra.mxu0 0.0
      %1994 = vmatprep.subr.mxu0 0.0
      %1995 = vmatpush1.msra.mxu0 0.0
      %1996 = vmatprep.subr.mxu0 0.0
      %1997 = vmatpush1.msra.mxu0 0.0
      %1998 = vmatprep.subr.mxu0 0.0
      %1999 = vmatpush1.msra.mxu0 0.0
      %2000 = vmatprep.subr.mxu0 0.0
      %2001 = vmatpush1.msra.mxu0 0.0
      %2002 = vmatprep.subr.mxu0 0.0
      %2003 = vmatpush1.msra.mxu0 0.0
      %2004 = vmatprep.subr.mxu0 0.0
      %2005 = vmatpush1.msra.mxu0 0.0
      %2006 = vmatprep.subr.mxu0 0.0
      %2007 = vmatpush1.msra.mxu0 0.0
      %2008 = vmatprep.subr.mxu0 0.0
      %2009 = vmatpush1.msra.mxu0 0.0
      %2010 = vmatprep.subr.mxu0 0.0
      %2011 = vmatpush1.msra.mxu0 0.0
      %2012 = vmatprep.subr.mxu0 0.0
      %2013 = vmatpush1.msra.mxu0 0.0
      %2014 = vmatprep.subr.mxu0 0.0
      %2015 = vmatpush1.msra.mxu0 0.0
      %2016 = vmatprep.subr.mxu0 0.0
      %2017 = vmatpush1.msra.mxu0 0.0
      %2018 = vmatprep.subr.mxu0 0.0
      %2019 = vmatpush1.msra.mxu0 0.0
      %2020 = vmatprep.mubr.f32.mxu0 0.0
      %2021 = vmatmul.mubr.f32.gmra.mrb[0].mxu0 %v1903
      %v2022 = vpop.f32.mrb[0].mxu0
      %v2023 = vadd.f32 0.0, %v2022
      %v2024 = vpop.f32.mrb[0].mxu0
      %2025 = vmatprep.mubr.f32.mxu0 0.0
      %2026 = vmatmul.mubr.f32.gmra.mrb[0].mxu0 %v1904
      %v2027 = vpop.f32.mrb[0].mxu0
      %v2028 = vadd.f32 0.0, %v2027
      %v2029 = vpop.f32.mrb[0].mxu0
      %2030 = vmatprep.mubr.f32.mxu0 0.0
      %2031 = vmatmul.mubr.f32.gmra.mrb[0].mxu0 %v1905
      %v2032 = vpop.f32.mrb[0].mxu0
      %v2033 = vadd.f32 0.0, %v2032
      %v2034 = vpop.f32.mrb[0].mxu0
      %2035 = vmatprep.mubr.f32.mxu0 0.0
      %2036 = vmatmul.mubr.f32.gmra.mrb[0].mxu0 %v1906
      %v2037 = vpop.f32.mrb[0].mxu0
      %v2038 = vadd.f32 0.0, %v2037
      %v2039 = vpop.f32.mrb[0].mxu0
      %2040 = vmatprep.mubr.f32.mxu0 0.0
      %2041 = vmatmul.mubr.f32.gmra.mrb[0].mxu0 %v1907
      %v2042 = vpop.f32.mrb[0].mxu0
      %v2043 = vadd.f32 0.0, %v2042
      %v2044 = vpop.f32.mrb[0].mxu0
      %2045 = vmatprep.mubr.f32.mxu0 0.0
      %2046 = vmatmul.mubr.f32.gmra.mrb[0].mxu0 %v1908
      %v2047 = vpop.f32.mrb[0].mxu0
      %v2048 = vadd.f32 0.0, %v2047
      %v2049 = vpop.f32.mrb[0].mxu0
      %2050 = vmatprep.mubr.f32.mxu0 0.0
      %2051 = vmatmul.mubr.f32.gmra.mrb[0].mxu0 %v1909
      %v2052 = vpop.f32.mrb[0].mxu0
      %v2053 = vadd.f32 0.0, %v2052
      %v2054 = vpop.f32.mrb[0].mxu0
      %2055 = vmatprep.mubr.f32.mxu0 0.0
      %2056 = vmatmul.mubr.f32.gmra.mrb[0].mxu0 %v1910
      %v2057 = vpop.f32.mrb[0].mxu0
      %v2058 = vadd.f32 0.0, %v2057
      %v2059 = vpop.f32.mrb[0].mxu0
      %2060 = vmatprep.mubr.f32.mxu0 0.0
      %2061 = vmatmul.mubr.f32.gmra.mrb[0].mxu0 %v1911
      %v2062 = vpop.f32.mrb[0].mxu0
      %v2063 = vadd.f32 0.0, %v2062
      %v2064 = vpop.f32.mrb[0].mxu0
      %2065 = vmatprep.mubr.f32.mxu0 0.0
      %2066 = vmatmul.mubr.f32.gmra.mrb[0].mxu0 %v1912
      %v2067 = vpop.f32.mrb[0].mxu0
      %v2068 = vadd.f32 0.0, %v2067
      %v2069 = vpop.f32.mrb[0].mxu0
      %2070 = vmatprep.mubr.f32.mxu0 0.0
      %2071 = vmatmul.mubr.f32.gmra.mrb[0].mxu0 %v1913
      %v2072 = vpop.f32.mrb[0].mxu0
      %v2073 = vadd.f32 0.0, %v2072
      %v2074 = vpop.f32.mrb[0].mxu0
      %2075 = vmatprep.mubr.f32.mxu0 0.0
      %2076 = vmatmul.mubr.f32.gmra.mrb[0].mxu0 %v1914
      %v2077 = vpop.f32.mrb[0].mxu0
      %v2078 = vadd.f32 0.0, %v2077
      %v2079 = vpop.f32.mrb[0].mxu0
      %2080 = vmatprep.mubr.f32.mxu0 0.0
      %2081 = vmatmul.mubr.f32.gmra.mrb[0].mxu0 %v1915
      %v2082 = vpop.f32.mrb[0].mxu0
      %v2083 = vadd.f32 0.0, %v2082
      %v2084 = vpop.f32.mrb[0].mxu0
      %2085 = vmatprep.mubr.f32.mxu0 0.0
      %2086 = vmatmul.mubr.f32.gmra.mrb[0].mxu0 %v1916
      %v2087 = vpop.f32.mrb[0].mxu0
      %v2088 = vadd.f32 0.0, %v2087
      %v2089 = vpop.f32.mrb[0].mxu0
      %2090 = vmatprep.mubr.f32.mxu0 0.0
      %2091 = vmatmul.mubr.f32.gmra.mrb[0].mxu0 %v1917
      %v2092 = vpop.f32.mrb[0].mxu0
      %v2093 = vadd.f32 0.0, %v2092
      %v2094 = vpop.f32.mrb[0].mxu0
      %2095 = vmatprep.mubr.f32.mxu0 0.0
      %2096 = vmatmul.mubr.f32.gmra.mrb[0].mxu0 %v1918
      %v2097 = vpop.f32.mrb[0].mxu0
      %v2098 = vadd.f32 0.0, %v2097
      %v2099 = vpop.f32.mrb[0].mxu0
      %2100 = vmatprep.mubr.f32.mxu0 0.0
      %2101 = vmatmul.mubr.f32.gmra.mrb[0].mxu0 %v1919
      %v2102 = vpop.f32.mrb[0].mxu0
      %v2103 = vadd.f32 0.0, %v2102
      %v2104 = vpop.f32.mrb[0].mxu0
      %2105 = vmatprep.mubr.f32.mxu0 0.0
      %2106 = vmatmul.mubr.f32.gmra.mrb[0].mxu0 %v1920
      %v2107 = vpop.f32.mrb[0].mxu0
      %v2108 = vadd.f32 0.0, %v2107
      %v2109 = vpop.f32.mrb[0].mxu0
      %2110 = vmatprep.mubr.f32.mxu0 0.0
      %2111 = vmatmul.mubr.f32.gmra.mrb[0].mxu0 %v1921
      %v2112 = vpop.f32.mrb[0].mxu0
      %v2113 = vadd.f32 0.0, %v2112
      %v2114 = vpop.f32.mrb[0].mxu0
      %2115 = vmatprep.mubr.f32.mxu0 0.0
      %2116 = vmatmul.mubr.f32.gmra.mrb[0].mxu0 %v1922
      %v2117 = vpop.f32.mrb[0].mxu0
      %v2118 = vadd.f32 0.0, %v2117
      %v2119 = vpop.f32.mrb[0].mxu0
      %2120 = vmatprep.mubr.f32.mxu0 0.0
      %2121 = vmatmul.mubr.f32.gmra.mrb[0].mxu0 %v1923
      %v2122 = vpop.f32.mrb[0].mxu0
      %v2123 = vadd.f32 0.0, %v2122
      %v2124 = vpop.f32.mrb[0].mxu0
      %2125 = vmatprep.mubr.f32.mxu0 0.0
      %2126 = vmatmul.mubr.f32.gmra.mrb[0].mxu0 %v1924
      %v2127 = vpop.f32.mrb[0].mxu0
      %v2128 = vadd.f32 0.0, %v2127
      %v2129 = vpop.f32.mrb[0].mxu0
      %2130 = vmatprep.mubr.f32.mxu0 0.0
      %2131 = vmatmul.mubr.f32.gmra.mrb[0].mxu0 %v1925
      %v2132 = vpop.f32.mrb[0].mxu0
      %v2133 = vadd.f32 0.0, %v2132
      %v2134 = vpop.f32.mrb[0].mxu0
      %2135 = vmatprep.mubr.f32.mxu0 0.0
      %2136 = vmatmul.mubr.f32.gmra.mrb[0].mxu0 %v1926
      %v2137 = vpop.f32.mrb[0].mxu0
      %v2138 = vadd.f32 0.0, %v2137
      %v2139 = vpop.f32.mrb[0].mxu0
      %2140 = vmatprep.mubr.f32.mxu0 0.0
      %2141 = vmatmul.mubr.f32.gmra.mrb[0].mxu0 %v1927
      %v2142 = vpop.f32.mrb[0].mxu0
      %v2143 = vadd.f32 0.0, %v2142
      %v2144 = vpop.f32.mrb[0].mxu0
      %2145 = vmatprep.mubr.f32.mxu0 0.0
      %2146 = vmatmul.mubr.f32.gmra.mrb[0].mxu0 %v1928
      %v2147 = vpop.f32.mrb[0].mxu0
      %v2148 = vadd.f32 0.0, %v2147
      %v2149 = vpop.f32.mrb[0].mxu0
      %2150 = vmatprep.mubr.f32.mxu0 0.0
      %2151 = vmatmul.mubr.f32.gmra.mrb[0].mxu0 %v1929
      %v2152 = vpop.f32.mrb[0].mxu0
      %v2153 = vadd.f32 0.0, %v2152
      %v2154 = vpop.f32.mrb[0].mxu0
      %2155 = vmatprep.mubr.f32.mxu0 0.0
      %2156 = vmatmul.mubr.f32.gmra.mrb[0].mxu0 %v1930
      %v2157 = vpop.f32.mrb[0].mxu0
      %v2158 = vadd.f32 0.0, %v2157
      %v2159 = vpop.f32.mrb[0].mxu0
      %2160 = vmatprep.mubr.f32.mxu0 0.0
      %2161 = vmatmul.mubr.f32.gmra.mrb[0].mxu0 %v1931
      %v2162 = vpop.f32.mrb[0].mxu0
      %v2163 = vadd.f32 0.0, %v2162
      %v2164 = vpop.f32.mrb[0].mxu0
      %2165 = vmatprep.mubr.f32.mxu0 0.0
      %2166 = vmatmul.mubr.f32.gmra.mrb[0].mxu0 %v1932
      %v2167 = vpop.f32.mrb[0].mxu0
      %v2168 = vadd.f32 0.0, %v2167
      %v2169 = vpop.f32.mrb[0].mxu0
      %2170 = vmatprep.mubr.f32.mxu0 0.0
      %2171 = vmatmul.mubr.f32.gmra.mrb[0].mxu0 %v1933
      %v2172 = vpop.f32.mrb[0].mxu0
      %v2173 = vadd.f32 0.0, %v2172
      %v2174 = vpop.f32.mrb[0].mxu0
      %2175 = vmatprep.mubr.f32.mxu0 0.0
      %2176 = vmatmul.mubr.f32.gmra.mrb[0].mxu0 %v1934
      %v2177 = vpop.f32.mrb[0].mxu0
      %v2178 = vadd.f32 0.0, %v2177
      %v2179 = vpop.f32.mrb[0].mxu0
      %2180 = vmatprep.mubr.f32.mxu0 0.0
      %2181 = vmatmul.mubr.f32.gmra.mrb[0].mxu0 %v1935
      %v2182 = vpop.f32.mrb[0].mxu0
      %v2183 = vadd.f32 0.0, %v2182
      %v2184 = vpop.f32.mrb[0].mxu0
      %2185 = vmatprep.mubr.f32.mxu0 0.0
      %2186 = vmatmul.mubr.f32.gmra.mrb[0].mxu0 %v1936
      %v2187 = vpop.f32.mrb[0].mxu0
      %v2188 = vadd.f32 0.0, %v2187
      %v2189 = vpop.f32.mrb[0].mxu0
      %2190 = vmatprep.mubr.f32.mxu0 0.0
      %2191 = vmatmul.mubr.f32.gmra.mrb[0].mxu0 %v1937
      %v2192 = vpop.f32.mrb[0].mxu0
      %v2193 = vadd.f32 0.0, %v2192
      %v2194 = vpop.f32.mrb[0].mxu0
      %2195 = vmatprep.mubr.f32.mxu0 0.0
      %2196 = vmatmul.mubr.f32.gmra.mrb[0].mxu0 %v1938
      %v2197 = vpop.f32.mrb[0].mxu0
      %v2198 = vadd.f32 0.0, %v2197
      %v2199 = vpop.f32.mrb[0].mxu0
      %2200 = vdwg.mxu0
      %v2201 = vadd.f32 %v1867, %v2023
      %v2202 = vadd.f32 %v1868, %v2028
      %v2203 = vadd.f32 %v1869, %v2033
      %v2204 = vadd.f32 %v1870, %v2038
      %v2205 = vadd.f32 %v1871, %v2043
      %v2206 = vadd.f32 %v1872, %v2048
      %v2207 = vadd.f32 %v1873, %v2053
      %v2208 = vadd.f32 %v1874, %v2058
      %v2209 = vadd.f32 %v1875, %v2063
      %v2210 = vadd.f32 %v1876, %v2068
      %v2211 = vadd.f32 %v1877, %v2073
      %v2212 = vadd.f32 %v1878, %v2078
      %v2213 = vadd.f32 %v1879, %v2083
      %v2214 = vadd.f32 %v1880, %v2088
      %v2215 = vadd.f32 %v1881, %v2093
      %v2216 = vadd.f32 %v1882, %v2098
      %v2217 = vadd.f32 %v1883, %v2103
      %v2218 = vadd.f32 %v1884, %v2108
      %v2219 = vadd.f32 %v1885, %v2113
      %v2220 = vadd.f32 %v1886, %v2118
      %v2221 = vadd.f32 %v1887, %v2123
      %v2222 = vadd.f32 %v1888, %v2128
      %v2223 = vadd.f32 %v1889, %v2133
      %v2224 = vadd.f32 %v1890, %v2138
      %v2225 = vadd.f32 %v1891, %v2143
      %v2226 = vadd.f32 %v1892, %v2148
      %v2227 = vadd.f32 %v1893, %v2153
      %v2228 = vadd.f32 %v1894, %v2158
      %v2229 = vadd.f32 %v1895, %v2163
      %v2230 = vadd.f32 %v1896, %v2168
      %v2231 = vadd.f32 %v1897, %v2173
      %v2232 = vadd.f32 %v1898, %v2178
      %v2233 = vadd.f32 %v1899, %v2183
      %v2234 = vadd.f32 %v1900, %v2188
      %v2235 = vadd.f32 %v1901, %v2193
      %v2236 = vadd.f32 %v1902, %v2198
      %v2237 = vld [vmem:[%s300 + $0x24] sm:$0xff]
      %v2238 = vld [vmem:[%s300 + $0x2c] sm:$0xff]
      %v2239 = vld [vmem:[%s300 + $0x34] sm:$0xff]
      %v2240 = vld [vmem:[%s300 + $0x3c] sm:$0xff]
      %v2241 = vld [vmem:[%s300 + $0x44] sm:$0xff]
      %v2242 = vld [vmem:[%s300 + $0x4c] sm:$0xff]
      %v2243 = vld [vmem:[%s300 + $0x54] sm:$0xff]
      %v2244 = vld [vmem:[%s300 + $0x5c] sm:$0xff]
      %v2245 = vld [vmem:[%s300 + $0x64] sm:$0xff]
      %v2246 = vld [vmem:[%s300 + $0x6c] sm:$0xff]
      %v2247 = vld [vmem:[%s300 + $0x74] sm:$0xff]
      %v2248 = vld [vmem:[%s300 + $0x7c] sm:$0xff]
      %v2249 = vld [vmem:[%s300 + $0x84] sm:$0xff]
      %v2250 = vld [vmem:[%s300 + $0x8c] sm:$0xff]
      %v2251 = vld [vmem:[%s300 + $0x94] sm:$0xff]
      %v2252 = vld [vmem:[%s300 + $0x9c] sm:$0xff]
      %v2253 = vld [vmem:[%s300 + $0xa4] sm:$0xff]
      %v2254 = vld [vmem:[%s300 + $0xac] sm:$0xff]
      %v2255 = vld [vmem:[%s300 + $0xb4] sm:$0xff]
      %v2256 = vld [vmem:[%s300 + $0xbc] sm:$0xff]
      %v2257 = vld [vmem:[%s300 + $0xc4] sm:$0xff]
      %v2258 = vld [vmem:[%s300 + $0xcc] sm:$0xff]
      %v2259 = vld [vmem:[%s300 + $0xd4] sm:$0xff]
      %v2260 = vld [vmem:[%s300 + $0xdc] sm:$0xff]
      %v2261 = vld [vmem:[%s300 + $0xe4] sm:$0xff]
      %v2262 = vld [vmem:[%s300 + $0xec] sm:$0xff]
      %v2263 = vld [vmem:[%s300 + $0xf4] sm:$0xff]
      %v2264 = vld [vmem:[%s300 + $0xfc] sm:$0xff]
      %v2265 = vld [vmem:[%s300 + $0x104] sm:$0xff]
      %v2266 = vld [vmem:[%s300 + $0x10c] sm:$0xff]
      %v2267 = vld [vmem:[%s300 + $0x114] sm:$0xff]
      %v2268 = vld [vmem:[%s300 + $0x11c] sm:$0xff]
      %v2269 = vld [vmem:[%s300 + $0x124] sm:$0xff]
      %v2270 = vld [vmem:[%s300 + $0x12c] sm:$0xff]
      %v2271 = vld [vmem:[%s300 + $0x134] sm:$0xff]
      %v2272 = vld [vmem:[%s300 + $0x13c] sm:$0xff]
      %s2273 = scalar_lea.vmem %s1, 768
      %v2274 = vld [vmem:[%s2273] sm:$0xff]
      %v2275 = vld [vmem:[%s2273 + $0x8] sm:$0xff]
      %v2276 = vld [vmem:[%s2273 + $0x10] sm:$0xff]
      %v2277 = vld [vmem:[%s2273 + $0x18] sm:$0xff]
      %v2278 = vld [vmem:[%s2273 + $0x20] sm:$0xff]
      %v2279 = vld [vmem:[%s2273 + $0x28] sm:$0xff]
      %v2280 = vld [vmem:[%s2273 + $0x30] sm:$0xff]
      %v2281 = vld [vmem:[%s2273 + $0x38] sm:$0xff]
      %v2282 = vld [vmem:[%s2273 + $0x40] sm:$0xff]
      %v2283 = vld [vmem:[%s2273 + $0x48] sm:$0xff]
      %v2284 = vld [vmem:[%s2273 + $0x50] sm:$0xff]
      %v2285 = vld [vmem:[%s2273 + $0x58] sm:$0xff]
      %v2286 = vld [vmem:[%s2273 + $0x60] sm:$0xff]
      %v2287 = vld [vmem:[%s2273 + $0x68] sm:$0xff]
      %v2288 = vld [vmem:[%s2273 + $0x70] sm:$0xff]
      %v2289 = vld [vmem:[%s2273 + $0x78] sm:$0xff]
      %2290 = vmatprep.subr.mxu0 0.0
      %2291 = vmatpush1.msra.mxu0 %v2274
      %2292 = vmatprep.subr.mxu0 0.0
      %2293 = vmatpush1.msra.mxu0 %v2275
      %2294 = vmatprep.subr.mxu0 0.0
      %2295 = vmatpush1.msra.mxu0 %v2276
      %2296 = vmatprep.subr.mxu0 0.0
      %2297 = vmatpush1.msra.mxu0 %v2277
      %2298 = vmatprep.subr.mxu0 0.0
      %2299 = vmatpush1.msra.mxu0 %v2278
      %2300 = vmatprep.subr.mxu0 0.0
      %2301 = vmatpush1.msra.mxu0 %v2279
      %2302 = vmatprep.subr.mxu0 0.0
      %2303 = vmatpush1.msra.mxu0 %v2280
      %2304 = vmatprep.subr.mxu0 0.0
      %2305 = vmatpush1.msra.mxu0 %v2281
      %2306 = vmatprep.subr.mxu0 0.0
      %2307 = vmatpush1.msra.mxu0 %v2282
      %2308 = vmatprep.subr.mxu0 0.0
      %2309 = vmatpush1.msra.mxu0 %v2283
      %2310 = vmatprep.subr.mxu0 0.0
      %2311 = vmatpush1.msra.mxu0 %v2284
      %2312 = vmatprep.subr.mxu0 0.0
      %2313 = vmatpush1.msra.mxu0 %v2285
      %2314 = vmatprep.subr.mxu0 0.0
      %2315 = vmatpush1.msra.mxu0 %v2286
      %2316 = vmatprep.subr.mxu0 0.0
      %2317 = vmatpush1.msra.mxu0 %v2287
      %2318 = vmatprep.subr.mxu0 0.0
      %2319 = vmatpush1.msra.mxu0 %v2288
      %2320 = vmatprep.subr.mxu0 0.0
      %2321 = vmatpush1.msra.mxu0 %v2289
      %2322 = vmatprep.subr.mxu0 0.0
      %2323 = vmatpush1.msra.mxu0 0.0
      %2324 = vmatprep.subr.mxu0 0.0
      %2325 = vmatpush1.msra.mxu0 0.0
      %2326 = vmatprep.subr.mxu0 0.0
      %2327 = vmatpush1.msra.mxu0 0.0
      %2328 = vmatprep.subr.mxu0 0.0
      %2329 = vmatpush1.msra.mxu0 0.0
      %2330 = vmatprep.subr.mxu0 0.0
      %2331 = vmatpush1.msra.mxu0 0.0
      %2332 = vmatprep.subr.mxu0 0.0
      %2333 = vmatpush1.msra.mxu0 0.0
      %2334 = vmatprep.subr.mxu0 0.0
      %2335 = vmatpush1.msra.mxu0 0.0
      %2336 = vmatprep.subr.mxu0 0.0
      %2337 = vmatpush1.msra.mxu0 0.0
      %2338 = vmatprep.subr.mxu0 0.0
      %2339 = vmatpush1.msra.mxu0 0.0
      %2340 = vmatprep.subr.mxu0 0.0
      %2341 = vmatpush1.msra.mxu0 0.0
      %2342 = vmatprep.subr.mxu0 0.0
      %2343 = vmatpush1.msra.mxu0 0.0
      %2344 = vmatprep.subr.mxu0 0.0
      %2345 = vmatpush1.msra.mxu0 0.0
      %2346 = vmatprep.subr.mxu0 0.0
      %2347 = vmatpush1.msra.mxu0 0.0
      %2348 = vmatprep.subr.mxu0 0.0
      %2349 = vmatpush1.msra.mxu0 0.0
      %2350 = vmatprep.subr.mxu0 0.0
      %2351 = vmatpush1.msra.mxu0 0.0
      %2352 = vmatprep.subr.mxu0 0.0
      %2353 = vmatpush1.msra.mxu0 0.0
      %2354 = vmatprep.mubr.f32.mxu0 0.0
      %2355 = vmatmul.mubr.f32.gmra.mrb[0].mxu0 %v2237
      %v2356 = vpop.f32.mrb[0].mxu0
      %v2357 = vadd.f32 0.0, %v2356
      %v2358 = vpop.f32.mrb[0].mxu0
      %2359 = vmatprep.mubr.f32.mxu0 0.0
      %2360 = vmatmul.mubr.f32.gmra.mrb[0].mxu0 %v2238
      %v2361 = vpop.f32.mrb[0].mxu0
      %v2362 = vadd.f32 0.0, %v2361
      %v2363 = vpop.f32.mrb[0].mxu0
      %2364 = vmatprep.mubr.f32.mxu0 0.0
      %2365 = vmatmul.mubr.f32.gmra.mrb[0].mxu0 %v2239
      %v2366 = vpop.f32.mrb[0].mxu0
      %v2367 = vadd.f32 0.0, %v2366
      %v2368 = vpop.f32.mrb[0].mxu0
      %2369 = vmatprep.mubr.f32.mxu0 0.0
      %2370 = vmatmul.mubr.f32.gmra.mrb[0].mxu0 %v2240
      %v2371 = vpop.f32.mrb[0].mxu0
      %v2372 = vadd.f32 0.0, %v2371
      %v2373 = vpop.f32.mrb[0].mxu0
      %2374 = vmatprep.mubr.f32.mxu0 0.0
      %2375 = vmatmul.mubr.f32.gmra.mrb[0].mxu0 %v2241
      %v2376 = vpop.f32.mrb[0].mxu0
      %v2377 = vadd.f32 0.0, %v2376
      %v2378 = vpop.f32.mrb[0].mxu0
      %2379 = vmatprep.mubr.f32.mxu0 0.0
      %2380 = vmatmul.mubr.f32.gmra.mrb[0].mxu0 %v2242
      %v2381 = vpop.f32.mrb[0].mxu0
      %v2382 = vadd.f32 0.0, %v2381
      %v2383 = vpop.f32.mrb[0].mxu0
      %2384 = vmatprep.mubr.f32.mxu0 0.0
      %2385 = vmatmul.mubr.f32.gmra.mrb[0].mxu0 %v2243
      %v2386 = vpop.f32.mrb[0].mxu0
      %v2387 = vadd.f32 0.0, %v2386
      %v2388 = vpop.f32.mrb[0].mxu0
      %2389 = vmatprep.mubr.f32.mxu0 0.0
      %2390 = vmatmul.mubr.f32.gmra.mrb[0].mxu0 %v2244
      %v2391 = vpop.f32.mrb[0].mxu0
      %v2392 = vadd.f32 0.0, %v2391
      %v2393 = vpop.f32.mrb[0].mxu0
      %2394 = vmatprep.mubr.f32.mxu0 0.0
      %2395 = vmatmul.mubr.f32.gmra.mrb[0].mxu0 %v2245
      %v2396 = vpop.f32.mrb[0].mxu0
      %v2397 = vadd.f32 0.0, %v2396
      %v2398 = vpop.f32.mrb[0].mxu0
      %2399 = vmatprep.mubr.f32.mxu0 0.0
      %2400 = vmatmul.mubr.f32.gmra.mrb[0].mxu0 %v2246
      %v2401 = vpop.f32.mrb[0].mxu0
      %v2402 = vadd.f32 0.0, %v2401
      %v2403 = vpop.f32.mrb[0].mxu0
      %2404 = vmatprep.mubr.f32.mxu0 0.0
      %2405 = vmatmul.mubr.f32.gmra.mrb[0].mxu0 %v2247
      %v2406 = vpop.f32.mrb[0].mxu0
      %v2407 = vadd.f32 0.0, %v2406
      %v2408 = vpop.f32.mrb[0].mxu0
      %2409 = vmatprep.mubr.f32.mxu0 0.0
      %2410 = vmatmul.mubr.f32.gmra.mrb[0].mxu0 %v2248
      %v2411 = vpop.f32.mrb[0].mxu0
      %v2412 = vadd.f32 0.0, %v2411
      %v2413 = vpop.f32.mrb[0].mxu0
      %2414 = vmatprep.mubr.f32.mxu0 0.0
      %2415 = vmatmul.mubr.f32.gmra.mrb[0].mxu0 %v2249
      %v2416 = vpop.f32.mrb[0].mxu0
      %v2417 = vadd.f32 0.0, %v2416
      %v2418 = vpop.f32.mrb[0].mxu0
      %2419 = vmatprep.mubr.f32.mxu0 0.0
      %2420 = vmatmul.mubr.f32.gmra.mrb[0].mxu0 %v2250
      %v2421 = vpop.f32.mrb[0].mxu0
      %v2422 = vadd.f32 0.0, %v2421
      %v2423 = vpop.f32.mrb[0].mxu0
      %2424 = vmatprep.mubr.f32.mxu0 0.0
      %2425 = vmatmul.mubr.f32.gmra.mrb[0].mxu0 %v2251
      %v2426 = vpop.f32.mrb[0].mxu0
      %v2427 = vadd.f32 0.0, %v2426
      %v2428 = vpop.f32.mrb[0].mxu0
      %2429 = vmatprep.mubr.f32.mxu0 0.0
      %2430 = vmatmul.mubr.f32.gmra.mrb[0].mxu0 %v2252
      %v2431 = vpop.f32.mrb[0].mxu0
      %v2432 = vadd.f32 0.0, %v2431
      %v2433 = vpop.f32.mrb[0].mxu0
      %2434 = vmatprep.mubr.f32.mxu0 0.0
      %2435 = vmatmul.mubr.f32.gmra.mrb[0].mxu0 %v2253
      %v2436 = vpop.f32.mrb[0].mxu0
      %v2437 = vadd.f32 0.0, %v2436
      %v2438 = vpop.f32.mrb[0].mxu0
      %2439 = vmatprep.mubr.f32.mxu0 0.0
      %2440 = vmatmul.mubr.f32.gmra.mrb[0].mxu0 %v2254
      %v2441 = vpop.f32.mrb[0].mxu0
      %v2442 = vadd.f32 0.0, %v2441
      %v2443 = vpop.f32.mrb[0].mxu0
      %2444 = vmatprep.mubr.f32.mxu0 0.0
      %2445 = vmatmul.mubr.f32.gmra.mrb[0].mxu0 %v2255
      %v2446 = vpop.f32.mrb[0].mxu0
      %v2447 = vadd.f32 0.0, %v2446
      %v2448 = vpop.f32.mrb[0].mxu0
      %2449 = vmatprep.mubr.f32.mxu0 0.0
      %2450 = vmatmul.mubr.f32.gmra.mrb[0].mxu0 %v2256
      %v2451 = vpop.f32.mrb[0].mxu0
      %v2452 = vadd.f32 0.0, %v2451
      %v2453 = vpop.f32.mrb[0].mxu0
      %2454 = vmatprep.mubr.f32.mxu0 0.0
      %2455 = vmatmul.mubr.f32.gmra.mrb[0].mxu0 %v2257
      %v2456 = vpop.f32.mrb[0].mxu0
      %v2457 = vadd.f32 0.0, %v2456
      %v2458 = vpop.f32.mrb[0].mxu0
      %2459 = vmatprep.mubr.f32.mxu0 0.0
      %2460 = vmatmul.mubr.f32.gmra.mrb[0].mxu0 %v2258
      %v2461 = vpop.f32.mrb[0].mxu0
      %v2462 = vadd.f32 0.0, %v2461
      %v2463 = vpop.f32.mrb[0].mxu0
      %2464 = vmatprep.mubr.f32.mxu0 0.0
      %2465 = vmatmul.mubr.f32.gmra.mrb[0].mxu0 %v2259
      %v2466 = vpop.f32.mrb[0].mxu0
      %v2467 = vadd.f32 0.0, %v2466
      %v2468 = vpop.f32.mrb[0].mxu0
      %2469 = vmatprep.mubr.f32.mxu0 0.0
      %2470 = vmatmul.mubr.f32.gmra.mrb[0].mxu0 %v2260
      %v2471 = vpop.f32.mrb[0].mxu0
      %v2472 = vadd.f32 0.0, %v2471
      %v2473 = vpop.f32.mrb[0].mxu0
      %2474 = vmatprep.mubr.f32.mxu0 0.0
      %2475 = vmatmul.mubr.f32.gmra.mrb[0].mxu0 %v2261
      %v2476 = vpop.f32.mrb[0].mxu0
      %v2477 = vadd.f32 0.0, %v2476
      %v2478 = vpop.f32.mrb[0].mxu0
      %2479 = vmatprep.mubr.f32.mxu0 0.0
      %2480 = vmatmul.mubr.f32.gmra.mrb[0].mxu0 %v2262
      %v2481 = vpop.f32.mrb[0].mxu0
      %v2482 = vadd.f32 0.0, %v2481
      %v2483 = vpop.f32.mrb[0].mxu0
      %2484 = vmatprep.mubr.f32.mxu0 0.0
      %2485 = vmatmul.mubr.f32.gmra.mrb[0].mxu0 %v2263
      %v2486 = vpop.f32.mrb[0].mxu0
      %v2487 = vadd.f32 0.0, %v2486
      %v2488 = vpop.f32.mrb[0].mxu0
      %2489 = vmatprep.mubr.f32.mxu0 0.0
      %2490 = vmatmul.mubr.f32.gmra.mrb[0].mxu0 %v2264
      %v2491 = vpop.f32.mrb[0].mxu0
      %v2492 = vadd.f32 0.0, %v2491
      %v2493 = vpop.f32.mrb[0].mxu0
      %2494 = vmatprep.mubr.f32.mxu0 0.0
      %2495 = vmatmul.mubr.f32.gmra.mrb[0].mxu0 %v2265
      %v2496 = vpop.f32.mrb[0].mxu0
      %v2497 = vadd.f32 0.0, %v2496
      %v2498 = vpop.f32.mrb[0].mxu0
      %2499 = vmatprep.mubr.f32.mxu0 0.0
      %2500 = vmatmul.mubr.f32.gmra.mrb[0].mxu0 %v2266
      %v2501 = vpop.f32.mrb[0].mxu0
      %v2502 = vadd.f32 0.0, %v2501
      %v2503 = vpop.f32.mrb[0].mxu0
      %2504 = vmatprep.mubr.f32.mxu0 0.0
      %2505 = vmatmul.mubr.f32.gmra.mrb[0].mxu0 %v2267
      %v2506 = vpop.f32.mrb[0].mxu0
      %v2507 = vadd.f32 0.0, %v2506
      %v2508 = vpop.f32.mrb[0].mxu0
      %2509 = vmatprep.mubr.f32.mxu0 0.0
      %2510 = vmatmul.mubr.f32.gmra.mrb[0].mxu0 %v2268
      %v2511 = vpop.f32.mrb[0].mxu0
      %v2512 = vadd.f32 0.0, %v2511
      %v2513 = vpop.f32.mrb[0].mxu0
      %2514 = vmatprep.mubr.f32.mxu0 0.0
      %2515 = vmatmul.mubr.f32.gmra.mrb[0].mxu0 %v2269
      %v2516 = vpop.f32.mrb[0].mxu0
      %v2517 = vadd.f32 0.0, %v2516
      %v2518 = vpop.f32.mrb[0].mxu0
      %2519 = vmatprep.mubr.f32.mxu0 0.0
      %2520 = vmatmul.mubr.f32.gmra.mrb[0].mxu0 %v2270
      %v2521 = vpop.f32.mrb[0].mxu0
      %v2522 = vadd.f32 0.0, %v2521
      %v2523 = vpop.f32.mrb[0].mxu0
      %2524 = vmatprep.mubr.f32.mxu0 0.0
      %2525 = vmatmul.mubr.f32.gmra.mrb[0].mxu0 %v2271
      %v2526 = vpop.f32.mrb[0].mxu0
      %v2527 = vadd.f32 0.0, %v2526
      %v2528 = vpop.f32.mrb[0].mxu0
      %2529 = vmatprep.mubr.f32.mxu0 0.0
      %2530 = vmatmul.mubr.f32.gmra.mrb[0].mxu0 %v2272
      %v2531 = vpop.f32.mrb[0].mxu0
      %v2532 = vadd.f32 0.0, %v2531
      %v2533 = vpop.f32.mrb[0].mxu0
      %2534 = vdwg.mxu0
      %v2535 = vadd.f32 %v2201, %v2357
      %v2536 = vadd.f32 %v2202, %v2362
      %v2537 = vadd.f32 %v2203, %v2367
      %v2538 = vadd.f32 %v2204, %v2372
      %v2539 = vadd.f32 %v2205, %v2377
      %v2540 = vadd.f32 %v2206, %v2382
      %v2541 = vadd.f32 %v2207, %v2387
      %v2542 = vadd.f32 %v2208, %v2392
      %v2543 = vadd.f32 %v2209, %v2397
      %v2544 = vadd.f32 %v2210, %v2402
      %v2545 = vadd.f32 %v2211, %v2407
      %v2546 = vadd.f32 %v2212, %v2412
      %v2547 = vadd.f32 %v2213, %v2417
      %v2548 = vadd.f32 %v2214, %v2422
      %v2549 = vadd.f32 %v2215, %v2427
      %v2550 = vadd.f32 %v2216, %v2432
      %v2551 = vadd.f32 %v2217, %v2437
      %v2552 = vadd.f32 %v2218, %v2442
      %v2553 = vadd.f32 %v2219, %v2447
      %v2554 = vadd.f32 %v2220, %v2452
      %v2555 = vadd.f32 %v2221, %v2457
      %v2556 = vadd.f32 %v2222, %v2462
      %v2557 = vadd.f32 %v2223, %v2467
      %v2558 = vadd.f32 %v2224, %v2472
      %v2559 = vadd.f32 %v2225, %v2477
      %v2560 = vadd.f32 %v2226, %v2482
      %v2561 = vadd.f32 %v2227, %v2487
      %v2562 = vadd.f32 %v2228, %v2492
      %v2563 = vadd.f32 %v2229, %v2497
      %v2564 = vadd.f32 %v2230, %v2502
      %v2565 = vadd.f32 %v2231, %v2507
      %v2566 = vadd.f32 %v2232, %v2512
      %v2567 = vadd.f32 %v2233, %v2517
      %v2568 = vadd.f32 %v2234, %v2522
      %v2569 = vadd.f32 %v2235, %v2527
      %v2570 = vadd.f32 %v2236, %v2532
      %v2571 = vld [vmem:[%s300 + $0x25] sm:$0xff]
      %v2572 = vld [vmem:[%s300 + $0x2d] sm:$0xff]
      %v2573 = vld [vmem:[%s300 + $0x35] sm:$0xff]
      %v2574 = vld [vmem:[%s300 + $0x3d] sm:$0xff]
      %v2575 = vld [vmem:[%s300 + $0x45] sm:$0xff]
      %v2576 = vld [vmem:[%s300 + $0x4d] sm:$0xff]
      %v2577 = vld [vmem:[%s300 + $0x55] sm:$0xff]
      %v2578 = vld [vmem:[%s300 + $0x5d] sm:$0xff]
      %v2579 = vld [vmem:[%s300 + $0x65] sm:$0xff]
      %v2580 = vld [vmem:[%s300 + $0x6d] sm:$0xff]
      %v2581 = vld [vmem:[%s300 + $0x75] sm:$0xff]
      %v2582 = vld [vmem:[%s300 + $0x7d] sm:$0xff]
      %v2583 = vld [vmem:[%s300 + $0x85] sm:$0xff]
      %v2584 = vld [vmem:[%s300 + $0x8d] sm:$0xff]
      %v2585 = vld [vmem:[%s300 + $0x95] sm:$0xff]
      %v2586 = vld [vmem:[%s300 + $0x9d] sm:$0xff]
      %v2587 = vld [vmem:[%s300 + $0xa5] sm:$0xff]
      %v2588 = vld [vmem:[%s300 + $0xad] sm:$0xff]
      %v2589 = vld [vmem:[%s300 + $0xb5] sm:$0xff]
      %v2590 = vld [vmem:[%s300 + $0xbd] sm:$0xff]
      %v2591 = vld [vmem:[%s300 + $0xc5] sm:$0xff]
      %v2592 = vld [vmem:[%s300 + $0xcd] sm:$0xff]
      %v2593 = vld [vmem:[%s300 + $0xd5] sm:$0xff]
      %v2594 = vld [vmem:[%s300 + $0xdd] sm:$0xff]
      %v2595 = vld [vmem:[%s300 + $0xe5] sm:$0xff]
      %v2596 = vld [vmem:[%s300 + $0xed] sm:$0xff]
      %v2597 = vld [vmem:[%s300 + $0xf5] sm:$0xff]
      %v2598 = vld [vmem:[%s300 + $0xfd] sm:$0xff]
      %v2599 = vld [vmem:[%s300 + $0x105] sm:$0xff]
      %v2600 = vld [vmem:[%s300 + $0x10d] sm:$0xff]
      %v2601 = vld [vmem:[%s300 + $0x115] sm:$0xff]
      %v2602 = vld [vmem:[%s300 + $0x11d] sm:$0xff]
      %v2603 = vld [vmem:[%s300 + $0x125] sm:$0xff]
      %v2604 = vld [vmem:[%s300 + $0x12d] sm:$0xff]
      %v2605 = vld [vmem:[%s300 + $0x135] sm:$0xff]
      %v2606 = vld [vmem:[%s300 + $0x13d] sm:$0xff]
      %s2607 = scalar_lea.vmem %s1, 896
      %v2608 = vld [vmem:[%s2607] sm:$0xff]
      %v2609 = vld [vmem:[%s2607 + $0x8] sm:$0xff]
      %v2610 = vld [vmem:[%s2607 + $0x10] sm:$0xff]
      %v2611 = vld [vmem:[%s2607 + $0x18] sm:$0xff]
      %v2612 = vld [vmem:[%s2607 + $0x20] sm:$0xff]
      %v2613 = vld [vmem:[%s2607 + $0x28] sm:$0xff]
      %v2614 = vld [vmem:[%s2607 + $0x30] sm:$0xff]
      %v2615 = vld [vmem:[%s2607 + $0x38] sm:$0xff]
      %v2616 = vld [vmem:[%s2607 + $0x40] sm:$0xff]
      %v2617 = vld [vmem:[%s2607 + $0x48] sm:$0xff]
      %v2618 = vld [vmem:[%s2607 + $0x50] sm:$0xff]
      %v2619 = vld [vmem:[%s2607 + $0x58] sm:$0xff]
      %v2620 = vld [vmem:[%s2607 + $0x60] sm:$0xff]
      %v2621 = vld [vmem:[%s2607 + $0x68] sm:$0xff]
      %v2622 = vld [vmem:[%s2607 + $0x70] sm:$0xff]
      %v2623 = vld [vmem:[%s2607 + $0x78] sm:$0xff]
      %2624 = vmatprep.subr.mxu0 0.0
      %2625 = vmatpush1.msra.mxu0 %v2608
      %2626 = vmatprep.subr.mxu0 0.0
      %2627 = vmatpush1.msra.mxu0 %v2609
      %2628 = vmatprep.subr.mxu0 0.0
      %2629 = vmatpush1.msra.mxu0 %v2610
      %2630 = vmatprep.subr.mxu0 0.0
      %2631 = vmatpush1.msra.mxu0 %v2611
      %2632 = vmatprep.subr.mxu0 0.0
      %2633 = vmatpush1.msra.mxu0 %v2612
      %2634 = vmatprep.subr.mxu0 0.0
      %2635 = vmatpush1.msra.mxu0 %v2613
      %2636 = vmatprep.subr.mxu0 0.0
      %2637 = vmatpush1.msra.mxu0 %v2614
      %2638 = vmatprep.subr.mxu0 0.0
      %2639 = vmatpush1.msra.mxu0 %v2615
      %2640 = vmatprep.subr.mxu0 0.0
      %2641 = vmatpush1.msra.mxu0 %v2616
      %2642 = vmatprep.subr.mxu0 0.0
      %2643 = vmatpush1.msra.mxu0 %v2617
      %2644 = vmatprep.subr.mxu0 0.0
      %2645 = vmatpush1.msra.mxu0 %v2618
      %2646 = vmatprep.subr.mxu0 0.0
      %2647 = vmatpush1.msra.mxu0 %v2619
      %2648 = vmatprep.subr.mxu0 0.0
      %2649 = vmatpush1.msra.mxu0 %v2620
      %2650 = vmatprep.subr.mxu0 0.0
      %2651 = vmatpush1.msra.mxu0 %v2621
      %2652 = vmatprep.subr.mxu0 0.0
      %2653 = vmatpush1.msra.mxu0 %v2622
      %2654 = vmatprep.subr.mxu0 0.0
      %2655 = vmatpush1.msra.mxu0 %v2623
      %2656 = vmatprep.subr.mxu0 0.0
      %2657 = vmatpush1.msra.mxu0 0.0
      %2658 = vmatprep.subr.mxu0 0.0
      %2659 = vmatpush1.msra.mxu0 0.0
      %2660 = vmatprep.subr.mxu0 0.0
      %2661 = vmatpush1.msra.mxu0 0.0
      %2662 = vmatprep.subr.mxu0 0.0
      %2663 = vmatpush1.msra.mxu0 0.0
      %2664 = vmatprep.subr.mxu0 0.0
      %2665 = vmatpush1.msra.mxu0 0.0
      %2666 = vmatprep.subr.mxu0 0.0
      %2667 = vmatpush1.msra.mxu0 0.0
      %2668 = vmatprep.subr.mxu0 0.0
      %2669 = vmatpush1.msra.mxu0 0.0
      %2670 = vmatprep.subr.mxu0 0.0
      %2671 = vmatpush1.msra.mxu0 0.0
      %2672 = vmatprep.subr.mxu0 0.0
      %2673 = vmatpush1.msra.mxu0 0.0
      %2674 = vmatprep.subr.mxu0 0.0
      %2675 = vmatpush1.msra.mxu0 0.0
      %2676 = vmatprep.subr.mxu0 0.0
      %2677 = vmatpush1.msra.mxu0 0.0
      %2678 = vmatprep.subr.mxu0 0.0
      %2679 = vmatpush1.msra.mxu0 0.0
      %2680 = vmatprep.subr.mxu0 0.0
      %2681 = vmatpush1.msra.mxu0 0.0
      %2682 = vmatprep.subr.mxu0 0.0
      %2683 = vmatpush1.msra.mxu0 0.0
      %2684 = vmatprep.subr.mxu0 0.0
      %2685 = vmatpush1.msra.mxu0 0.0
      %2686 = vmatprep.subr.mxu0 0.0
      %2687 = vmatpush1.msra.mxu0 0.0
      %2688 = vmatprep.mubr.f32.mxu0 0.0
      %2689 = vmatmul.mubr.f32.gmra.mrb[0].mxu0 %v2571
      %v2690 = vpop.f32.mrb[0].mxu0
      %v2691 = vadd.f32 0.0, %v2690
      %v2692 = vpop.f32.mrb[0].mxu0
      %2693 = vmatprep.mubr.f32.mxu0 0.0
      %2694 = vmatmul.mubr.f32.gmra.mrb[0].mxu0 %v2572
      %v2695 = vpop.f32.mrb[0].mxu0
      %v2696 = vadd.f32 0.0, %v2695
      %v2697 = vpop.f32.mrb[0].mxu0
      %2698 = vmatprep.mubr.f32.mxu0 0.0
      %2699 = vmatmul.mubr.f32.gmra.mrb[0].mxu0 %v2573
      %v2700 = vpop.f32.mrb[0].mxu0
      %v2701 = vadd.f32 0.0, %v2700
      %v2702 = vpop.f32.mrb[0].mxu0
      %2703 = vmatprep.mubr.f32.mxu0 0.0
      %2704 = vmatmul.mubr.f32.gmra.mrb[0].mxu0 %v2574
      %v2705 = vpop.f32.mrb[0].mxu0
      %v2706 = vadd.f32 0.0, %v2705
      %v2707 = vpop.f32.mrb[0].mxu0
      %2708 = vmatprep.mubr.f32.mxu0 0.0
      %2709 = vmatmul.mubr.f32.gmra.mrb[0].mxu0 %v2575
      %v2710 = vpop.f32.mrb[0].mxu0
      %v2711 = vadd.f32 0.0, %v2710
      %v2712 = vpop.f32.mrb[0].mxu0
      %2713 = vmatprep.mubr.f32.mxu0 0.0
      %2714 = vmatmul.mubr.f32.gmra.mrb[0].mxu0 %v2576
      %v2715 = vpop.f32.mrb[0].mxu0
      %v2716 = vadd.f32 0.0, %v2715
      %v2717 = vpop.f32.mrb[0].mxu0
      %2718 = vmatprep.mubr.f32.mxu0 0.0
      %2719 = vmatmul.mubr.f32.gmra.mrb[0].mxu0 %v2577
      %v2720 = vpop.f32.mrb[0].mxu0
      %v2721 = vadd.f32 0.0, %v2720
      %v2722 = vpop.f32.mrb[0].mxu0
      %2723 = vmatprep.mubr.f32.mxu0 0.0
      %2724 = vmatmul.mubr.f32.gmra.mrb[0].mxu0 %v2578
      %v2725 = vpop.f32.mrb[0].mxu0
      %v2726 = vadd.f32 0.0, %v2725
      %v2727 = vpop.f32.mrb[0].mxu0
      %2728 = vmatprep.mubr.f32.mxu0 0.0
      %2729 = vmatmul.mubr.f32.gmra.mrb[0].mxu0 %v2579
      %v2730 = vpop.f32.mrb[0].mxu0
      %v2731 = vadd.f32 0.0, %v2730
      %v2732 = vpop.f32.mrb[0].mxu0
      %2733 = vmatprep.mubr.f32.mxu0 0.0
      %2734 = vmatmul.mubr.f32.gmra.mrb[0].mxu0 %v2580
      %v2735 = vpop.f32.mrb[0].mxu0
      %v2736 = vadd.f32 0.0, %v2735
      %v2737 = vpop.f32.mrb[0].mxu0
      %2738 = vmatprep.mubr.f32.mxu0 0.0
      %2739 = vmatmul.mubr.f32.gmra.mrb[0].mxu0 %v2581
      %v2740 = vpop.f32.mrb[0].mxu0
      %v2741 = vadd.f32 0.0, %v2740
      %v2742 = vpop.f32.mrb[0].mxu0
      %2743 = vmatprep.mubr.f32.mxu0 0.0
      %2744 = vmatmul.mubr.f32.gmra.mrb[0].mxu0 %v2582
      %v2745 = vpop.f32.mrb[0].mxu0
      %v2746 = vadd.f32 0.0, %v2745
      %v2747 = vpop.f32.mrb[0].mxu0
      %2748 = vmatprep.mubr.f32.mxu0 0.0
      %2749 = vmatmul.mubr.f32.gmra.mrb[0].mxu0 %v2583
      %v2750 = vpop.f32.mrb[0].mxu0
      %v2751 = vadd.f32 0.0, %v2750
      %v2752 = vpop.f32.mrb[0].mxu0
      %2753 = vmatprep.mubr.f32.mxu0 0.0
      %2754 = vmatmul.mubr.f32.gmra.mrb[0].mxu0 %v2584
      %v2755 = vpop.f32.mrb[0].mxu0
      %v2756 = vadd.f32 0.0, %v2755
      %v2757 = vpop.f32.mrb[0].mxu0
      %2758 = vmatprep.mubr.f32.mxu0 0.0
      %2759 = vmatmul.mubr.f32.gmra.mrb[0].mxu0 %v2585
      %v2760 = vpop.f32.mrb[0].mxu0
      %v2761 = vadd.f32 0.0, %v2760
      %v2762 = vpop.f32.mrb[0].mxu0
      %2763 = vmatprep.mubr.f32.mxu0 0.0
      %2764 = vmatmul.mubr.f32.gmra.mrb[0].mxu0 %v2586
      %v2765 = vpop.f32.mrb[0].mxu0
      %v2766 = vadd.f32 0.0, %v2765
      %v2767 = vpop.f32.mrb[0].mxu0
      %2768 = vmatprep.mubr.f32.mxu0 0.0
      %2769 = vmatmul.mubr.f32.gmra.mrb[0].mxu0 %v2587
      %v2770 = vpop.f32.mrb[0].mxu0
      %v2771 = vadd.f32 0.0, %v2770
      %v2772 = vpop.f32.mrb[0].mxu0
      %2773 = vmatprep.mubr.f32.mxu0 0.0
      %2774 = vmatmul.mubr.f32.gmra.mrb[0].mxu0 %v2588
      %v2775 = vpop.f32.mrb[0].mxu0
      %v2776 = vadd.f32 0.0, %v2775
      %v2777 = vpop.f32.mrb[0].mxu0
      %2778 = vmatprep.mubr.f32.mxu0 0.0
      %2779 = vmatmul.mubr.f32.gmra.mrb[0].mxu0 %v2589
      %v2780 = vpop.f32.mrb[0].mxu0
      %v2781 = vadd.f32 0.0, %v2780
      %v2782 = vpop.f32.mrb[0].mxu0
      %2783 = vmatprep.mubr.f32.mxu0 0.0
      %2784 = vmatmul.mubr.f32.gmra.mrb[0].mxu0 %v2590
      %v2785 = vpop.f32.mrb[0].mxu0
      %v2786 = vadd.f32 0.0, %v2785
      %v2787 = vpop.f32.mrb[0].mxu0
      %2788 = vmatprep.mubr.f32.mxu0 0.0
      %2789 = vmatmul.mubr.f32.gmra.mrb[0].mxu0 %v2591
      %v2790 = vpop.f32.mrb[0].mxu0
      %v2791 = vadd.f32 0.0, %v2790
      %v2792 = vpop.f32.mrb[0].mxu0
      %2793 = vmatprep.mubr.f32.mxu0 0.0
      %2794 = vmatmul.mubr.f32.gmra.mrb[0].mxu0 %v2592
      %v2795 = vpop.f32.mrb[0].mxu0
      %v2796 = vadd.f32 0.0, %v2795
      %v2797 = vpop.f32.mrb[0].mxu0
      %2798 = vmatprep.mubr.f32.mxu0 0.0
      %2799 = vmatmul.mubr.f32.gmra.mrb[0].mxu0 %v2593
      %v2800 = vpop.f32.mrb[0].mxu0
      %v2801 = vadd.f32 0.0, %v2800
      %v2802 = vpop.f32.mrb[0].mxu0
      %2803 = vmatprep.mubr.f32.mxu0 0.0
      %2804 = vmatmul.mubr.f32.gmra.mrb[0].mxu0 %v2594
      %v2805 = vpop.f32.mrb[0].mxu0
      %v2806 = vadd.f32 0.0, %v2805
      %v2807 = vpop.f32.mrb[0].mxu0
      %2808 = vmatprep.mubr.f32.mxu0 0.0
      %2809 = vmatmul.mubr.f32.gmra.mrb[0].mxu0 %v2595
      %v2810 = vpop.f32.mrb[0].mxu0
      %v2811 = vadd.f32 0.0, %v2810
      %v2812 = vpop.f32.mrb[0].mxu0
      %2813 = vmatprep.mubr.f32.mxu0 0.0
      %2814 = vmatmul.mubr.f32.gmra.mrb[0].mxu0 %v2596
      %v2815 = vpop.f32.mrb[0].mxu0
      %v2816 = vadd.f32 0.0, %v2815
      %v2817 = vpop.f32.mrb[0].mxu0
      %2818 = vmatprep.mubr.f32.mxu0 0.0
      %2819 = vmatmul.mubr.f32.gmra.mrb[0].mxu0 %v2597
      %v2820 = vpop.f32.mrb[0].mxu0
      %v2821 = vadd.f32 0.0, %v2820
      %v2822 = vpop.f32.mrb[0].mxu0
      %2823 = vmatprep.mubr.f32.mxu0 0.0
      %2824 = vmatmul.mubr.f32.gmra.mrb[0].mxu0 %v2598
      %v2825 = vpop.f32.mrb[0].mxu0
      %v2826 = vadd.f32 0.0, %v2825
      %v2827 = vpop.f32.mrb[0].mxu0
      %2828 = vmatprep.mubr.f32.mxu0 0.0
      %2829 = vmatmul.mubr.f32.gmra.mrb[0].mxu0 %v2599
      %v2830 = vpop.f32.mrb[0].mxu0
      %v2831 = vadd.f32 0.0, %v2830
      %v2832 = vpop.f32.mrb[0].mxu0
      %2833 = vmatprep.mubr.f32.mxu0 0.0
      %2834 = vmatmul.mubr.f32.gmra.mrb[0].mxu0 %v2600
      %v2835 = vpop.f32.mrb[0].mxu0
      %v2836 = vadd.f32 0.0, %v2835
      %v2837 = vpop.f32.mrb[0].mxu0
      %2838 = vmatprep.mubr.f32.mxu0 0.0
      %2839 = vmatmul.mubr.f32.gmra.mrb[0].mxu0 %v2601
      %v2840 = vpop.f32.mrb[0].mxu0
      %v2841 = vadd.f32 0.0, %v2840
      %v2842 = vpop.f32.mrb[0].mxu0
      %2843 = vmatprep.mubr.f32.mxu0 0.0
      %2844 = vmatmul.mubr.f32.gmra.mrb[0].mxu0 %v2602
      %v2845 = vpop.f32.mrb[0].mxu0
      %v2846 = vadd.f32 0.0, %v2845
      %v2847 = vpop.f32.mrb[0].mxu0
      %2848 = vmatprep.mubr.f32.mxu0 0.0
      %2849 = vmatmul.mubr.f32.gmra.mrb[0].mxu0 %v2603
      %v2850 = vpop.f32.mrb[0].mxu0
      %v2851 = vadd.f32 0.0, %v2850
      %v2852 = vpop.f32.mrb[0].mxu0
      %2853 = vmatprep.mubr.f32.mxu0 0.0
      %2854 = vmatmul.mubr.f32.gmra.mrb[0].mxu0 %v2604
      %v2855 = vpop.f32.mrb[0].mxu0
      %v2856 = vadd.f32 0.0, %v2855
      %v2857 = vpop.f32.mrb[0].mxu0
      %2858 = vmatprep.mubr.f32.mxu0 0.0
      %2859 = vmatmul.mubr.f32.gmra.mrb[0].mxu0 %v2605
      %v2860 = vpop.f32.mrb[0].mxu0
      %v2861 = vadd.f32 0.0, %v2860
      %v2862 = vpop.f32.mrb[0].mxu0
      %2863 = vmatprep.mubr.f32.mxu0 0.0
      %2864 = vmatmul.mubr.f32.gmra.mrb[0].mxu0 %v2606
      %v2865 = vpop.f32.mrb[0].mxu0
      %v2866 = vadd.f32 0.0, %v2865
      %v2867 = vpop.f32.mrb[0].mxu0
      %2868 = vdwg.mxu0
      %v2869 = vadd.f32 %v2535, %v2691
      %v2870 = vadd.f32 %v2536, %v2696
      %v2871 = vadd.f32 %v2537, %v2701
      %v2872 = vadd.f32 %v2538, %v2706
      %v2873 = vadd.f32 %v2539, %v2711
      %v2874 = vadd.f32 %v2540, %v2716
      %v2875 = vadd.f32 %v2541, %v2721
      %v2876 = vadd.f32 %v2542, %v2726
      %v2877 = vadd.f32 %v2543, %v2731
      %v2878 = vadd.f32 %v2544, %v2736
      %v2879 = vadd.f32 %v2545, %v2741
      %v2880 = vadd.f32 %v2546, %v2746
      %v2881 = vadd.f32 %v2547, %v2751
      %v2882 = vadd.f32 %v2548, %v2756
      %v2883 = vadd.f32 %v2549, %v2761
      %v2884 = vadd.f32 %v2550, %v2766
      %v2885 = vadd.f32 %v2551, %v2771
      %v2886 = vadd.f32 %v2552, %v2776
      %v2887 = vadd.f32 %v2553, %v2781
      %v2888 = vadd.f32 %v2554, %v2786
      %v2889 = vadd.f32 %v2555, %v2791
      %v2890 = vadd.f32 %v2556, %v2796
      %v2891 = vadd.f32 %v2557, %v2801
      %v2892 = vadd.f32 %v2558, %v2806
      %v2893 = vadd.f32 %v2559, %v2811
      %v2894 = vadd.f32 %v2560, %v2816
      %v2895 = vadd.f32 %v2561, %v2821
      %v2896 = vadd.f32 %v2562, %v2826
      %v2897 = vadd.f32 %v2563, %v2831
      %v2898 = vadd.f32 %v2564, %v2836
      %v2899 = vadd.f32 %v2565, %v2841
      %v2900 = vadd.f32 %v2566, %v2846
      %v2901 = vadd.f32 %v2567, %v2851
      %v2902 = vadd.f32 %v2568, %v2856
      %v2903 = vadd.f32 %v2569, %v2861
      %v2904 = vadd.f32 %v2570, %v2866
      %v2905 = vld [vmem:[%s300 + $0x26] sm:$0xff]
      %v2906 = vld [vmem:[%s300 + $0x2e] sm:$0xff]
      %v2907 = vld [vmem:[%s300 + $0x36] sm:$0xff]
      %v2908 = vld [vmem:[%s300 + $0x3e] sm:$0xff]
      %v2909 = vld [vmem:[%s300 + $0x46] sm:$0xff]
      %v2910 = vld [vmem:[%s300 + $0x4e] sm:$0xff]
      %v2911 = vld [vmem:[%s300 + $0x56] sm:$0xff]
      %v2912 = vld [vmem:[%s300 + $0x5e] sm:$0xff]
      %v2913 = vld [vmem:[%s300 + $0x66] sm:$0xff]
      %v2914 = vld [vmem:[%s300 + $0x6e] sm:$0xff]
      %v2915 = vld [vmem:[%s300 + $0x76] sm:$0xff]
      %v2916 = vld [vmem:[%s300 + $0x7e] sm:$0xff]
      %v2917 = vld [vmem:[%s300 + $0x86] sm:$0xff]
      %v2918 = vld [vmem:[%s300 + $0x8e] sm:$0xff]
      %v2919 = vld [vmem:[%s300 + $0x96] sm:$0xff]
      %v2920 = vld [vmem:[%s300 + $0x9e] sm:$0xff]
      %v2921 = vld [vmem:[%s300 + $0xa6] sm:$0xff]
      %v2922 = vld [vmem:[%s300 + $0xae] sm:$0xff]
      %v2923 = vld [vmem:[%s300 + $0xb6] sm:$0xff]
      %v2924 = vld [vmem:[%s300 + $0xbe] sm:$0xff]
      %v2925 = vld [vmem:[%s300 + $0xc6] sm:$0xff]
      %v2926 = vld [vmem:[%s300 + $0xce] sm:$0xff]
      %v2927 = vld [vmem:[%s300 + $0xd6] sm:$0xff]
      %v2928 = vld [vmem:[%s300 + $0xde] sm:$0xff]
      %v2929 = vld [vmem:[%s300 + $0xe6] sm:$0xff]
      %v2930 = vld [vmem:[%s300 + $0xee] sm:$0xff]
      %v2931 = vld [vmem:[%s300 + $0xf6] sm:$0xff]
      %v2932 = vld [vmem:[%s300 + $0xfe] sm:$0xff]
      %v2933 = vld [vmem:[%s300 + $0x106] sm:$0xff]
      %v2934 = vld [vmem:[%s300 + $0x10e] sm:$0xff]
      %v2935 = vld [vmem:[%s300 + $0x116] sm:$0xff]
      %v2936 = vld [vmem:[%s300 + $0x11e] sm:$0xff]
      %v2937 = vld [vmem:[%s300 + $0x126] sm:$0xff]
      %v2938 = vld [vmem:[%s300 + $0x12e] sm:$0xff]
      %v2939 = vld [vmem:[%s300 + $0x136] sm:$0xff]
      %v2940 = vld [vmem:[%s300 + $0x13e] sm:$0xff]
      %s2941 = scalar_lea.vmem %s1, 1024
      %v2942 = vld [vmem:[%s2941] sm:$0xff]
      %v2943 = vld [vmem:[%s2941 + $0x8] sm:$0xff]
      %v2944 = vld [vmem:[%s2941 + $0x10] sm:$0xff]
      %v2945 = vld [vmem:[%s2941 + $0x18] sm:$0xff]
      %v2946 = vld [vmem:[%s2941 + $0x20] sm:$0xff]
      %v2947 = vld [vmem:[%s2941 + $0x28] sm:$0xff]
      %v2948 = vld [vmem:[%s2941 + $0x30] sm:$0xff]
      %v2949 = vld [vmem:[%s2941 + $0x38] sm:$0xff]
      %v2950 = vld [vmem:[%s2941 + $0x40] sm:$0xff]
      %v2951 = vld [vmem:[%s2941 + $0x48] sm:$0xff]
      %v2952 = vld [vmem:[%s2941 + $0x50] sm:$0xff]
      %v2953 = vld [vmem:[%s2941 + $0x58] sm:$0xff]
      %v2954 = vld [vmem:[%s2941 + $0x60] sm:$0xff]
      %v2955 = vld [vmem:[%s2941 + $0x68] sm:$0xff]
      %v2956 = vld [vmem:[%s2941 + $0x70] sm:$0xff]
      %v2957 = vld [vmem:[%s2941 + $0x78] sm:$0xff]
      %2958 = vmatprep.subr.mxu0 0.0
      %2959 = vmatpush1.msra.mxu0 %v2942
      %2960 = vmatprep.subr.mxu0 0.0
      %2961 = vmatpush1.msra.mxu0 %v2943
      %2962 = vmatprep.subr.mxu0 0.0
      %2963 = vmatpush1.msra.mxu0 %v2944
      %2964 = vmatprep.subr.mxu0 0.0
      %2965 = vmatpush1.msra.mxu0 %v2945
      %2966 = vmatprep.subr.mxu0 0.0
      %2967 = vmatpush1.msra.mxu0 %v2946
      %2968 = vmatprep.subr.mxu0 0.0
      %2969 = vmatpush1.msra.mxu0 %v2947
      %2970 = vmatprep.subr.mxu0 0.0
      %2971 = vmatpush1.msra.mxu0 %v2948
      %2972 = vmatprep.subr.mxu0 0.0
      %2973 = vmatpush1.msra.mxu0 %v2949
      %2974 = vmatprep.subr.mxu0 0.0
      %2975 = vmatpush1.msra.mxu0 %v2950
      %2976 = vmatprep.subr.mxu0 0.0
      %2977 = vmatpush1.msra.mxu0 %v2951
      %2978 = vmatprep.subr.mxu0 0.0
      %2979 = vmatpush1.msra.mxu0 %v2952
      %2980 = vmatprep.subr.mxu0 0.0
      %2981 = vmatpush1.msra.mxu0 %v2953
      %2982 = vmatprep.subr.mxu0 0.0
      %2983 = vmatpush1.msra.mxu0 %v2954
      %2984 = vmatprep.subr.mxu0 0.0
      %2985 = vmatpush1.msra.mxu0 %v2955
      %2986 = vmatprep.subr.mxu0 0.0
      %2987 = vmatpush1.msra.mxu0 %v2956
      %2988 = vmatprep.subr.mxu0 0.0
      %2989 = vmatpush1.msra.mxu0 %v2957
      %2990 = vmatprep.subr.mxu0 0.0
      %2991 = vmatpush1.msra.mxu0 0.0
      %2992 = vmatprep.subr.mxu0 0.0
      %2993 = vmatpush1.msra.mxu0 0.0
      %2994 = vmatprep.subr.mxu0 0.0
      %2995 = vmatpush1.msra.mxu0 0.0
      %2996 = vmatprep.subr.mxu0 0.0
      %2997 = vmatpush1.msra.mxu0 0.0
      %2998 = vmatprep.subr.mxu0 0.0
      %2999 = vmatpush1.msra.mxu0 0.0
      %3000 = vmatprep.subr.mxu0 0.0
      %3001 = vmatpush1.msra.mxu0 0.0
      %3002 = vmatprep.subr.mxu0 0.0
      %3003 = vmatpush1.msra.mxu0 0.0
      %3004 = vmatprep.subr.mxu0 0.0
      %3005 = vmatpush1.msra.mxu0 0.0
      %3006 = vmatprep.subr.mxu0 0.0
      %3007 = vmatpush1.msra.mxu0 0.0
      %3008 = vmatprep.subr.mxu0 0.0
      %3009 = vmatpush1.msra.mxu0 0.0
      %3010 = vmatprep.subr.mxu0 0.0
      %3011 = vmatpush1.msra.mxu0 0.0
      %3012 = vmatprep.subr.mxu0 0.0
      %3013 = vmatpush1.msra.mxu0 0.0
      %3014 = vmatprep.subr.mxu0 0.0
      %3015 = vmatpush1.msra.mxu0 0.0
      %3016 = vmatprep.subr.mxu0 0.0
      %3017 = vmatpush1.msra.mxu0 0.0
      %3018 = vmatprep.subr.mxu0 0.0
      %3019 = vmatpush1.msra.mxu0 0.0
      %3020 = vmatprep.subr.mxu0 0.0
      %3021 = vmatpush1.msra.mxu0 0.0
      %3022 = vmatprep.mubr.f32.mxu0 0.0
      %3023 = vmatmul.mubr.f32.gmra.mrb[0].mxu0 %v2905
      %v3024 = vpop.f32.mrb[0].mxu0
      %v3025 = vadd.f32 0.0, %v3024
      %v3026 = vpop.f32.mrb[0].mxu0
      %3027 = vmatprep.mubr.f32.mxu0 0.0
      %3028 = vmatmul.mubr.f32.gmra.mrb[0].mxu0 %v2906
      %v3029 = vpop.f32.mrb[0].mxu0
      %v3030 = vadd.f32 0.0, %v3029
      %v3031 = vpop.f32.mrb[0].mxu0
      %3032 = vmatprep.mubr.f32.mxu0 0.0
      %3033 = vmatmul.mubr.f32.gmra.mrb[0].mxu0 %v2907
      %v3034 = vpop.f32.mrb[0].mxu0
      %v3035 = vadd.f32 0.0, %v3034
      %v3036 = vpop.f32.mrb[0].mxu0
      %3037 = vmatprep.mubr.f32.mxu0 0.0
      %3038 = vmatmul.mubr.f32.gmra.mrb[0].mxu0 %v2908
      %v3039 = vpop.f32.mrb[0].mxu0
      %v3040 = vadd.f32 0.0, %v3039
      %v3041 = vpop.f32.mrb[0].mxu0
      %3042 = vmatprep.mubr.f32.mxu0 0.0
      %3043 = vmatmul.mubr.f32.gmra.mrb[0].mxu0 %v2909
      %v3044 = vpop.f32.mrb[0].mxu0
      %v3045 = vadd.f32 0.0, %v3044
      %v3046 = vpop.f32.mrb[0].mxu0
      %3047 = vmatprep.mubr.f32.mxu0 0.0
      %3048 = vmatmul.mubr.f32.gmra.mrb[0].mxu0 %v2910
      %v3049 = vpop.f32.mrb[0].mxu0
      %v3050 = vadd.f32 0.0, %v3049
      %v3051 = vpop.f32.mrb[0].mxu0
      %3052 = vmatprep.mubr.f32.mxu0 0.0
      %3053 = vmatmul.mubr.f32.gmra.mrb[0].mxu0 %v2911
      %v3054 = vpop.f32.mrb[0].mxu0
      %v3055 = vadd.f32 0.0, %v3054
      %v3056 = vpop.f32.mrb[0].mxu0
      %3057 = vmatprep.mubr.f32.mxu0 0.0
      %3058 = vmatmul.mubr.f32.gmra.mrb[0].mxu0 %v2912
      %v3059 = vpop.f32.mrb[0].mxu0
      %v3060 = vadd.f32 0.0, %v3059
      %v3061 = vpop.f32.mrb[0].mxu0
      %3062 = vmatprep.mubr.f32.mxu0 0.0
      %3063 = vmatmul.mubr.f32.gmra.mrb[0].mxu0 %v2913
      %v3064 = vpop.f32.mrb[0].mxu0
      %v3065 = vadd.f32 0.0, %v3064
      %v3066 = vpop.f32.mrb[0].mxu0
      %3067 = vmatprep.mubr.f32.mxu0 0.0
      %3068 = vmatmul.mubr.f32.gmra.mrb[0].mxu0 %v2914
      %v3069 = vpop.f32.mrb[0].mxu0
      %v3070 = vadd.f32 0.0, %v3069
      %v3071 = vpop.f32.mrb[0].mxu0
      %3072 = vmatprep.mubr.f32.mxu0 0.0
      %3073 = vmatmul.mubr.f32.gmra.mrb[0].mxu0 %v2915
      %v3074 = vpop.f32.mrb[0].mxu0
      %v3075 = vadd.f32 0.0, %v3074
      %v3076 = vpop.f32.mrb[0].mxu0
      %3077 = vmatprep.mubr.f32.mxu0 0.0
      %3078 = vmatmul.mubr.f32.gmra.mrb[0].mxu0 %v2916
      %v3079 = vpop.f32.mrb[0].mxu0
      %v3080 = vadd.f32 0.0, %v3079
      %v3081 = vpop.f32.mrb[0].mxu0
      %3082 = vmatprep.mubr.f32.mxu0 0.0
      %3083 = vmatmul.mubr.f32.gmra.mrb[0].mxu0 %v2917
      %v3084 = vpop.f32.mrb[0].mxu0
      %v3085 = vadd.f32 0.0, %v3084
      %v3086 = vpop.f32.mrb[0].mxu0
      %3087 = vmatprep.mubr.f32.mxu0 0.0
      %3088 = vmatmul.mubr.f32.gmra.mrb[0].mxu0 %v2918
      %v3089 = vpop.f32.mrb[0].mxu0
      %v3090 = vadd.f32 0.0, %v3089
      %v3091 = vpop.f32.mrb[0].mxu0
      %3092 = vmatprep.mubr.f32.mxu0 0.0
      %3093 = vmatmul.mubr.f32.gmra.mrb[0].mxu0 %v2919
      %v3094 = vpop.f32.mrb[0].mxu0
      %v3095 = vadd.f32 0.0, %v3094
      %v3096 = vpop.f32.mrb[0].mxu0
      %3097 = vmatprep.mubr.f32.mxu0 0.0
      %3098 = vmatmul.mubr.f32.gmra.mrb[0].mxu0 %v2920
      %v3099 = vpop.f32.mrb[0].mxu0
      %v3100 = vadd.f32 0.0, %v3099
      %v3101 = vpop.f32.mrb[0].mxu0
      %3102 = vmatprep.mubr.f32.mxu0 0.0
      %3103 = vmatmul.mubr.f32.gmra.mrb[0].mxu0 %v2921
      %v3104 = vpop.f32.mrb[0].mxu0
      %v3105 = vadd.f32 0.0, %v3104
      %v3106 = vpop.f32.mrb[0].mxu0
      %3107 = vmatprep.mubr.f32.mxu0 0.0
      %3108 = vmatmul.mubr.f32.gmra.mrb[0].mxu0 %v2922
      %v3109 = vpop.f32.mrb[0].mxu0
      %v3110 = vadd.f32 0.0, %v3109
      %v3111 = vpop.f32.mrb[0].mxu0
      %3112 = vmatprep.mubr.f32.mxu0 0.0
      %3113 = vmatmul.mubr.f32.gmra.mrb[0].mxu0 %v2923
      %v3114 = vpop.f32.mrb[0].mxu0
      %v3115 = vadd.f32 0.0, %v3114
      %v3116 = vpop.f32.mrb[0].mxu0
      %3117 = vmatprep.mubr.f32.mxu0 0.0
      %3118 = vmatmul.mubr.f32.gmra.mrb[0].mxu0 %v2924
      %v3119 = vpop.f32.mrb[0].mxu0
      %v3120 = vadd.f32 0.0, %v3119
      %v3121 = vpop.f32.mrb[0].mxu0
      %3122 = vmatprep.mubr.f32.mxu0 0.0
      %3123 = vmatmul.mubr.f32.gmra.mrb[0].mxu0 %v2925
      %v3124 = vpop.f32.mrb[0].mxu0
      %v3125 = vadd.f32 0.0, %v3124
      %v3126 = vpop.f32.mrb[0].mxu0
      %3127 = vmatprep.mubr.f32.mxu0 0.0
      %3128 = vmatmul.mubr.f32.gmra.mrb[0].mxu0 %v2926
      %v3129 = vpop.f32.mrb[0].mxu0
      %v3130 = vadd.f32 0.0, %v3129
      %v3131 = vpop.f32.mrb[0].mxu0
      %3132 = vmatprep.mubr.f32.mxu0 0.0
      %3133 = vmatmul.mubr.f32.gmra.mrb[0].mxu0 %v2927
      %v3134 = vpop.f32.mrb[0].mxu0
      %v3135 = vadd.f32 0.0, %v3134
      %v3136 = vpop.f32.mrb[0].mxu0
      %3137 = vmatprep.mubr.f32.mxu0 0.0
      %3138 = vmatmul.mubr.f32.gmra.mrb[0].mxu0 %v2928
      %v3139 = vpop.f32.mrb[0].mxu0
      %v3140 = vadd.f32 0.0, %v3139
      %v3141 = vpop.f32.mrb[0].mxu0
      %3142 = vmatprep.mubr.f32.mxu0 0.0
      %3143 = vmatmul.mubr.f32.gmra.mrb[0].mxu0 %v2929
      %v3144 = vpop.f32.mrb[0].mxu0
      %v3145 = vadd.f32 0.0, %v3144
      %v3146 = vpop.f32.mrb[0].mxu0
      %3147 = vmatprep.mubr.f32.mxu0 0.0
      %3148 = vmatmul.mubr.f32.gmra.mrb[0].mxu0 %v2930
      %v3149 = vpop.f32.mrb[0].mxu0
      %v3150 = vadd.f32 0.0, %v3149
      %v3151 = vpop.f32.mrb[0].mxu0
      %3152 = vmatprep.mubr.f32.mxu0 0.0
      %3153 = vmatmul.mubr.f32.gmra.mrb[0].mxu0 %v2931
      %v3154 = vpop.f32.mrb[0].mxu0
      %v3155 = vadd.f32 0.0, %v3154
      %v3156 = vpop.f32.mrb[0].mxu0
      %3157 = vmatprep.mubr.f32.mxu0 0.0
      %3158 = vmatmul.mubr.f32.gmra.mrb[0].mxu0 %v2932
      %v3159 = vpop.f32.mrb[0].mxu0
      %v3160 = vadd.f32 0.0, %v3159
      %v3161 = vpop.f32.mrb[0].mxu0
      %3162 = vmatprep.mubr.f32.mxu0 0.0
      %3163 = vmatmul.mubr.f32.gmra.mrb[0].mxu0 %v2933
      %v3164 = vpop.f32.mrb[0].mxu0
      %v3165 = vadd.f32 0.0, %v3164
      %v3166 = vpop.f32.mrb[0].mxu0
      %3167 = vmatprep.mubr.f32.mxu0 0.0
      %3168 = vmatmul.mubr.f32.gmra.mrb[0].mxu0 %v2934
      %v3169 = vpop.f32.mrb[0].mxu0
      %v3170 = vadd.f32 0.0, %v3169
      %v3171 = vpop.f32.mrb[0].mxu0
      %3172 = vmatprep.mubr.f32.mxu0 0.0
      %3173 = vmatmul.mubr.f32.gmra.mrb[0].mxu0 %v2935
      %v3174 = vpop.f32.mrb[0].mxu0
      %v3175 = vadd.f32 0.0, %v3174
      %v3176 = vpop.f32.mrb[0].mxu0
      %3177 = vmatprep.mubr.f32.mxu0 0.0
      %3178 = vmatmul.mubr.f32.gmra.mrb[0].mxu0 %v2936
      %v3179 = vpop.f32.mrb[0].mxu0
      %v3180 = vadd.f32 0.0, %v3179
      %v3181 = vpop.f32.mrb[0].mxu0
      %3182 = vmatprep.mubr.f32.mxu0 0.0
      %3183 = vmatmul.mubr.f32.gmra.mrb[0].mxu0 %v2937
      %v3184 = vpop.f32.mrb[0].mxu0
      %v3185 = vadd.f32 0.0, %v3184
      %v3186 = vpop.f32.mrb[0].mxu0
      %3187 = vmatprep.mubr.f32.mxu0 0.0
      %3188 = vmatmul.mubr.f32.gmra.mrb[0].mxu0 %v2938
      %v3189 = vpop.f32.mrb[0].mxu0
      %v3190 = vadd.f32 0.0, %v3189
      %v3191 = vpop.f32.mrb[0].mxu0
      %3192 = vmatprep.mubr.f32.mxu0 0.0
      %3193 = vmatmul.mubr.f32.gmra.mrb[0].mxu0 %v2939
      %v3194 = vpop.f32.mrb[0].mxu0
      %v3195 = vadd.f32 0.0, %v3194
      %v3196 = vpop.f32.mrb[0].mxu0
      %3197 = vmatprep.mubr.f32.mxu0 0.0
      %3198 = vmatmul.mubr.f32.gmra.mrb[0].mxu0 %v2940
      %v3199 = vpop.f32.mrb[0].mxu0
      %v3200 = vadd.f32 0.0, %v3199
      %v3201 = vpop.f32.mrb[0].mxu0
      %3202 = vdwg.mxu0
      %v3203 = vadd.f32 %v2869, %v3025
      %v3204 = vadd.f32 %v2870, %v3030
      %v3205 = vadd.f32 %v2871, %v3035
      %v3206 = vadd.f32 %v2872, %v3040
      %v3207 = vadd.f32 %v2873, %v3045
      %v3208 = vadd.f32 %v2874, %v3050
      %v3209 = vadd.f32 %v2875, %v3055
      %v3210 = vadd.f32 %v2876, %v3060
      %v3211 = vadd.f32 %v2877, %v3065
      %v3212 = vadd.f32 %v2878, %v3070
      %v3213 = vadd.f32 %v2879, %v3075
      %v3214 = vadd.f32 %v2880, %v3080
      %v3215 = vadd.f32 %v2881, %v3085
      %v3216 = vadd.f32 %v2882, %v3090
      %v3217 = vadd.f32 %v2883, %v3095
      %v3218 = vadd.f32 %v2884, %v3100
      %v3219 = vadd.f32 %v2885, %v3105
      %v3220 = vadd.f32 %v2886, %v3110
      %v3221 = vadd.f32 %v2887, %v3115
      %v3222 = vadd.f32 %v2888, %v3120
      %v3223 = vadd.f32 %v2889, %v3125
      %v3224 = vadd.f32 %v2890, %v3130
      %v3225 = vadd.f32 %v2891, %v3135
      %v3226 = vadd.f32 %v2892, %v3140
      %v3227 = vadd.f32 %v2893, %v3145
      %v3228 = vadd.f32 %v2894, %v3150
      %v3229 = vadd.f32 %v2895, %v3155
      %v3230 = vadd.f32 %v2896, %v3160
      %v3231 = vadd.f32 %v2897, %v3165
      %v3232 = vadd.f32 %v2898, %v3170
      %v3233 = vadd.f32 %v2899, %v3175
      %v3234 = vadd.f32 %v2900, %v3180
      %v3235 = vadd.f32 %v2901, %v3185
      %v3236 = vadd.f32 %v2902, %v3190
      %v3237 = vadd.f32 %v2903, %v3195
      %v3238 = vadd.f32 %v2904, %v3200
      %v3239 = vld [vmem:[%s3] sm:$0x1]
      %v3241 = vlaneseq
      %v3242 = vshrl.u32 %v3241, 7
      %v3243 = vsub.s32 0, %v3242
      %v3244 = vrot.slane %v3239, %v3243
      %v3246 = vmul.f32 %v3203, %v3244
      %v3247 = vmul.f32 %v3204, %v3244
      %v3248 = vmul.f32 %v3205, %v3244
      %v3249 = vmul.f32 %v3206, %v3244
      %v3250 = vmul.f32 %v3207, %v3244
      %v3251 = vmul.f32 %v3208, %v3244
      %v3252 = vmul.f32 %v3209, %v3244
      %v3253 = vmul.f32 %v3210, %v3244
      %v3254 = vmul.f32 %v3211, %v3244
      %v3255 = vmul.f32 %v3212, %v3244
      %v3256 = vmul.f32 %v3213, %v3244
      %v3257 = vmul.f32 %v3214, %v3244
      %v3258 = vmul.f32 %v3215, %v3244
      %v3259 = vmul.f32 %v3216, %v3244
      %v3260 = vmul.f32 %v3217, %v3244
      %v3261 = vmul.f32 %v3218, %v3244
      %v3262 = vmul.f32 %v3219, %v3244
      %v3263 = vmul.f32 %v3220, %v3244
      %v3264 = vmul.f32 %v3221, %v3244
      %v3265 = vmul.f32 %v3222, %v3244
      %v3266 = vmul.f32 %v3223, %v3244
      %v3267 = vmul.f32 %v3224, %v3244
      %v3268 = vmul.f32 %v3225, %v3244
      %v3269 = vmul.f32 %v3226, %v3244
      %v3270 = vmul.f32 %v3227, %v3244
      %v3271 = vmul.f32 %v3228, %v3244
      %v3272 = vmul.f32 %v3229, %v3244
      %v3273 = vmul.f32 %v3230, %v3244
      %v3274 = vmul.f32 %v3231, %v3244
      %v3275 = vmul.f32 %v3232, %v3244
      %v3276 = vmul.f32 %v3233, %v3244
      %v3277 = vmul.f32 %v3234, %v3244
      %v3278 = vmul.f32 %v3235, %v3244
      %v3279 = vmul.f32 %v3236, %v3244
      %v3280 = vmul.f32 %v3237, %v3244
      %v3281 = vmul.f32 %v3238, %v3244
      %v3282 = vld [vmem:[%s4] sm:$0x1]
      %v3284 = vlaneseq
      %v3285 = vshrl.u32 %v3284, 7
      %v3286 = vsub.s32 0, %v3285
      %v3287 = vrot.slane %v3282, %v3286
      %v3289 = vadd.f32 %v3246, %v3287
      %v3290 = vadd.f32 %v3247, %v3287
      %v3291 = vadd.f32 %v3248, %v3287
      %v3292 = vadd.f32 %v3249, %v3287
      %v3293 = vadd.f32 %v3250, %v3287
      %v3294 = vadd.f32 %v3251, %v3287
      %v3295 = vadd.f32 %v3252, %v3287
      %v3296 = vadd.f32 %v3253, %v3287
      %v3297 = vadd.f32 %v3254, %v3287
      %v3298 = vadd.f32 %v3255, %v3287
      %v3299 = vadd.f32 %v3256, %v3287
      %v3300 = vadd.f32 %v3257, %v3287
      %v3301 = vadd.f32 %v3258, %v3287
      %v3302 = vadd.f32 %v3259, %v3287
      %v3303 = vadd.f32 %v3260, %v3287
      %v3304 = vadd.f32 %v3261, %v3287
      %v3305 = vadd.f32 %v3262, %v3287
      %v3306 = vadd.f32 %v3263, %v3287
      %v3307 = vadd.f32 %v3264, %v3287
      %v3308 = vadd.f32 %v3265, %v3287
      %v3309 = vadd.f32 %v3266, %v3287
      %v3310 = vadd.f32 %v3267, %v3287
      %v3311 = vadd.f32 %v3268, %v3287
      %v3312 = vadd.f32 %v3269, %v3287
      %v3313 = vadd.f32 %v3270, %v3287
      %v3314 = vadd.f32 %v3271, %v3287
      %v3315 = vadd.f32 %v3272, %v3287
      %v3316 = vadd.f32 %v3273, %v3287
      %v3317 = vadd.f32 %v3274, %v3287
      %v3318 = vadd.f32 %v3275, %v3287
      %v3319 = vadd.f32 %v3276, %v3287
      %v3320 = vadd.f32 %v3277, %v3287
      %v3321 = vadd.f32 %v3278, %v3287
      %v3322 = vadd.f32 %v3279, %v3287
      %v3323 = vadd.f32 %v3280, %v3287
      %v3324 = vadd.f32 %v3281, %v3287
      %v3325 = vmax.f32 %v3289, 0.0
      %v3326 = vmax.f32 %v3290, 0.0
      %v3327 = vmax.f32 %v3291, 0.0
      %v3328 = vmax.f32 %v3292, 0.0
      %v3329 = vmax.f32 %v3293, 0.0
      %v3330 = vmax.f32 %v3294, 0.0
      %v3331 = vmax.f32 %v3295, 0.0
      %v3332 = vmax.f32 %v3296, 0.0
      %v3333 = vmax.f32 %v3297, 0.0
      %v3334 = vmax.f32 %v3298, 0.0
      %v3335 = vmax.f32 %v3299, 0.0
      %v3336 = vmax.f32 %v3300, 0.0
      %v3337 = vmax.f32 %v3301, 0.0
      %v3338 = vmax.f32 %v3302, 0.0
      %v3339 = vmax.f32 %v3303, 0.0
      %v3340 = vmax.f32 %v3304, 0.0
      %v3341 = vmax.f32 %v3305, 0.0
      %v3342 = vmax.f32 %v3306, 0.0
      %v3343 = vmax.f32 %v3307, 0.0
      %v3344 = vmax.f32 %v3308, 0.0
      %v3345 = vmax.f32 %v3309, 0.0
      %v3346 = vmax.f32 %v3310, 0.0
      %v3347 = vmax.f32 %v3311, 0.0
      %v3348 = vmax.f32 %v3312, 0.0
      %v3349 = vmax.f32 %v3313, 0.0
      %v3350 = vmax.f32 %v3314, 0.0
      %v3351 = vmax.f32 %v3315, 0.0
      %v3352 = vmax.f32 %v3316, 0.0
      %v3353 = vmax.f32 %v3317, 0.0
      %v3354 = vmax.f32 %v3318, 0.0
      %v3355 = vmax.f32 %v3319, 0.0
      %v3356 = vmax.f32 %v3320, 0.0
      %v3357 = vmax.f32 %v3321, 0.0
      %v3358 = vmax.f32 %v3322, 0.0
      %v3359 = vmax.f32 %v3323, 0.0
      %v3360 = vmax.f32 %v3324, 0.0
      %v3361 = vld [vmem:[%s7] sm:$0xff]
      %v3362 = vld [vmem:[%s7 + $0x8] sm:$0xff]
      %v3363 = vld [vmem:[%s7 + $0x10] sm:$0xff]
      %v3364 = vld [vmem:[%s7 + $0x18] sm:$0xff]
      %v3365 = vld [vmem:[%s7 + $0x20] sm:$0xff]
      %v3366 = vld [vmem:[%s7 + $0x28] sm:$0xff]
      %v3367 = vld [vmem:[%s7 + $0x30] sm:$0xff]
      %v3368 = vld [vmem:[%s7 + $0x38] sm:$0xff]
      %v3369 = vld [vmem:[%s7 + $0x40] sm:$0xff]
      %v3370 = vld [vmem:[%s7 + $0x48] sm:$0xff]
      %v3371 = vld [vmem:[%s7 + $0x50] sm:$0xff]
      %v3372 = vld [vmem:[%s7 + $0x58] sm:$0xff]
      %v3373 = vld [vmem:[%s7 + $0x60] sm:$0xff]
      %v3374 = vld [vmem:[%s7 + $0x68] sm:$0xff]
      %v3375 = vld [vmem:[%s7 + $0x70] sm:$0xff]
      %v3376 = vld [vmem:[%s7 + $0x78] sm:$0xff]
      %v3377 = vld [vmem:[%s7 + $0x80] sm:$0xff]
      %v3378 = vld [vmem:[%s7 + $0x88] sm:$0xff]
      %v3379 = vld [vmem:[%s7 + $0x90] sm:$0xff]
      %v3380 = vld [vmem:[%s7 + $0x98] sm:$0xff]
      %v3381 = vld [vmem:[%s7 + $0xa0] sm:$0xff]
      %v3382 = vld [vmem:[%s7 + $0xa8] sm:$0xff]
      %v3383 = vld [vmem:[%s7 + $0xb0] sm:$0xff]
      %v3384 = vld [vmem:[%s7 + $0xb8] sm:$0xff]
      %v3385 = vld [vmem:[%s7 + $0xc0] sm:$0xff]
      %v3386 = vld [vmem:[%s7 + $0xc8] sm:$0xff]
      %v3387 = vld [vmem:[%s7 + $0xd0] sm:$0xff]
      %v3388 = vld [vmem:[%s7 + $0xd8] sm:$0xff]
      %v3389 = vld [vmem:[%s7 + $0xe0] sm:$0xff]
      %v3390 = vld [vmem:[%s7 + $0xe8] sm:$0xff]
      %v3391 = vld [vmem:[%s7 + $0xf0] sm:$0xff]
      %v3392 = vld [vmem:[%s7 + $0xf8] sm:$0xff]
      %v3393 = vld [vmem:[%s7 + $0x100] sm:$0xff]
      %v3394 = vld [vmem:[%s7 + $0x108] sm:$0xff]
      %v3395 = vld [vmem:[%s7 + $0x110] sm:$0xff]
      %v3396 = vld [vmem:[%s7 + $0x118] sm:$0xff]
      %3398 = vset.pattern.permute.xlu0 0
      %3399 = vperm.xlu0 %3398, %v3361
      %v3400 = vpop.permute.xlu0 %3399
      %3403 = vset.pattern.permute.xlu0 0
      %3404 = vperm.xlu0 %3403, %v3362
      %v3405 = vpop.permute.xlu0 %3404
      %3408 = vset.pattern.permute.xlu0 0
      %3409 = vperm.xlu0 %3408, %v3363
      %v3410 = vpop.permute.xlu0 %3409
      %3413 = vset.pattern.permute.xlu0 0
      %3414 = vperm.xlu0 %3413, %v3364
      %v3415 = vpop.permute.xlu0 %3414
      %3418 = vset.pattern.permute.xlu0 0
      %3419 = vperm.xlu0 %3418, %v3365
      %v3420 = vpop.permute.xlu0 %3419
      %3423 = vset.pattern.permute.xlu0 0
      %3424 = vperm.xlu0 %3423, %v3366
      %v3425 = vpop.permute.xlu0 %3424
      %3428 = vset.pattern.permute.xlu0 0
      %3429 = vperm.xlu0 %3428, %v3367
      %v3430 = vpop.permute.xlu0 %3429
      %3433 = vset.pattern.permute.xlu0 0
      %3434 = vperm.xlu0 %3433, %v3368
      %v3435 = vpop.permute.xlu0 %3434
      %3438 = vset.pattern.permute.xlu0 0
      %3439 = vperm.xlu0 %3438, %v3369
      %v3440 = vpop.permute.xlu0 %3439
      %3443 = vset.pattern.permute.xlu0 0
      %3444 = vperm.xlu0 %3443, %v3370
      %v3445 = vpop.permute.xlu0 %3444
      %3448 = vset.pattern.permute.xlu0 0
      %3449 = vperm.xlu0 %3448, %v3371
      %v3450 = vpop.permute.xlu0 %3449
      %3453 = vset.pattern.permute.xlu0 0
      %3454 = vperm.xlu0 %3453, %v3372
      %v3455 = vpop.permute.xlu0 %3454
      %3458 = vset.pattern.permute.xlu0 0
      %3459 = vperm.xlu0 %3458, %v3373
      %v3460 = vpop.permute.xlu0 %3459
      %3463 = vset.pattern.permute.xlu0 0
      %3464 = vperm.xlu0 %3463, %v3374
      %v3465 = vpop.permute.xlu0 %3464
      %3468 = vset.pattern.permute.xlu0 0
      %3469 = vperm.xlu0 %3468, %v3375
      %v3470 = vpop.permute.xlu0 %3469
      %3473 = vset.pattern.permute.xlu0 0
      %3474 = vperm.xlu0 %3473, %v3376
      %v3475 = vpop.permute.xlu0 %3474
      %3478 = vset.pattern.permute.xlu0 0
      %3479 = vperm.xlu0 %3478, %v3377
      %v3480 = vpop.permute.xlu0 %3479
      %3483 = vset.pattern.permute.xlu0 0
      %3484 = vperm.xlu0 %3483, %v3378
      %v3485 = vpop.permute.xlu0 %3484
      %3488 = vset.pattern.permute.xlu0 0
      %3489 = vperm.xlu0 %3488, %v3379
      %v3490 = vpop.permute.xlu0 %3489
      %3493 = vset.pattern.permute.xlu0 0
      %3494 = vperm.xlu0 %3493, %v3380
      %v3495 = vpop.permute.xlu0 %3494
      %3498 = vset.pattern.permute.xlu0 0
      %3499 = vperm.xlu0 %3498, %v3381
      %v3500 = vpop.permute.xlu0 %3499
      %3503 = vset.pattern.permute.xlu0 0
      %3504 = vperm.xlu0 %3503, %v3382
      %v3505 = vpop.permute.xlu0 %3504
      %3508 = vset.pattern.permute.xlu0 0
      %3509 = vperm.xlu0 %3508, %v3383
      %v3510 = vpop.permute.xlu0 %3509
      %3513 = vset.pattern.permute.xlu0 0
      %3514 = vperm.xlu0 %3513, %v3384
      %v3515 = vpop.permute.xlu0 %3514
      %3518 = vset.pattern.permute.xlu0 0
      %3519 = vperm.xlu0 %3518, %v3385
      %v3520 = vpop.permute.xlu0 %3519
      %3523 = vset.pattern.permute.xlu0 0
      %3524 = vperm.xlu0 %3523, %v3386
      %v3525 = vpop.permute.xlu0 %3524
      %3528 = vset.pattern.permute.xlu0 0
      %3529 = vperm.xlu0 %3528, %v3387
      %v3530 = vpop.permute.xlu0 %3529
      %3533 = vset.pattern.permute.xlu0 0
      %3534 = vperm.xlu0 %3533, %v3388
      %v3535 = vpop.permute.xlu0 %3534
      %3538 = vset.pattern.permute.xlu0 0
      %3539 = vperm.xlu0 %3538, %v3389
      %v3540 = vpop.permute.xlu0 %3539
      %3543 = vset.pattern.permute.xlu0 0
      %3544 = vperm.xlu0 %3543, %v3390
      %v3545 = vpop.permute.xlu0 %3544
      %3548 = vset.pattern.permute.xlu0 0
      %3549 = vperm.xlu0 %3548, %v3391
      %v3550 = vpop.permute.xlu0 %3549
      %3553 = vset.pattern.permute.xlu0 0
      %3554 = vperm.xlu0 %3553, %v3392
      %v3555 = vpop.permute.xlu0 %3554
      %3558 = vset.pattern.permute.xlu0 0
      %3559 = vperm.xlu0 %3558, %v3393
      %v3560 = vpop.permute.xlu0 %3559
      %3563 = vset.pattern.permute.xlu0 0
      %3564 = vperm.xlu0 %3563, %v3394
      %v3565 = vpop.permute.xlu0 %3564
      %3568 = vset.pattern.permute.xlu0 0
      %3569 = vperm.xlu0 %3568, %v3395
      %v3570 = vpop.permute.xlu0 %3569
      %3573 = vset.pattern.permute.xlu0 0
      %3574 = vperm.xlu0 %3573, %v3396
      %v3575 = vpop.permute.xlu0 %3574
      %v3577 = vmul.f32 %v3325, %v3400
      %v3578 = vmul.f32 %v3326, %v3405
      %v3579 = vmul.f32 %v3327, %v3410
      %v3580 = vmul.f32 %v3328, %v3415
      %v3581 = vmul.f32 %v3329, %v3420
      %v3582 = vmul.f32 %v3330, %v3425
      %v3583 = vmul.f32 %v3331, %v3430
      %v3584 = vmul.f32 %v3332, %v3435
      %v3585 = vmul.f32 %v3333, %v3440
      %v3586 = vmul.f32 %v3334, %v3445
      %v3587 = vmul.f32 %v3335, %v3450
      %v3588 = vmul.f32 %v3336, %v3455
      %v3589 = vmul.f32 %v3337, %v3460
      %v3590 = vmul.f32 %v3338, %v3465
      %v3591 = vmul.f32 %v3339, %v3470
      %v3592 = vmul.f32 %v3340, %v3475
      %v3593 = vmul.f32 %v3341, %v3480
      %v3594 = vmul.f32 %v3342, %v3485
      %v3595 = vmul.f32 %v3343, %v3490
      %v3596 = vmul.f32 %v3344, %v3495
      %v3597 = vmul.f32 %v3345, %v3500
      %v3598 = vmul.f32 %v3346, %v3505
      %v3599 = vmul.f32 %v3347, %v3510
      %v3600 = vmul.f32 %v3348, %v3515
      %v3601 = vmul.f32 %v3349, %v3520
      %v3602 = vmul.f32 %v3350, %v3525
      %v3603 = vmul.f32 %v3351, %v3530
      %v3604 = vmul.f32 %v3352, %v3535
      %v3605 = vmul.f32 %v3353, %v3540
      %v3606 = vmul.f32 %v3354, %v3545
      %v3607 = vmul.f32 %v3355, %v3550
      %v3608 = vmul.f32 %v3356, %v3555
      %v3609 = vmul.f32 %v3357, %v3560
      %v3610 = vmul.f32 %v3358, %v3565
      %v3611 = vmul.f32 %v3359, %v3570
      %v3612 = vmul.f32 %v3360, %v3575
      %3613 = vst [vmem:[#allocation2] sm:$0xff] 0.0
      %3614 = vst [vmem:[#allocation2 + $0x8] sm:$0xff] 0.0
      %3615 = vst [vmem:[#allocation2 + $0x10] sm:$0xff] 0.0
      %3616 = vst [vmem:[#allocation2 + $0x18] sm:$0xff] 0.0
      %3617 = vst [vmem:[#allocation2 + $0x20] sm:$0xff] 0.0
      %3618 = vst [vmem:[#allocation2 + $0x28] sm:$0xff] 0.0
      %3619 = vst [vmem:[#allocation2 + $0x30] sm:$0xff] 0.0
      %3620 = vst [vmem:[#allocation2 + $0x38] sm:$0xff] 0.0
      %3621 = vst [vmem:[#allocation2 + $0x40] sm:$0xff] 0.0
      %3622 = vst [vmem:[#allocation2 + $0x48] sm:$0xff] 0.0
      %3623 = vst [vmem:[#allocation2 + $0x50] sm:$0xff] 0.0
      %3624 = vst [vmem:[#allocation2 + $0x58] sm:$0xff] 0.0
      %3625 = vst [vmem:[#allocation2 + $0x60] sm:$0xff] 0.0
      %3626 = vst [vmem:[#allocation2 + $0x68] sm:$0xff] 0.0
      %3627 = vst [vmem:[#allocation2 + $0x70] sm:$0xff] 0.0
      %3628 = vst [vmem:[#allocation2 + $0x78] sm:$0xff] 0.0
      %3629 = vst [vmem:[#allocation2 + $0x80] sm:$0xff] 0.0
      %3630 = vst [vmem:[#allocation2 + $0x88] sm:$0xff] 0.0
      %3631 = vst [vmem:[#allocation2 + $0x90] sm:$0xff] 0.0
      %3632 = vst [vmem:[#allocation2 + $0x98] sm:$0xff] 0.0
      %3633 = vst [vmem:[#allocation2 + $0xa0] sm:$0xff] 0.0
      %3634 = vst [vmem:[#allocation2 + $0xa8] sm:$0xff] 0.0
      %3635 = vst [vmem:[#allocation2 + $0xb0] sm:$0xff] 0.0
      %3636 = vst [vmem:[#allocation2 + $0xb8] sm:$0xff] 0.0
      %3637 = vst [vmem:[#allocation2 + $0xc0] sm:$0xff] 0.0
      %3638 = vst [vmem:[#allocation2 + $0xc8] sm:$0xff] 0.0
      %3639 = vst [vmem:[#allocation2 + $0xd0] sm:$0xff] 0.0
      %3640 = vst [vmem:[#allocation2 + $0xd8] sm:$0xff] 0.0
      %3641 = vst [vmem:[#allocation2 + $0xe0] sm:$0xff] 0.0
      %3642 = vst [vmem:[#allocation2 + $0xe8] sm:$0xff] 0.0
      %3643 = vst [vmem:[#allocation2 + $0xf0] sm:$0xff] 0.0
      %3644 = vst [vmem:[#allocation2 + $0xf8] sm:$0xff] 0.0
      %3645 = vst [vmem:[#allocation2 + $0x100] sm:$0xff] 0.0
      %3646 = vst [vmem:[#allocation2 + $0x108] sm:$0xff] 0.0
      %3647 = vst [vmem:[#allocation2 + $0x110] sm:$0xff] 0.0
      %3648 = vst [vmem:[#allocation2 + $0x118] sm:$0xff] 0.0
      %3649 = vst [vmem:[#allocation2 + $0x120] sm:$0xff] 0.0
      %3650 = vst [vmem:[#allocation2 + $0x128] sm:$0xff] 0.0
      %3651 = vst [vmem:[#allocation2 + $0x130] sm:$0xff] 0.0
      %3652 = vst [vmem:[#allocation2 + $0x138] sm:$0xff] 0.0
      %3653 = vst [vmem:[#allocation2 + $0x140] sm:$0xff] 0.0
      %3654 = vst [vmem:[#allocation2 + $0x148] sm:$0xff] 0.0
      %3655 = vst [vmem:[#allocation2 + $0x150] sm:$0x3f] 0.0
      %3656 = vst [vmem:[#allocation2 + $0x13] sm:$0xff] %v3577
      %3657 = vst [vmem:[#allocation2 + $0x1b] sm:$0xff] %v3578
      %3658 = vst [vmem:[#allocation2 + $0x23] sm:$0xff] %v3579
      %3659 = vst [vmem:[#allocation2 + $0x2b] sm:$0xff] %v3580
      %3660 = vst [vmem:[#allocation2 + $0x33] sm:$0xff] %v3581
      %3661 = vst [vmem:[#allocation2 + $0x3b] sm:$0xff] %v3582
      %3662 = vst [vmem:[#allocation2 + $0x43] sm:$0xff] %v3583
      %3663 = vst [vmem:[#allocation2 + $0x4b] sm:$0xff] %v3584
      %3664 = vst [vmem:[#allocation2 + $0x53] sm:$0xff] %v3585
      %3665 = vst [vmem:[#allocation2 + $0x5b] sm:$0xff] %v3586
      %3666 = vst [vmem:[#allocation2 + $0x63] sm:$0xff] %v3587
      %3667 = vst [vmem:[#allocation2 + $0x6b] sm:$0xff] %v3588
      %3668 = vst [vmem:[#allocation2 + $0x73] sm:$0xff] %v3589
      %3669 = vst [vmem:[#allocation2 + $0x7b] sm:$0xff] %v3590
      %3670 = vst [vmem:[#allocation2 + $0x83] sm:$0xff] %v3591
      %3671 = vst [vmem:[#allocation2 + $0x8b] sm:$0xff] %v3592
      %3672 = vst [vmem:[#allocation2 + $0x93] sm:$0xff] %v3593
      %3673 = vst [vmem:[#allocation2 + $0x9b] sm:$0xff] %v3594
      %3674 = vst [vmem:[#allocation2 + $0xa3] sm:$0xff] %v3595
      %3675 = vst [vmem:[#allocation2 + $0xab] sm:$0xff] %v3596
      %3676 = vst [vmem:[#allocation2 + $0xb3] sm:$0xff] %v3597
      %3677 = vst [vmem:[#allocation2 + $0xbb] sm:$0xff] %v3598
      %3678 = vst [vmem:[#allocation2 + $0xc3] sm:$0xff] %v3599
      %3679 = vst [vmem:[#allocation2 + $0xcb] sm:$0xff] %v3600
      %3680 = vst [vmem:[#allocation2 + $0xd3] sm:$0xff] %v3601
      %3681 = vst [vmem:[#allocation2 + $0xdb] sm:$0xff] %v3602
      %3682 = vst [vmem:[#allocation2 + $0xe3] sm:$0xff] %v3603
      %3683 = vst [vmem:[#allocation2 + $0xeb] sm:$0xff] %v3604
      %3684 = vst [vmem:[#allocation2 + $0xf3] sm:$0xff] %v3605
      %3685 = vst [vmem:[#allocation2 + $0xfb] sm:$0xff] %v3606
      %3686 = vst [vmem:[#allocation2 + $0x103] sm:$0xff] %v3607
      %3687 = vst [vmem:[#allocation2 + $0x10b] sm:$0xff] %v3608
      %3688 = vst [vmem:[#allocation2 + $0x113] sm:$0xff] %v3609
      %3689 = vst [vmem:[#allocation2 + $0x11b] sm:$0xff] %v3610
      %3690 = vst [vmem:[#allocation2 + $0x123] sm:$0xff] %v3611
      %3691 = vst [vmem:[#allocation2 + $0x12b] sm:$0xff] %v3612
      %v3692 = vld [vmem:[#allocation2] sm:$0xff]
      %v3693 = vld [vmem:[#allocation2 + $0x8] sm:$0xff]
      %v3694 = vld [vmem:[#allocation2 + $0x10] sm:$0xff]
      %v3695 = vld [vmem:[#allocation2 + $0x18] sm:$0xff]
      %v3696 = vld [vmem:[#allocation2 + $0x20] sm:$0xff]
      %v3697 = vld [vmem:[#allocation2 + $0x28] sm:$0xff]
      %v3698 = vld [vmem:[#allocation2 + $0x30] sm:$0xff]
      %v3699 = vld [vmem:[#allocation2 + $0x38] sm:$0xff]
      %v3700 = vld [vmem:[#allocation2 + $0x40] sm:$0xff]
      %v3701 = vld [vmem:[#allocation2 + $0x48] sm:$0xff]
      %v3702 = vld [vmem:[#allocation2 + $0x50] sm:$0xff]
      %v3703 = vld [vmem:[#allocation2 + $0x58] sm:$0xff]
      %v3704 = vld [vmem:[#allocation2 + $0x60] sm:$0xff]
      %v3705 = vld [vmem:[#allocation2 + $0x68] sm:$0xff]
      %v3706 = vld [vmem:[#allocation2 + $0x70] sm:$0xff]
      %v3707 = vld [vmem:[#allocation2 + $0x78] sm:$0xff]
      %v3708 = vld [vmem:[#allocation2 + $0x80] sm:$0xff]
      %v3709 = vld [vmem:[#allocation2 + $0x88] sm:$0xff]
      %v3710 = vld [vmem:[#allocation2 + $0x90] sm:$0xff]
      %v3711 = vld [vmem:[#allocation2 + $0x98] sm:$0xff]
      %v3712 = vld [vmem:[#allocation2 + $0xa0] sm:$0xff]
      %v3713 = vld [vmem:[#allocation2 + $0xa8] sm:$0xff]
      %v3714 = vld [vmem:[#allocation2 + $0xb0] sm:$0xff]
      %v3715 = vld [vmem:[#allocation2 + $0xb8] sm:$0xff]
      %v3716 = vld [vmem:[#allocation2 + $0xc0] sm:$0xff]
      %v3717 = vld [vmem:[#allocation2 + $0xc8] sm:$0xff]
      %v3718 = vld [vmem:[#allocation2 + $0xd0] sm:$0xff]
      %v3719 = vld [vmem:[#allocation2 + $0xd8] sm:$0xff]
      %v3720 = vld [vmem:[#allocation2 + $0xe0] sm:$0xff]
      %v3721 = vld [vmem:[#allocation2 + $0xe8] sm:$0xff]
      %v3722 = vld [vmem:[#allocation2 + $0xf0] sm:$0xff]
      %v3723 = vld [vmem:[#allocation2 + $0xf8] sm:$0xff]
      %v3724 = vld [vmem:[#allocation2 + $0x100] sm:$0xff]
      %v3725 = vld [vmem:[#allocation2 + $0x108] sm:$0xff]
      %v3726 = vld [vmem:[#allocation2 + $0x110] sm:$0xff]
      %v3727 = vld [vmem:[#allocation2 + $0x118] sm:$0xff]
      %v3728 = vld [vmem:[%s2] sm:$0xff]
      %v3729 = vld [vmem:[%s2 + $0x8] sm:$0xff]
      %v3730 = vld [vmem:[%s2 + $0x10] sm:$0xff]
      %v3731 = vld [vmem:[%s2 + $0x18] sm:$0xff]
      %v3732 = vld [vmem:[%s2 + $0x20] sm:$0xff]
      %v3733 = vld [vmem:[%s2 + $0x28] sm:$0xff]
      %v3734 = vld [vmem:[%s2 + $0x30] sm:$0xff]
      %v3735 = vld [vmem:[%s2 + $0x38] sm:$0xff]
      %v3736 = vld [vmem:[%s2 + $0x40] sm:$0xff]
      %v3737 = vld [vmem:[%s2 + $0x48] sm:$0xff]
      %v3738 = vld [vmem:[%s2 + $0x50] sm:$0xff]
      %v3739 = vld [vmem:[%s2 + $0x58] sm:$0xff]
      %v3740 = vld [vmem:[%s2 + $0x60] sm:$0xff]
      %v3741 = vld [vmem:[%s2 + $0x68] sm:$0xff]
      %v3742 = vld [vmem:[%s2 + $0x70] sm:$0xff]
      %v3743 = vld [vmem:[%s2 + $0x78] sm:$0xff]
      %v3744 = vld [vmem:[#allocation2 + $0x1] sm:$0xff]
      %v3745 = vld [vmem:[#allocation2 + $0x9] sm:$0xff]
      %v3746 = vld [vmem:[#allocation2 + $0x11] sm:$0xff]
      %v3747 = vld [vmem:[#allocation2 + $0x19] sm:$0xff]
      %v3748 = vld [vmem:[#allocation2 + $0x21] sm:$0xff]
      %v3749 = vld [vmem:[#allocation2 + $0x29] sm:$0xff]
      %v3750 = vld [vmem:[#allocation2 + $0x31] sm:$0xff]
      %v3751 = vld [vmem:[#allocation2 + $0x39] sm:$0xff]
      %v3752 = vld [vmem:[#allocation2 + $0x41] sm:$0xff]
      %v3753 = vld [vmem:[#allocation2 + $0x49] sm:$0xff]
      %v3754 = vld [vmem:[#allocation2 + $0x51] sm:$0xff]
      %v3755 = vld [vmem:[#allocation2 + $0x59] sm:$0xff]
      %v3756 = vld [vmem:[#allocation2 + $0x61] sm:$0xff]
      %v3757 = vld [vmem:[#allocation2 + $0x69] sm:$0xff]
      %v3758 = vld [vmem:[#allocation2 + $0x71] sm:$0xff]
      %v3759 = vld [vmem:[#allocation2 + $0x79] sm:$0xff]
      %v3760 = vld [vmem:[#allocation2 + $0x81] sm:$0xff]
      %v3761 = vld [vmem:[#allocation2 + $0x89] sm:$0xff]
      %v3762 = vld [vmem:[#allocation2 + $0x91] sm:$0xff]
      %v3763 = vld [vmem:[#allocation2 + $0x99] sm:$0xff]
      %v3764 = vld [vmem:[#allocation2 + $0xa1] sm:$0xff]
      %v3765 = vld [vmem:[#allocation2 + $0xa9] sm:$0xff]
      %v3766 = vld [vmem:[#allocation2 + $0xb1] sm:$0xff]
      %v3767 = vld [vmem:[#allocation2 + $0xb9] sm:$0xff]
      %v3768 = vld [vmem:[#allocation2 + $0xc1] sm:$0xff]
      %v3769 = vld [vmem:[#allocation2 + $0xc9] sm:$0xff]
      %v3770 = vld [vmem:[#allocation2 + $0xd1] sm:$0xff]
      %v3771 = vld [vmem:[#allocation2 + $0xd9] sm:$0xff]
      %v3772 = vld [vmem:[#allocation2 + $0xe1] sm:$0xff]
      %v3773 = vld [vmem:[#allocation2 + $0xe9] sm:$0xff]
      %v3774 = vld [vmem:[#allocation2 + $0xf1] sm:$0xff]
      %v3775 = vld [vmem:[#allocation2 + $0xf9] sm:$0xff]
      %v3776 = vld [vmem:[#allocation2 + $0x101] sm:$0xff]
      %v3777 = vld [vmem:[#allocation2 + $0x109] sm:$0xff]
      %v3778 = vld [vmem:[#allocation2 + $0x111] sm:$0xff]
      %v3779 = vld [vmem:[#allocation2 + $0x119] sm:$0xff]
      %s3780 = scalar_lea.vmem %s2, 128
      %v3781 = vld [vmem:[%s3780] sm:$0xff]
      %v3782 = vld [vmem:[%s3780 + $0x8] sm:$0xff]
      %v3783 = vld [vmem:[%s3780 + $0x10] sm:$0xff]
      %v3784 = vld [vmem:[%s3780 + $0x18] sm:$0xff]
      %v3785 = vld [vmem:[%s3780 + $0x20] sm:$0xff]
      %v3786 = vld [vmem:[%s3780 + $0x28] sm:$0xff]
      %v3787 = vld [vmem:[%s3780 + $0x30] sm:$0xff]
      %v3788 = vld [vmem:[%s3780 + $0x38] sm:$0xff]
      %v3789 = vld [vmem:[%s3780 + $0x40] sm:$0xff]
      %v3790 = vld [vmem:[%s3780 + $0x48] sm:$0xff]
      %v3791 = vld [vmem:[%s3780 + $0x50] sm:$0xff]
      %v3792 = vld [vmem:[%s3780 + $0x58] sm:$0xff]
      %v3793 = vld [vmem:[%s3780 + $0x60] sm:$0xff]
      %v3794 = vld [vmem:[%s3780 + $0x68] sm:$0xff]
      %v3795 = vld [vmem:[%s3780 + $0x70] sm:$0xff]
      %v3796 = vld [vmem:[%s3780 + $0x78] sm:$0xff]
      %3797 = vmatprep.subr.mxu0 0.0
      %3798 = vmatpush1.msra.mxu0 %v3781
      %3799 = vmatprep.subr.mxu0 0.0
      %3800 = vmatpush1.msra.mxu0 %v3782
      %3801 = vmatprep.subr.mxu0 0.0
      %3802 = vmatpush1.msra.mxu0 %v3783
      %3803 = vmatprep.subr.mxu0 0.0
      %3804 = vmatpush1.msra.mxu0 %v3784
      %3805 = vmatprep.subr.mxu0 0.0
      %3806 = vmatpush1.msra.mxu0 %v3785
      %3807 = vmatprep.subr.mxu0 0.0
      %3808 = vmatpush1.msra.mxu0 %v3786
      %3809 = vmatprep.subr.mxu0 0.0
      %3810 = vmatpush1.msra.mxu0 %v3787
      %3811 = vmatprep.subr.mxu0 0.0
      %3812 = vmatpush1.msra.mxu0 %v3788
      %3813 = vmatprep.subr.mxu0 0.0
      %3814 = vmatpush1.msra.mxu0 %v3789
      %3815 = vmatprep.subr.mxu0 0.0
      %3816 = vmatpush1.msra.mxu0 %v3790
      %3817 = vmatprep.subr.mxu0 0.0
      %3818 = vmatpush1.msra.mxu0 %v3791
      %3819 = vmatprep.subr.mxu0 0.0
      %3820 = vmatpush1.msra.mxu0 %v3792
      %3821 = vmatprep.subr.mxu0 0.0
      %3822 = vmatpush1.msra.mxu0 %v3793
      %3823 = vmatprep.subr.mxu0 0.0
      %3824 = vmatpush1.msra.mxu0 %v3794
      %3825 = vmatprep.subr.mxu0 0.0
      %3826 = vmatpush1.msra.mxu0 %v3795
      %3827 = vmatprep.subr.mxu0 0.0
      %3828 = vmatpush1.msra.mxu0 %v3796
      %3829 = vmatprep.subr.mxu0 0.0
      %3830 = vmatpush1.msra.mxu0 0.0
      %3831 = vmatprep.subr.mxu0 0.0
      %3832 = vmatpush1.msra.mxu0 0.0
      %3833 = vmatprep.subr.mxu0 0.0
      %3834 = vmatpush1.msra.mxu0 0.0
      %3835 = vmatprep.subr.mxu0 0.0
      %3836 = vmatpush1.msra.mxu0 0.0
      %3837 = vmatprep.subr.mxu0 0.0
      %3838 = vmatpush1.msra.mxu0 0.0
      %3839 = vmatprep.subr.mxu0 0.0
      %3840 = vmatpush1.msra.mxu0 0.0
      %3841 = vmatprep.subr.mxu0 0.0
      %3842 = vmatpush1.msra.mxu0 0.0
      %3843 = vmatprep.subr.mxu0 0.0
      %3844 = vmatpush1.msra.mxu0 0.0
      %3845 = vmatprep.subr.mxu0 0.0
      %3846 = vmatpush1.msra.mxu0 0.0
      %3847 = vmatprep.subr.mxu0 0.0
      %3848 = vmatpush1.msra.mxu0 0.0
      %3849 = vmatprep.subr.mxu0 0.0
      %3850 = vmatpush1.msra.mxu0 0.0
      %3851 = vmatprep.subr.mxu0 0.0
      %3852 = vmatpush1.msra.mxu0 0.0
      %3853 = vmatprep.subr.mxu0 0.0
      %3854 = vmatpush1.msra.mxu0 0.0
      %3855 = vmatprep.subr.mxu0 0.0
      %3856 = vmatpush1.msra.mxu0 0.0
      %3857 = vmatprep.subr.mxu0 0.0
      %3858 = vmatpush1.msra.mxu0 0.0
      %3859 = vmatprep.subr.mxu0 0.0
      %3860 = vmatpush1.msra.mxu0 0.0
      %3861 = vmatprep.mubr.f32.mxu0 0.0
      %3862 = vmatmul.mubr.f32.gmra.mrb[0].mxu0 %v3744
      %v3863 = vpop.f32.mrb[0].mxu0
      %v3864 = vadd.f32 0.0, %v3863
      %v3865 = vpop.f32.mrb[0].mxu0
      %3866 = vmatprep.mubr.f32.mxu0 0.0
      %3867 = vmatmul.mubr.f32.gmra.mrb[0].mxu0 %v3745
      %v3868 = vpop.f32.mrb[0].mxu0
      %v3869 = vadd.f32 0.0, %v3868
      %v3870 = vpop.f32.mrb[0].mxu0
      %3871 = vmatprep.mubr.f32.mxu0 0.0
      %3872 = vmatmul.mubr.f32.gmra.mrb[0].mxu0 %v3746
      %v3873 = vpop.f32.mrb[0].mxu0
      %v3874 = vadd.f32 0.0, %v3873
      %v3875 = vpop.f32.mrb[0].mxu0
      %3876 = vmatprep.mubr.f32.mxu0 0.0
      %3877 = vmatmul.mubr.f32.gmra.mrb[0].mxu0 %v3747
      %v3878 = vpop.f32.mrb[0].mxu0
      %v3879 = vadd.f32 0.0, %v3878
      %v3880 = vpop.f32.mrb[0].mxu0
      %3881 = vmatprep.mubr.f32.mxu0 0.0
      %3882 = vmatmul.mubr.f32.gmra.mrb[0].mxu0 %v3748
      %v3883 = vpop.f32.mrb[0].mxu0
      %v3884 = vadd.f32 0.0, %v3883
      %v3885 = vpop.f32.mrb[0].mxu0
      %3886 = vmatprep.mubr.f32.mxu0 0.0
      %3887 = vmatmul.mubr.f32.gmra.mrb[0].mxu0 %v3749
      %v3888 = vpop.f32.mrb[0].mxu0
      %v3889 = vadd.f32 0.0, %v3888
      %v3890 = vpop.f32.mrb[0].mxu0
      %3891 = vmatprep.mubr.f32.mxu0 0.0
      %3892 = vmatmul.mubr.f32.gmra.mrb[0].mxu0 %v3750
      %v3893 = vpop.f32.mrb[0].mxu0
      %v3894 = vadd.f32 0.0, %v3893
      %v3895 = vpop.f32.mrb[0].mxu0
      %3896 = vmatprep.mubr.f32.mxu0 0.0
      %3897 = vmatmul.mubr.f32.gmra.mrb[0].mxu0 %v3751
      %v3898 = vpop.f32.mrb[0].mxu0
      %v3899 = vadd.f32 0.0, %v3898
      %v3900 = vpop.f32.mrb[0].mxu0
      %3901 = vmatprep.mubr.f32.mxu0 0.0
      %3902 = vmatmul.mubr.f32.gmra.mrb[0].mxu0 %v3752
      %v3903 = vpop.f32.mrb[0].mxu0
      %v3904 = vadd.f32 0.0, %v3903
      %v3905 = vpop.f32.mrb[0].mxu0
      %3906 = vmatprep.mubr.f32.mxu0 0.0
      %3907 = vmatmul.mubr.f32.gmra.mrb[0].mxu0 %v3753
      %v3908 = vpop.f32.mrb[0].mxu0
      %v3909 = vadd.f32 0.0, %v3908
      %v3910 = vpop.f32.mrb[0].mxu0
      %3911 = vmatprep.mubr.f32.mxu0 0.0
      %3912 = vmatmul.mubr.f32.gmra.mrb[0].mxu0 %v3754
      %v3913 = vpop.f32.mrb[0].mxu0
      %v3914 = vadd.f32 0.0, %v3913
      %v3915 = vpop.f32.mrb[0].mxu0
      %3916 = vmatprep.mubr.f32.mxu0 0.0
      %3917 = vmatmul.mubr.f32.gmra.mrb[0].mxu0 %v3755
      %v3918 = vpop.f32.mrb[0].mxu0
      %v3919 = vadd.f32 0.0, %v3918
      %v3920 = vpop.f32.mrb[0].mxu0
      %3921 = vmatprep.mubr.f32.mxu0 0.0
      %3922 = vmatmul.mubr.f32.gmra.mrb[0].mxu0 %v3756
      %v3923 = vpop.f32.mrb[0].mxu0
      %v3924 = vadd.f32 0.0, %v3923
      %v3925 = vpop.f32.mrb[0].mxu0
      %3926 = vmatprep.mubr.f32.mxu0 0.0
      %3927 = vmatmul.mubr.f32.gmra.mrb[0].mxu0 %v3757
      %v3928 = vpop.f32.mrb[0].mxu0
      %v3929 = vadd.f32 0.0, %v3928
      %v3930 = vpop.f32.mrb[0].mxu0
      %3931 = vmatprep.mubr.f32.mxu0 0.0
      %3932 = vmatmul.mubr.f32.gmra.mrb[0].mxu0 %v3758
      %v3933 = vpop.f32.mrb[0].mxu0
      %v3934 = vadd.f32 0.0, %v3933
      %v3935 = vpop.f32.mrb[0].mxu0
      %3936 = vmatprep.mubr.f32.mxu0 0.0
      %3937 = vmatmul.mubr.f32.gmra.mrb[0].mxu0 %v3759
      %v3938 = vpop.f32.mrb[0].mxu0
      %v3939 = vadd.f32 0.0, %v3938
      %v3940 = vpop.f32.mrb[0].mxu0
      %3941 = vmatprep.mubr.f32.mxu0 0.0
      %3942 = vmatmul.mubr.f32.gmra.mrb[0].mxu0 %v3760
      %v3943 = vpop.f32.mrb[0].mxu0
      %v3944 = vadd.f32 0.0, %v3943
      %v3945 = vpop.f32.mrb[0].mxu0
      %3946 = vmatprep.mubr.f32.mxu0 0.0
      %3947 = vmatmul.mubr.f32.gmra.mrb[0].mxu0 %v3761
      %v3948 = vpop.f32.mrb[0].mxu0
      %v3949 = vadd.f32 0.0, %v3948
      %v3950 = vpop.f32.mrb[0].mxu0
      %3951 = vmatprep.mubr.f32.mxu0 0.0
      %3952 = vmatmul.mubr.f32.gmra.mrb[0].mxu0 %v3762
      %v3953 = vpop.f32.mrb[0].mxu0
      %v3954 = vadd.f32 0.0, %v3953
      %v3955 = vpop.f32.mrb[0].mxu0
      %3956 = vmatprep.mubr.f32.mxu0 0.0
      %3957 = vmatmul.mubr.f32.gmra.mrb[0].mxu0 %v3763
      %v3958 = vpop.f32.mrb[0].mxu0
      %v3959 = vadd.f32 0.0, %v3958
      %v3960 = vpop.f32.mrb[0].mxu0
      %3961 = vmatprep.mubr.f32.mxu0 0.0
      %3962 = vmatmul.mubr.f32.gmra.mrb[0].mxu0 %v3764
      %v3963 = vpop.f32.mrb[0].mxu0
      %v3964 = vadd.f32 0.0, %v3963
      %v3965 = vpop.f32.mrb[0].mxu0
      %3966 = vmatprep.mubr.f32.mxu0 0.0
      %3967 = vmatmul.mubr.f32.gmra.mrb[0].mxu0 %v3765
      %v3968 = vpop.f32.mrb[0].mxu0
      %v3969 = vadd.f32 0.0, %v3968
      %v3970 = vpop.f32.mrb[0].mxu0
      %3971 = vmatprep.mubr.f32.mxu0 0.0
      %3972 = vmatmul.mubr.f32.gmra.mrb[0].mxu0 %v3766
      %v3973 = vpop.f32.mrb[0].mxu0
      %v3974 = vadd.f32 0.0, %v3973
      %v3975 = vpop.f32.mrb[0].mxu0
      %3976 = vmatprep.mubr.f32.mxu0 0.0
      %3977 = vmatmul.mubr.f32.gmra.mrb[0].mxu0 %v3767
      %v3978 = vpop.f32.mrb[0].mxu0
      %v3979 = vadd.f32 0.0, %v3978
      %v3980 = vpop.f32.mrb[0].mxu0
      %3981 = vmatprep.mubr.f32.mxu0 0.0
      %3982 = vmatmul.mubr.f32.gmra.mrb[0].mxu0 %v3768
      %v3983 = vpop.f32.mrb[0].mxu0
      %v3984 = vadd.f32 0.0, %v3983
      %v3985 = vpop.f32.mrb[0].mxu0
      %3986 = vmatprep.mubr.f32.mxu0 0.0
      %3987 = vmatmul.mubr.f32.gmra.mrb[0].mxu0 %v3769
      %v3988 = vpop.f32.mrb[0].mxu0
      %v3989 = vadd.f32 0.0, %v3988
      %v3990 = vpop.f32.mrb[0].mxu0
      %3991 = vmatprep.mubr.f32.mxu0 0.0
      %3992 = vmatmul.mubr.f32.gmra.mrb[0].mxu0 %v3770
      %v3993 = vpop.f32.mrb[0].mxu0
      %v3994 = vadd.f32 0.0, %v3993
      %v3995 = vpop.f32.mrb[0].mxu0
      %3996 = vmatprep.mubr.f32.mxu0 0.0
      %3997 = vmatmul.mubr.f32.gmra.mrb[0].mxu0 %v3771
      %v3998 = vpop.f32.mrb[0].mxu0
      %v3999 = vadd.f32 0.0, %v3998
      %v4000 = vpop.f32.mrb[0].mxu0
      %4001 = vmatprep.mubr.f32.mxu0 0.0
      %4002 = vmatmul.mubr.f32.gmra.mrb[0].mxu0 %v3772
      %v4003 = vpop.f32.mrb[0].mxu0
      %v4004 = vadd.f32 0.0, %v4003
      %v4005 = vpop.f32.mrb[0].mxu0
      %4006 = vmatprep.mubr.f32.mxu0 0.0
      %4007 = vmatmul.mubr.f32.gmra.mrb[0].mxu0 %v3773
      %v4008 = vpop.f32.mrb[0].mxu0
      %v4009 = vadd.f32 0.0, %v4008
      %v4010 = vpop.f32.mrb[0].mxu0
      %4011 = vmatprep.mubr.f32.mxu0 0.0
      %4012 = vmatmul.mubr.f32.gmra.mrb[0].mxu0 %v3774
      %v4013 = vpop.f32.mrb[0].mxu0
      %v4014 = vadd.f32 0.0, %v4013
      %v4015 = vpop.f32.mrb[0].mxu0
      %4016 = vmatprep.mubr.f32.mxu0 0.0
      %4017 = vmatmul.mubr.f32.gmra.mrb[0].mxu0 %v3775
      %v4018 = vpop.f32.mrb[0].mxu0
      %v4019 = vadd.f32 0.0, %v4018
      %v4020 = vpop.f32.mrb[0].mxu0
      %4021 = vmatprep.mubr.f32.mxu0 0.0
      %4022 = vmatmul.mubr.f32.gmra.mrb[0].mxu0 %v3776
      %v4023 = vpop.f32.mrb[0].mxu0
      %v4024 = vadd.f32 0.0, %v4023
      %v4025 = vpop.f32.mrb[0].mxu0
      %4026 = vmatprep.mubr.f32.mxu0 0.0
      %4027 = vmatmul.mubr.f32.gmra.mrb[0].mxu0 %v3777
      %v4028 = vpop.f32.mrb[0].mxu0
      %v4029 = vadd.f32 0.0, %v4028
      %v4030 = vpop.f32.mrb[0].mxu0
      %4031 = vmatprep.mubr.f32.mxu0 0.0
      %4032 = vmatmul.mubr.f32.gmra.mrb[0].mxu0 %v3778
      %v4033 = vpop.f32.mrb[0].mxu0
      %v4034 = vadd.f32 0.0, %v4033
      %v4035 = vpop.f32.mrb[0].mxu0
      %4036 = vmatprep.mubr.f32.mxu0 0.0
      %4037 = vmatmul.mubr.f32.gmra.mrb[0].mxu0 %v3779
      %v4038 = vpop.f32.mrb[0].mxu0
      %v4039 = vadd.f32 0.0, %v4038
      %v4040 = vpop.f32.mrb[0].mxu0
      %4041 = vdwg.mxu0
      %4042 = vmatprep.subr.mxu0 0.0
      %4043 = vmatpush1.msra.mxu0 %v3728
      %4044 = vmatprep.subr.mxu0 0.0
      %4045 = vmatpush1.msra.mxu0 %v3729
      %4046 = vmatprep.subr.mxu0 0.0
      %4047 = vmatpush1.msra.mxu0 %v3730
      %4048 = vmatprep.subr.mxu0 0.0
      %4049 = vmatpush1.msra.mxu0 %v3731
      %4050 = vmatprep.subr.mxu0 0.0
      %4051 = vmatpush1.msra.mxu0 %v3732
      %4052 = vmatprep.subr.mxu0 0.0
      %4053 = vmatpush1.msra.mxu0 %v3733
      %4054 = vmatprep.subr.mxu0 0.0
      %4055 = vmatpush1.msra.mxu0 %v3734
      %4056 = vmatprep.subr.mxu0 0.0
      %4057 = vmatpush1.msra.mxu0 %v3735
      %4058 = vmatprep.subr.mxu0 0.0
      %4059 = vmatpush1.msra.mxu0 %v3736
      %4060 = vmatprep.subr.mxu0 0.0
      %4061 = vmatpush1.msra.mxu0 %v3737
      %4062 = vmatprep.subr.mxu0 0.0
      %4063 = vmatpush1.msra.mxu0 %v3738
      %4064 = vmatprep.subr.mxu0 0.0
      %4065 = vmatpush1.msra.mxu0 %v3739
      %4066 = vmatprep.subr.mxu0 0.0
      %4067 = vmatpush1.msra.mxu0 %v3740
      %4068 = vmatprep.subr.mxu0 0.0
      %4069 = vmatpush1.msra.mxu0 %v3741
      %4070 = vmatprep.subr.mxu0 0.0
      %4071 = vmatpush1.msra.mxu0 %v3742
      %4072 = vmatprep.subr.mxu0 0.0
      %4073 = vmatpush1.msra.mxu0 %v3743
      %4074 = vmatprep.subr.mxu0 0.0
      %4075 = vmatpush1.msra.mxu0 0.0
      %4076 = vmatprep.subr.mxu0 0.0
      %4077 = vmatpush1.msra.mxu0 0.0
      %4078 = vmatprep.subr.mxu0 0.0
      %4079 = vmatpush1.msra.mxu0 0.0
      %4080 = vmatprep.subr.mxu0 0.0
      %4081 = vmatpush1.msra.mxu0 0.0
      %4082 = vmatprep.subr.mxu0 0.0
      %4083 = vmatpush1.msra.mxu0 0.0
      %4084 = vmatprep.subr.mxu0 0.0
      %4085 = vmatpush1.msra.mxu0 0.0
      %4086 = vmatprep.subr.mxu0 0.0
      %4087 = vmatpush1.msra.mxu0 0.0
      %4088 = vmatprep.subr.mxu0 0.0
      %4089 = vmatpush1.msra.mxu0 0.0
      %4090 = vmatprep.subr.mxu0 0.0
      %4091 = vmatpush1.msra.mxu0 0.0
      %4092 = vmatprep.subr.mxu0 0.0
      %4093 = vmatpush1.msra.mxu0 0.0
      %4094 = vmatprep.subr.mxu0 0.0
      %4095 = vmatpush1.msra.mxu0 0.0
      %4096 = vmatprep.subr.mxu0 0.0
      %4097 = vmatpush1.msra.mxu0 0.0
      %4098 = vmatprep.subr.mxu0 0.0
      %4099 = vmatpush1.msra.mxu0 0.0
      %4100 = vmatprep.subr.mxu0 0.0
      %4101 = vmatpush1.msra.mxu0 0.0
      %4102 = vmatprep.subr.mxu0 0.0
      %4103 = vmatpush1.msra.mxu0 0.0
      %4104 = vmatprep.subr.mxu0 0.0
      %4105 = vmatpush1.msra.mxu0 0.0
      %4106 = vmatprep.mubr.f32.mxu0 0.0
      %4107 = vmatmul.mubr.f32.gmra.mrb[0].mxu0 %v3692
      %v4108 = vpop.f32.mrb[0].mxu0
      %v4109 = vadd.f32 %v3864, %v4108
      %v4110 = vpop.f32.mrb[0].mxu0
      %4111 = vmatprep.mubr.f32.mxu0 0.0
      %4112 = vmatmul.mubr.f32.gmra.mrb[0].mxu0 %v3693
      %v4113 = vpop.f32.mrb[0].mxu0
      %v4114 = vadd.f32 %v3869, %v4113
      %v4115 = vpop.f32.mrb[0].mxu0
      %4116 = vmatprep.mubr.f32.mxu0 0.0
      %4117 = vmatmul.mubr.f32.gmra.mrb[0].mxu0 %v3694
      %v4118 = vpop.f32.mrb[0].mxu0
      %v4119 = vadd.f32 %v3874, %v4118
      %v4120 = vpop.f32.mrb[0].mxu0
      %4121 = vmatprep.mubr.f32.mxu0 0.0
      %4122 = vmatmul.mubr.f32.gmra.mrb[0].mxu0 %v3695
      %v4123 = vpop.f32.mrb[0].mxu0
      %v4124 = vadd.f32 %v3879, %v4123
      %v4125 = vpop.f32.mrb[0].mxu0
      %4126 = vmatprep.mubr.f32.mxu0 0.0
      %4127 = vmatmul.mubr.f32.gmra.mrb[0].mxu0 %v3696
      %v4128 = vpop.f32.mrb[0].mxu0
      %v4129 = vadd.f32 %v3884, %v4128
      %v4130 = vpop.f32.mrb[0].mxu0
      %4131 = vmatprep.mubr.f32.mxu0 0.0
      %4132 = vmatmul.mubr.f32.gmra.mrb[0].mxu0 %v3697
      %v4133 = vpop.f32.mrb[0].mxu0
      %v4134 = vadd.f32 %v3889, %v4133
      %v4135 = vpop.f32.mrb[0].mxu0
      %4136 = vmatprep.mubr.f32.mxu0 0.0
      %4137 = vmatmul.mubr.f32.gmra.mrb[0].mxu0 %v3698
      %v4138 = vpop.f32.mrb[0].mxu0
      %v4139 = vadd.f32 %v3894, %v4138
      %v4140 = vpop.f32.mrb[0].mxu0
      %4141 = vmatprep.mubr.f32.mxu0 0.0
      %4142 = vmatmul.mubr.f32.gmra.mrb[0].mxu0 %v3699
      %v4143 = vpop.f32.mrb[0].mxu0
      %v4144 = vadd.f32 %v3899, %v4143
      %v4145 = vpop.f32.mrb[0].mxu0
      %4146 = vmatprep.mubr.f32.mxu0 0.0
      %4147 = vmatmul.mubr.f32.gmra.mrb[0].mxu0 %v3700
      %v4148 = vpop.f32.mrb[0].mxu0
      %v4149 = vadd.f32 %v3904, %v4148
      %v4150 = vpop.f32.mrb[0].mxu0
      %4151 = vmatprep.mubr.f32.mxu0 0.0
      %4152 = vmatmul.mubr.f32.gmra.mrb[0].mxu0 %v3701
      %v4153 = vpop.f32.mrb[0].mxu0
      %v4154 = vadd.f32 %v3909, %v4153
      %v4155 = vpop.f32.mrb[0].mxu0
      %4156 = vmatprep.mubr.f32.mxu0 0.0
      %4157 = vmatmul.mubr.f32.gmra.mrb[0].mxu0 %v3702
      %v4158 = vpop.f32.mrb[0].mxu0
      %v4159 = vadd.f32 %v3914, %v4158
      %v4160 = vpop.f32.mrb[0].mxu0
      %4161 = vmatprep.mubr.f32.mxu0 0.0
      %4162 = vmatmul.mubr.f32.gmra.mrb[0].mxu0 %v3703
      %v4163 = vpop.f32.mrb[0].mxu0
      %v4164 = vadd.f32 %v3919, %v4163
      %v4165 = vpop.f32.mrb[0].mxu0
      %4166 = vmatprep.mubr.f32.mxu0 0.0
      %4167 = vmatmul.mubr.f32.gmra.mrb[0].mxu0 %v3704
      %v4168 = vpop.f32.mrb[0].mxu0
      %v4169 = vadd.f32 %v3924, %v4168
      %v4170 = vpop.f32.mrb[0].mxu0
      %4171 = vmatprep.mubr.f32.mxu0 0.0
      %4172 = vmatmul.mubr.f32.gmra.mrb[0].mxu0 %v3705
      %v4173 = vpop.f32.mrb[0].mxu0
      %v4174 = vadd.f32 %v3929, %v4173
      %v4175 = vpop.f32.mrb[0].mxu0
      %4176 = vmatprep.mubr.f32.mxu0 0.0
      %4177 = vmatmul.mubr.f32.gmra.mrb[0].mxu0 %v3706
      %v4178 = vpop.f32.mrb[0].mxu0
      %v4179 = vadd.f32 %v3934, %v4178
      %v4180 = vpop.f32.mrb[0].mxu0
      %4181 = vmatprep.mubr.f32.mxu0 0.0
      %4182 = vmatmul.mubr.f32.gmra.mrb[0].mxu0 %v3707
      %v4183 = vpop.f32.mrb[0].mxu0
      %v4184 = vadd.f32 %v3939, %v4183
      %v4185 = vpop.f32.mrb[0].mxu0
      %4186 = vmatprep.mubr.f32.mxu0 0.0
      %4187 = vmatmul.mubr.f32.gmra.mrb[0].mxu0 %v3708
      %v4188 = vpop.f32.mrb[0].mxu0
      %v4189 = vadd.f32 %v3944, %v4188
      %v4190 = vpop.f32.mrb[0].mxu0
      %4191 = vmatprep.mubr.f32.mxu0 0.0
      %4192 = vmatmul.mubr.f32.gmra.mrb[0].mxu0 %v3709
      %v4193 = vpop.f32.mrb[0].mxu0
      %v4194 = vadd.f32 %v3949, %v4193
      %v4195 = vpop.f32.mrb[0].mxu0
      %4196 = vmatprep.mubr.f32.mxu0 0.0
      %4197 = vmatmul.mubr.f32.gmra.mrb[0].mxu0 %v3710
      %v4198 = vpop.f32.mrb[0].mxu0
      %v4199 = vadd.f32 %v3954, %v4198
      %v4200 = vpop.f32.mrb[0].mxu0
      %4201 = vmatprep.mubr.f32.mxu0 0.0
      %4202 = vmatmul.mubr.f32.gmra.mrb[0].mxu0 %v3711
      %v4203 = vpop.f32.mrb[0].mxu0
      %v4204 = vadd.f32 %v3959, %v4203
      %v4205 = vpop.f32.mrb[0].mxu0
      %4206 = vmatprep.mubr.f32.mxu0 0.0
      %4207 = vmatmul.mubr.f32.gmra.mrb[0].mxu0 %v3712
      %v4208 = vpop.f32.mrb[0].mxu0
      %v4209 = vadd.f32 %v3964, %v4208
      %v4210 = vpop.f32.mrb[0].mxu0
      %4211 = vmatprep.mubr.f32.mxu0 0.0
      %4212 = vmatmul.mubr.f32.gmra.mrb[0].mxu0 %v3713
      %v4213 = vpop.f32.mrb[0].mxu0
      %v4214 = vadd.f32 %v3969, %v4213
      %v4215 = vpop.f32.mrb[0].mxu0
      %4216 = vmatprep.mubr.f32.mxu0 0.0
      %4217 = vmatmul.mubr.f32.gmra.mrb[0].mxu0 %v3714
      %v4218 = vpop.f32.mrb[0].mxu0
      %v4219 = vadd.f32 %v3974, %v4218
      %v4220 = vpop.f32.mrb[0].mxu0
      %4221 = vmatprep.mubr.f32.mxu0 0.0
      %4222 = vmatmul.mubr.f32.gmra.mrb[0].mxu0 %v3715
      %v4223 = vpop.f32.mrb[0].mxu0
      %v4224 = vadd.f32 %v3979, %v4223
      %v4225 = vpop.f32.mrb[0].mxu0
      %4226 = vmatprep.mubr.f32.mxu0 0.0
      %4227 = vmatmul.mubr.f32.gmra.mrb[0].mxu0 %v3716
      %v4228 = vpop.f32.mrb[0].mxu0
      %v4229 = vadd.f32 %v3984, %v4228
      %v4230 = vpop.f32.mrb[0].mxu0
      %4231 = vmatprep.mubr.f32.mxu0 0.0
      %4232 = vmatmul.mubr.f32.gmra.mrb[0].mxu0 %v3717
      %v4233 = vpop.f32.mrb[0].mxu0
      %v4234 = vadd.f32 %v3989, %v4233
      %v4235 = vpop.f32.mrb[0].mxu0
      %4236 = vmatprep.mubr.f32.mxu0 0.0
      %4237 = vmatmul.mubr.f32.gmra.mrb[0].mxu0 %v3718
      %v4238 = vpop.f32.mrb[0].mxu0
      %v4239 = vadd.f32 %v3994, %v4238
      %v4240 = vpop.f32.mrb[0].mxu0
      %4241 = vmatprep.mubr.f32.mxu0 0.0
      %4242 = vmatmul.mubr.f32.gmra.mrb[0].mxu0 %v3719
      %v4243 = vpop.f32.mrb[0].mxu0
      %v4244 = vadd.f32 %v3999, %v4243
      %v4245 = vpop.f32.mrb[0].mxu0
      %4246 = vmatprep.mubr.f32.mxu0 0.0
      %4247 = vmatmul.mubr.f32.gmra.mrb[0].mxu0 %v3720
      %v4248 = vpop.f32.mrb[0].mxu0
      %v4249 = vadd.f32 %v4004, %v4248
      %v4250 = vpop.f32.mrb[0].mxu0
      %4251 = vmatprep.mubr.f32.mxu0 0.0
      %4252 = vmatmul.mubr.f32.gmra.mrb[0].mxu0 %v3721
      %v4253 = vpop.f32.mrb[0].mxu0
      %v4254 = vadd.f32 %v4009, %v4253
      %v4255 = vpop.f32.mrb[0].mxu0
      %4256 = vmatprep.mubr.f32.mxu0 0.0
      %4257 = vmatmul.mubr.f32.gmra.mrb[0].mxu0 %v3722
      %v4258 = vpop.f32.mrb[0].mxu0
      %v4259 = vadd.f32 %v4014, %v4258
      %v4260 = vpop.f32.mrb[0].mxu0
      %4261 = vmatprep.mubr.f32.mxu0 0.0
      %4262 = vmatmul.mubr.f32.gmra.mrb[0].mxu0 %v3723
      %v4263 = vpop.f32.mrb[0].mxu0
      %v4264 = vadd.f32 %v4019, %v4263
      %v4265 = vpop.f32.mrb[0].mxu0
      %4266 = vmatprep.mubr.f32.mxu0 0.0
      %4267 = vmatmul.mubr.f32.gmra.mrb[0].mxu0 %v3724
      %v4268 = vpop.f32.mrb[0].mxu0
      %v4269 = vadd.f32 %v4024, %v4268
      %v4270 = vpop.f32.mrb[0].mxu0
      %4271 = vmatprep.mubr.f32.mxu0 0.0
      %4272 = vmatmul.mubr.f32.gmra.mrb[0].mxu0 %v3725
      %v4273 = vpop.f32.mrb[0].mxu0
      %v4274 = vadd.f32 %v4029, %v4273
      %v4275 = vpop.f32.mrb[0].mxu0
      %4276 = vmatprep.mubr.f32.mxu0 0.0
      %4277 = vmatmul.mubr.f32.gmra.mrb[0].mxu0 %v3726
      %v4278 = vpop.f32.mrb[0].mxu0
      %v4279 = vadd.f32 %v4034, %v4278
      %v4280 = vpop.f32.mrb[0].mxu0
      %4281 = vmatprep.mubr.f32.mxu0 0.0
      %4282 = vmatmul.mubr.f32.gmra.mrb[0].mxu0 %v3727
      %v4283 = vpop.f32.mrb[0].mxu0
      %v4284 = vadd.f32 %v4039, %v4283
      %v4285 = vpop.f32.mrb[0].mxu0
      %4286 = vdwg.mxu0
      %v4287 = vld [vmem:[#allocation2 + $0x2] sm:$0xff]
      %v4288 = vld [vmem:[#allocation2 + $0xa] sm:$0xff]
      %v4289 = vld [vmem:[#allocation2 + $0x12] sm:$0xff]
      %v4290 = vld [vmem:[#allocation2 + $0x1a] sm:$0xff]
      %v4291 = vld [vmem:[#allocation2 + $0x22] sm:$0xff]
      %v4292 = vld [vmem:[#allocation2 + $0x2a] sm:$0xff]
      %v4293 = vld [vmem:[#allocation2 + $0x32] sm:$0xff]
      %v4294 = vld [vmem:[#allocation2 + $0x3a] sm:$0xff]
      %v4295 = vld [vmem:[#allocation2 + $0x42] sm:$0xff]
      %v4296 = vld [vmem:[#allocation2 + $0x4a] sm:$0xff]
      %v4297 = vld [vmem:[#allocation2 + $0x52] sm:$0xff]
      %v4298 = vld [vmem:[#allocation2 + $0x5a] sm:$0xff]
      %v4299 = vld [vmem:[#allocation2 + $0x62] sm:$0xff]
      %v4300 = vld [vmem:[#allocation2 + $0x6a] sm:$0xff]
      %v4301 = vld [vmem:[#allocation2 + $0x72] sm:$0xff]
      %v4302 = vld [vmem:[#allocation2 + $0x7a] sm:$0xff]
      %v4303 = vld [vmem:[#allocation2 + $0x82] sm:$0xff]
      %v4304 = vld [vmem:[#allocation2 + $0x8a] sm:$0xff]
      %v4305 = vld [vmem:[#allocation2 + $0x92] sm:$0xff]
      %v4306 = vld [vmem:[#allocation2 + $0x9a] sm:$0xff]
      %v4307 = vld [vmem:[#allocation2 + $0xa2] sm:$0xff]
      %v4308 = vld [vmem:[#allocation2 + $0xaa] sm:$0xff]
      %v4309 = vld [vmem:[#allocation2 + $0xb2] sm:$0xff]
      %v4310 = vld [vmem:[#allocation2 + $0xba] sm:$0xff]
      %v4311 = vld [vmem:[#allocation2 + $0xc2] sm:$0xff]
      %v4312 = vld [vmem:[#allocation2 + $0xca] sm:$0xff]
      %v4313 = vld [vmem:[#allocation2 + $0xd2] sm:$0xff]
      %v4314 = vld [vmem:[#allocation2 + $0xda] sm:$0xff]
      %v4315 = vld [vmem:[#allocation2 + $0xe2] sm:$0xff]
      %v4316 = vld [vmem:[#allocation2 + $0xea] sm:$0xff]
      %v4317 = vld [vmem:[#allocation2 + $0xf2] sm:$0xff]
      %v4318 = vld [vmem:[#allocation2 + $0xfa] sm:$0xff]
      %v4319 = vld [vmem:[#allocation2 + $0x102] sm:$0xff]
      %v4320 = vld [vmem:[#allocation2 + $0x10a] sm:$0xff]
      %v4321 = vld [vmem:[#allocation2 + $0x112] sm:$0xff]
      %v4322 = vld [vmem:[#allocation2 + $0x11a] sm:$0xff]
      %s4323 = scalar_lea.vmem %s2, 256
      %v4324 = vld [vmem:[%s4323] sm:$0xff]
      %v4325 = vld [vmem:[%s4323 + $0x8] sm:$0xff]
      %v4326 = vld [vmem:[%s4323 + $0x10] sm:$0xff]
      %v4327 = vld [vmem:[%s4323 + $0x18] sm:$0xff]
      %v4328 = vld [vmem:[%s4323 + $0x20] sm:$0xff]
      %v4329 = vld [vmem:[%s4323 + $0x28] sm:$0xff]
      %v4330 = vld [vmem:[%s4323 + $0x30] sm:$0xff]
      %v4331 = vld [vmem:[%s4323 + $0x38] sm:$0xff]
      %v4332 = vld [vmem:[%s4323 + $0x40] sm:$0xff]
      %v4333 = vld [vmem:[%s4323 + $0x48] sm:$0xff]
      %v4334 = vld [vmem:[%s4323 + $0x50] sm:$0xff]
      %v4335 = vld [vmem:[%s4323 + $0x58] sm:$0xff]
      %v4336 = vld [vmem:[%s4323 + $0x60] sm:$0xff]
      %v4337 = vld [vmem:[%s4323 + $0x68] sm:$0xff]
      %v4338 = vld [vmem:[%s4323 + $0x70] sm:$0xff]
      %v4339 = vld [vmem:[%s4323 + $0x78] sm:$0xff]
      %4340 = vmatprep.subr.mxu0 0.0
      %4341 = vmatpush1.msra.mxu0 %v4324
      %4342 = vmatprep.subr.mxu0 0.0
      %4343 = vmatpush1.msra.mxu0 %v4325
      %4344 = vmatprep.subr.mxu0 0.0
      %4345 = vmatpush1.msra.mxu0 %v4326
      %4346 = vmatprep.subr.mxu0 0.0
      %4347 = vmatpush1.msra.mxu0 %v4327
      %4348 = vmatprep.subr.mxu0 0.0
      %4349 = vmatpush1.msra.mxu0 %v4328
      %4350 = vmatprep.subr.mxu0 0.0
      %4351 = vmatpush1.msra.mxu0 %v4329
      %4352 = vmatprep.subr.mxu0 0.0
      %4353 = vmatpush1.msra.mxu0 %v4330
      %4354 = vmatprep.subr.mxu0 0.0
      %4355 = vmatpush1.msra.mxu0 %v4331
      %4356 = vmatprep.subr.mxu0 0.0
      %4357 = vmatpush1.msra.mxu0 %v4332
      %4358 = vmatprep.subr.mxu0 0.0
      %4359 = vmatpush1.msra.mxu0 %v4333
      %4360 = vmatprep.subr.mxu0 0.0
      %4361 = vmatpush1.msra.mxu0 %v4334
      %4362 = vmatprep.subr.mxu0 0.0
      %4363 = vmatpush1.msra.mxu0 %v4335
      %4364 = vmatprep.subr.mxu0 0.0
      %4365 = vmatpush1.msra.mxu0 %v4336
      %4366 = vmatprep.subr.mxu0 0.0
      %4367 = vmatpush1.msra.mxu0 %v4337
      %4368 = vmatprep.subr.mxu0 0.0
      %4369 = vmatpush1.msra.mxu0 %v4338
      %4370 = vmatprep.subr.mxu0 0.0
      %4371 = vmatpush1.msra.mxu0 %v4339
      %4372 = vmatprep.subr.mxu0 0.0
      %4373 = vmatpush1.msra.mxu0 0.0
      %4374 = vmatprep.subr.mxu0 0.0
      %4375 = vmatpush1.msra.mxu0 0.0
      %4376 = vmatprep.subr.mxu0 0.0
      %4377 = vmatpush1.msra.mxu0 0.0
      %4378 = vmatprep.subr.mxu0 0.0
      %4379 = vmatpush1.msra.mxu0 0.0
      %4380 = vmatprep.subr.mxu0 0.0
      %4381 = vmatpush1.msra.mxu0 0.0
      %4382 = vmatprep.subr.mxu0 0.0
      %4383 = vmatpush1.msra.mxu0 0.0
      %4384 = vmatprep.subr.mxu0 0.0
      %4385 = vmatpush1.msra.mxu0 0.0
      %4386 = vmatprep.subr.mxu0 0.0
      %4387 = vmatpush1.msra.mxu0 0.0
      %4388 = vmatprep.subr.mxu0 0.0
      %4389 = vmatpush1.msra.mxu0 0.0
      %4390 = vmatprep.subr.mxu0 0.0
      %4391 = vmatpush1.msra.mxu0 0.0
      %4392 = vmatprep.subr.mxu0 0.0
      %4393 = vmatpush1.msra.mxu0 0.0
      %4394 = vmatprep.subr.mxu0 0.0
      %4395 = vmatpush1.msra.mxu0 0.0
      %4396 = vmatprep.subr.mxu0 0.0
      %4397 = vmatpush1.msra.mxu0 0.0
      %4398 = vmatprep.subr.mxu0 0.0
      %4399 = vmatpush1.msra.mxu0 0.0
      %4400 = vmatprep.subr.mxu0 0.0
      %4401 = vmatpush1.msra.mxu0 0.0
      %4402 = vmatprep.subr.mxu0 0.0
      %4403 = vmatpush1.msra.mxu0 0.0
      %4404 = vmatprep.mubr.f32.mxu0 0.0
      %4405 = vmatmul.mubr.f32.gmra.mrb[0].mxu0 %v4287
      %v4406 = vpop.f32.mrb[0].mxu0
      %v4407 = vadd.f32 0.0, %v4406
      %v4408 = vpop.f32.mrb[0].mxu0
      %4409 = vmatprep.mubr.f32.mxu0 0.0
      %4410 = vmatmul.mubr.f32.gmra.mrb[0].mxu0 %v4288
      %v4411 = vpop.f32.mrb[0].mxu0
      %v4412 = vadd.f32 0.0, %v4411
      %v4413 = vpop.f32.mrb[0].mxu0
      %4414 = vmatprep.mubr.f32.mxu0 0.0
      %4415 = vmatmul.mubr.f32.gmra.mrb[0].mxu0 %v4289
      %v4416 = vpop.f32.mrb[0].mxu0
      %v4417 = vadd.f32 0.0, %v4416
      %v4418 = vpop.f32.mrb[0].mxu0
      %4419 = vmatprep.mubr.f32.mxu0 0.0
      %4420 = vmatmul.mubr.f32.gmra.mrb[0].mxu0 %v4290
      %v4421 = vpop.f32.mrb[0].mxu0
      %v4422 = vadd.f32 0.0, %v4421
      %v4423 = vpop.f32.mrb[0].mxu0
      %4424 = vmatprep.mubr.f32.mxu0 0.0
      %4425 = vmatmul.mubr.f32.gmra.mrb[0].mxu0 %v4291
      %v4426 = vpop.f32.mrb[0].mxu0
      %v4427 = vadd.f32 0.0, %v4426
      %v4428 = vpop.f32.mrb[0].mxu0
      %4429 = vmatprep.mubr.f32.mxu0 0.0
      %4430 = vmatmul.mubr.f32.gmra.mrb[0].mxu0 %v4292
      %v4431 = vpop.f32.mrb[0].mxu0
      %v4432 = vadd.f32 0.0, %v4431
      %v4433 = vpop.f32.mrb[0].mxu0
      %4434 = vmatprep.mubr.f32.mxu0 0.0
      %4435 = vmatmul.mubr.f32.gmra.mrb[0].mxu0 %v4293
      %v4436 = vpop.f32.mrb[0].mxu0
      %v4437 = vadd.f32 0.0, %v4436
      %v4438 = vpop.f32.mrb[0].mxu0
      %4439 = vmatprep.mubr.f32.mxu0 0.0
      %4440 = vmatmul.mubr.f32.gmra.mrb[0].mxu0 %v4294
      %v4441 = vpop.f32.mrb[0].mxu0
      %v4442 = vadd.f32 0.0, %v4441
      %v4443 = vpop.f32.mrb[0].mxu0
      %4444 = vmatprep.mubr.f32.mxu0 0.0
      %4445 = vmatmul.mubr.f32.gmra.mrb[0].mxu0 %v4295
      %v4446 = vpop.f32.mrb[0].mxu0
      %v4447 = vadd.f32 0.0, %v4446
      %v4448 = vpop.f32.mrb[0].mxu0
      %4449 = vmatprep.mubr.f32.mxu0 0.0
      %4450 = vmatmul.mubr.f32.gmra.mrb[0].mxu0 %v4296
      %v4451 = vpop.f32.mrb[0].mxu0
      %v4452 = vadd.f32 0.0, %v4451
      %v4453 = vpop.f32.mrb[0].mxu0
      %4454 = vmatprep.mubr.f32.mxu0 0.0
      %4455 = vmatmul.mubr.f32.gmra.mrb[0].mxu0 %v4297
      %v4456 = vpop.f32.mrb[0].mxu0
      %v4457 = vadd.f32 0.0, %v4456
      %v4458 = vpop.f32.mrb[0].mxu0
      %4459 = vmatprep.mubr.f32.mxu0 0.0
      %4460 = vmatmul.mubr.f32.gmra.mrb[0].mxu0 %v4298
      %v4461 = vpop.f32.mrb[0].mxu0
      %v4462 = vadd.f32 0.0, %v4461
      %v4463 = vpop.f32.mrb[0].mxu0
      %4464 = vmatprep.mubr.f32.mxu0 0.0
      %4465 = vmatmul.mubr.f32.gmra.mrb[0].mxu0 %v4299
      %v4466 = vpop.f32.mrb[0].mxu0
      %v4467 = vadd.f32 0.0, %v4466
      %v4468 = vpop.f32.mrb[0].mxu0
      %4469 = vmatprep.mubr.f32.mxu0 0.0
      %4470 = vmatmul.mubr.f32.gmra.mrb[0].mxu0 %v4300
      %v4471 = vpop.f32.mrb[0].mxu0
      %v4472 = vadd.f32 0.0, %v4471
      %v4473 = vpop.f32.mrb[0].mxu0
      %4474 = vmatprep.mubr.f32.mxu0 0.0
      %4475 = vmatmul.mubr.f32.gmra.mrb[0].mxu0 %v4301
      %v4476 = vpop.f32.mrb[0].mxu0
      %v4477 = vadd.f32 0.0, %v4476
      %v4478 = vpop.f32.mrb[0].mxu0
      %4479 = vmatprep.mubr.f32.mxu0 0.0
      %4480 = vmatmul.mubr.f32.gmra.mrb[0].mxu0 %v4302
      %v4481 = vpop.f32.mrb[0].mxu0
      %v4482 = vadd.f32 0.0, %v4481
      %v4483 = vpop.f32.mrb[0].mxu0
      %4484 = vmatprep.mubr.f32.mxu0 0.0
      %4485 = vmatmul.mubr.f32.gmra.mrb[0].mxu0 %v4303
      %v4486 = vpop.f32.mrb[0].mxu0
      %v4487 = vadd.f32 0.0, %v4486
      %v4488 = vpop.f32.mrb[0].mxu0
      %4489 = vmatprep.mubr.f32.mxu0 0.0
      %4490 = vmatmul.mubr.f32.gmra.mrb[0].mxu0 %v4304
      %v4491 = vpop.f32.mrb[0].mxu0
      %v4492 = vadd.f32 0.0, %v4491
      %v4493 = vpop.f32.mrb[0].mxu0
      %4494 = vmatprep.mubr.f32.mxu0 0.0
      %4495 = vmatmul.mubr.f32.gmra.mrb[0].mxu0 %v4305
      %v4496 = vpop.f32.mrb[0].mxu0
      %v4497 = vadd.f32 0.0, %v4496
      %v4498 = vpop.f32.mrb[0].mxu0
      %4499 = vmatprep.mubr.f32.mxu0 0.0
      %4500 = vmatmul.mubr.f32.gmra.mrb[0].mxu0 %v4306
      %v4501 = vpop.f32.mrb[0].mxu0
      %v4502 = vadd.f32 0.0, %v4501
      %v4503 = vpop.f32.mrb[0].mxu0
      %4504 = vmatprep.mubr.f32.mxu0 0.0
      %4505 = vmatmul.mubr.f32.gmra.mrb[0].mxu0 %v4307
      %v4506 = vpop.f32.mrb[0].mxu0
      %v4507 = vadd.f32 0.0, %v4506
      %v4508 = vpop.f32.mrb[0].mxu0
      %4509 = vmatprep.mubr.f32.mxu0 0.0
      %4510 = vmatmul.mubr.f32.gmra.mrb[0].mxu0 %v4308
      %v4511 = vpop.f32.mrb[0].mxu0
      %v4512 = vadd.f32 0.0, %v4511
      %v4513 = vpop.f32.mrb[0].mxu0
      %4514 = vmatprep.mubr.f32.mxu0 0.0
      %4515 = vmatmul.mubr.f32.gmra.mrb[0].mxu0 %v4309
      %v4516 = vpop.f32.mrb[0].mxu0
      %v4517 = vadd.f32 0.0, %v4516
      %v4518 = vpop.f32.mrb[0].mxu0
      %4519 = vmatprep.mubr.f32.mxu0 0.0
      %4520 = vmatmul.mubr.f32.gmra.mrb[0].mxu0 %v4310
      %v4521 = vpop.f32.mrb[0].mxu0
      %v4522 = vadd.f32 0.0, %v4521
      %v4523 = vpop.f32.mrb[0].mxu0
      %4524 = vmatprep.mubr.f32.mxu0 0.0
      %4525 = vmatmul.mubr.f32.gmra.mrb[0].mxu0 %v4311
      %v4526 = vpop.f32.mrb[0].mxu0
      %v4527 = vadd.f32 0.0, %v4526
      %v4528 = vpop.f32.mrb[0].mxu0
      %4529 = vmatprep.mubr.f32.mxu0 0.0
      %4530 = vmatmul.mubr.f32.gmra.mrb[0].mxu0 %v4312
      %v4531 = vpop.f32.mrb[0].mxu0
      %v4532 = vadd.f32 0.0, %v4531
      %v4533 = vpop.f32.mrb[0].mxu0
      %4534 = vmatprep.mubr.f32.mxu0 0.0
      %4535 = vmatmul.mubr.f32.gmra.mrb[0].mxu0 %v4313
      %v4536 = vpop.f32.mrb[0].mxu0
      %v4537 = vadd.f32 0.0, %v4536
      %v4538 = vpop.f32.mrb[0].mxu0
      %4539 = vmatprep.mubr.f32.mxu0 0.0
      %4540 = vmatmul.mubr.f32.gmra.mrb[0].mxu0 %v4314
      %v4541 = vpop.f32.mrb[0].mxu0
      %v4542 = vadd.f32 0.0, %v4541
      %v4543 = vpop.f32.mrb[0].mxu0
      %4544 = vmatprep.mubr.f32.mxu0 0.0
      %4545 = vmatmul.mubr.f32.gmra.mrb[0].mxu0 %v4315
      %v4546 = vpop.f32.mrb[0].mxu0
      %v4547 = vadd.f32 0.0, %v4546
      %v4548 = vpop.f32.mrb[0].mxu0
      %4549 = vmatprep.mubr.f32.mxu0 0.0
      %4550 = vmatmul.mubr.f32.gmra.mrb[0].mxu0 %v4316
      %v4551 = vpop.f32.mrb[0].mxu0
      %v4552 = vadd.f32 0.0, %v4551
      %v4553 = vpop.f32.mrb[0].mxu0
      %4554 = vmatprep.mubr.f32.mxu0 0.0
      %4555 = vmatmul.mubr.f32.gmra.mrb[0].mxu0 %v4317
      %v4556 = vpop.f32.mrb[0].mxu0
      %v4557 = vadd.f32 0.0, %v4556
      %v4558 = vpop.f32.mrb[0].mxu0
      %4559 = vmatprep.mubr.f32.mxu0 0.0
      %4560 = vmatmul.mubr.f32.gmra.mrb[0].mxu0 %v4318
      %v4561 = vpop.f32.mrb[0].mxu0
      %v4562 = vadd.f32 0.0, %v4561
      %v4563 = vpop.f32.mrb[0].mxu0
      %4564 = vmatprep.mubr.f32.mxu0 0.0
      %4565 = vmatmul.mubr.f32.gmra.mrb[0].mxu0 %v4319
      %v4566 = vpop.f32.mrb[0].mxu0
      %v4567 = vadd.f32 0.0, %v4566
      %v4568 = vpop.f32.mrb[0].mxu0
      %4569 = vmatprep.mubr.f32.mxu0 0.0
      %4570 = vmatmul.mubr.f32.gmra.mrb[0].mxu0 %v4320
      %v4571 = vpop.f32.mrb[0].mxu0
      %v4572 = vadd.f32 0.0, %v4571
      %v4573 = vpop.f32.mrb[0].mxu0
      %4574 = vmatprep.mubr.f32.mxu0 0.0
      %4575 = vmatmul.mubr.f32.gmra.mrb[0].mxu0 %v4321
      %v4576 = vpop.f32.mrb[0].mxu0
      %v4577 = vadd.f32 0.0, %v4576
      %v4578 = vpop.f32.mrb[0].mxu0
      %4579 = vmatprep.mubr.f32.mxu0 0.0
      %4580 = vmatmul.mubr.f32.gmra.mrb[0].mxu0 %v4322
      %v4581 = vpop.f32.mrb[0].mxu0
      %v4582 = vadd.f32 0.0, %v4581
      %v4583 = vpop.f32.mrb[0].mxu0
      %4584 = vdwg.mxu0
      %v4585 = vadd.f32 %v4109, %v4407
      %v4586 = vadd.f32 %v4114, %v4412
      %v4587 = vadd.f32 %v4119, %v4417
      %v4588 = vadd.f32 %v4124, %v4422
      %v4589 = vadd.f32 %v4129, %v4427
      %v4590 = vadd.f32 %v4134, %v4432
      %v4591 = vadd.f32 %v4139, %v4437
      %v4592 = vadd.f32 %v4144, %v4442
      %v4593 = vadd.f32 %v4149, %v4447
      %v4594 = vadd.f32 %v4154, %v4452
      %v4595 = vadd.f32 %v4159, %v4457
      %v4596 = vadd.f32 %v4164, %v4462
      %v4597 = vadd.f32 %v4169, %v4467
      %v4598 = vadd.f32 %v4174, %v4472
      %v4599 = vadd.f32 %v4179, %v4477
      %v4600 = vadd.f32 %v4184, %v4482
      %v4601 = vadd.f32 %v4189, %v4487
      %v4602 = vadd.f32 %v4194, %v4492
      %v4603 = vadd.f32 %v4199, %v4497
      %v4604 = vadd.f32 %v4204, %v4502
      %v4605 = vadd.f32 %v4209, %v4507
      %v4606 = vadd.f32 %v4214, %v4512
      %v4607 = vadd.f32 %v4219, %v4517
      %v4608 = vadd.f32 %v4224, %v4522
      %v4609 = vadd.f32 %v4229, %v4527
      %v4610 = vadd.f32 %v4234, %v4532
      %v4611 = vadd.f32 %v4239, %v4537
      %v4612 = vadd.f32 %v4244, %v4542
      %v4613 = vadd.f32 %v4249, %v4547
      %v4614 = vadd.f32 %v4254, %v4552
      %v4615 = vadd.f32 %v4259, %v4557
      %v4616 = vadd.f32 %v4264, %v4562
      %v4617 = vadd.f32 %v4269, %v4567
      %v4618 = vadd.f32 %v4274, %v4572
      %v4619 = vadd.f32 %v4279, %v4577
      %v4620 = vadd.f32 %v4284, %v4582
      %v4621 = vld [vmem:[#allocation2 + $0x12] sm:$0xff]
      %v4622 = vld [vmem:[#allocation2 + $0x1a] sm:$0xff]
      %v4623 = vld [vmem:[#allocation2 + $0x22] sm:$0xff]
      %v4624 = vld [vmem:[#allocation2 + $0x2a] sm:$0xff]
      %v4625 = vld [vmem:[#allocation2 + $0x32] sm:$0xff]
      %v4626 = vld [vmem:[#allocation2 + $0x3a] sm:$0xff]
      %v4627 = vld [vmem:[#allocation2 + $0x42] sm:$0xff]
      %v4628 = vld [vmem:[#allocation2 + $0x4a] sm:$0xff]
      %v4629 = vld [vmem:[#allocation2 + $0x52] sm:$0xff]
      %v4630 = vld [vmem:[#allocation2 + $0x5a] sm:$0xff]
      %v4631 = vld [vmem:[#allocation2 + $0x62] sm:$0xff]
      %v4632 = vld [vmem:[#allocation2 + $0x6a] sm:$0xff]
      %v4633 = vld [vmem:[#allocation2 + $0x72] sm:$0xff]
      %v4634 = vld [vmem:[#allocation2 + $0x7a] sm:$0xff]
      %v4635 = vld [vmem:[#allocation2 + $0x82] sm:$0xff]
      %v4636 = vld [vmem:[#allocation2 + $0x8a] sm:$0xff]
      %v4637 = vld [vmem:[#allocation2 + $0x92] sm:$0xff]
      %v4638 = vld [vmem:[#allocation2 + $0x9a] sm:$0xff]
      %v4639 = vld [vmem:[#allocation2 + $0xa2] sm:$0xff]
      %v4640 = vld [vmem:[#allocation2 + $0xaa] sm:$0xff]
      %v4641 = vld [vmem:[#allocation2 + $0xb2] sm:$0xff]
      %v4642 = vld [vmem:[#allocation2 + $0xba] sm:$0xff]
      %v4643 = vld [vmem:[#allocation2 + $0xc2] sm:$0xff]
      %v4644 = vld [vmem:[#allocation2 + $0xca] sm:$0xff]
      %v4645 = vld [vmem:[#allocation2 + $0xd2] sm:$0xff]
      %v4646 = vld [vmem:[#allocation2 + $0xda] sm:$0xff]
      %v4647 = vld [vmem:[#allocation2 + $0xe2] sm:$0xff]
      %v4648 = vld [vmem:[#allocation2 + $0xea] sm:$0xff]
      %v4649 = vld [vmem:[#allocation2 + $0xf2] sm:$0xff]
      %v4650 = vld [vmem:[#allocation2 + $0xfa] sm:$0xff]
      %v4651 = vld [vmem:[#allocation2 + $0x102] sm:$0xff]
      %v4652 = vld [vmem:[#allocation2 + $0x10a] sm:$0xff]
      %v4653 = vld [vmem:[#allocation2 + $0x112] sm:$0xff]
      %v4654 = vld [vmem:[#allocation2 + $0x11a] sm:$0xff]
      %v4655 = vld [vmem:[#allocation2 + $0x122] sm:$0xff]
      %v4656 = vld [vmem:[#allocation2 + $0x12a] sm:$0xff]
      %s4657 = scalar_lea.vmem %s2, 384
      %v4658 = vld [vmem:[%s4657] sm:$0xff]
      %v4659 = vld [vmem:[%s4657 + $0x8] sm:$0xff]
      %v4660 = vld [vmem:[%s4657 + $0x10] sm:$0xff]
      %v4661 = vld [vmem:[%s4657 + $0x18] sm:$0xff]
      %v4662 = vld [vmem:[%s4657 + $0x20] sm:$0xff]
      %v4663 = vld [vmem:[%s4657 + $0x28] sm:$0xff]
      %v4664 = vld [vmem:[%s4657 + $0x30] sm:$0xff]
      %v4665 = vld [vmem:[%s4657 + $0x38] sm:$0xff]
      %v4666 = vld [vmem:[%s4657 + $0x40] sm:$0xff]
      %v4667 = vld [vmem:[%s4657 + $0x48] sm:$0xff]
      %v4668 = vld [vmem:[%s4657 + $0x50] sm:$0xff]
      %v4669 = vld [vmem:[%s4657 + $0x58] sm:$0xff]
      %v4670 = vld [vmem:[%s4657 + $0x60] sm:$0xff]
      %v4671 = vld [vmem:[%s4657 + $0x68] sm:$0xff]
      %v4672 = vld [vmem:[%s4657 + $0x70] sm:$0xff]
      %v4673 = vld [vmem:[%s4657 + $0x78] sm:$0xff]
      %4674 = vmatprep.subr.mxu0 0.0
      %4675 = vmatpush1.msra.mxu0 %v4658
      %4676 = vmatprep.subr.mxu0 0.0
      %4677 = vmatpush1.msra.mxu0 %v4659
      %4678 = vmatprep.subr.mxu0 0.0
      %4679 = vmatpush1.msra.mxu0 %v4660
      %4680 = vmatprep.subr.mxu0 0.0
      %4681 = vmatpush1.msra.mxu0 %v4661
      %4682 = vmatprep.subr.mxu0 0.0
      %4683 = vmatpush1.msra.mxu0 %v4662
      %4684 = vmatprep.subr.mxu0 0.0
      %4685 = vmatpush1.msra.mxu0 %v4663
      %4686 = vmatprep.subr.mxu0 0.0
      %4687 = vmatpush1.msra.mxu0 %v4664
      %4688 = vmatprep.subr.mxu0 0.0
      %4689 = vmatpush1.msra.mxu0 %v4665
      %4690 = vmatprep.subr.mxu0 0.0
      %4691 = vmatpush1.msra.mxu0 %v4666
      %4692 = vmatprep.subr.mxu0 0.0
      %4693 = vmatpush1.msra.mxu0 %v4667
      %4694 = vmatprep.subr.mxu0 0.0
      %4695 = vmatpush1.msra.mxu0 %v4668
      %4696 = vmatprep.subr.mxu0 0.0
      %4697 = vmatpush1.msra.mxu0 %v4669
      %4698 = vmatprep.subr.mxu0 0.0
      %4699 = vmatpush1.msra.mxu0 %v4670
      %4700 = vmatprep.subr.mxu0 0.0
      %4701 = vmatpush1.msra.mxu0 %v4671
      %4702 = vmatprep.subr.mxu0 0.0
      %4703 = vmatpush1.msra.mxu0 %v4672
      %4704 = vmatprep.subr.mxu0 0.0
      %4705 = vmatpush1.msra.mxu0 %v4673
      %4706 = vmatprep.subr.mxu0 0.0
      %4707 = vmatpush1.msra.mxu0 0.0
      %4708 = vmatprep.subr.mxu0 0.0
      %4709 = vmatpush1.msra.mxu0 0.0
      %4710 = vmatprep.subr.mxu0 0.0
      %4711 = vmatpush1.msra.mxu0 0.0
      %4712 = vmatprep.subr.mxu0 0.0
      %4713 = vmatpush1.msra.mxu0 0.0
      %4714 = vmatprep.subr.mxu0 0.0
      %4715 = vmatpush1.msra.mxu0 0.0
      %4716 = vmatprep.subr.mxu0 0.0
      %4717 = vmatpush1.msra.mxu0 0.0
      %4718 = vmatprep.subr.mxu0 0.0
      %4719 = vmatpush1.msra.mxu0 0.0
      %4720 = vmatprep.subr.mxu0 0.0
      %4721 = vmatpush1.msra.mxu0 0.0
      %4722 = vmatprep.subr.mxu0 0.0
      %4723 = vmatpush1.msra.mxu0 0.0
      %4724 = vmatprep.subr.mxu0 0.0
      %4725 = vmatpush1.msra.mxu0 0.0
      %4726 = vmatprep.subr.mxu0 0.0
      %4727 = vmatpush1.msra.mxu0 0.0
      %4728 = vmatprep.subr.mxu0 0.0
      %4729 = vmatpush1.msra.mxu0 0.0
      %4730 = vmatprep.subr.mxu0 0.0
      %4731 = vmatpush1.msra.mxu0 0.0
      %4732 = vmatprep.subr.mxu0 0.0
      %4733 = vmatpush1.msra.mxu0 0.0
      %4734 = vmatprep.subr.mxu0 0.0
      %4735 = vmatpush1.msra.mxu0 0.0
      %4736 = vmatprep.subr.mxu0 0.0
      %4737 = vmatpush1.msra.mxu0 0.0
      %4738 = vmatprep.mubr.f32.mxu0 0.0
      %4739 = vmatmul.mubr.f32.gmra.mrb[0].mxu0 %v4621
      %v4740 = vpop.f32.mrb[0].mxu0
      %v4741 = vadd.f32 0.0, %v4740
      %v4742 = vpop.f32.mrb[0].mxu0
      %4743 = vmatprep.mubr.f32.mxu0 0.0
      %4744 = vmatmul.mubr.f32.gmra.mrb[0].mxu0 %v4622
      %v4745 = vpop.f32.mrb[0].mxu0
      %v4746 = vadd.f32 0.0, %v4745
      %v4747 = vpop.f32.mrb[0].mxu0
      %4748 = vmatprep.mubr.f32.mxu0 0.0
      %4749 = vmatmul.mubr.f32.gmra.mrb[0].mxu0 %v4623
      %v4750 = vpop.f32.mrb[0].mxu0
      %v4751 = vadd.f32 0.0, %v4750
      %v4752 = vpop.f32.mrb[0].mxu0
      %4753 = vmatprep.mubr.f32.mxu0 0.0
      %4754 = vmatmul.mubr.f32.gmra.mrb[0].mxu0 %v4624
      %v4755 = vpop.f32.mrb[0].mxu0
      %v4756 = vadd.f32 0.0, %v4755
      %v4757 = vpop.f32.mrb[0].mxu0
      %4758 = vmatprep.mubr.f32.mxu0 0.0
      %4759 = vmatmul.mubr.f32.gmra.mrb[0].mxu0 %v4625
      %v4760 = vpop.f32.mrb[0].mxu0
      %v4761 = vadd.f32 0.0, %v4760
      %v4762 = vpop.f32.mrb[0].mxu0
      %4763 = vmatprep.mubr.f32.mxu0 0.0
      %4764 = vmatmul.mubr.f32.gmra.mrb[0].mxu0 %v4626
      %v4765 = vpop.f32.mrb[0].mxu0
      %v4766 = vadd.f32 0.0, %v4765
      %v4767 = vpop.f32.mrb[0].mxu0
      %4768 = vmatprep.mubr.f32.mxu0 0.0
      %4769 = vmatmul.mubr.f32.gmra.mrb[0].mxu0 %v4627
      %v4770 = vpop.f32.mrb[0].mxu0
      %v4771 = vadd.f32 0.0, %v4770
      %v4772 = vpop.f32.mrb[0].mxu0
      %4773 = vmatprep.mubr.f32.mxu0 0.0
      %4774 = vmatmul.mubr.f32.gmra.mrb[0].mxu0 %v4628
      %v4775 = vpop.f32.mrb[0].mxu0
      %v4776 = vadd.f32 0.0, %v4775
      %v4777 = vpop.f32.mrb[0].mxu0
      %4778 = vmatprep.mubr.f32.mxu0 0.0
      %4779 = vmatmul.mubr.f32.gmra.mrb[0].mxu0 %v4629
      %v4780 = vpop.f32.mrb[0].mxu0
      %v4781 = vadd.f32 0.0, %v4780
      %v4782 = vpop.f32.mrb[0].mxu0
      %4783 = vmatprep.mubr.f32.mxu0 0.0
      %4784 = vmatmul.mubr.f32.gmra.mrb[0].mxu0 %v4630
      %v4785 = vpop.f32.mrb[0].mxu0
      %v4786 = vadd.f32 0.0, %v4785
      %v4787 = vpop.f32.mrb[0].mxu0
      %4788 = vmatprep.mubr.f32.mxu0 0.0
      %4789 = vmatmul.mubr.f32.gmra.mrb[0].mxu0 %v4631
      %v4790 = vpop.f32.mrb[0].mxu0
      %v4791 = vadd.f32 0.0, %v4790
      %v4792 = vpop.f32.mrb[0].mxu0
      %4793 = vmatprep.mubr.f32.mxu0 0.0
      %4794 = vmatmul.mubr.f32.gmra.mrb[0].mxu0 %v4632
      %v4795 = vpop.f32.mrb[0].mxu0
      %v4796 = vadd.f32 0.0, %v4795
      %v4797 = vpop.f32.mrb[0].mxu0
      %4798 = vmatprep.mubr.f32.mxu0 0.0
      %4799 = vmatmul.mubr.f32.gmra.mrb[0].mxu0 %v4633
      %v4800 = vpop.f32.mrb[0].mxu0
      %v4801 = vadd.f32 0.0, %v4800
      %v4802 = vpop.f32.mrb[0].mxu0
      %4803 = vmatprep.mubr.f32.mxu0 0.0
      %4804 = vmatmul.mubr.f32.gmra.mrb[0].mxu0 %v4634
      %v4805 = vpop.f32.mrb[0].mxu0
      %v4806 = vadd.f32 0.0, %v4805
      %v4807 = vpop.f32.mrb[0].mxu0
      %4808 = vmatprep.mubr.f32.mxu0 0.0
      %4809 = vmatmul.mubr.f32.gmra.mrb[0].mxu0 %v4635
      %v4810 = vpop.f32.mrb[0].mxu0
      %v4811 = vadd.f32 0.0, %v4810
      %v4812 = vpop.f32.mrb[0].mxu0
      %4813 = vmatprep.mubr.f32.mxu0 0.0
      %4814 = vmatmul.mubr.f32.gmra.mrb[0].mxu0 %v4636
      %v4815 = vpop.f32.mrb[0].mxu0
      %v4816 = vadd.f32 0.0, %v4815
      %v4817 = vpop.f32.mrb[0].mxu0
      %4818 = vmatprep.mubr.f32.mxu0 0.0
      %4819 = vmatmul.mubr.f32.gmra.mrb[0].mxu0 %v4637
      %v4820 = vpop.f32.mrb[0].mxu0
      %v4821 = vadd.f32 0.0, %v4820
      %v4822 = vpop.f32.mrb[0].mxu0
      %4823 = vmatprep.mubr.f32.mxu0 0.0
      %4824 = vmatmul.mubr.f32.gmra.mrb[0].mxu0 %v4638
      %v4825 = vpop.f32.mrb[0].mxu0
      %v4826 = vadd.f32 0.0, %v4825
      %v4827 = vpop.f32.mrb[0].mxu0
      %4828 = vmatprep.mubr.f32.mxu0 0.0
      %4829 = vmatmul.mubr.f32.gmra.mrb[0].mxu0 %v4639
      %v4830 = vpop.f32.mrb[0].mxu0
      %v4831 = vadd.f32 0.0, %v4830
      %v4832 = vpop.f32.mrb[0].mxu0
      %4833 = vmatprep.mubr.f32.mxu0 0.0
      %4834 = vmatmul.mubr.f32.gmra.mrb[0].mxu0 %v4640
      %v4835 = vpop.f32.mrb[0].mxu0
      %v4836 = vadd.f32 0.0, %v4835
      %v4837 = vpop.f32.mrb[0].mxu0
      %4838 = vmatprep.mubr.f32.mxu0 0.0
      %4839 = vmatmul.mubr.f32.gmra.mrb[0].mxu0 %v4641
      %v4840 = vpop.f32.mrb[0].mxu0
      %v4841 = vadd.f32 0.0, %v4840
      %v4842 = vpop.f32.mrb[0].mxu0
      %4843 = vmatprep.mubr.f32.mxu0 0.0
      %4844 = vmatmul.mubr.f32.gmra.mrb[0].mxu0 %v4642
      %v4845 = vpop.f32.mrb[0].mxu0
      %v4846 = vadd.f32 0.0, %v4845
      %v4847 = vpop.f32.mrb[0].mxu0
      %4848 = vmatprep.mubr.f32.mxu0 0.0
      %4849 = vmatmul.mubr.f32.gmra.mrb[0].mxu0 %v4643
      %v4850 = vpop.f32.mrb[0].mxu0
      %v4851 = vadd.f32 0.0, %v4850
      %v4852 = vpop.f32.mrb[0].mxu0
      %4853 = vmatprep.mubr.f32.mxu0 0.0
      %4854 = vmatmul.mubr.f32.gmra.mrb[0].mxu0 %v4644
      %v4855 = vpop.f32.mrb[0].mxu0
      %v4856 = vadd.f32 0.0, %v4855
      %v4857 = vpop.f32.mrb[0].mxu0
      %4858 = vmatprep.mubr.f32.mxu0 0.0
      %4859 = vmatmul.mubr.f32.gmra.mrb[0].mxu0 %v4645
      %v4860 = vpop.f32.mrb[0].mxu0
      %v4861 = vadd.f32 0.0, %v4860
      %v4862 = vpop.f32.mrb[0].mxu0
      %4863 = vmatprep.mubr.f32.mxu0 0.0
      %4864 = vmatmul.mubr.f32.gmra.mrb[0].mxu0 %v4646
      %v4865 = vpop.f32.mrb[0].mxu0
      %v4866 = vadd.f32 0.0, %v4865
      %v4867 = vpop.f32.mrb[0].mxu0
      %4868 = vmatprep.mubr.f32.mxu0 0.0
      %4869 = vmatmul.mubr.f32.gmra.mrb[0].mxu0 %v4647
      %v4870 = vpop.f32.mrb[0].mxu0
      %v4871 = vadd.f32 0.0, %v4870
      %v4872 = vpop.f32.mrb[0].mxu0
      %4873 = vmatprep.mubr.f32.mxu0 0.0
      %4874 = vmatmul.mubr.f32.gmra.mrb[0].mxu0 %v4648
      %v4875 = vpop.f32.mrb[0].mxu0
      %v4876 = vadd.f32 0.0, %v4875
      %v4877 = vpop.f32.mrb[0].mxu0
      %4878 = vmatprep.mubr.f32.mxu0 0.0
      %4879 = vmatmul.mubr.f32.gmra.mrb[0].mxu0 %v4649
      %v4880 = vpop.f32.mrb[0].mxu0
      %v4881 = vadd.f32 0.0, %v4880
      %v4882 = vpop.f32.mrb[0].mxu0
      %4883 = vmatprep.mubr.f32.mxu0 0.0
      %4884 = vmatmul.mubr.f32.gmra.mrb[0].mxu0 %v4650
      %v4885 = vpop.f32.mrb[0].mxu0
      %v4886 = vadd.f32 0.0, %v4885
      %v4887 = vpop.f32.mrb[0].mxu0
      %4888 = vmatprep.mubr.f32.mxu0 0.0
      %4889 = vmatmul.mubr.f32.gmra.mrb[0].mxu0 %v4651
      %v4890 = vpop.f32.mrb[0].mxu0
      %v4891 = vadd.f32 0.0, %v4890
      %v4892 = vpop.f32.mrb[0].mxu0
      %4893 = vmatprep.mubr.f32.mxu0 0.0
      %4894 = vmatmul.mubr.f32.gmra.mrb[0].mxu0 %v4652
      %v4895 = vpop.f32.mrb[0].mxu0
      %v4896 = vadd.f32 0.0, %v4895
      %v4897 = vpop.f32.mrb[0].mxu0
      %4898 = vmatprep.mubr.f32.mxu0 0.0
      %4899 = vmatmul.mubr.f32.gmra.mrb[0].mxu0 %v4653
      %v4900 = vpop.f32.mrb[0].mxu0
      %v4901 = vadd.f32 0.0, %v4900
      %v4902 = vpop.f32.mrb[0].mxu0
      %4903 = vmatprep.mubr.f32.mxu0 0.0
      %4904 = vmatmul.mubr.f32.gmra.mrb[0].mxu0 %v4654
      %v4905 = vpop.f32.mrb[0].mxu0
      %v4906 = vadd.f32 0.0, %v4905
      %v4907 = vpop.f32.mrb[0].mxu0
      %4908 = vmatprep.mubr.f32.mxu0 0.0
      %4909 = vmatmul.mubr.f32.gmra.mrb[0].mxu0 %v4655
      %v4910 = vpop.f32.mrb[0].mxu0
      %v4911 = vadd.f32 0.0, %v4910
      %v4912 = vpop.f32.mrb[0].mxu0
      %4913 = vmatprep.mubr.f32.mxu0 0.0
      %4914 = vmatmul.mubr.f32.gmra.mrb[0].mxu0 %v4656
      %v4915 = vpop.f32.mrb[0].mxu0
      %v4916 = vadd.f32 0.0, %v4915
      %v4917 = vpop.f32.mrb[0].mxu0
      %4918 = vdwg.mxu0
      %v4919 = vadd.f32 %v4585, %v4741
      %v4920 = vadd.f32 %v4586, %v4746
      %v4921 = vadd.f32 %v4587, %v4751
      %v4922 = vadd.f32 %v4588, %v4756
      %v4923 = vadd.f32 %v4589, %v4761
      %v4924 = vadd.f32 %v4590, %v4766
      %v4925 = vadd.f32 %v4591, %v4771
      %v4926 = vadd.f32 %v4592, %v4776
      %v4927 = vadd.f32 %v4593, %v4781
      %v4928 = vadd.f32 %v4594, %v4786
      %v4929 = vadd.f32 %v4595, %v4791
      %v4930 = vadd.f32 %v4596, %v4796
      %v4931 = vadd.f32 %v4597, %v4801
      %v4932 = vadd.f32 %v4598, %v4806
      %v4933 = vadd.f32 %v4599, %v4811
      %v4934 = vadd.f32 %v4600, %v4816
      %v4935 = vadd.f32 %v4601, %v4821
      %v4936 = vadd.f32 %v4602, %v4826
      %v4937 = vadd.f32 %v4603, %v4831
      %v4938 = vadd.f32 %v4604, %v4836
      %v4939 = vadd.f32 %v4605, %v4841
      %v4940 = vadd.f32 %v4606, %v4846
      %v4941 = vadd.f32 %v4607, %v4851
      %v4942 = vadd.f32 %v4608, %v4856
      %v4943 = vadd.f32 %v4609, %v4861
      %v4944 = vadd.f32 %v4610, %v4866
      %v4945 = vadd.f32 %v4611, %v4871
      %v4946 = vadd.f32 %v4612, %v4876
      %v4947 = vadd.f32 %v4613, %v4881
      %v4948 = vadd.f32 %v4614, %v4886
      %v4949 = vadd.f32 %v4615, %v4891
      %v4950 = vadd.f32 %v4616, %v4896
      %v4951 = vadd.f32 %v4617, %v4901
      %v4952 = vadd.f32 %v4618, %v4906
      %v4953 = vadd.f32 %v4619, %v4911
      %v4954 = vadd.f32 %v4620, %v4916
      %v4955 = vld [vmem:[#allocation2 + $0x13] sm:$0xff]
      %v4956 = vld [vmem:[#allocation2 + $0x1b] sm:$0xff]
      %v4957 = vld [vmem:[#allocation2 + $0x23] sm:$0xff]
      %v4958 = vld [vmem:[#allocation2 + $0x2b] sm:$0xff]
      %v4959 = vld [vmem:[#allocation2 + $0x33] sm:$0xff]
      %v4960 = vld [vmem:[#allocation2 + $0x3b] sm:$0xff]
      %v4961 = vld [vmem:[#allocation2 + $0x43] sm:$0xff]
      %v4962 = vld [vmem:[#allocation2 + $0x4b] sm:$0xff]
      %v4963 = vld [vmem:[#allocation2 + $0x53] sm:$0xff]
      %v4964 = vld [vmem:[#allocation2 + $0x5b] sm:$0xff]
      %v4965 = vld [vmem:[#allocation2 + $0x63] sm:$0xff]
      %v4966 = vld [vmem:[#allocation2 + $0x6b] sm:$0xff]
      %v4967 = vld [vmem:[#allocation2 + $0x73] sm:$0xff]
      %v4968 = vld [vmem:[#allocation2 + $0x7b] sm:$0xff]
      %v4969 = vld [vmem:[#allocation2 + $0x83] sm:$0xff]
      %v4970 = vld [vmem:[#allocation2 + $0x8b] sm:$0xff]
      %v4971 = vld [vmem:[#allocation2 + $0x93] sm:$0xff]
      %v4972 = vld [vmem:[#allocation2 + $0x9b] sm:$0xff]
      %v4973 = vld [vmem:[#allocation2 + $0xa3] sm:$0xff]
      %v4974 = vld [vmem:[#allocation2 + $0xab] sm:$0xff]
      %v4975 = vld [vmem:[#allocation2 + $0xb3] sm:$0xff]
      %v4976 = vld [vmem:[#allocation2 + $0xbb] sm:$0xff]
      %v4977 = vld [vmem:[#allocation2 + $0xc3] sm:$0xff]
      %v4978 = vld [vmem:[#allocation2 + $0xcb] sm:$0xff]
      %v4979 = vld [vmem:[#allocation2 + $0xd3] sm:$0xff]
      %v4980 = vld [vmem:[#allocation2 + $0xdb] sm:$0xff]
      %v4981 = vld [vmem:[#allocation2 + $0xe3] sm:$0xff]
      %v4982 = vld [vmem:[#allocation2 + $0xeb] sm:$0xff]
      %v4983 = vld [vmem:[#allocation2 + $0xf3] sm:$0xff]
      %v4984 = vld [vmem:[#allocation2 + $0xfb] sm:$0xff]
      %v4985 = vld [vmem:[#allocation2 + $0x103] sm:$0xff]
      %v4986 = vld [vmem:[#allocation2 + $0x10b] sm:$0xff]
      %v4987 = vld [vmem:[#allocation2 + $0x113] sm:$0xff]
      %v4988 = vld [vmem:[#allocation2 + $0x11b] sm:$0xff]
      %v4989 = vld [vmem:[#allocation2 + $0x123] sm:$0xff]
      %v4990 = vld [vmem:[#allocation2 + $0x12b] sm:$0xff]
      %s4991 = scalar_lea.vmem %s2, 512
      %v4992 = vld [vmem:[%s4991] sm:$0xff]
      %v4993 = vld [vmem:[%s4991 + $0x8] sm:$0xff]
      %v4994 = vld [vmem:[%s4991 + $0x10] sm:$0xff]
      %v4995 = vld [vmem:[%s4991 + $0x18] sm:$0xff]
      %v4996 = vld [vmem:[%s4991 + $0x20] sm:$0xff]
      %v4997 = vld [vmem:[%s4991 + $0x28] sm:$0xff]
      %v4998 = vld [vmem:[%s4991 + $0x30] sm:$0xff]
      %v4999 = vld [vmem:[%s4991 + $0x38] sm:$0xff]
      %v5000 = vld [vmem:[%s4991 + $0x40] sm:$0xff]
      %v5001 = vld [vmem:[%s4991 + $0x48] sm:$0xff]
      %v5002 = vld [vmem:[%s4991 + $0x50] sm:$0xff]
      %v5003 = vld [vmem:[%s4991 + $0x58] sm:$0xff]
      %v5004 = vld [vmem:[%s4991 + $0x60] sm:$0xff]
      %v5005 = vld [vmem:[%s4991 + $0x68] sm:$0xff]
      %v5006 = vld [vmem:[%s4991 + $0x70] sm:$0xff]
      %v5007 = vld [vmem:[%s4991 + $0x78] sm:$0xff]
      %5008 = vmatprep.subr.mxu0 0.0
      %5009 = vmatpush1.msra.mxu0 %v4992
      %5010 = vmatprep.subr.mxu0 0.0
      %5011 = vmatpush1.msra.mxu0 %v4993
      %5012 = vmatprep.subr.mxu0 0.0
      %5013 = vmatpush1.msra.mxu0 %v4994
      %5014 = vmatprep.subr.mxu0 0.0
      %5015 = vmatpush1.msra.mxu0 %v4995
      %5016 = vmatprep.subr.mxu0 0.0
      %5017 = vmatpush1.msra.mxu0 %v4996
      %5018 = vmatprep.subr.mxu0 0.0
      %5019 = vmatpush1.msra.mxu0 %v4997
      %5020 = vmatprep.subr.mxu0 0.0
      %5021 = vmatpush1.msra.mxu0 %v4998
      %5022 = vmatprep.subr.mxu0 0.0
      %5023 = vmatpush1.msra.mxu0 %v4999
      %5024 = vmatprep.subr.mxu0 0.0
      %5025 = vmatpush1.msra.mxu0 %v5000
      %5026 = vmatprep.subr.mxu0 0.0
      %5027 = vmatpush1.msra.mxu0 %v5001
      %5028 = vmatprep.subr.mxu0 0.0
      %5029 = vmatpush1.msra.mxu0 %v5002
      %5030 = vmatprep.subr.mxu0 0.0
      %5031 = vmatpush1.msra.mxu0 %v5003
      %5032 = vmatprep.subr.mxu0 0.0
      %5033 = vmatpush1.msra.mxu0 %v5004
      %5034 = vmatprep.subr.mxu0 0.0
      %5035 = vmatpush1.msra.mxu0 %v5005
      %5036 = vmatprep.subr.mxu0 0.0
      %5037 = vmatpush1.msra.mxu0 %v5006
      %5038 = vmatprep.subr.mxu0 0.0
      %5039 = vmatpush1.msra.mxu0 %v5007
      %5040 = vmatprep.subr.mxu0 0.0
      %5041 = vmatpush1.msra.mxu0 0.0
      %5042 = vmatprep.subr.mxu0 0.0
      %5043 = vmatpush1.msra.mxu0 0.0
      %5044 = vmatprep.subr.mxu0 0.0
      %5045 = vmatpush1.msra.mxu0 0.0
      %5046 = vmatprep.subr.mxu0 0.0
      %5047 = vmatpush1.msra.mxu0 0.0
      %5048 = vmatprep.subr.mxu0 0.0
      %5049 = vmatpush1.msra.mxu0 0.0
      %5050 = vmatprep.subr.mxu0 0.0
      %5051 = vmatpush1.msra.mxu0 0.0
      %5052 = vmatprep.subr.mxu0 0.0
      %5053 = vmatpush1.msra.mxu0 0.0
      %5054 = vmatprep.subr.mxu0 0.0
      %5055 = vmatpush1.msra.mxu0 0.0
      %5056 = vmatprep.subr.mxu0 0.0
      %5057 = vmatpush1.msra.mxu0 0.0
      %5058 = vmatprep.subr.mxu0 0.0
      %5059 = vmatpush1.msra.mxu0 0.0
      %5060 = vmatprep.subr.mxu0 0.0
      %5061 = vmatpush1.msra.mxu0 0.0
      %5062 = vmatprep.subr.mxu0 0.0
      %5063 = vmatpush1.msra.mxu0 0.0
      %5064 = vmatprep.subr.mxu0 0.0
      %5065 = vmatpush1.msra.mxu0 0.0
      %5066 = vmatprep.subr.mxu0 0.0
      %5067 = vmatpush1.msra.mxu0 0.0
      %5068 = vmatprep.subr.mxu0 0.0
      %5069 = vmatpush1.msra.mxu0 0.0
      %5070 = vmatprep.subr.mxu0 0.0
      %5071 = vmatpush1.msra.mxu0 0.0
      %5072 = vmatprep.mubr.f32.mxu0 0.0
      %5073 = vmatmul.mubr.f32.gmra.mrb[0].mxu0 %v4955
      %v5074 = vpop.f32.mrb[0].mxu0
      %v5075 = vadd.f32 0.0, %v5074
      %v5076 = vpop.f32.mrb[0].mxu0
      %5077 = vmatprep.mubr.f32.mxu0 0.0
      %5078 = vmatmul.mubr.f32.gmra.mrb[0].mxu0 %v4956
      %v5079 = vpop.f32.mrb[0].mxu0
      %v5080 = vadd.f32 0.0, %v5079
      %v5081 = vpop.f32.mrb[0].mxu0
      %5082 = vmatprep.mubr.f32.mxu0 0.0
      %5083 = vmatmul.mubr.f32.gmra.mrb[0].mxu0 %v4957
      %v5084 = vpop.f32.mrb[0].mxu0
      %v5085 = vadd.f32 0.0, %v5084
      %v5086 = vpop.f32.mrb[0].mxu0
      %5087 = vmatprep.mubr.f32.mxu0 0.0
      %5088 = vmatmul.mubr.f32.gmra.mrb[0].mxu0 %v4958
      %v5089 = vpop.f32.mrb[0].mxu0
      %v5090 = vadd.f32 0.0, %v5089
      %v5091 = vpop.f32.mrb[0].mxu0
      %5092 = vmatprep.mubr.f32.mxu0 0.0
      %5093 = vmatmul.mubr.f32.gmra.mrb[0].mxu0 %v4959
      %v5094 = vpop.f32.mrb[0].mxu0
      %v5095 = vadd.f32 0.0, %v5094
      %v5096 = vpop.f32.mrb[0].mxu0
      %5097 = vmatprep.mubr.f32.mxu0 0.0
      %5098 = vmatmul.mubr.f32.gmra.mrb[0].mxu0 %v4960
      %v5099 = vpop.f32.mrb[0].mxu0
      %v5100 = vadd.f32 0.0, %v5099
      %v5101 = vpop.f32.mrb[0].mxu0
      %5102 = vmatprep.mubr.f32.mxu0 0.0
      %5103 = vmatmul.mubr.f32.gmra.mrb[0].mxu0 %v4961
      %v5104 = vpop.f32.mrb[0].mxu0
      %v5105 = vadd.f32 0.0, %v5104
      %v5106 = vpop.f32.mrb[0].mxu0
      %5107 = vmatprep.mubr.f32.mxu0 0.0
      %5108 = vmatmul.mubr.f32.gmra.mrb[0].mxu0 %v4962
      %v5109 = vpop.f32.mrb[0].mxu0
      %v5110 = vadd.f32 0.0, %v5109
      %v5111 = vpop.f32.mrb[0].mxu0
      %5112 = vmatprep.mubr.f32.mxu0 0.0
      %5113 = vmatmul.mubr.f32.gmra.mrb[0].mxu0 %v4963
      %v5114 = vpop.f32.mrb[0].mxu0
      %v5115 = vadd.f32 0.0, %v5114
      %v5116 = vpop.f32.mrb[0].mxu0
      %5117 = vmatprep.mubr.f32.mxu0 0.0
      %5118 = vmatmul.mubr.f32.gmra.mrb[0].mxu0 %v4964
      %v5119 = vpop.f32.mrb[0].mxu0
      %v5120 = vadd.f32 0.0, %v5119
      %v5121 = vpop.f32.mrb[0].mxu0
      %5122 = vmatprep.mubr.f32.mxu0 0.0
      %5123 = vmatmul.mubr.f32.gmra.mrb[0].mxu0 %v4965
      %v5124 = vpop.f32.mrb[0].mxu0
      %v5125 = vadd.f32 0.0, %v5124
      %v5126 = vpop.f32.mrb[0].mxu0
      %5127 = vmatprep.mubr.f32.mxu0 0.0
      %5128 = vmatmul.mubr.f32.gmra.mrb[0].mxu0 %v4966
      %v5129 = vpop.f32.mrb[0].mxu0
      %v5130 = vadd.f32 0.0, %v5129
      %v5131 = vpop.f32.mrb[0].mxu0
      %5132 = vmatprep.mubr.f32.mxu0 0.0
      %5133 = vmatmul.mubr.f32.gmra.mrb[0].mxu0 %v4967
      %v5134 = vpop.f32.mrb[0].mxu0
      %v5135 = vadd.f32 0.0, %v5134
      %v5136 = vpop.f32.mrb[0].mxu0
      %5137 = vmatprep.mubr.f32.mxu0 0.0
      %5138 = vmatmul.mubr.f32.gmra.mrb[0].mxu0 %v4968
      %v5139 = vpop.f32.mrb[0].mxu0
      %v5140 = vadd.f32 0.0, %v5139
      %v5141 = vpop.f32.mrb[0].mxu0
      %5142 = vmatprep.mubr.f32.mxu0 0.0
      %5143 = vmatmul.mubr.f32.gmra.mrb[0].mxu0 %v4969
      %v5144 = vpop.f32.mrb[0].mxu0
      %v5145 = vadd.f32 0.0, %v5144
      %v5146 = vpop.f32.mrb[0].mxu0
      %5147 = vmatprep.mubr.f32.mxu0 0.0
      %5148 = vmatmul.mubr.f32.gmra.mrb[0].mxu0 %v4970
      %v5149 = vpop.f32.mrb[0].mxu0
      %v5150 = vadd.f32 0.0, %v5149
      %v5151 = vpop.f32.mrb[0].mxu0
      %5152 = vmatprep.mubr.f32.mxu0 0.0
      %5153 = vmatmul.mubr.f32.gmra.mrb[0].mxu0 %v4971
      %v5154 = vpop.f32.mrb[0].mxu0
      %v5155 = vadd.f32 0.0, %v5154
      %v5156 = vpop.f32.mrb[0].mxu0
      %5157 = vmatprep.mubr.f32.mxu0 0.0
      %5158 = vmatmul.mubr.f32.gmra.mrb[0].mxu0 %v4972
      %v5159 = vpop.f32.mrb[0].mxu0
      %v5160 = vadd.f32 0.0, %v5159
      %v5161 = vpop.f32.mrb[0].mxu0
      %5162 = vmatprep.mubr.f32.mxu0 0.0
      %5163 = vmatmul.mubr.f32.gmra.mrb[0].mxu0 %v4973
      %v5164 = vpop.f32.mrb[0].mxu0
      %v5165 = vadd.f32 0.0, %v5164
      %v5166 = vpop.f32.mrb[0].mxu0
      %5167 = vmatprep.mubr.f32.mxu0 0.0
      %5168 = vmatmul.mubr.f32.gmra.mrb[0].mxu0 %v4974
      %v5169 = vpop.f32.mrb[0].mxu0
      %v5170 = vadd.f32 0.0, %v5169
      %v5171 = vpop.f32.mrb[0].mxu0
      %5172 = vmatprep.mubr.f32.mxu0 0.0
      %5173 = vmatmul.mubr.f32.gmra.mrb[0].mxu0 %v4975
      %v5174 = vpop.f32.mrb[0].mxu0
      %v5175 = vadd.f32 0.0, %v5174
      %v5176 = vpop.f32.mrb[0].mxu0
      %5177 = vmatprep.mubr.f32.mxu0 0.0
      %5178 = vmatmul.mubr.f32.gmra.mrb[0].mxu0 %v4976
      %v5179 = vpop.f32.mrb[0].mxu0
      %v5180 = vadd.f32 0.0, %v5179
      %v5181 = vpop.f32.mrb[0].mxu0
      %5182 = vmatprep.mubr.f32.mxu0 0.0
      %5183 = vmatmul.mubr.f32.gmra.mrb[0].mxu0 %v4977
      %v5184 = vpop.f32.mrb[0].mxu0
      %v5185 = vadd.f32 0.0, %v5184
      %v5186 = vpop.f32.mrb[0].mxu0
      %5187 = vmatprep.mubr.f32.mxu0 0.0
      %5188 = vmatmul.mubr.f32.gmra.mrb[0].mxu0 %v4978
      %v5189 = vpop.f32.mrb[0].mxu0
      %v5190 = vadd.f32 0.0, %v5189
      %v5191 = vpop.f32.mrb[0].mxu0
      %5192 = vmatprep.mubr.f32.mxu0 0.0
      %5193 = vmatmul.mubr.f32.gmra.mrb[0].mxu0 %v4979
      %v5194 = vpop.f32.mrb[0].mxu0
      %v5195 = vadd.f32 0.0, %v5194
      %v5196 = vpop.f32.mrb[0].mxu0
      %5197 = vmatprep.mubr.f32.mxu0 0.0
      %5198 = vmatmul.mubr.f32.gmra.mrb[0].mxu0 %v4980
      %v5199 = vpop.f32.mrb[0].mxu0
      %v5200 = vadd.f32 0.0, %v5199
      %v5201 = vpop.f32.mrb[0].mxu0
      %5202 = vmatprep.mubr.f32.mxu0 0.0
      %5203 = vmatmul.mubr.f32.gmra.mrb[0].mxu0 %v4981
      %v5204 = vpop.f32.mrb[0].mxu0
      %v5205 = vadd.f32 0.0, %v5204
      %v5206 = vpop.f32.mrb[0].mxu0
      %5207 = vmatprep.mubr.f32.mxu0 0.0
      %5208 = vmatmul.mubr.f32.gmra.mrb[0].mxu0 %v4982
      %v5209 = vpop.f32.mrb[0].mxu0
      %v5210 = vadd.f32 0.0, %v5209
      %v5211 = vpop.f32.mrb[0].mxu0
      %5212 = vmatprep.mubr.f32.mxu0 0.0
      %5213 = vmatmul.mubr.f32.gmra.mrb[0].mxu0 %v4983
      %v5214 = vpop.f32.mrb[0].mxu0
      %v5215 = vadd.f32 0.0, %v5214
      %v5216 = vpop.f32.mrb[0].mxu0
      %5217 = vmatprep.mubr.f32.mxu0 0.0
      %5218 = vmatmul.mubr.f32.gmra.mrb[0].mxu0 %v4984
      %v5219 = vpop.f32.mrb[0].mxu0
      %v5220 = vadd.f32 0.0, %v5219
      %v5221 = vpop.f32.mrb[0].mxu0
      %5222 = vmatprep.mubr.f32.mxu0 0.0
      %5223 = vmatmul.mubr.f32.gmra.mrb[0].mxu0 %v4985
      %v5224 = vpop.f32.mrb[0].mxu0
      %v5225 = vadd.f32 0.0, %v5224
      %v5226 = vpop.f32.mrb[0].mxu0
      %5227 = vmatprep.mubr.f32.mxu0 0.0
      %5228 = vmatmul.mubr.f32.gmra.mrb[0].mxu0 %v4986
      %v5229 = vpop.f32.mrb[0].mxu0
      %v5230 = vadd.f32 0.0, %v5229
      %v5231 = vpop.f32.mrb[0].mxu0
      %5232 = vmatprep.mubr.f32.mxu0 0.0
      %5233 = vmatmul.mubr.f32.gmra.mrb[0].mxu0 %v4987
      %v5234 = vpop.f32.mrb[0].mxu0
      %v5235 = vadd.f32 0.0, %v5234
      %v5236 = vpop.f32.mrb[0].mxu0
      %5237 = vmatprep.mubr.f32.mxu0 0.0
      %5238 = vmatmul.mubr.f32.gmra.mrb[0].mxu0 %v4988
      %v5239 = vpop.f32.mrb[0].mxu0
      %v5240 = vadd.f32 0.0, %v5239
      %v5241 = vpop.f32.mrb[0].mxu0
      %5242 = vmatprep.mubr.f32.mxu0 0.0
      %5243 = vmatmul.mubr.f32.gmra.mrb[0].mxu0 %v4989
      %v5244 = vpop.f32.mrb[0].mxu0
      %v5245 = vadd.f32 0.0, %v5244
      %v5246 = vpop.f32.mrb[0].mxu0
      %5247 = vmatprep.mubr.f32.mxu0 0.0
      %5248 = vmatmul.mubr.f32.gmra.mrb[0].mxu0 %v4990
      %v5249 = vpop.f32.mrb[0].mxu0
      %v5250 = vadd.f32 0.0, %v5249
      %v5251 = vpop.f32.mrb[0].mxu0
      %5252 = vdwg.mxu0
      %v5253 = vadd.f32 %v4919, %v5075
      %v5254 = vadd.f32 %v4920, %v5080
      %v5255 = vadd.f32 %v4921, %v5085
      %v5256 = vadd.f32 %v4922, %v5090
      %v5257 = vadd.f32 %v4923, %v5095
      %v5258 = vadd.f32 %v4924, %v5100
      %v5259 = vadd.f32 %v4925, %v5105
      %v5260 = vadd.f32 %v4926, %v5110
      %v5261 = vadd.f32 %v4927, %v5115
      %v5262 = vadd.f32 %v4928, %v5120
      %v5263 = vadd.f32 %v4929, %v5125
      %v5264 = vadd.f32 %v4930, %v5130
      %v5265 = vadd.f32 %v4931, %v5135
      %v5266 = vadd.f32 %v4932, %v5140
      %v5267 = vadd.f32 %v4933, %v5145
      %v5268 = vadd.f32 %v4934, %v5150
      %v5269 = vadd.f32 %v4935, %v5155
      %v5270 = vadd.f32 %v4936, %v5160
      %v5271 = vadd.f32 %v4937, %v5165
      %v5272 = vadd.f32 %v4938, %v5170
      %v5273 = vadd.f32 %v4939, %v5175
      %v5274 = vadd.f32 %v4940, %v5180
      %v5275 = vadd.f32 %v4941, %v5185
      %v5276 = vadd.f32 %v4942, %v5190
      %v5277 = vadd.f32 %v4943, %v5195
      %v5278 = vadd.f32 %v4944, %v5200
      %v5279 = vadd.f32 %v4945, %v5205
      %v5280 = vadd.f32 %v4946, %v5210
      %v5281 = vadd.f32 %v4947, %v5215
      %v5282 = vadd.f32 %v4948, %v5220
      %v5283 = vadd.f32 %v4949, %v5225
      %v5284 = vadd.f32 %v4950, %v5230
      %v5285 = vadd.f32 %v4951, %v5235
      %v5286 = vadd.f32 %v4952, %v5240
      %v5287 = vadd.f32 %v4953, %v5245
      %v5288 = vadd.f32 %v4954, %v5250
      %v5289 = vld [vmem:[#allocation2 + $0x14] sm:$0xff]
      %v5290 = vld [vmem:[#allocation2 + $0x1c] sm:$0xff]
      %v5291 = vld [vmem:[#allocation2 + $0x24] sm:$0xff]
      %v5292 = vld [vmem:[#allocation2 + $0x2c] sm:$0xff]
      %v5293 = vld [vmem:[#allocation2 + $0x34] sm:$0xff]
      %v5294 = vld [vmem:[#allocation2 + $0x3c] sm:$0xff]
      %v5295 = vld [vmem:[#allocation2 + $0x44] sm:$0xff]
      %v5296 = vld [vmem:[#allocation2 + $0x4c] sm:$0xff]
      %v5297 = vld [vmem:[#allocation2 + $0x54] sm:$0xff]
      %v5298 = vld [vmem:[#allocation2 + $0x5c] sm:$0xff]
      %v5299 = vld [vmem:[#allocation2 + $0x64] sm:$0xff]
      %v5300 = vld [vmem:[#allocation2 + $0x6c] sm:$0xff]
      %v5301 = vld [vmem:[#allocation2 + $0x74] sm:$0xff]
      %v5302 = vld [vmem:[#allocation2 + $0x7c] sm:$0xff]
      %v5303 = vld [vmem:[#allocation2 + $0x84] sm:$0xff]
      %v5304 = vld [vmem:[#allocation2 + $0x8c] sm:$0xff]
      %v5305 = vld [vmem:[#allocation2 + $0x94] sm:$0xff]
      %v5306 = vld [vmem:[#allocation2 + $0x9c] sm:$0xff]
      %v5307 = vld [vmem:[#allocation2 + $0xa4] sm:$0xff]
      %v5308 = vld [vmem:[#allocation2 + $0xac] sm:$0xff]
      %v5309 = vld [vmem:[#allocation2 + $0xb4] sm:$0xff]
      %v5310 = vld [vmem:[#allocation2 + $0xbc] sm:$0xff]
      %v5311 = vld [vmem:[#allocation2 + $0xc4] sm:$0xff]
      %v5312 = vld [vmem:[#allocation2 + $0xcc] sm:$0xff]
      %v5313 = vld [vmem:[#allocation2 + $0xd4] sm:$0xff]
      %v5314 = vld [vmem:[#allocation2 + $0xdc] sm:$0xff]
      %v5315 = vld [vmem:[#allocation2 + $0xe4] sm:$0xff]
      %v5316 = vld [vmem:[#allocation2 + $0xec] sm:$0xff]
      %v5317 = vld [vmem:[#allocation2 + $0xf4] sm:$0xff]
      %v5318 = vld [vmem:[#allocation2 + $0xfc] sm:$0xff]
      %v5319 = vld [vmem:[#allocation2 + $0x104] sm:$0xff]
      %v5320 = vld [vmem:[#allocation2 + $0x10c] sm:$0xff]
      %v5321 = vld [vmem:[#allocation2 + $0x114] sm:$0xff]
      %v5322 = vld [vmem:[#allocation2 + $0x11c] sm:$0xff]
      %v5323 = vld [vmem:[#allocation2 + $0x124] sm:$0xff]
      %v5324 = vld [vmem:[#allocation2 + $0x12c] sm:$0xff]
      %s5325 = scalar_lea.vmem %s2, 640
      %v5326 = vld [vmem:[%s5325] sm:$0xff]
      %v5327 = vld [vmem:[%s5325 + $0x8] sm:$0xff]
      %v5328 = vld [vmem:[%s5325 + $0x10] sm:$0xff]
      %v5329 = vld [vmem:[%s5325 + $0x18] sm:$0xff]
      %v5330 = vld [vmem:[%s5325 + $0x20] sm:$0xff]
      %v5331 = vld [vmem:[%s5325 + $0x28] sm:$0xff]
      %v5332 = vld [vmem:[%s5325 + $0x30] sm:$0xff]
      %v5333 = vld [vmem:[%s5325 + $0x38] sm:$0xff]
      %v5334 = vld [vmem:[%s5325 + $0x40] sm:$0xff]
      %v5335 = vld [vmem:[%s5325 + $0x48] sm:$0xff]
      %v5336 = vld [vmem:[%s5325 + $0x50] sm:$0xff]
      %v5337 = vld [vmem:[%s5325 + $0x58] sm:$0xff]
      %v5338 = vld [vmem:[%s5325 + $0x60] sm:$0xff]
      %v5339 = vld [vmem:[%s5325 + $0x68] sm:$0xff]
      %v5340 = vld [vmem:[%s5325 + $0x70] sm:$0xff]
      %v5341 = vld [vmem:[%s5325 + $0x78] sm:$0xff]
      %5342 = vmatprep.subr.mxu0 0.0
      %5343 = vmatpush1.msra.mxu0 %v5326
      %5344 = vmatprep.subr.mxu0 0.0
      %5345 = vmatpush1.msra.mxu0 %v5327
      %5346 = vmatprep.subr.mxu0 0.0
      %5347 = vmatpush1.msra.mxu0 %v5328
      %5348 = vmatprep.subr.mxu0 0.0
      %5349 = vmatpush1.msra.mxu0 %v5329
      %5350 = vmatprep.subr.mxu0 0.0
      %5351 = vmatpush1.msra.mxu0 %v5330
      %5352 = vmatprep.subr.mxu0 0.0
      %5353 = vmatpush1.msra.mxu0 %v5331
      %5354 = vmatprep.subr.mxu0 0.0
      %5355 = vmatpush1.msra.mxu0 %v5332
      %5356 = vmatprep.subr.mxu0 0.0
      %5357 = vmatpush1.msra.mxu0 %v5333
      %5358 = vmatprep.subr.mxu0 0.0
      %5359 = vmatpush1.msra.mxu0 %v5334
      %5360 = vmatprep.subr.mxu0 0.0
      %5361 = vmatpush1.msra.mxu0 %v5335
      %5362 = vmatprep.subr.mxu0 0.0
      %5363 = vmatpush1.msra.mxu0 %v5336
      %5364 = vmatprep.subr.mxu0 0.0
      %5365 = vmatpush1.msra.mxu0 %v5337
      %5366 = vmatprep.subr.mxu0 0.0
      %5367 = vmatpush1.msra.mxu0 %v5338
      %5368 = vmatprep.subr.mxu0 0.0
      %5369 = vmatpush1.msra.mxu0 %v5339
      %5370 = vmatprep.subr.mxu0 0.0
      %5371 = vmatpush1.msra.mxu0 %v5340
      %5372 = vmatprep.subr.mxu0 0.0
      %5373 = vmatpush1.msra.mxu0 %v5341
      %5374 = vmatprep.subr.mxu0 0.0
      %5375 = vmatpush1.msra.mxu0 0.0
      %5376 = vmatprep.subr.mxu0 0.0
      %5377 = vmatpush1.msra.mxu0 0.0
      %5378 = vmatprep.subr.mxu0 0.0
      %5379 = vmatpush1.msra.mxu0 0.0
      %5380 = vmatprep.subr.mxu0 0.0
      %5381 = vmatpush1.msra.mxu0 0.0
      %5382 = vmatprep.subr.mxu0 0.0
      %5383 = vmatpush1.msra.mxu0 0.0
      %5384 = vmatprep.subr.mxu0 0.0
      %5385 = vmatpush1.msra.mxu0 0.0
      %5386 = vmatprep.subr.mxu0 0.0
      %5387 = vmatpush1.msra.mxu0 0.0
      %5388 = vmatprep.subr.mxu0 0.0
      %5389 = vmatpush1.msra.mxu0 0.0
      %5390 = vmatprep.subr.mxu0 0.0
      %5391 = vmatpush1.msra.mxu0 0.0
      %5392 = vmatprep.subr.mxu0 0.0
      %5393 = vmatpush1.msra.mxu0 0.0
      %5394 = vmatprep.subr.mxu0 0.0
      %5395 = vmatpush1.msra.mxu0 0.0
      %5396 = vmatprep.subr.mxu0 0.0
      %5397 = vmatpush1.msra.mxu0 0.0
      %5398 = vmatprep.subr.mxu0 0.0
      %5399 = vmatpush1.msra.mxu0 0.0
      %5400 = vmatprep.subr.mxu0 0.0
      %5401 = vmatpush1.msra.mxu0 0.0
      %5402 = vmatprep.subr.mxu0 0.0
      %5403 = vmatpush1.msra.mxu0 0.0
      %5404 = vmatprep.subr.mxu0 0.0
      %5405 = vmatpush1.msra.mxu0 0.0
      %5406 = vmatprep.mubr.f32.mxu0 0.0
      %5407 = vmatmul.mubr.f32.gmra.mrb[0].mxu0 %v5289
      %v5408 = vpop.f32.mrb[0].mxu0
      %v5409 = vadd.f32 0.0, %v5408
      %v5410 = vpop.f32.mrb[0].mxu0
      %5411 = vmatprep.mubr.f32.mxu0 0.0
      %5412 = vmatmul.mubr.f32.gmra.mrb[0].mxu0 %v5290
      %v5413 = vpop.f32.mrb[0].mxu0
      %v5414 = vadd.f32 0.0, %v5413
      %v5415 = vpop.f32.mrb[0].mxu0
      %5416 = vmatprep.mubr.f32.mxu0 0.0
      %5417 = vmatmul.mubr.f32.gmra.mrb[0].mxu0 %v5291
      %v5418 = vpop.f32.mrb[0].mxu0
      %v5419 = vadd.f32 0.0, %v5418
      %v5420 = vpop.f32.mrb[0].mxu0
      %5421 = vmatprep.mubr.f32.mxu0 0.0
      %5422 = vmatmul.mubr.f32.gmra.mrb[0].mxu0 %v5292
      %v5423 = vpop.f32.mrb[0].mxu0
      %v5424 = vadd.f32 0.0, %v5423
      %v5425 = vpop.f32.mrb[0].mxu0
      %5426 = vmatprep.mubr.f32.mxu0 0.0
      %5427 = vmatmul.mubr.f32.gmra.mrb[0].mxu0 %v5293
      %v5428 = vpop.f32.mrb[0].mxu0
      %v5429 = vadd.f32 0.0, %v5428
      %v5430 = vpop.f32.mrb[0].mxu0
      %5431 = vmatprep.mubr.f32.mxu0 0.0
      %5432 = vmatmul.mubr.f32.gmra.mrb[0].mxu0 %v5294
      %v5433 = vpop.f32.mrb[0].mxu0
      %v5434 = vadd.f32 0.0, %v5433
      %v5435 = vpop.f32.mrb[0].mxu0
      %5436 = vmatprep.mubr.f32.mxu0 0.0
      %5437 = vmatmul.mubr.f32.gmra.mrb[0].mxu0 %v5295
      %v5438 = vpop.f32.mrb[0].mxu0
      %v5439 = vadd.f32 0.0, %v5438
      %v5440 = vpop.f32.mrb[0].mxu0
      %5441 = vmatprep.mubr.f32.mxu0 0.0
      %5442 = vmatmul.mubr.f32.gmra.mrb[0].mxu0 %v5296
      %v5443 = vpop.f32.mrb[0].mxu0
      %v5444 = vadd.f32 0.0, %v5443
      %v5445 = vpop.f32.mrb[0].mxu0
      %5446 = vmatprep.mubr.f32.mxu0 0.0
      %5447 = vmatmul.mubr.f32.gmra.mrb[0].mxu0 %v5297
      %v5448 = vpop.f32.mrb[0].mxu0
      %v5449 = vadd.f32 0.0, %v5448
      %v5450 = vpop.f32.mrb[0].mxu0
      %5451 = vmatprep.mubr.f32.mxu0 0.0
      %5452 = vmatmul.mubr.f32.gmra.mrb[0].mxu0 %v5298
      %v5453 = vpop.f32.mrb[0].mxu0
      %v5454 = vadd.f32 0.0, %v5453
      %v5455 = vpop.f32.mrb[0].mxu0
      %5456 = vmatprep.mubr.f32.mxu0 0.0
      %5457 = vmatmul.mubr.f32.gmra.mrb[0].mxu0 %v5299
      %v5458 = vpop.f32.mrb[0].mxu0
      %v5459 = vadd.f32 0.0, %v5458
      %v5460 = vpop.f32.mrb[0].mxu0
      %5461 = vmatprep.mubr.f32.mxu0 0.0
      %5462 = vmatmul.mubr.f32.gmra.mrb[0].mxu0 %v5300
      %v5463 = vpop.f32.mrb[0].mxu0
      %v5464 = vadd.f32 0.0, %v5463
      %v5465 = vpop.f32.mrb[0].mxu0
      %5466 = vmatprep.mubr.f32.mxu0 0.0
      %5467 = vmatmul.mubr.f32.gmra.mrb[0].mxu0 %v5301
      %v5468 = vpop.f32.mrb[0].mxu0
      %v5469 = vadd.f32 0.0, %v5468
      %v5470 = vpop.f32.mrb[0].mxu0
      %5471 = vmatprep.mubr.f32.mxu0 0.0
      %5472 = vmatmul.mubr.f32.gmra.mrb[0].mxu0 %v5302
      %v5473 = vpop.f32.mrb[0].mxu0
      %v5474 = vadd.f32 0.0, %v5473
      %v5475 = vpop.f32.mrb[0].mxu0
      %5476 = vmatprep.mubr.f32.mxu0 0.0
      %5477 = vmatmul.mubr.f32.gmra.mrb[0].mxu0 %v5303
      %v5478 = vpop.f32.mrb[0].mxu0
      %v5479 = vadd.f32 0.0, %v5478
      %v5480 = vpop.f32.mrb[0].mxu0
      %5481 = vmatprep.mubr.f32.mxu0 0.0
      %5482 = vmatmul.mubr.f32.gmra.mrb[0].mxu0 %v5304
      %v5483 = vpop.f32.mrb[0].mxu0
      %v5484 = vadd.f32 0.0, %v5483
      %v5485 = vpop.f32.mrb[0].mxu0
      %5486 = vmatprep.mubr.f32.mxu0 0.0
      %5487 = vmatmul.mubr.f32.gmra.mrb[0].mxu0 %v5305
      %v5488 = vpop.f32.mrb[0].mxu0
      %v5489 = vadd.f32 0.0, %v5488
      %v5490 = vpop.f32.mrb[0].mxu0
      %5491 = vmatprep.mubr.f32.mxu0 0.0
      %5492 = vmatmul.mubr.f32.gmra.mrb[0].mxu0 %v5306
      %v5493 = vpop.f32.mrb[0].mxu0
      %v5494 = vadd.f32 0.0, %v5493
      %v5495 = vpop.f32.mrb[0].mxu0
      %5496 = vmatprep.mubr.f32.mxu0 0.0
      %5497 = vmatmul.mubr.f32.gmra.mrb[0].mxu0 %v5307
      %v5498 = vpop.f32.mrb[0].mxu0
      %v5499 = vadd.f32 0.0, %v5498
      %v5500 = vpop.f32.mrb[0].mxu0
      %5501 = vmatprep.mubr.f32.mxu0 0.0
      %5502 = vmatmul.mubr.f32.gmra.mrb[0].mxu0 %v5308
      %v5503 = vpop.f32.mrb[0].mxu0
      %v5504 = vadd.f32 0.0, %v5503
      %v5505 = vpop.f32.mrb[0].mxu0
      %5506 = vmatprep.mubr.f32.mxu0 0.0
      %5507 = vmatmul.mubr.f32.gmra.mrb[0].mxu0 %v5309
      %v5508 = vpop.f32.mrb[0].mxu0
      %v5509 = vadd.f32 0.0, %v5508
      %v5510 = vpop.f32.mrb[0].mxu0
      %5511 = vmatprep.mubr.f32.mxu0 0.0
      %5512 = vmatmul.mubr.f32.gmra.mrb[0].mxu0 %v5310
      %v5513 = vpop.f32.mrb[0].mxu0
      %v5514 = vadd.f32 0.0, %v5513
      %v5515 = vpop.f32.mrb[0].mxu0
      %5516 = vmatprep.mubr.f32.mxu0 0.0
      %5517 = vmatmul.mubr.f32.gmra.mrb[0].mxu0 %v5311
      %v5518 = vpop.f32.mrb[0].mxu0
      %v5519 = vadd.f32 0.0, %v5518
      %v5520 = vpop.f32.mrb[0].mxu0
      %5521 = vmatprep.mubr.f32.mxu0 0.0
      %5522 = vmatmul.mubr.f32.gmra.mrb[0].mxu0 %v5312
      %v5523 = vpop.f32.mrb[0].mxu0
      %v5524 = vadd.f32 0.0, %v5523
      %v5525 = vpop.f32.mrb[0].mxu0
      %5526 = vmatprep.mubr.f32.mxu0 0.0
      %5527 = vmatmul.mubr.f32.gmra.mrb[0].mxu0 %v5313
      %v5528 = vpop.f32.mrb[0].mxu0
      %v5529 = vadd.f32 0.0, %v5528
      %v5530 = vpop.f32.mrb[0].mxu0
      %5531 = vmatprep.mubr.f32.mxu0 0.0
      %5532 = vmatmul.mubr.f32.gmra.mrb[0].mxu0 %v5314
      %v5533 = vpop.f32.mrb[0].mxu0
      %v5534 = vadd.f32 0.0, %v5533
      %v5535 = vpop.f32.mrb[0].mxu0
      %5536 = vmatprep.mubr.f32.mxu0 0.0
      %5537 = vmatmul.mubr.f32.gmra.mrb[0].mxu0 %v5315
      %v5538 = vpop.f32.mrb[0].mxu0
      %v5539 = vadd.f32 0.0, %v5538
      %v5540 = vpop.f32.mrb[0].mxu0
      %5541 = vmatprep.mubr.f32.mxu0 0.0
      %5542 = vmatmul.mubr.f32.gmra.mrb[0].mxu0 %v5316
      %v5543 = vpop.f32.mrb[0].mxu0
      %v5544 = vadd.f32 0.0, %v5543
      %v5545 = vpop.f32.mrb[0].mxu0
      %5546 = vmatprep.mubr.f32.mxu0 0.0
      %5547 = vmatmul.mubr.f32.gmra.mrb[0].mxu0 %v5317
      %v5548 = vpop.f32.mrb[0].mxu0
      %v5549 = vadd.f32 0.0, %v5548
      %v5550 = vpop.f32.mrb[0].mxu0
      %5551 = vmatprep.mubr.f32.mxu0 0.0
      %5552 = vmatmul.mubr.f32.gmra.mrb[0].mxu0 %v5318
      %v5553 = vpop.f32.mrb[0].mxu0
      %v5554 = vadd.f32 0.0, %v5553
      %v5555 = vpop.f32.mrb[0].mxu0
      %5556 = vmatprep.mubr.f32.mxu0 0.0
      %5557 = vmatmul.mubr.f32.gmra.mrb[0].mxu0 %v5319
      %v5558 = vpop.f32.mrb[0].mxu0
      %v5559 = vadd.f32 0.0, %v5558
      %v5560 = vpop.f32.mrb[0].mxu0
      %5561 = vmatprep.mubr.f32.mxu0 0.0
      %5562 = vmatmul.mubr.f32.gmra.mrb[0].mxu0 %v5320
      %v5563 = vpop.f32.mrb[0].mxu0
      %v5564 = vadd.f32 0.0, %v5563
      %v5565 = vpop.f32.mrb[0].mxu0
      %5566 = vmatprep.mubr.f32.mxu0 0.0
      %5567 = vmatmul.mubr.f32.gmra.mrb[0].mxu0 %v5321
      %v5568 = vpop.f32.mrb[0].mxu0
      %v5569 = vadd.f32 0.0, %v5568
      %v5570 = vpop.f32.mrb[0].mxu0
      %5571 = vmatprep.mubr.f32.mxu0 0.0
      %5572 = vmatmul.mubr.f32.gmra.mrb[0].mxu0 %v5322
      %v5573 = vpop.f32.mrb[0].mxu0
      %v5574 = vadd.f32 0.0, %v5573
      %v5575 = vpop.f32.mrb[0].mxu0
      %5576 = vmatprep.mubr.f32.mxu0 0.0
      %5577 = vmatmul.mubr.f32.gmra.mrb[0].mxu0 %v5323
      %v5578 = vpop.f32.mrb[0].mxu0
      %v5579 = vadd.f32 0.0, %v5578
      %v5580 = vpop.f32.mrb[0].mxu0
      %5581 = vmatprep.mubr.f32.mxu0 0.0
      %5582 = vmatmul.mubr.f32.gmra.mrb[0].mxu0 %v5324
      %v5583 = vpop.f32.mrb[0].mxu0
      %v5584 = vadd.f32 0.0, %v5583
      %v5585 = vpop.f32.mrb[0].mxu0
      %5586 = vdwg.mxu0
      %v5587 = vadd.f32 %v5253, %v5409
      %v5588 = vadd.f32 %v5254, %v5414
      %v5589 = vadd.f32 %v5255, %v5419
      %v5590 = vadd.f32 %v5256, %v5424
      %v5591 = vadd.f32 %v5257, %v5429
      %v5592 = vadd.f32 %v5258, %v5434
      %v5593 = vadd.f32 %v5259, %v5439
      %v5594 = vadd.f32 %v5260, %v5444
      %v5595 = vadd.f32 %v5261, %v5449
      %v5596 = vadd.f32 %v5262, %v5454
      %v5597 = vadd.f32 %v5263, %v5459
      %v5598 = vadd.f32 %v5264, %v5464
      %v5599 = vadd.f32 %v5265, %v5469
      %v5600 = vadd.f32 %v5266, %v5474
      %v5601 = vadd.f32 %v5267, %v5479
      %v5602 = vadd.f32 %v5268, %v5484
      %v5603 = vadd.f32 %v5269, %v5489
      %v5604 = vadd.f32 %v5270, %v5494
      %v5605 = vadd.f32 %v5271, %v5499
      %v5606 = vadd.f32 %v5272, %v5504
      %v5607 = vadd.f32 %v5273, %v5509
      %v5608 = vadd.f32 %v5274, %v5514
      %v5609 = vadd.f32 %v5275, %v5519
      %v5610 = vadd.f32 %v5276, %v5524
      %v5611 = vadd.f32 %v5277, %v5529
      %v5612 = vadd.f32 %v5278, %v5534
      %v5613 = vadd.f32 %v5279, %v5539
      %v5614 = vadd.f32 %v5280, %v5544
      %v5615 = vadd.f32 %v5281, %v5549
      %v5616 = vadd.f32 %v5282, %v5554
      %v5617 = vadd.f32 %v5283, %v5559
      %v5618 = vadd.f32 %v5284, %v5564
      %v5619 = vadd.f32 %v5285, %v5569
      %v5620 = vadd.f32 %v5286, %v5574
      %v5621 = vadd.f32 %v5287, %v5579
      %v5622 = vadd.f32 %v5288, %v5584
      %v5623 = vld [vmem:[#allocation2 + $0x24] sm:$0xff]
      %v5624 = vld [vmem:[#allocation2 + $0x2c] sm:$0xff]
      %v5625 = vld [vmem:[#allocation2 + $0x34] sm:$0xff]
      %v5626 = vld [vmem:[#allocation2 + $0x3c] sm:$0xff]
      %v5627 = vld [vmem:[#allocation2 + $0x44] sm:$0xff]
      %v5628 = vld [vmem:[#allocation2 + $0x4c] sm:$0xff]
      %v5629 = vld [vmem:[#allocation2 + $0x54] sm:$0xff]
      %v5630 = vld [vmem:[#allocation2 + $0x5c] sm:$0xff]
      %v5631 = vld [vmem:[#allocation2 + $0x64] sm:$0xff]
      %v5632 = vld [vmem:[#allocation2 + $0x6c] sm:$0xff]
      %v5633 = vld [vmem:[#allocation2 + $0x74] sm:$0xff]
      %v5634 = vld [vmem:[#allocation2 + $0x7c] sm:$0xff]
      %v5635 = vld [vmem:[#allocation2 + $0x84] sm:$0xff]
      %v5636 = vld [vmem:[#allocation2 + $0x8c] sm:$0xff]
      %v5637 = vld [vmem:[#allocation2 + $0x94] sm:$0xff]
      %v5638 = vld [vmem:[#allocation2 + $0x9c] sm:$0xff]
      %v5639 = vld [vmem:[#allocation2 + $0xa4] sm:$0xff]
      %v5640 = vld [vmem:[#allocation2 + $0xac] sm:$0xff]
      %v5641 = vld [vmem:[#allocation2 + $0xb4] sm:$0xff]
      %v5642 = vld [vmem:[#allocation2 + $0xbc] sm:$0xff]
      %v5643 = vld [vmem:[#allocation2 + $0xc4] sm:$0xff]
      %v5644 = vld [vmem:[#allocation2 + $0xcc] sm:$0xff]
      %v5645 = vld [vmem:[#allocation2 + $0xd4] sm:$0xff]
      %v5646 = vld [vmem:[#allocation2 + $0xdc] sm:$0xff]
      %v5647 = vld [vmem:[#allocation2 + $0xe4] sm:$0xff]
      %v5648 = vld [vmem:[#allocation2 + $0xec] sm:$0xff]
      %v5649 = vld [vmem:[#allocation2 + $0xf4] sm:$0xff]
      %v5650 = vld [vmem:[#allocation2 + $0xfc] sm:$0xff]
      %v5651 = vld [vmem:[#allocation2 + $0x104] sm:$0xff]
      %v5652 = vld [vmem:[#allocation2 + $0x10c] sm:$0xff]
      %v5653 = vld [vmem:[#allocation2 + $0x114] sm:$0xff]
      %v5654 = vld [vmem:[#allocation2 + $0x11c] sm:$0xff]
      %v5655 = vld [vmem:[#allocation2 + $0x124] sm:$0xff]
      %v5656 = vld [vmem:[#allocation2 + $0x12c] sm:$0xff]
      %v5657 = vld [vmem:[#allocation2 + $0x134] sm:$0xff]
      %v5658 = vld [vmem:[#allocation2 + $0x13c] sm:$0xff]
      %s5659 = scalar_lea.vmem %s2, 768
      %v5660 = vld [vmem:[%s5659] sm:$0xff]
      %v5661 = vld [vmem:[%s5659 + $0x8] sm:$0xff]
      %v5662 = vld [vmem:[%s5659 + $0x10] sm:$0xff]
      %v5663 = vld [vmem:[%s5659 + $0x18] sm:$0xff]
      %v5664 = vld [vmem:[%s5659 + $0x20] sm:$0xff]
      %v5665 = vld [vmem:[%s5659 + $0x28] sm:$0xff]
      %v5666 = vld [vmem:[%s5659 + $0x30] sm:$0xff]
      %v5667 = vld [vmem:[%s5659 + $0x38] sm:$0xff]
      %v5668 = vld [vmem:[%s5659 + $0x40] sm:$0xff]
      %v5669 = vld [vmem:[%s5659 + $0x48] sm:$0xff]
      %v5670 = vld [vmem:[%s5659 + $0x50] sm:$0xff]
      %v5671 = vld [vmem:[%s5659 + $0x58] sm:$0xff]
      %v5672 = vld [vmem:[%s5659 + $0x60] sm:$0xff]
      %v5673 = vld [vmem:[%s5659 + $0x68] sm:$0xff]
      %v5674 = vld [vmem:[%s5659 + $0x70] sm:$0xff]
      %v5675 = vld [vmem:[%s5659 + $0x78] sm:$0xff]
      %5676 = vmatprep.subr.mxu0 0.0
      %5677 = vmatpush1.msra.mxu0 %v5660
      %5678 = vmatprep.subr.mxu0 0.0
      %5679 = vmatpush1.msra.mxu0 %v5661
      %5680 = vmatprep.subr.mxu0 0.0
      %5681 = vmatpush1.msra.mxu0 %v5662
      %5682 = vmatprep.subr.mxu0 0.0
      %5683 = vmatpush1.msra.mxu0 %v5663
      %5684 = vmatprep.subr.mxu0 0.0
      %5685 = vmatpush1.msra.mxu0 %v5664
      %5686 = vmatprep.subr.mxu0 0.0
      %5687 = vmatpush1.msra.mxu0 %v5665
      %5688 = vmatprep.subr.mxu0 0.0
      %5689 = vmatpush1.msra.mxu0 %v5666
      %5690 = vmatprep.subr.mxu0 0.0
      %5691 = vmatpush1.msra.mxu0 %v5667
      %5692 = vmatprep.subr.mxu0 0.0
      %5693 = vmatpush1.msra.mxu0 %v5668
      %5694 = vmatprep.subr.mxu0 0.0
      %5695 = vmatpush1.msra.mxu0 %v5669
      %5696 = vmatprep.subr.mxu0 0.0
      %5697 = vmatpush1.msra.mxu0 %v5670
      %5698 = vmatprep.subr.mxu0 0.0
      %5699 = vmatpush1.msra.mxu0 %v5671
      %5700 = vmatprep.subr.mxu0 0.0
      %5701 = vmatpush1.msra.mxu0 %v5672
      %5702 = vmatprep.subr.mxu0 0.0
      %5703 = vmatpush1.msra.mxu0 %v5673
      %5704 = vmatprep.subr.mxu0 0.0
      %5705 = vmatpush1.msra.mxu0 %v5674
      %5706 = vmatprep.subr.mxu0 0.0
      %5707 = vmatpush1.msra.mxu0 %v5675
      %5708 = vmatprep.subr.mxu0 0.0
      %5709 = vmatpush1.msra.mxu0 0.0
      %5710 = vmatprep.subr.mxu0 0.0
      %5711 = vmatpush1.msra.mxu0 0.0
      %5712 = vmatprep.subr.mxu0 0.0
      %5713 = vmatpush1.msra.mxu0 0.0
      %5714 = vmatprep.subr.mxu0 0.0
      %5715 = vmatpush1.msra.mxu0 0.0
      %5716 = vmatprep.subr.mxu0 0.0
      %5717 = vmatpush1.msra.mxu0 0.0
      %5718 = vmatprep.subr.mxu0 0.0
      %5719 = vmatpush1.msra.mxu0 0.0
      %5720 = vmatprep.subr.mxu0 0.0
      %5721 = vmatpush1.msra.mxu0 0.0
      %5722 = vmatprep.subr.mxu0 0.0
      %5723 = vmatpush1.msra.mxu0 0.0
      %5724 = vmatprep.subr.mxu0 0.0
      %5725 = vmatpush1.msra.mxu0 0.0
      %5726 = vmatprep.subr.mxu0 0.0
      %5727 = vmatpush1.msra.mxu0 0.0
      %5728 = vmatprep.subr.mxu0 0.0
      %5729 = vmatpush1.msra.mxu0 0.0
      %5730 = vmatprep.subr.mxu0 0.0
      %5731 = vmatpush1.msra.mxu0 0.0
      %5732 = vmatprep.subr.mxu0 0.0
      %5733 = vmatpush1.msra.mxu0 0.0
      %5734 = vmatprep.subr.mxu0 0.0
      %5735 = vmatpush1.msra.mxu0 0.0
      %5736 = vmatprep.subr.mxu0 0.0
      %5737 = vmatpush1.msra.mxu0 0.0
      %5738 = vmatprep.subr.mxu0 0.0
      %5739 = vmatpush1.msra.mxu0 0.0
      %5740 = vmatprep.mubr.f32.mxu0 0.0
      %5741 = vmatmul.mubr.f32.gmra.mrb[0].mxu0 %v5623
      %v5742 = vpop.f32.mrb[0].mxu0
      %v5743 = vadd.f32 0.0, %v5742
      %v5744 = vpop.f32.mrb[0].mxu0
      %5745 = vmatprep.mubr.f32.mxu0 0.0
      %5746 = vmatmul.mubr.f32.gmra.mrb[0].mxu0 %v5624
      %v5747 = vpop.f32.mrb[0].mxu0
      %v5748 = vadd.f32 0.0, %v5747
      %v5749 = vpop.f32.mrb[0].mxu0
      %5750 = vmatprep.mubr.f32.mxu0 0.0
      %5751 = vmatmul.mubr.f32.gmra.mrb[0].mxu0 %v5625
      %v5752 = vpop.f32.mrb[0].mxu0
      %v5753 = vadd.f32 0.0, %v5752
      %v5754 = vpop.f32.mrb[0].mxu0
      %5755 = vmatprep.mubr.f32.mxu0 0.0
      %5756 = vmatmul.mubr.f32.gmra.mrb[0].mxu0 %v5626
      %v5757 = vpop.f32.mrb[0].mxu0
      %v5758 = vadd.f32 0.0, %v5757
      %v5759 = vpop.f32.mrb[0].mxu0
      %5760 = vmatprep.mubr.f32.mxu0 0.0
      %5761 = vmatmul.mubr.f32.gmra.mrb[0].mxu0 %v5627
      %v5762 = vpop.f32.mrb[0].mxu0
      %v5763 = vadd.f32 0.0, %v5762
      %v5764 = vpop.f32.mrb[0].mxu0
      %5765 = vmatprep.mubr.f32.mxu0 0.0
      %5766 = vmatmul.mubr.f32.gmra.mrb[0].mxu0 %v5628
      %v5767 = vpop.f32.mrb[0].mxu0
      %v5768 = vadd.f32 0.0, %v5767
      %v5769 = vpop.f32.mrb[0].mxu0
      %5770 = vmatprep.mubr.f32.mxu0 0.0
      %5771 = vmatmul.mubr.f32.gmra.mrb[0].mxu0 %v5629
      %v5772 = vpop.f32.mrb[0].mxu0
      %v5773 = vadd.f32 0.0, %v5772
      %v5774 = vpop.f32.mrb[0].mxu0
      %5775 = vmatprep.mubr.f32.mxu0 0.0
      %5776 = vmatmul.mubr.f32.gmra.mrb[0].mxu0 %v5630
      %v5777 = vpop.f32.mrb[0].mxu0
      %v5778 = vadd.f32 0.0, %v5777
      %v5779 = vpop.f32.mrb[0].mxu0
      %5780 = vmatprep.mubr.f32.mxu0 0.0
      %5781 = vmatmul.mubr.f32.gmra.mrb[0].mxu0 %v5631
      %v5782 = vpop.f32.mrb[0].mxu0
      %v5783 = vadd.f32 0.0, %v5782
      %v5784 = vpop.f32.mrb[0].mxu0
      %5785 = vmatprep.mubr.f32.mxu0 0.0
      %5786 = vmatmul.mubr.f32.gmra.mrb[0].mxu0 %v5632
      %v5787 = vpop.f32.mrb[0].mxu0
      %v5788 = vadd.f32 0.0, %v5787
      %v5789 = vpop.f32.mrb[0].mxu0
      %5790 = vmatprep.mubr.f32.mxu0 0.0
      %5791 = vmatmul.mubr.f32.gmra.mrb[0].mxu0 %v5633
      %v5792 = vpop.f32.mrb[0].mxu0
      %v5793 = vadd.f32 0.0, %v5792
      %v5794 = vpop.f32.mrb[0].mxu0
      %5795 = vmatprep.mubr.f32.mxu0 0.0
      %5796 = vmatmul.mubr.f32.gmra.mrb[0].mxu0 %v5634
      %v5797 = vpop.f32.mrb[0].mxu0
      %v5798 = vadd.f32 0.0, %v5797
      %v5799 = vpop.f32.mrb[0].mxu0
      %5800 = vmatprep.mubr.f32.mxu0 0.0
      %5801 = vmatmul.mubr.f32.gmra.mrb[0].mxu0 %v5635
      %v5802 = vpop.f32.mrb[0].mxu0
      %v5803 = vadd.f32 0.0, %v5802
      %v5804 = vpop.f32.mrb[0].mxu0
      %5805 = vmatprep.mubr.f32.mxu0 0.0
      %5806 = vmatmul.mubr.f32.gmra.mrb[0].mxu0 %v5636
      %v5807 = vpop.f32.mrb[0].mxu0
      %v5808 = vadd.f32 0.0, %v5807
      %v5809 = vpop.f32.mrb[0].mxu0
      %5810 = vmatprep.mubr.f32.mxu0 0.0
      %5811 = vmatmul.mubr.f32.gmra.mrb[0].mxu0 %v5637
      %v5812 = vpop.f32.mrb[0].mxu0
      %v5813 = vadd.f32 0.0, %v5812
      %v5814 = vpop.f32.mrb[0].mxu0
      %5815 = vmatprep.mubr.f32.mxu0 0.0
      %5816 = vmatmul.mubr.f32.gmra.mrb[0].mxu0 %v5638
      %v5817 = vpop.f32.mrb[0].mxu0
      %v5818 = vadd.f32 0.0, %v5817
      %v5819 = vpop.f32.mrb[0].mxu0
      %5820 = vmatprep.mubr.f32.mxu0 0.0
      %5821 = vmatmul.mubr.f32.gmra.mrb[0].mxu0 %v5639
      %v5822 = vpop.f32.mrb[0].mxu0
      %v5823 = vadd.f32 0.0, %v5822
      %v5824 = vpop.f32.mrb[0].mxu0
      %5825 = vmatprep.mubr.f32.mxu0 0.0
      %5826 = vmatmul.mubr.f32.gmra.mrb[0].mxu0 %v5640
      %v5827 = vpop.f32.mrb[0].mxu0
      %v5828 = vadd.f32 0.0, %v5827
      %v5829 = vpop.f32.mrb[0].mxu0
      %5830 = vmatprep.mubr.f32.mxu0 0.0
      %5831 = vmatmul.mubr.f32.gmra.mrb[0].mxu0 %v5641
      %v5832 = vpop.f32.mrb[0].mxu0
      %v5833 = vadd.f32 0.0, %v5832
      %v5834 = vpop.f32.mrb[0].mxu0
      %5835 = vmatprep.mubr.f32.mxu0 0.0
      %5836 = vmatmul.mubr.f32.gmra.mrb[0].mxu0 %v5642
      %v5837 = vpop.f32.mrb[0].mxu0
      %v5838 = vadd.f32 0.0, %v5837
      %v5839 = vpop.f32.mrb[0].mxu0
      %5840 = vmatprep.mubr.f32.mxu0 0.0
      %5841 = vmatmul.mubr.f32.gmra.mrb[0].mxu0 %v5643
      %v5842 = vpop.f32.mrb[0].mxu0
      %v5843 = vadd.f32 0.0, %v5842
      %v5844 = vpop.f32.mrb[0].mxu0
      %5845 = vmatprep.mubr.f32.mxu0 0.0
      %5846 = vmatmul.mubr.f32.gmra.mrb[0].mxu0 %v5644
      %v5847 = vpop.f32.mrb[0].mxu0
      %v5848 = vadd.f32 0.0, %v5847
      %v5849 = vpop.f32.mrb[0].mxu0
      %5850 = vmatprep.mubr.f32.mxu0 0.0
      %5851 = vmatmul.mubr.f32.gmra.mrb[0].mxu0 %v5645
      %v5852 = vpop.f32.mrb[0].mxu0
      %v5853 = vadd.f32 0.0, %v5852
      %v5854 = vpop.f32.mrb[0].mxu0
      %5855 = vmatprep.mubr.f32.mxu0 0.0
      %5856 = vmatmul.mubr.f32.gmra.mrb[0].mxu0 %v5646
      %v5857 = vpop.f32.mrb[0].mxu0
      %v5858 = vadd.f32 0.0, %v5857
      %v5859 = vpop.f32.mrb[0].mxu0
      %5860 = vmatprep.mubr.f32.mxu0 0.0
      %5861 = vmatmul.mubr.f32.gmra.mrb[0].mxu0 %v5647
      %v5862 = vpop.f32.mrb[0].mxu0
      %v5863 = vadd.f32 0.0, %v5862
      %v5864 = vpop.f32.mrb[0].mxu0
      %5865 = vmatprep.mubr.f32.mxu0 0.0
      %5866 = vmatmul.mubr.f32.gmra.mrb[0].mxu0 %v5648
      %v5867 = vpop.f32.mrb[0].mxu0
      %v5868 = vadd.f32 0.0, %v5867
      %v5869 = vpop.f32.mrb[0].mxu0
      %5870 = vmatprep.mubr.f32.mxu0 0.0
      %5871 = vmatmul.mubr.f32.gmra.mrb[0].mxu0 %v5649
      %v5872 = vpop.f32.mrb[0].mxu0
      %v5873 = vadd.f32 0.0, %v5872
      %v5874 = vpop.f32.mrb[0].mxu0
      %5875 = vmatprep.mubr.f32.mxu0 0.0
      %5876 = vmatmul.mubr.f32.gmra.mrb[0].mxu0 %v5650
      %v5877 = vpop.f32.mrb[0].mxu0
      %v5878 = vadd.f32 0.0, %v5877
      %v5879 = vpop.f32.mrb[0].mxu0
      %5880 = vmatprep.mubr.f32.mxu0 0.0
      %5881 = vmatmul.mubr.f32.gmra.mrb[0].mxu0 %v5651
      %v5882 = vpop.f32.mrb[0].mxu0
      %v5883 = vadd.f32 0.0, %v5882
      %v5884 = vpop.f32.mrb[0].mxu0
      %5885 = vmatprep.mubr.f32.mxu0 0.0
      %5886 = vmatmul.mubr.f32.gmra.mrb[0].mxu0 %v5652
      %v5887 = vpop.f32.mrb[0].mxu0
      %v5888 = vadd.f32 0.0, %v5887
      %v5889 = vpop.f32.mrb[0].mxu0
      %5890 = vmatprep.mubr.f32.mxu0 0.0
      %5891 = vmatmul.mubr.f32.gmra.mrb[0].mxu0 %v5653
      %v5892 = vpop.f32.mrb[0].mxu0
      %v5893 = vadd.f32 0.0, %v5892
      %v5894 = vpop.f32.mrb[0].mxu0
      %5895 = vmatprep.mubr.f32.mxu0 0.0
      %5896 = vmatmul.mubr.f32.gmra.mrb[0].mxu0 %v5654
      %v5897 = vpop.f32.mrb[0].mxu0
      %v5898 = vadd.f32 0.0, %v5897
      %v5899 = vpop.f32.mrb[0].mxu0
      %5900 = vmatprep.mubr.f32.mxu0 0.0
      %5901 = vmatmul.mubr.f32.gmra.mrb[0].mxu0 %v5655
      %v5902 = vpop.f32.mrb[0].mxu0
      %v5903 = vadd.f32 0.0, %v5902
      %v5904 = vpop.f32.mrb[0].mxu0
      %5905 = vmatprep.mubr.f32.mxu0 0.0
      %5906 = vmatmul.mubr.f32.gmra.mrb[0].mxu0 %v5656
      %v5907 = vpop.f32.mrb[0].mxu0
      %v5908 = vadd.f32 0.0, %v5907
      %v5909 = vpop.f32.mrb[0].mxu0
      %5910 = vmatprep.mubr.f32.mxu0 0.0
      %5911 = vmatmul.mubr.f32.gmra.mrb[0].mxu0 %v5657
      %v5912 = vpop.f32.mrb[0].mxu0
      %v5913 = vadd.f32 0.0, %v5912
      %v5914 = vpop.f32.mrb[0].mxu0
      %5915 = vmatprep.mubr.f32.mxu0 0.0
      %5916 = vmatmul.mubr.f32.gmra.mrb[0].mxu0 %v5658
      %v5917 = vpop.f32.mrb[0].mxu0
      %v5918 = vadd.f32 0.0, %v5917
      %v5919 = vpop.f32.mrb[0].mxu0
      %5920 = vdwg.mxu0
      %v5921 = vadd.f32 %v5587, %v5743
      %v5922 = vadd.f32 %v5588, %v5748
      %v5923 = vadd.f32 %v5589, %v5753
      %v5924 = vadd.f32 %v5590, %v5758
      %v5925 = vadd.f32 %v5591, %v5763
      %v5926 = vadd.f32 %v5592, %v5768
      %v5927 = vadd.f32 %v5593, %v5773
      %v5928 = vadd.f32 %v5594, %v5778
      %v5929 = vadd.f32 %v5595, %v5783
      %v5930 = vadd.f32 %v5596, %v5788
      %v5931 = vadd.f32 %v5597, %v5793
      %v5932 = vadd.f32 %v5598, %v5798
      %v5933 = vadd.f32 %v5599, %v5803
      %v5934 = vadd.f32 %v5600, %v5808
      %v5935 = vadd.f32 %v5601, %v5813
      %v5936 = vadd.f32 %v5602, %v5818
      %v5937 = vadd.f32 %v5603, %v5823
      %v5938 = vadd.f32 %v5604, %v5828
      %v5939 = vadd.f32 %v5605, %v5833
      %v5940 = vadd.f32 %v5606, %v5838
      %v5941 = vadd.f32 %v5607, %v5843
      %v5942 = vadd.f32 %v5608, %v5848
      %v5943 = vadd.f32 %v5609, %v5853
      %v5944 = vadd.f32 %v5610, %v5858
      %v5945 = vadd.f32 %v5611, %v5863
      %v5946 = vadd.f32 %v5612, %v5868
      %v5947 = vadd.f32 %v5613, %v5873
      %v5948 = vadd.f32 %v5614, %v5878
      %v5949 = vadd.f32 %v5615, %v5883
      %v5950 = vadd.f32 %v5616, %v5888
      %v5951 = vadd.f32 %v5617, %v5893
      %v5952 = vadd.f32 %v5618, %v5898
      %v5953 = vadd.f32 %v5619, %v5903
      %v5954 = vadd.f32 %v5620, %v5908
      %v5955 = vadd.f32 %v5621, %v5913
      %v5956 = vadd.f32 %v5622, %v5918
      %v5957 = vld [vmem:[#allocation2 + $0x25] sm:$0xff]
      %v5958 = vld [vmem:[#allocation2 + $0x2d] sm:$0xff]
      %v5959 = vld [vmem:[#allocation2 + $0x35] sm:$0xff]
      %v5960 = vld [vmem:[#allocation2 + $0x3d] sm:$0xff]
      %v5961 = vld [vmem:[#allocation2 + $0x45] sm:$0xff]
      %v5962 = vld [vmem:[#allocation2 + $0x4d] sm:$0xff]
      %v5963 = vld [vmem:[#allocation2 + $0x55] sm:$0xff]
      %v5964 = vld [vmem:[#allocation2 + $0x5d] sm:$0xff]
      %v5965 = vld [vmem:[#allocation2 + $0x65] sm:$0xff]
      %v5966 = vld [vmem:[#allocation2 + $0x6d] sm:$0xff]
      %v5967 = vld [vmem:[#allocation2 + $0x75] sm:$0xff]
      %v5968 = vld [vmem:[#allocation2 + $0x7d] sm:$0xff]
      %v5969 = vld [vmem:[#allocation2 + $0x85] sm:$0xff]
      %v5970 = vld [vmem:[#allocation2 + $0x8d] sm:$0xff]
      %v5971 = vld [vmem:[#allocation2 + $0x95] sm:$0xff]
      %v5972 = vld [vmem:[#allocation2 + $0x9d] sm:$0xff]
      %v5973 = vld [vmem:[#allocation2 + $0xa5] sm:$0xff]
      %v5974 = vld [vmem:[#allocation2 + $0xad] sm:$0xff]
      %v5975 = vld [vmem:[#allocation2 + $0xb5] sm:$0xff]
      %v5976 = vld [vmem:[#allocation2 + $0xbd] sm:$0xff]
      %v5977 = vld [vmem:[#allocation2 + $0xc5] sm:$0xff]
      %v5978 = vld [vmem:[#allocation2 + $0xcd] sm:$0xff]
      %v5979 = vld [vmem:[#allocation2 + $0xd5] sm:$0xff]
      %v5980 = vld [vmem:[#allocation2 + $0xdd] sm:$0xff]
      %v5981 = vld [vmem:[#allocation2 + $0xe5] sm:$0xff]
      %v5982 = vld [vmem:[#allocation2 + $0xed] sm:$0xff]
      %v5983 = vld [vmem:[#allocation2 + $0xf5] sm:$0xff]
      %v5984 = vld [vmem:[#allocation2 + $0xfd] sm:$0xff]
      %v5985 = vld [vmem:[#allocation2 + $0x105] sm:$0xff]
      %v5986 = vld [vmem:[#allocation2 + $0x10d] sm:$0xff]
      %v5987 = vld [vmem:[#allocation2 + $0x115] sm:$0xff]
      %v5988 = vld [vmem:[#allocation2 + $0x11d] sm:$0xff]
      %v5989 = vld [vmem:[#allocation2 + $0x125] sm:$0xff]
      %v5990 = vld [vmem:[#allocation2 + $0x12d] sm:$0xff]
      %v5991 = vld [vmem:[#allocation2 + $0x135] sm:$0xff]
      %v5992 = vld [vmem:[#allocation2 + $0x13d] sm:$0xff]
      %s5993 = scalar_lea.vmem %s2, 896
      %v5994 = vld [vmem:[%s5993] sm:$0xff]
      %v5995 = vld [vmem:[%s5993 + $0x8] sm:$0xff]
      %v5996 = vld [vmem:[%s5993 + $0x10] sm:$0xff]
      %v5997 = vld [vmem:[%s5993 + $0x18] sm:$0xff]
      %v5998 = vld [vmem:[%s5993 + $0x20] sm:$0xff]
      %v5999 = vld [vmem:[%s5993 + $0x28] sm:$0xff]
      %v6000 = vld [vmem:[%s5993 + $0x30] sm:$0xff]
      %v6001 = vld [vmem:[%s5993 + $0x38] sm:$0xff]
      %v6002 = vld [vmem:[%s5993 + $0x40] sm:$0xff]
      %v6003 = vld [vmem:[%s5993 + $0x48] sm:$0xff]
      %v6004 = vld [vmem:[%s5993 + $0x50] sm:$0xff]
      %v6005 = vld [vmem:[%s5993 + $0x58] sm:$0xff]
      %v6006 = vld [vmem:[%s5993 + $0x60] sm:$0xff]
      %v6007 = vld [vmem:[%s5993 + $0x68] sm:$0xff]
      %v6008 = vld [vmem:[%s5993 + $0x70] sm:$0xff]
      %v6009 = vld [vmem:[%s5993 + $0x78] sm:$0xff]
      %6010 = vmatprep.subr.mxu0 0.0
      %6011 = vmatpush1.msra.mxu0 %v5994
      %6012 = vmatprep.subr.mxu0 0.0
      %6013 = vmatpush1.msra.mxu0 %v5995
      %6014 = vmatprep.subr.mxu0 0.0
      %6015 = vmatpush1.msra.mxu0 %v5996
      %6016 = vmatprep.subr.mxu0 0.0
      %6017 = vmatpush1.msra.mxu0 %v5997
      %6018 = vmatprep.subr.mxu0 0.0
      %6019 = vmatpush1.msra.mxu0 %v5998
      %6020 = vmatprep.subr.mxu0 0.0
      %6021 = vmatpush1.msra.mxu0 %v5999
      %6022 = vmatprep.subr.mxu0 0.0
      %6023 = vmatpush1.msra.mxu0 %v6000
      %6024 = vmatprep.subr.mxu0 0.0
      %6025 = vmatpush1.msra.mxu0 %v6001
      %6026 = vmatprep.subr.mxu0 0.0
      %6027 = vmatpush1.msra.mxu0 %v6002
      %6028 = vmatprep.subr.mxu0 0.0
      %6029 = vmatpush1.msra.mxu0 %v6003
      %6030 = vmatprep.subr.mxu0 0.0
      %6031 = vmatpush1.msra.mxu0 %v6004
      %6032 = vmatprep.subr.mxu0 0.0
      %6033 = vmatpush1.msra.mxu0 %v6005
      %6034 = vmatprep.subr.mxu0 0.0
      %6035 = vmatpush1.msra.mxu0 %v6006
      %6036 = vmatprep.subr.mxu0 0.0
      %6037 = vmatpush1.msra.mxu0 %v6007
      %6038 = vmatprep.subr.mxu0 0.0
      %6039 = vmatpush1.msra.mxu0 %v6008
      %6040 = vmatprep.subr.mxu0 0.0
      %6041 = vmatpush1.msra.mxu0 %v6009
      %6042 = vmatprep.subr.mxu0 0.0
      %6043 = vmatpush1.msra.mxu0 0.0
      %6044 = vmatprep.subr.mxu0 0.0
      %6045 = vmatpush1.msra.mxu0 0.0
      %6046 = vmatprep.subr.mxu0 0.0
      %6047 = vmatpush1.msra.mxu0 0.0
      %6048 = vmatprep.subr.mxu0 0.0
      %6049 = vmatpush1.msra.mxu0 0.0
      %6050 = vmatprep.subr.mxu0 0.0
      %6051 = vmatpush1.msra.mxu0 0.0
      %6052 = vmatprep.subr.mxu0 0.0
      %6053 = vmatpush1.msra.mxu0 0.0
      %6054 = vmatprep.subr.mxu0 0.0
      %6055 = vmatpush1.msra.mxu0 0.0
      %6056 = vmatprep.subr.mxu0 0.0
      %6057 = vmatpush1.msra.mxu0 0.0
      %6058 = vmatprep.subr.mxu0 0.0
      %6059 = vmatpush1.msra.mxu0 0.0
      %6060 = vmatprep.subr.mxu0 0.0
      %6061 = vmatpush1.msra.mxu0 0.0
      %6062 = vmatprep.subr.mxu0 0.0
      %6063 = vmatpush1.msra.mxu0 0.0
      %6064 = vmatprep.subr.mxu0 0.0
      %6065 = vmatpush1.msra.mxu0 0.0
      %6066 = vmatprep.subr.mxu0 0.0
      %6067 = vmatpush1.msra.mxu0 0.0
      %6068 = vmatprep.subr.mxu0 0.0
      %6069 = vmatpush1.msra.mxu0 0.0
      %6070 = vmatprep.subr.mxu0 0.0
      %6071 = vmatpush1.msra.mxu0 0.0
      %6072 = vmatprep.subr.mxu0 0.0
      %6073 = vmatpush1.msra.mxu0 0.0
      %6074 = vmatprep.mubr.f32.mxu0 0.0
      %6075 = vmatmul.mubr.f32.gmra.mrb[0].mxu0 %v5957
      %v6076 = vpop.f32.mrb[0].mxu0
      %v6077 = vadd.f32 0.0, %v6076
      %v6078 = vpop.f32.mrb[0].mxu0
      %6079 = vmatprep.mubr.f32.mxu0 0.0
      %6080 = vmatmul.mubr.f32.gmra.mrb[0].mxu0 %v5958
      %v6081 = vpop.f32.mrb[0].mxu0
      %v6082 = vadd.f32 0.0, %v6081
      %v6083 = vpop.f32.mrb[0].mxu0
      %6084 = vmatprep.mubr.f32.mxu0 0.0
      %6085 = vmatmul.mubr.f32.gmra.mrb[0].mxu0 %v5959
      %v6086 = vpop.f32.mrb[0].mxu0
      %v6087 = vadd.f32 0.0, %v6086
      %v6088 = vpop.f32.mrb[0].mxu0
      %6089 = vmatprep.mubr.f32.mxu0 0.0
      %6090 = vmatmul.mubr.f32.gmra.mrb[0].mxu0 %v5960
      %v6091 = vpop.f32.mrb[0].mxu0
      %v6092 = vadd.f32 0.0, %v6091
      %v6093 = vpop.f32.mrb[0].mxu0
      %6094 = vmatprep.mubr.f32.mxu0 0.0
      %6095 = vmatmul.mubr.f32.gmra.mrb[0].mxu0 %v5961
      %v6096 = vpop.f32.mrb[0].mxu0
      %v6097 = vadd.f32 0.0, %v6096
      %v6098 = vpop.f32.mrb[0].mxu0
      %6099 = vmatprep.mubr.f32.mxu0 0.0
      %6100 = vmatmul.mubr.f32.gmra.mrb[0].mxu0 %v5962
      %v6101 = vpop.f32.mrb[0].mxu0
      %v6102 = vadd.f32 0.0, %v6101
      %v6103 = vpop.f32.mrb[0].mxu0
      %6104 = vmatprep.mubr.f32.mxu0 0.0
      %6105 = vmatmul.mubr.f32.gmra.mrb[0].mxu0 %v5963
      %v6106 = vpop.f32.mrb[0].mxu0
      %v6107 = vadd.f32 0.0, %v6106
      %v6108 = vpop.f32.mrb[0].mxu0
      %6109 = vmatprep.mubr.f32.mxu0 0.0
      %6110 = vmatmul.mubr.f32.gmra.mrb[0].mxu0 %v5964
      %v6111 = vpop.f32.mrb[0].mxu0
      %v6112 = vadd.f32 0.0, %v6111
      %v6113 = vpop.f32.mrb[0].mxu0
      %6114 = vmatprep.mubr.f32.mxu0 0.0
      %6115 = vmatmul.mubr.f32.gmra.mrb[0].mxu0 %v5965
      %v6116 = vpop.f32.mrb[0].mxu0
      %v6117 = vadd.f32 0.0, %v6116
      %v6118 = vpop.f32.mrb[0].mxu0
      %6119 = vmatprep.mubr.f32.mxu0 0.0
      %6120 = vmatmul.mubr.f32.gmra.mrb[0].mxu0 %v5966
      %v6121 = vpop.f32.mrb[0].mxu0
      %v6122 = vadd.f32 0.0, %v6121
      %v6123 = vpop.f32.mrb[0].mxu0
      %6124 = vmatprep.mubr.f32.mxu0 0.0
      %6125 = vmatmul.mubr.f32.gmra.mrb[0].mxu0 %v5967
      %v6126 = vpop.f32.mrb[0].mxu0
      %v6127 = vadd.f32 0.0, %v6126
      %v6128 = vpop.f32.mrb[0].mxu0
      %6129 = vmatprep.mubr.f32.mxu0 0.0
      %6130 = vmatmul.mubr.f32.gmra.mrb[0].mxu0 %v5968
      %v6131 = vpop.f32.mrb[0].mxu0
      %v6132 = vadd.f32 0.0, %v6131
      %v6133 = vpop.f32.mrb[0].mxu0
      %6134 = vmatprep.mubr.f32.mxu0 0.0
      %6135 = vmatmul.mubr.f32.gmra.mrb[0].mxu0 %v5969
      %v6136 = vpop.f32.mrb[0].mxu0
      %v6137 = vadd.f32 0.0, %v6136
      %v6138 = vpop.f32.mrb[0].mxu0
      %6139 = vmatprep.mubr.f32.mxu0 0.0
      %6140 = vmatmul.mubr.f32.gmra.mrb[0].mxu0 %v5970
      %v6141 = vpop.f32.mrb[0].mxu0
      %v6142 = vadd.f32 0.0, %v6141
      %v6143 = vpop.f32.mrb[0].mxu0
      %6144 = vmatprep.mubr.f32.mxu0 0.0
      %6145 = vmatmul.mubr.f32.gmra.mrb[0].mxu0 %v5971
      %v6146 = vpop.f32.mrb[0].mxu0
      %v6147 = vadd.f32 0.0, %v6146
      %v6148 = vpop.f32.mrb[0].mxu0
      %6149 = vmatprep.mubr.f32.mxu0 0.0
      %6150 = vmatmul.mubr.f32.gmra.mrb[0].mxu0 %v5972
      %v6151 = vpop.f32.mrb[0].mxu0
      %v6152 = vadd.f32 0.0, %v6151
      %v6153 = vpop.f32.mrb[0].mxu0
      %6154 = vmatprep.mubr.f32.mxu0 0.0
      %6155 = vmatmul.mubr.f32.gmra.mrb[0].mxu0 %v5973
      %v6156 = vpop.f32.mrb[0].mxu0
      %v6157 = vadd.f32 0.0, %v6156
      %v6158 = vpop.f32.mrb[0].mxu0
      %6159 = vmatprep.mubr.f32.mxu0 0.0
      %6160 = vmatmul.mubr.f32.gmra.mrb[0].mxu0 %v5974
      %v6161 = vpop.f32.mrb[0].mxu0
      %v6162 = vadd.f32 0.0, %v6161
      %v6163 = vpop.f32.mrb[0].mxu0
      %6164 = vmatprep.mubr.f32.mxu0 0.0
      %6165 = vmatmul.mubr.f32.gmra.mrb[0].mxu0 %v5975
      %v6166 = vpop.f32.mrb[0].mxu0
      %v6167 = vadd.f32 0.0, %v6166
      %v6168 = vpop.f32.mrb[0].mxu0
      %6169 = vmatprep.mubr.f32.mxu0 0.0
      %6170 = vmatmul.mubr.f32.gmra.mrb[0].mxu0 %v5976
      %v6171 = vpop.f32.mrb[0].mxu0
      %v6172 = vadd.f32 0.0, %v6171
      %v6173 = vpop.f32.mrb[0].mxu0
      %6174 = vmatprep.mubr.f32.mxu0 0.0
      %6175 = vmatmul.mubr.f32.gmra.mrb[0].mxu0 %v5977
      %v6176 = vpop.f32.mrb[0].mxu0
      %v6177 = vadd.f32 0.0, %v6176
      %v6178 = vpop.f32.mrb[0].mxu0
      %6179 = vmatprep.mubr.f32.mxu0 0.0
      %6180 = vmatmul.mubr.f32.gmra.mrb[0].mxu0 %v5978
      %v6181 = vpop.f32.mrb[0].mxu0
      %v6182 = vadd.f32 0.0, %v6181
      %v6183 = vpop.f32.mrb[0].mxu0
      %6184 = vmatprep.mubr.f32.mxu0 0.0
      %6185 = vmatmul.mubr.f32.gmra.mrb[0].mxu0 %v5979
      %v6186 = vpop.f32.mrb[0].mxu0
      %v6187 = vadd.f32 0.0, %v6186
      %v6188 = vpop.f32.mrb[0].mxu0
      %6189 = vmatprep.mubr.f32.mxu0 0.0
      %6190 = vmatmul.mubr.f32.gmra.mrb[0].mxu0 %v5980
      %v6191 = vpop.f32.mrb[0].mxu0
      %v6192 = vadd.f32 0.0, %v6191
      %v6193 = vpop.f32.mrb[0].mxu0
      %6194 = vmatprep.mubr.f32.mxu0 0.0
      %6195 = vmatmul.mubr.f32.gmra.mrb[0].mxu0 %v5981
      %v6196 = vpop.f32.mrb[0].mxu0
      %v6197 = vadd.f32 0.0, %v6196
      %v6198 = vpop.f32.mrb[0].mxu0
      %6199 = vmatprep.mubr.f32.mxu0 0.0
      %6200 = vmatmul.mubr.f32.gmra.mrb[0].mxu0 %v5982
      %v6201 = vpop.f32.mrb[0].mxu0
      %v6202 = vadd.f32 0.0, %v6201
      %v6203 = vpop.f32.mrb[0].mxu0
      %6204 = vmatprep.mubr.f32.mxu0 0.0
      %6205 = vmatmul.mubr.f32.gmra.mrb[0].mxu0 %v5983
      %v6206 = vpop.f32.mrb[0].mxu0
      %v6207 = vadd.f32 0.0, %v6206
      %v6208 = vpop.f32.mrb[0].mxu0
      %6209 = vmatprep.mubr.f32.mxu0 0.0
      %6210 = vmatmul.mubr.f32.gmra.mrb[0].mxu0 %v5984
      %v6211 = vpop.f32.mrb[0].mxu0
      %v6212 = vadd.f32 0.0, %v6211
      %v6213 = vpop.f32.mrb[0].mxu0
      %6214 = vmatprep.mubr.f32.mxu0 0.0
      %6215 = vmatmul.mubr.f32.gmra.mrb[0].mxu0 %v5985
      %v6216 = vpop.f32.mrb[0].mxu0
      %v6217 = vadd.f32 0.0, %v6216
      %v6218 = vpop.f32.mrb[0].mxu0
      %6219 = vmatprep.mubr.f32.mxu0 0.0
      %6220 = vmatmul.mubr.f32.gmra.mrb[0].mxu0 %v5986
      %v6221 = vpop.f32.mrb[0].mxu0
      %v6222 = vadd.f32 0.0, %v6221
      %v6223 = vpop.f32.mrb[0].mxu0
      %6224 = vmatprep.mubr.f32.mxu0 0.0
      %6225 = vmatmul.mubr.f32.gmra.mrb[0].mxu0 %v5987
      %v6226 = vpop.f32.mrb[0].mxu0
      %v6227 = vadd.f32 0.0, %v6226
      %v6228 = vpop.f32.mrb[0].mxu0
      %6229 = vmatprep.mubr.f32.mxu0 0.0
      %6230 = vmatmul.mubr.f32.gmra.mrb[0].mxu0 %v5988
      %v6231 = vpop.f32.mrb[0].mxu0
      %v6232 = vadd.f32 0.0, %v6231
      %v6233 = vpop.f32.mrb[0].mxu0
      %6234 = vmatprep.mubr.f32.mxu0 0.0
      %6235 = vmatmul.mubr.f32.gmra.mrb[0].mxu0 %v5989
      %v6236 = vpop.f32.mrb[0].mxu0
      %v6237 = vadd.f32 0.0, %v6236
      %v6238 = vpop.f32.mrb[0].mxu0
      %6239 = vmatprep.mubr.f32.mxu0 0.0
      %6240 = vmatmul.mubr.f32.gmra.mrb[0].mxu0 %v5990
      %v6241 = vpop.f32.mrb[0].mxu0
      %v6242 = vadd.f32 0.0, %v6241
      %v6243 = vpop.f32.mrb[0].mxu0
      %6244 = vmatprep.mubr.f32.mxu0 0.0
      %6245 = vmatmul.mubr.f32.gmra.mrb[0].mxu0 %v5991
      %v6246 = vpop.f32.mrb[0].mxu0
      %v6247 = vadd.f32 0.0, %v6246
      %v6248 = vpop.f32.mrb[0].mxu0
      %6249 = vmatprep.mubr.f32.mxu0 0.0
      %6250 = vmatmul.mubr.f32.gmra.mrb[0].mxu0 %v5992
      %v6251 = vpop.f32.mrb[0].mxu0
      %v6252 = vadd.f32 0.0, %v6251
      %v6253 = vpop.f32.mrb[0].mxu0
      %6254 = vdwg.mxu0
      %v6255 = vadd.f32 %v5921, %v6077
      %v6256 = vadd.f32 %v5922, %v6082
      %v6257 = vadd.f32 %v5923, %v6087
      %v6258 = vadd.f32 %v5924, %v6092
      %v6259 = vadd.f32 %v5925, %v6097
      %v6260 = vadd.f32 %v5926, %v6102
      %v6261 = vadd.f32 %v5927, %v6107
      %v6262 = vadd.f32 %v5928, %v6112
      %v6263 = vadd.f32 %v5929, %v6117
      %v6264 = vadd.f32 %v5930, %v6122
      %v6265 = vadd.f32 %v5931, %v6127
      %v6266 = vadd.f32 %v5932, %v6132
      %v6267 = vadd.f32 %v5933, %v6137
      %v6268 = vadd.f32 %v5934, %v6142
      %v6269 = vadd.f32 %v5935, %v6147
      %v6270 = vadd.f32 %v5936, %v6152
      %v6271 = vadd.f32 %v5937, %v6157
      %v6272 = vadd.f32 %v5938, %v6162
      %v6273 = vadd.f32 %v5939, %v6167
      %v6274 = vadd.f32 %v5940, %v6172
      %v6275 = vadd.f32 %v5941, %v6177
      %v6276 = vadd.f32 %v5942, %v6182
      %v6277 = vadd.f32 %v5943, %v6187
      %v6278 = vadd.f32 %v5944, %v6192
      %v6279 = vadd.f32 %v5945, %v6197
      %v6280 = vadd.f32 %v5946, %v6202
      %v6281 = vadd.f32 %v5947, %v6207
      %v6282 = vadd.f32 %v5948, %v6212
      %v6283 = vadd.f32 %v5949, %v6217
      %v6284 = vadd.f32 %v5950, %v6222
      %v6285 = vadd.f32 %v5951, %v6227
      %v6286 = vadd.f32 %v5952, %v6232
      %v6287 = vadd.f32 %v5953, %v6237
      %v6288 = vadd.f32 %v5954, %v6242
      %v6289 = vadd.f32 %v5955, %v6247
      %v6290 = vadd.f32 %v5956, %v6252
      %v6291 = vld [vmem:[#allocation2 + $0x26] sm:$0xff]
      %v6292 = vld [vmem:[#allocation2 + $0x2e] sm:$0xff]
      %v6293 = vld [vmem:[#allocation2 + $0x36] sm:$0xff]
      %v6294 = vld [vmem:[#allocation2 + $0x3e] sm:$0xff]
      %v6295 = vld [vmem:[#allocation2 + $0x46] sm:$0xff]
      %v6296 = vld [vmem:[#allocation2 + $0x4e] sm:$0xff]
      %v6297 = vld [vmem:[#allocation2 + $0x56] sm:$0xff]
      %v6298 = vld [vmem:[#allocation2 + $0x5e] sm:$0xff]
      %v6299 = vld [vmem:[#allocation2 + $0x66] sm:$0xff]
      %v6300 = vld [vmem:[#allocation2 + $0x6e] sm:$0xff]
      %v6301 = vld [vmem:[#allocation2 + $0x76] sm:$0xff]
      %v6302 = vld [vmem:[#allocation2 + $0x7e] sm:$0xff]
      %v6303 = vld [vmem:[#allocation2 + $0x86] sm:$0xff]
      %v6304 = vld [vmem:[#allocation2 + $0x8e] sm:$0xff]
      %v6305 = vld [vmem:[#allocation2 + $0x96] sm:$0xff]
      %v6306 = vld [vmem:[#allocation2 + $0x9e] sm:$0xff]
      %v6307 = vld [vmem:[#allocation2 + $0xa6] sm:$0xff]
      %v6308 = vld [vmem:[#allocation2 + $0xae] sm:$0xff]
      %v6309 = vld [vmem:[#allocation2 + $0xb6] sm:$0xff]
      %v6310 = vld [vmem:[#allocation2 + $0xbe] sm:$0xff]
      %v6311 = vld [vmem:[#allocation2 + $0xc6] sm:$0xff]
      %v6312 = vld [vmem:[#allocation2 + $0xce] sm:$0xff]
      %v6313 = vld [vmem:[#allocation2 + $0xd6] sm:$0xff]
      %v6314 = vld [vmem:[#allocation2 + $0xde] sm:$0xff]
      %v6315 = vld [vmem:[#allocation2 + $0xe6] sm:$0xff]
      %v6316 = vld [vmem:[#allocation2 + $0xee] sm:$0xff]
      %v6317 = vld [vmem:[#allocation2 + $0xf6] sm:$0xff]
      %v6318 = vld [vmem:[#allocation2 + $0xfe] sm:$0xff]
      %v6319 = vld [vmem:[#allocation2 + $0x106] sm:$0xff]
      %v6320 = vld [vmem:[#allocation2 + $0x10e] sm:$0xff]
      %v6321 = vld [vmem:[#allocation2 + $0x116] sm:$0xff]
      %v6322 = vld [vmem:[#allocation2 + $0x11e] sm:$0xff]
      %v6323 = vld [vmem:[#allocation2 + $0x126] sm:$0xff]
      %v6324 = vld [vmem:[#allocation2 + $0x12e] sm:$0xff]
      %v6325 = vld [vmem:[#allocation2 + $0x136] sm:$0xff]
      %v6326 = vld [vmem:[#allocation2 + $0x13e] sm:$0xff]
      %s6327 = scalar_lea.vmem %s2, 1024
      %v6328 = vld [vmem:[%s6327] sm:$0xff]
      %v6329 = vld [vmem:[%s6327 + $0x8] sm:$0xff]
      %v6330 = vld [vmem:[%s6327 + $0x10] sm:$0xff]
      %v6331 = vld [vmem:[%s6327 + $0x18] sm:$0xff]
      %v6332 = vld [vmem:[%s6327 + $0x20] sm:$0xff]
      %v6333 = vld [vmem:[%s6327 + $0x28] sm:$0xff]
      %v6334 = vld [vmem:[%s6327 + $0x30] sm:$0xff]
      %v6335 = vld [vmem:[%s6327 + $0x38] sm:$0xff]
      %v6336 = vld [vmem:[%s6327 + $0x40] sm:$0xff]
      %v6337 = vld [vmem:[%s6327 + $0x48] sm:$0xff]
      %v6338 = vld [vmem:[%s6327 + $0x50] sm:$0xff]
      %v6339 = vld [vmem:[%s6327 + $0x58] sm:$0xff]
      %v6340 = vld [vmem:[%s6327 + $0x60] sm:$0xff]
      %v6341 = vld [vmem:[%s6327 + $0x68] sm:$0xff]
      %v6342 = vld [vmem:[%s6327 + $0x70] sm:$0xff]
      %v6343 = vld [vmem:[%s6327 + $0x78] sm:$0xff]
      %6344 = vmatprep.subr.mxu0 0.0
      %6345 = vmatpush1.msra.mxu0 %v6328
      %6346 = vmatprep.subr.mxu0 0.0
      %6347 = vmatpush1.msra.mxu0 %v6329
      %6348 = vmatprep.subr.mxu0 0.0
      %6349 = vmatpush1.msra.mxu0 %v6330
      %6350 = vmatprep.subr.mxu0 0.0
      %6351 = vmatpush1.msra.mxu0 %v6331
      %6352 = vmatprep.subr.mxu0 0.0
      %6353 = vmatpush1.msra.mxu0 %v6332
      %6354 = vmatprep.subr.mxu0 0.0
      %6355 = vmatpush1.msra.mxu0 %v6333
      %6356 = vmatprep.subr.mxu0 0.0
      %6357 = vmatpush1.msra.mxu0 %v6334
      %6358 = vmatprep.subr.mxu0 0.0
      %6359 = vmatpush1.msra.mxu0 %v6335
      %6360 = vmatprep.subr.mxu0 0.0
      %6361 = vmatpush1.msra.mxu0 %v6336
      %6362 = vmatprep.subr.mxu0 0.0
      %6363 = vmatpush1.msra.mxu0 %v6337
      %6364 = vmatprep.subr.mxu0 0.0
      %6365 = vmatpush1.msra.mxu0 %v6338
      %6366 = vmatprep.subr.mxu0 0.0
      %6367 = vmatpush1.msra.mxu0 %v6339
      %6368 = vmatprep.subr.mxu0 0.0
      %6369 = vmatpush1.msra.mxu0 %v6340
      %6370 = vmatprep.subr.mxu0 0.0
      %6371 = vmatpush1.msra.mxu0 %v6341
      %6372 = vmatprep.subr.mxu0 0.0
      %6373 = vmatpush1.msra.mxu0 %v6342
      %6374 = vmatprep.subr.mxu0 0.0
      %6375 = vmatpush1.msra.mxu0 %v6343
      %6376 = vmatprep.subr.mxu0 0.0
      %6377 = vmatpush1.msra.mxu0 0.0
      %6378 = vmatprep.subr.mxu0 0.0
      %6379 = vmatpush1.msra.mxu0 0.0
      %6380 = vmatprep.subr.mxu0 0.0
      %6381 = vmatpush1.msra.mxu0 0.0
      %6382 = vmatprep.subr.mxu0 0.0
      %6383 = vmatpush1.msra.mxu0 0.0
      %6384 = vmatprep.subr.mxu0 0.0
      %6385 = vmatpush1.msra.mxu0 0.0
      %6386 = vmatprep.subr.mxu0 0.0
      %6387 = vmatpush1.msra.mxu0 0.0
      %6388 = vmatprep.subr.mxu0 0.0
      %6389 = vmatpush1.msra.mxu0 0.0
      %6390 = vmatprep.subr.mxu0 0.0
      %6391 = vmatpush1.msra.mxu0 0.0
      %6392 = vmatprep.subr.mxu0 0.0
      %6393 = vmatpush1.msra.mxu0 0.0
      %6394 = vmatprep.subr.mxu0 0.0
      %6395 = vmatpush1.msra.mxu0 0.0
      %6396 = vmatprep.subr.mxu0 0.0
      %6397 = vmatpush1.msra.mxu0 0.0
      %6398 = vmatprep.subr.mxu0 0.0
      %6399 = vmatpush1.msra.mxu0 0.0
      %6400 = vmatprep.subr.mxu0 0.0
      %6401 = vmatpush1.msra.mxu0 0.0
      %6402 = vmatprep.subr.mxu0 0.0
      %6403 = vmatpush1.msra.mxu0 0.0
      %6404 = vmatprep.subr.mxu0 0.0
      %6405 = vmatpush1.msra.mxu0 0.0
      %6406 = vmatprep.subr.mxu0 0.0
      %6407 = vmatpush1.msra.mxu0 0.0
      %6408 = vmatprep.mubr.f32.mxu0 0.0
      %6409 = vmatmul.mubr.f32.gmra.mrb[0].mxu0 %v6291
      %v6410 = vpop.f32.mrb[0].mxu0
      %v6411 = vadd.f32 0.0, %v6410
      %v6412 = vpop.f32.mrb[0].mxu0
      %6413 = vmatprep.mubr.f32.mxu0 0.0
      %6414 = vmatmul.mubr.f32.gmra.mrb[0].mxu0 %v6292
      %v6415 = vpop.f32.mrb[0].mxu0
      %v6416 = vadd.f32 0.0, %v6415
      %v6417 = vpop.f32.mrb[0].mxu0
      %6418 = vmatprep.mubr.f32.mxu0 0.0
      %6419 = vmatmul.mubr.f32.gmra.mrb[0].mxu0 %v6293
      %v6420 = vpop.f32.mrb[0].mxu0
      %v6421 = vadd.f32 0.0, %v6420
      %v6422 = vpop.f32.mrb[0].mxu0
      %6423 = vmatprep.mubr.f32.mxu0 0.0
      %6424 = vmatmul.mubr.f32.gmra.mrb[0].mxu0 %v6294
      %v6425 = vpop.f32.mrb[0].mxu0
      %v6426 = vadd.f32 0.0, %v6425
      %v6427 = vpop.f32.mrb[0].mxu0
      %6428 = vmatprep.mubr.f32.mxu0 0.0
      %6429 = vmatmul.mubr.f32.gmra.mrb[0].mxu0 %v6295
      %v6430 = vpop.f32.mrb[0].mxu0
      %v6431 = vadd.f32 0.0, %v6430
      %v6432 = vpop.f32.mrb[0].mxu0
      %6433 = vmatprep.mubr.f32.mxu0 0.0
      %6434 = vmatmul.mubr.f32.gmra.mrb[0].mxu0 %v6296
      %v6435 = vpop.f32.mrb[0].mxu0
      %v6436 = vadd.f32 0.0, %v6435
      %v6437 = vpop.f32.mrb[0].mxu0
      %6438 = vmatprep.mubr.f32.mxu0 0.0
      %6439 = vmatmul.mubr.f32.gmra.mrb[0].mxu0 %v6297
      %v6440 = vpop.f32.mrb[0].mxu0
      %v6441 = vadd.f32 0.0, %v6440
      %v6442 = vpop.f32.mrb[0].mxu0
      %6443 = vmatprep.mubr.f32.mxu0 0.0
      %6444 = vmatmul.mubr.f32.gmra.mrb[0].mxu0 %v6298
      %v6445 = vpop.f32.mrb[0].mxu0
      %v6446 = vadd.f32 0.0, %v6445
      %v6447 = vpop.f32.mrb[0].mxu0
      %6448 = vmatprep.mubr.f32.mxu0 0.0
      %6449 = vmatmul.mubr.f32.gmra.mrb[0].mxu0 %v6299
      %v6450 = vpop.f32.mrb[0].mxu0
      %v6451 = vadd.f32 0.0, %v6450
      %v6452 = vpop.f32.mrb[0].mxu0
      %6453 = vmatprep.mubr.f32.mxu0 0.0
      %6454 = vmatmul.mubr.f32.gmra.mrb[0].mxu0 %v6300
      %v6455 = vpop.f32.mrb[0].mxu0
      %v6456 = vadd.f32 0.0, %v6455
      %v6457 = vpop.f32.mrb[0].mxu0
      %6458 = vmatprep.mubr.f32.mxu0 0.0
      %6459 = vmatmul.mubr.f32.gmra.mrb[0].mxu0 %v6301
      %v6460 = vpop.f32.mrb[0].mxu0
      %v6461 = vadd.f32 0.0, %v6460
      %v6462 = vpop.f32.mrb[0].mxu0
      %6463 = vmatprep.mubr.f32.mxu0 0.0
      %6464 = vmatmul.mubr.f32.gmra.mrb[0].mxu0 %v6302
      %v6465 = vpop.f32.mrb[0].mxu0
      %v6466 = vadd.f32 0.0, %v6465
      %v6467 = vpop.f32.mrb[0].mxu0
      %6468 = vmatprep.mubr.f32.mxu0 0.0
      %6469 = vmatmul.mubr.f32.gmra.mrb[0].mxu0 %v6303
      %v6470 = vpop.f32.mrb[0].mxu0
      %v6471 = vadd.f32 0.0, %v6470
      %v6472 = vpop.f32.mrb[0].mxu0
      %6473 = vmatprep.mubr.f32.mxu0 0.0
      %6474 = vmatmul.mubr.f32.gmra.mrb[0].mxu0 %v6304
      %v6475 = vpop.f32.mrb[0].mxu0
      %v6476 = vadd.f32 0.0, %v6475
      %v6477 = vpop.f32.mrb[0].mxu0
      %6478 = vmatprep.mubr.f32.mxu0 0.0
      %6479 = vmatmul.mubr.f32.gmra.mrb[0].mxu0 %v6305
      %v6480 = vpop.f32.mrb[0].mxu0
      %v6481 = vadd.f32 0.0, %v6480
      %v6482 = vpop.f32.mrb[0].mxu0
      %6483 = vmatprep.mubr.f32.mxu0 0.0
      %6484 = vmatmul.mubr.f32.gmra.mrb[0].mxu0 %v6306
      %v6485 = vpop.f32.mrb[0].mxu0
      %v6486 = vadd.f32 0.0, %v6485
      %v6487 = vpop.f32.mrb[0].mxu0
      %6488 = vmatprep.mubr.f32.mxu0 0.0
      %6489 = vmatmul.mubr.f32.gmra.mrb[0].mxu0 %v6307
      %v6490 = vpop.f32.mrb[0].mxu0
      %v6491 = vadd.f32 0.0, %v6490
      %v6492 = vpop.f32.mrb[0].mxu0
      %6493 = vmatprep.mubr.f32.mxu0 0.0
      %6494 = vmatmul.mubr.f32.gmra.mrb[0].mxu0 %v6308
      %v6495 = vpop.f32.mrb[0].mxu0
      %v6496 = vadd.f32 0.0, %v6495
      %v6497 = vpop.f32.mrb[0].mxu0
      %6498 = vmatprep.mubr.f32.mxu0 0.0
      %6499 = vmatmul.mubr.f32.gmra.mrb[0].mxu0 %v6309
      %v6500 = vpop.f32.mrb[0].mxu0
      %v6501 = vadd.f32 0.0, %v6500
      %v6502 = vpop.f32.mrb[0].mxu0
      %6503 = vmatprep.mubr.f32.mxu0 0.0
      %6504 = vmatmul.mubr.f32.gmra.mrb[0].mxu0 %v6310
      %v6505 = vpop.f32.mrb[0].mxu0
      %v6506 = vadd.f32 0.0, %v6505
      %v6507 = vpop.f32.mrb[0].mxu0
      %6508 = vmatprep.mubr.f32.mxu0 0.0
      %6509 = vmatmul.mubr.f32.gmra.mrb[0].mxu0 %v6311
      %v6510 = vpop.f32.mrb[0].mxu0
      %v6511 = vadd.f32 0.0, %v6510
      %v6512 = vpop.f32.mrb[0].mxu0
      %6513 = vmatprep.mubr.f32.mxu0 0.0
      %6514 = vmatmul.mubr.f32.gmra.mrb[0].mxu0 %v6312
      %v6515 = vpop.f32.mrb[0].mxu0
      %v6516 = vadd.f32 0.0, %v6515
      %v6517 = vpop.f32.mrb[0].mxu0
      %6518 = vmatprep.mubr.f32.mxu0 0.0
      %6519 = vmatmul.mubr.f32.gmra.mrb[0].mxu0 %v6313
      %v6520 = vpop.f32.mrb[0].mxu0
      %v6521 = vadd.f32 0.0, %v6520
      %v6522 = vpop.f32.mrb[0].mxu0
      %6523 = vmatprep.mubr.f32.mxu0 0.0
      %6524 = vmatmul.mubr.f32.gmra.mrb[0].mxu0 %v6314
      %v6525 = vpop.f32.mrb[0].mxu0
      %v6526 = vadd.f32 0.0, %v6525
      %v6527 = vpop.f32.mrb[0].mxu0
      %6528 = vmatprep.mubr.f32.mxu0 0.0
      %6529 = vmatmul.mubr.f32.gmra.mrb[0].mxu0 %v6315
      %v6530 = vpop.f32.mrb[0].mxu0
      %v6531 = vadd.f32 0.0, %v6530
      %v6532 = vpop.f32.mrb[0].mxu0
      %6533 = vmatprep.mubr.f32.mxu0 0.0
      %6534 = vmatmul.mubr.f32.gmra.mrb[0].mxu0 %v6316
      %v6535 = vpop.f32.mrb[0].mxu0
      %v6536 = vadd.f32 0.0, %v6535
      %v6537 = vpop.f32.mrb[0].mxu0
      %6538 = vmatprep.mubr.f32.mxu0 0.0
      %6539 = vmatmul.mubr.f32.gmra.mrb[0].mxu0 %v6317
      %v6540 = vpop.f32.mrb[0].mxu0
      %v6541 = vadd.f32 0.0, %v6540
      %v6542 = vpop.f32.mrb[0].mxu0
      %6543 = vmatprep.mubr.f32.mxu0 0.0
      %6544 = vmatmul.mubr.f32.gmra.mrb[0].mxu0 %v6318
      %v6545 = vpop.f32.mrb[0].mxu0
      %v6546 = vadd.f32 0.0, %v6545
      %v6547 = vpop.f32.mrb[0].mxu0
      %6548 = vmatprep.mubr.f32.mxu0 0.0
      %6549 = vmatmul.mubr.f32.gmra.mrb[0].mxu0 %v6319
      %v6550 = vpop.f32.mrb[0].mxu0
      %v6551 = vadd.f32 0.0, %v6550
      %v6552 = vpop.f32.mrb[0].mxu0
      %6553 = vmatprep.mubr.f32.mxu0 0.0
      %6554 = vmatmul.mubr.f32.gmra.mrb[0].mxu0 %v6320
      %v6555 = vpop.f32.mrb[0].mxu0
      %v6556 = vadd.f32 0.0, %v6555
      %v6557 = vpop.f32.mrb[0].mxu0
      %6558 = vmatprep.mubr.f32.mxu0 0.0
      %6559 = vmatmul.mubr.f32.gmra.mrb[0].mxu0 %v6321
      %v6560 = vpop.f32.mrb[0].mxu0
      %v6561 = vadd.f32 0.0, %v6560
      %v6562 = vpop.f32.mrb[0].mxu0
      %6563 = vmatprep.mubr.f32.mxu0 0.0
      %6564 = vmatmul.mubr.f32.gmra.mrb[0].mxu0 %v6322
      %v6565 = vpop.f32.mrb[0].mxu0
      %v6566 = vadd.f32 0.0, %v6565
      %v6567 = vpop.f32.mrb[0].mxu0
      %6568 = vmatprep.mubr.f32.mxu0 0.0
      %6569 = vmatmul.mubr.f32.gmra.mrb[0].mxu0 %v6323
      %v6570 = vpop.f32.mrb[0].mxu0
      %v6571 = vadd.f32 0.0, %v6570
      %v6572 = vpop.f32.mrb[0].mxu0
      %6573 = vmatprep.mubr.f32.mxu0 0.0
      %6574 = vmatmul.mubr.f32.gmra.mrb[0].mxu0 %v6324
      %v6575 = vpop.f32.mrb[0].mxu0
      %v6576 = vadd.f32 0.0, %v6575
      %v6577 = vpop.f32.mrb[0].mxu0
      %6578 = vmatprep.mubr.f32.mxu0 0.0
      %6579 = vmatmul.mubr.f32.gmra.mrb[0].mxu0 %v6325
      %v6580 = vpop.f32.mrb[0].mxu0
      %v6581 = vadd.f32 0.0, %v6580
      %v6582 = vpop.f32.mrb[0].mxu0
      %6583 = vmatprep.mubr.f32.mxu0 0.0
      %6584 = vmatmul.mubr.f32.gmra.mrb[0].mxu0 %v6326
      %v6585 = vpop.f32.mrb[0].mxu0
      %v6586 = vadd.f32 0.0, %v6585
      %v6587 = vpop.f32.mrb[0].mxu0
      %6588 = vdwg.mxu0
      %v6589 = vadd.f32 %v6255, %v6411
      %v6590 = vadd.f32 %v6256, %v6416
      %v6591 = vadd.f32 %v6257, %v6421
      %v6592 = vadd.f32 %v6258, %v6426
      %v6593 = vadd.f32 %v6259, %v6431
      %v6594 = vadd.f32 %v6260, %v6436
      %v6595 = vadd.f32 %v6261, %v6441
      %v6596 = vadd.f32 %v6262, %v6446
      %v6597 = vadd.f32 %v6263, %v6451
      %v6598 = vadd.f32 %v6264, %v6456
      %v6599 = vadd.f32 %v6265, %v6461
      %v6600 = vadd.f32 %v6266, %v6466
      %v6601 = vadd.f32 %v6267, %v6471
      %v6602 = vadd.f32 %v6268, %v6476
      %v6603 = vadd.f32 %v6269, %v6481
      %v6604 = vadd.f32 %v6270, %v6486
      %v6605 = vadd.f32 %v6271, %v6491
      %v6606 = vadd.f32 %v6272, %v6496
      %v6607 = vadd.f32 %v6273, %v6501
      %v6608 = vadd.f32 %v6274, %v6506
      %v6609 = vadd.f32 %v6275, %v6511
      %v6610 = vadd.f32 %v6276, %v6516
      %v6611 = vadd.f32 %v6277, %v6521
      %v6612 = vadd.f32 %v6278, %v6526
      %v6613 = vadd.f32 %v6279, %v6531
      %v6614 = vadd.f32 %v6280, %v6536
      %v6615 = vadd.f32 %v6281, %v6541
      %v6616 = vadd.f32 %v6282, %v6546
      %v6617 = vadd.f32 %v6283, %v6551
      %v6618 = vadd.f32 %v6284, %v6556
      %v6619 = vadd.f32 %v6285, %v6561
      %v6620 = vadd.f32 %v6286, %v6566
      %v6621 = vadd.f32 %v6287, %v6571
      %v6622 = vadd.f32 %v6288, %v6576
      %v6623 = vadd.f32 %v6289, %v6581
      %v6624 = vadd.f32 %v6290, %v6586
      %v6625 = vld [vmem:[%s5] sm:$0x1]
      %v6627 = vlaneseq
      %v6628 = vshrl.u32 %v6627, 7
      %v6629 = vsub.s32 0, %v6628
      %v6630 = vrot.slane %v6625, %v6629
      %v6632 = vmul.f32 %v6589, %v6630
      %v6633 = vmul.f32 %v6590, %v6630
      %v6634 = vmul.f32 %v6591, %v6630
      %v6635 = vmul.f32 %v6592, %v6630
      %v6636 = vmul.f32 %v6593, %v6630
      %v6637 = vmul.f32 %v6594, %v6630
      %v6638 = vmul.f32 %v6595, %v6630
      %v6639 = vmul.f32 %v6596, %v6630
      %v6640 = vmul.f32 %v6597, %v6630
      %v6641 = vmul.f32 %v6598, %v6630
      %v6642 = vmul.f32 %v6599, %v6630
      %v6643 = vmul.f32 %v6600, %v6630
      %v6644 = vmul.f32 %v6601, %v6630
      %v6645 = vmul.f32 %v6602, %v6630
      %v6646 = vmul.f32 %v6603, %v6630
      %v6647 = vmul.f32 %v6604, %v6630
      %v6648 = vmul.f32 %v6605, %v6630
      %v6649 = vmul.f32 %v6606, %v6630
      %v6650 = vmul.f32 %v6607, %v6630
      %v6651 = vmul.f32 %v6608, %v6630
      %v6652 = vmul.f32 %v6609, %v6630
      %v6653 = vmul.f32 %v6610, %v6630
      %v6654 = vmul.f32 %v6611, %v6630
      %v6655 = vmul.f32 %v6612, %v6630
      %v6656 = vmul.f32 %v6613, %v6630
      %v6657 = vmul.f32 %v6614, %v6630
      %v6658 = vmul.f32 %v6615, %v6630
      %v6659 = vmul.f32 %v6616, %v6630
      %v6660 = vmul.f32 %v6617, %v6630
      %v6661 = vmul.f32 %v6618, %v6630
      %v6662 = vmul.f32 %v6619, %v6630
      %v6663 = vmul.f32 %v6620, %v6630
      %v6664 = vmul.f32 %v6621, %v6630
      %v6665 = vmul.f32 %v6622, %v6630
      %v6666 = vmul.f32 %v6623, %v6630
      %v6667 = vmul.f32 %v6624, %v6630
      %v6668 = vld [vmem:[%s6] sm:$0x1]
      %v6670 = vlaneseq
      %v6671 = vshrl.u32 %v6670, 7
      %v6672 = vsub.s32 0, %v6671
      %v6673 = vrot.slane %v6668, %v6672
      %v6675 = vadd.f32 %v6632, %v6673
      %v6676 = vadd.f32 %v6633, %v6673
      %v6677 = vadd.f32 %v6634, %v6673
      %v6678 = vadd.f32 %v6635, %v6673
      %v6679 = vadd.f32 %v6636, %v6673
      %v6680 = vadd.f32 %v6637, %v6673
      %v6681 = vadd.f32 %v6638, %v6673
      %v6682 = vadd.f32 %v6639, %v6673
      %v6683 = vadd.f32 %v6640, %v6673
      %v6684 = vadd.f32 %v6641, %v6673
      %v6685 = vadd.f32 %v6642, %v6673
      %v6686 = vadd.f32 %v6643, %v6673
      %v6687 = vadd.f32 %v6644, %v6673
      %v6688 = vadd.f32 %v6645, %v6673
      %v6689 = vadd.f32 %v6646, %v6673
      %v6690 = vadd.f32 %v6647, %v6673
      %v6691 = vadd.f32 %v6648, %v6673
      %v6692 = vadd.f32 %v6649, %v6673
      %v6693 = vadd.f32 %v6650, %v6673
      %v6694 = vadd.f32 %v6651, %v6673
      %v6695 = vadd.f32 %v6652, %v6673
      %v6696 = vadd.f32 %v6653, %v6673
      %v6697 = vadd.f32 %v6654, %v6673
      %v6698 = vadd.f32 %v6655, %v6673
      %v6699 = vadd.f32 %v6656, %v6673
      %v6700 = vadd.f32 %v6657, %v6673
      %v6701 = vadd.f32 %v6658, %v6673
      %v6702 = vadd.f32 %v6659, %v6673
      %v6703 = vadd.f32 %v6660, %v6673
      %v6704 = vadd.f32 %v6661, %v6673
      %v6705 = vadd.f32 %v6662, %v6673
      %v6706 = vadd.f32 %v6663, %v6673
      %v6707 = vadd.f32 %v6664, %v6673
      %v6708 = vadd.f32 %v6665, %v6673
      %v6709 = vadd.f32 %v6666, %v6673
      %v6710 = vadd.f32 %v6667, %v6673
      %v6711 = vld [vmem:[%s300 + $0x13] sm:$0xff]
      %v6712 = vld [vmem:[%s300 + $0x1b] sm:$0xff]
      %v6713 = vld [vmem:[%s300 + $0x23] sm:$0xff]
      %v6714 = vld [vmem:[%s300 + $0x2b] sm:$0xff]
      %v6715 = vld [vmem:[%s300 + $0x33] sm:$0xff]
      %v6716 = vld [vmem:[%s300 + $0x3b] sm:$0xff]
      %v6717 = vld [vmem:[%s300 + $0x43] sm:$0xff]
      %v6718 = vld [vmem:[%s300 + $0x4b] sm:$0xff]
      %v6719 = vld [vmem:[%s300 + $0x53] sm:$0xff]
      %v6720 = vld [vmem:[%s300 + $0x5b] sm:$0xff]
      %v6721 = vld [vmem:[%s300 + $0x63] sm:$0xff]
      %v6722 = vld [vmem:[%s300 + $0x6b] sm:$0xff]
      %v6723 = vld [vmem:[%s300 + $0x73] sm:$0xff]
      %v6724 = vld [vmem:[%s300 + $0x7b] sm:$0xff]
      %v6725 = vld [vmem:[%s300 + $0x83] sm:$0xff]
      %v6726 = vld [vmem:[%s300 + $0x8b] sm:$0xff]
      %v6727 = vld [vmem:[%s300 + $0x93] sm:$0xff]
      %v6728 = vld [vmem:[%s300 + $0x9b] sm:$0xff]
      %v6729 = vld [vmem:[%s300 + $0xa3] sm:$0xff]
      %v6730 = vld [vmem:[%s300 + $0xab] sm:$0xff]
      %v6731 = vld [vmem:[%s300 + $0xb3] sm:$0xff]
      %v6732 = vld [vmem:[%s300 + $0xbb] sm:$0xff]
      %v6733 = vld [vmem:[%s300 + $0xc3] sm:$0xff]
      %v6734 = vld [vmem:[%s300 + $0xcb] sm:$0xff]
      %v6735 = vld [vmem:[%s300 + $0xd3] sm:$0xff]
      %v6736 = vld [vmem:[%s300 + $0xdb] sm:$0xff]
      %v6737 = vld [vmem:[%s300 + $0xe3] sm:$0xff]
      %v6738 = vld [vmem:[%s300 + $0xeb] sm:$0xff]
      %v6739 = vld [vmem:[%s300 + $0xf3] sm:$0xff]
      %v6740 = vld [vmem:[%s300 + $0xfb] sm:$0xff]
      %v6741 = vld [vmem:[%s300 + $0x103] sm:$0xff]
      %v6742 = vld [vmem:[%s300 + $0x10b] sm:$0xff]
      %v6743 = vld [vmem:[%s300 + $0x113] sm:$0xff]
      %v6744 = vld [vmem:[%s300 + $0x11b] sm:$0xff]
      %v6745 = vld [vmem:[%s300 + $0x123] sm:$0xff]
      %v6746 = vld [vmem:[%s300 + $0x12b] sm:$0xff]
      %v6747 = vadd.f32 %v6675, %v6711
      %v6748 = vadd.f32 %v6676, %v6712
      %v6749 = vadd.f32 %v6677, %v6713
      %v6750 = vadd.f32 %v6678, %v6714
      %v6751 = vadd.f32 %v6679, %v6715
      %v6752 = vadd.f32 %v6680, %v6716
      %v6753 = vadd.f32 %v6681, %v6717
      %v6754 = vadd.f32 %v6682, %v6718
      %v6755 = vadd.f32 %v6683, %v6719
      %v6756 = vadd.f32 %v6684, %v6720
      %v6757 = vadd.f32 %v6685, %v6721
      %v6758 = vadd.f32 %v6686, %v6722
      %v6759 = vadd.f32 %v6687, %v6723
      %v6760 = vadd.f32 %v6688, %v6724
      %v6761 = vadd.f32 %v6689, %v6725
      %v6762 = vadd.f32 %v6690, %v6726
      %v6763 = vadd.f32 %v6691, %v6727
      %v6764 = vadd.f32 %v6692, %v6728
      %v6765 = vadd.f32 %v6693, %v6729
      %v6766 = vadd.f32 %v6694, %v6730
      %v6767 = vadd.f32 %v6695, %v6731
      %v6768 = vadd.f32 %v6696, %v6732
      %v6769 = vadd.f32 %v6697, %v6733
      %v6770 = vadd.f32 %v6698, %v6734
      %v6771 = vadd.f32 %v6699, %v6735
      %v6772 = vadd.f32 %v6700, %v6736
      %v6773 = vadd.f32 %v6701, %v6737
      %v6774 = vadd.f32 %v6702, %v6738
      %v6775 = vadd.f32 %v6703, %v6739
      %v6776 = vadd.f32 %v6704, %v6740
      %v6777 = vadd.f32 %v6705, %v6741
      %v6778 = vadd.f32 %v6706, %v6742
      %v6779 = vadd.f32 %v6707, %v6743
      %v6780 = vadd.f32 %v6708, %v6744
      %v6781 = vadd.f32 %v6709, %v6745
      %v6782 = vadd.f32 %v6710, %v6746
      %6783 = vst [vmem:[%s305] sm:$0xff] %v6747
      %6784 = vst [vmem:[%s305 + $0x8] sm:$0xff] %v6748
      %6785 = vst [vmem:[%s305 + $0x10] sm:$0xff] %v6749
      %6786 = vst [vmem:[%s305 + $0x18] sm:$0xff] %v6750
      %6787 = vst [vmem:[%s305 + $0x20] sm:$0xff] %v6751
      %6788 = vst [vmem:[%s305 + $0x28] sm:$0xff] %v6752
      %6789 = vst [vmem:[%s305 + $0x30] sm:$0xff] %v6753
      %6790 = vst [vmem:[%s305 + $0x38] sm:$0xff] %v6754
      %6791 = vst [vmem:[%s305 + $0x40] sm:$0xff] %v6755
      %6792 = vst [vmem:[%s305 + $0x48] sm:$0xff] %v6756
      %6793 = vst [vmem:[%s305 + $0x50] sm:$0xff] %v6757
      %6794 = vst [vmem:[%s305 + $0x58] sm:$0xff] %v6758
      %6795 = vst [vmem:[%s305 + $0x60] sm:$0xff] %v6759
      %6796 = vst [vmem:[%s305 + $0x68] sm:$0xff] %v6760
      %6797 = vst [vmem:[%s305 + $0x70] sm:$0xff] %v6761
      %6798 = vst [vmem:[%s305 + $0x78] sm:$0xff] %v6762
      %6799 = vst [vmem:[%s305 + $0x80] sm:$0xff] %v6763
      %6800 = vst [vmem:[%s305 + $0x88] sm:$0xff] %v6764
      %6801 = vst [vmem:[%s305 + $0x90] sm:$0xff] %v6765
      %6802 = vst [vmem:[%s305 + $0x98] sm:$0xff] %v6766
      %6803 = vst [vmem:[%s305 + $0xa0] sm:$0xff] %v6767
      %6804 = vst [vmem:[%s305 + $0xa8] sm:$0xff] %v6768
      %6805 = vst [vmem:[%s305 + $0xb0] sm:$0xff] %v6769
      %6806 = vst [vmem:[%s305 + $0xb8] sm:$0xff] %v6770
      %6807 = vst [vmem:[%s305 + $0xc0] sm:$0xff] %v6771
      %6808 = vst [vmem:[%s305 + $0xc8] sm:$0xff] %v6772
      %6809 = vst [vmem:[%s305 + $0xd0] sm:$0xff] %v6773
      %6810 = vst [vmem:[%s305 + $0xd8] sm:$0xff] %v6774
      %6811 = vst [vmem:[%s305 + $0xe0] sm:$0xff] %v6775
      %6812 = vst [vmem:[%s305 + $0xe8] sm:$0xff] %v6776
      %6813 = vst [vmem:[%s305 + $0xf0] sm:$0xff] %v6777
      %6814 = vst [vmem:[%s305 + $0xf8] sm:$0xff] %v6778
      %6815 = vst [vmem:[%s305 + $0x100] sm:$0xff] %v6779
      %6816 = vst [vmem:[%s305 + $0x108] sm:$0xff] %v6780
      %6817 = vst [vmem:[%s305 + $0x110] sm:$0xff] %v6781
      %6818 = vst [vmem:[%s305 + $0x118] sm:$0xff] %v6782
      %p6819 = scmp.lt.s32.totalorder %s19, 1
      %s6820 = scalar_select %p6819, %s19, 1
      %s6821 = smul.addr %s6820, 36
      %s6822 = smul.addr %s6821, 8
      %s6823 = scalar_lea.vmem %s8, %s6822
      // Predicated region
      $region53: #{res_block_forward.1} parent=51 // pred_check
        %p6824 = pneg %p210
      $region54: #{res_block_forward.1} parent=51 // pred_check_branch
        %6826 = sbr.rel (%p6824) target = $region56
      $region55: #{res_block_forward.1} parent=51 // pred_region
        _
      $region56: #{res_block_forward.1} parent=51 // pred_fallthru
        _
    $region52: #{res_block_forward.1} parent=5 // pred_fallthru
      _
    %p6827 = scmp.le.s32.totalorder 2, %s14
    // Predicated region
    $region57: #{res_block_forward.1} parent=5 // pred_check
      %p6828 = pneg %p6827
    $region58: #{res_block_forward.1} parent=5 // pred_check_branch
      %6830 = sbr.rel (%p6828) target = $region60
    $region59: #{res_block_forward.1} parent=5 // pred_region
      %s6831 = ssub.s32 %s14, 2
      // Predicated region
      $region61: #{res_block_forward.1} parent=59 // pred_check
        %p6832 = pneg %p216
      $region62: #{res_block_forward.1} parent=59 // pred_check_branch
        %6834 = sbr.rel (%p6832) target = $region64
      $region63: #{res_block_forward.1} parent=59 // pred_region
        %p6835 = scmp.lt.s32.totalorder %s20, 1
        %s6836 = scalar_select %p6835, %s20, 1
        %s6837 = smul.addr %s6836, 36
        %s6838 = smul.addr %s6837, 8
        %s6839 = scalar_lea.vmem %s8, %s6838
      $region64: #{res_block_forward.1} parent=59 // pred_fallthru
        _
    $region60: #{res_block_forward.1} parent=5 // pred_fallthru
      _
  $region6: #{res_block_forward.1} parent=0 // loop_footer
    %s18 = sadd.s32 1, %s14
  $region7: #{res_block_forward.1} parent=0 // loop_footer_branch
    %13 = sbr.rel target = $region3
  $region8: #{res_block_forward.1} parent=0 // loop_exit
    _

</llo_original>
